<compile_context>
chip_gen: v5e
topology: v5e:2x2
jax: 0.10.0
libtpu: 0.0.40
codegen_flags: <defaults>
</compile_context>

<pallas_src>
import functools

import jax
import jax.numpy as jnp
from jax.experimental import pallas as pl
from jax.experimental.pallas import tpu as pltpu


# ----------------------------------------------------------------------------
# Tap plans (static):  plan[q] = tuple of (input_phase, dh, dw, weight_block)
# ----------------------------------------------------------------------------
# Conv2d, kernel 3, stride 2, padding 1: input split into 4 phases on the host,
# one output phase, 9 taps.
_PLAN_CONV_S2 = (
    tuple(((dh % 2) * 2 + (dw % 2), dh // 2, dw // 2, dh * 3 + dw)
          for dh in range(3) for dw in range(3)),
)

# Conv2d, kernel 3, stride 1, padding 1: single input phase, 9 taps.
_PLAN_CONV_S1 = (
    tuple((0, dh, dw, dh * 3 + dw) for dh in range(3) for dw in range(3)),
)

# ConvTranspose2d(k=3, s=2, p=1, output_padding=1): 4 output phases
# (h-parity, w-parity); only the 9 non-zero taps of the zero-dilated input are
# computed.  Weight blocks are packed in the (kh, kw) order below.
_PLAN_CONVT = (
    ((0, 0, 0, 0),),                                       # out[2i,   2j  ]
    ((0, 0, 0, 1), (0, 0, 1, 2)),                          # out[2i,   2j+1]
    ((0, 0, 0, 3), (0, 1, 0, 4)),                          # out[2i+1, 2j  ]
    ((0, 0, 0, 5), (0, 0, 1, 6), (0, 1, 0, 7), (0, 1, 1, 8)),  # out[2i+1, 2j+1]
)
_CONVT_WEIGHT_TAPS = ((1, 1), (1, 2), (1, 0), (2, 1), (0, 1),
                      (2, 2), (2, 0), (0, 2), (0, 0))


# ----------------------------------------------------------------------------
# Pallas kernels
# ----------------------------------------------------------------------------
def _multi_tap_conv_kernel(x_ref, w_ref, b_ref, o_ref, *, plan, hp, ho, wo,
                           activation):
    """Direct conv / transposed-conv as a sum of per-tap matmuls (all in VMEM).

    x_ref : (1, P*Hp, Wp, Cin) f32  phase-stacked padded input for one image
    w_ref : (9, Cin, Cout)     bf16 per-tap weight blocks (BatchNorm folded)
    b_ref : (1, Cout)          f32  folded bias (+ BN shift)
    o_ref : (1, Q*Ho*Wo, Cout) f32  Q output phases, row-major (q, oh, ow)
    """
    m = ho * wo
    cin = x_ref.shape[-1]
    x = x_ref[0]                                    # (P*Hp, Wp, Cin)
    for q, taps in enumerate(plan):
        acc = None
        for (p, dh, dw, t) in taps:
            r0 = p * hp + dh
            xs = x[r0:r0 + ho, dw:dw + wo, :]       # (Ho, Wo, Cin) - VMEM only
            xs = xs.reshape(m, cin).astype(jnp.bfloat16)
            contrib = jnp.dot(xs, w_ref[t], preferred_element_type=jnp.float32)
            acc = contrib if acc is None else acc + contrib
        y = acc + b_ref[...]
        if activation == "leaky_relu":
            y = jnp.where(y >= 0, y, 0.01 * y)      # PyTorch default slope
        elif activation == "sigmoid":
            y = jax.nn.sigmoid(y)
        o_ref[0, q * m:(q + 1) * m, :] = y.astype(o_ref.dtype)


def _bottleneck_kernel(h_ref, wcat_ref, bcat_ref, eps_ref, wdec_ref, bdec_ref,
                       mu_ref, lv_ref, z_ref, d_ref, *, latent):
    """Fused [fc_mu | fc_var] matmul + reparameterization + decoder_input."""
    y = jnp.dot(h_ref[...].astype(jnp.bfloat16), wcat_ref[...],
                preferred_element_type=jnp.float32) + bcat_ref[...]
    mu = y[:, :latent]
    log_var = y[:, latent:]
    z = mu + eps_ref[...] * jnp.exp(0.5 * log_var)
    d = jnp.dot(z.astype(jnp.bfloat16), wdec_ref[...],
                preferred_element_type=jnp.float32) + bdec_ref[...]
    mu_ref[...] = mu
    lv_ref[...] = log_var
    z_ref[...] = z
    d_ref[...] = d


# ----------------------------------------------------------------------------
# pallas_call wrappers
# ----------------------------------------------------------------------------
def _conv_layer(phases, w_blocks, bias, plan, hp, ho, wo, activation):
    """phases: (N, P*Hp, Wp, Cin) f32 -> (N, Q*Ho*Wo, Cout) f32."""
    n, rows, wp, cin = phases.shape
    t_, _, cout = w_blocks.shape
    q_ = len(plan)
    m = ho * wo
    kernel = functools.partial(_multi_tap_conv_kernel, plan=plan, hp=hp, ho=ho,
                               wo=wo, activation=activation)
    return pl.pallas_call(
        kernel,
        grid=(n,),
        in_specs=[
            pl.BlockSpec((1, rows, wp, cin), lambda i: (i, 0, 0, 0)),
            pl.BlockSpec((t_, cin, cout), lambda i: (0, 0, 0)),
            pl.BlockSpec((1, cout), lambda i: (0, 0)),
        ],
        out_specs=pl.BlockSpec((1, q_ * m, cout), lambda i: (i, 0, 0)),
        out_shape=jax.ShapeDtypeStruct((n, q_ * m, cout), jnp.float32),
        compiler_params=pltpu.CompilerParams(
            dimension_semantics=("parallel",),       # batch across cores (v7x)
            vmem_limit_bytes=32 * 1024 * 1024),
    )(phases, w_blocks, bias)


def _bottleneck(flat_h, wcat, bcat, eps, wdec, bdec, latent):
    n = flat_h.shape[0]
    f = wdec.shape[1]
    vmem = pl.BlockSpec(memory_space=pltpu.MemorySpace.VMEM)
    return pl.pallas_call(
        functools.partial(_bottleneck_kernel, latent=latent),
        out_shape=(jax.ShapeDtypeStruct((n, latent), jnp.float32),
                   jax.ShapeDtypeStruct((n, latent), jnp.float32),
                   jax.ShapeDtypeStruct((n, latent), jnp.float32),
                   jax.ShapeDtypeStruct((n, f), jnp.float32)),
        in_specs=[vmem] * 6,
        out_specs=(vmem, vmem, vmem, vmem),
        compiler_params=pltpu.CompilerParams(vmem_limit_bytes=32 * 1024 * 1024),
    )(flat_h, wcat, bcat, eps, wdec, bdec)


# ----------------------------------------------------------------------------
# Host-side layer glue (cheap pads / phase splits / interleaves, ~1x traffic)
# ----------------------------------------------------------------------------
def conv2d_s2(x_nhwc, w_blocks, bias):
    n, h, w, _ = x_nhwc.shape
    ho, wo = h // 2, w // 2
    xp = jnp.pad(x_nhwc, ((0, 0), (1, 1), (1, 1), (0, 0)))
    # sub-pixel phase split so the kernel only needs contiguous slices
    phases = jnp.concatenate([xp[:, a::2, b::2, :] for a in (0, 1) for b in (0, 1)],
                             axis=1)                     # (N, 4*(Ho+1), Wo+1, C)
    out = _conv_layer(phases, w_blocks, bias, _PLAN_CONV_S2, ho + 1, ho, wo,
                      "leaky_relu")
    return out.reshape(n, ho, wo, -1)


def conv2d_s1_sigmoid(x_nhwc, w_blocks, bias):
    n, h, w, _ = x_nhwc.shape
    xp = jnp.pad(x_nhwc, ((0, 0), (1, 1), (1, 1), (0, 0)))
    out = _conv_layer(xp, w_blocks, bias, _PLAN_CONV_S1, h + 2, h, w, "sigmoid")
    return out.reshape(n, h, w, -1)


def conv_transpose2d_s2(x_nhwc, w_blocks, bias):
    n, h, w, _ = x_nhwc.shape
    cout = w_blocks.shape[-1]
    xp = jnp.pad(x_nhwc, ((0, 0), (0, 1), (0, 1), (0, 0)))   # bottom/right halo
    out = _conv_layer(xp, w_blocks, bias, _PLAN_CONVT, h + 1, h, w, "leaky_relu")
    # interleave the 4 output phases -> (N, 2H, 2W, Cout)
    out = out.reshape(n, 2, 2, h, w, cout)
    out = jnp.transpose(out, (0, 3, 1, 4, 2, 5))
    return out.reshape(n, 2 * h, 2 * w, cout)


# ----------------------------------------------------------------------------
# Parameter construction (deterministic, synthetic, PyTorch layouts)
# ----------------------------------------------------------------------------
def make_params(key, latent_dims, hidden_dims, image_shape):
    c_img, h_img, _ = image_shape
    last_channels = hidden_dims[-1]
    spatial = h_img // (2 ** len(hidden_dims))
    flattened = last_channels * spatial * spatial
    bn_eps = 1e-5

    params = {"encoder": [], "decoder": []}

    def bn_affine(c):
        gamma = jnp.ones((c,), jnp.float32)
        beta = jnp.zeros((c,), jnp.float32)
        running_mean = jnp.zeros((c,), jnp.float32)
        running_var = jnp.ones((c,), jnp.float32)
        scale = gamma / jnp.sqrt(running_var + bn_eps)
        shift = beta - running_mean * scale
        return scale, shift

    in_ch = c_img
    for h_dim in hidden_dims:
        key, k1, k2 = jax.random.split(key, 3)
        w = jax.random.normal(k1, (h_dim, in_ch, 3, 3), jnp.float32) * 0.05
        b = jax.random.normal(k2, (h_dim,), jnp.float32) * 0.05
        scale, shift = bn_affine(h_dim)
        params["encoder"].append((w, b, scale, shift))
        in_ch = h_dim

    key, k1, k2, k3, k4, k5, k6 = jax.random.split(key, 7)
    params["fc_mu_w"] = jax.random.normal(k1, (flattened, latent_dims), jnp.float32) * 0.05
    params["fc_mu_b"] = jax.random.normal(k2, (latent_dims,), jnp.float32) * 0.05
    params["fc_var_w"] = jax.random.normal(k3, (flattened, latent_dims), jnp.float32) * 0.05
    params["fc_var_b"] = jax.random.normal(k4, (latent_dims,), jnp.float32) * 0.05
    params["dec_in_w"] = jax.random.normal(k5, (latent_dims, flattened), jnp.float32) * 0.05
    params["dec_in_b"] = jax.random.normal(k6, (flattened,), jnp.float32) * 0.05

    in_ch = last_channels
    for h_dim in reversed(hidden_dims):
        key, k1, k2 = jax.random.split(key, 3)
        # PyTorch ConvTranspose2d weight layout: (in_channels, out_channels, kH, kW)
        wt = jax.random.normal(k1, (in_ch, h_dim, 3, 3), jnp.float32) * 0.05
        b = jax.random.normal(k2, (h_dim,), jnp.float32) * 0.05
        scale, shift = bn_affine(h_dim)
        params["decoder"].append((wt, b, scale, shift))
        in_ch = h_dim

    key, k1, k2 = jax.random.split(key, 3)
    params["final_w"] = jax.random.normal(k1, (c_img, in_ch, 3, 3), jnp.float32) * 0.05
    params["final_b"] = jax.random.normal(k2, (c_img,), jnp.float32) * 0.05
    return params


def fold_and_pack(params, latent_dims, hidden_dims, image_shape):
    """Host-side precompute: BN folding (in f32), bf16 cast, FC weight permutes."""
    c_img, h_img, _ = image_shape
    spatial = h_img // (2 ** len(hidden_dims))
    c_last = hidden_dims[-1]
    hw = spatial * spatial
    f = c_last * hw

    def fold_conv(w_oihw, b, scale, shift):
        cout, cin = w_oihw.shape[0], w_oihw.shape[1]
        blocks = jnp.transpose(w_oihw, (2, 3, 1, 0)).reshape(9, cin, cout)
        blocks = blocks * scale[None, None, :]
        bias = (b * scale + shift).reshape(1, cout)
        return blocks.astype(jnp.bfloat16), bias.astype(jnp.float32)

    def fold_convt(wt_iohw, b, scale, shift):
        cout = wt_iohw.shape[1]
        blocks = jnp.stack([wt_iohw[:, :, kh, kw] for (kh, kw) in _CONVT_WEIGHT_TAPS],
                           axis=0)                           # (9, Cin, Cout)
        blocks = blocks * scale[None, None, :]
        bias = (b * scale + shift).reshape(1, cout)
        return blocks.astype(jnp.bfloat16), bias.astype(jnp.float32)

    packed = {"encoder": [], "decoder": []}
    for (w, b, scale, shift) in params["encoder"]:
        packed["encoder"].append(fold_conv(w, b, scale, shift))
    for (wt, b, scale, shift) in params["decoder"]:
        packed["decoder"].append(fold_convt(wt, b, scale, shift))
    packed["final"] = fold_conv(params["final_w"], params["final_b"],
                                jnp.ones((c_img,), jnp.float32),
                                jnp.zeros((c_img,), jnp.float32))

    # Permute fc rows from torch (C,H,W)-major flatten to NHWC flatten, and fuse
    # the mu / log_var heads along N.
    def permute_fc_rows(w):
        return w.reshape(c_last, hw, latent_dims).transpose(1, 0, 2).reshape(f, latent_dims)

    wcat = jnp.concatenate([permute_fc_rows(params["fc_mu_w"]),
                            permute_fc_rows(params["fc_var_w"])], axis=1)
    bcat = jnp.concatenate([params["fc_mu_b"], params["fc_var_b"]]).reshape(1, 2 * latent_dims)
    packed["wcat"] = wcat.astype(jnp.bfloat16)
    packed["bcat"] = bcat.astype(jnp.float32)

    # Permute decoder_input columns so its output is already NHWC-flat.
    wdec = params["dec_in_w"].reshape(latent_dims, c_last, hw).transpose(0, 2, 1).reshape(latent_dims, f)
    bdec = params["dec_in_b"].reshape(c_last, hw).transpose(1, 0).reshape(1, f)
    packed["wdec"] = wdec.astype(jnp.bfloat16)
    packed["bdec"] = bdec.astype(jnp.float32)
    return packed


# ----------------------------------------------------------------------------
# Forward pass
# ----------------------------------------------------------------------------
def make_forward(latent_dims, hidden_dims, image_shape):
    spatial = image_shape[1] // (2 ** len(hidden_dims))
    c_last = hidden_dims[-1]

    def forward(packed, x_nchw, eps):
        n = x_nchw.shape[0]
        h = jnp.transpose(x_nchw, (0, 2, 3, 1))          # NCHW -> NHWC

        # ---- encoder: Conv2d(s2) + BN + LeakyReLU, fused per layer ----------
        for (blocks, bias) in packed["encoder"]:
            h = conv2d_s2(h, blocks, bias)

        # NHWC-flat (fc weights were permuted offline to match)
        flat_h = h.reshape(n, -1)

        # ---- fused [fc_mu|fc_var] + reparameterize + decoder_input ----------
        mu, log_var, z, d = _bottleneck(flat_h, packed["wcat"], packed["bcat"],
                                        eps, packed["wdec"], packed["bdec"],
                                        latent_dims)

        # decoder_input output is already in NHWC-flat order
        h = d.reshape(n, spatial, spatial, c_last)

        # ---- decoder: ConvTranspose2d(s2) + BN + LeakyReLU (zero-skip) ------
        for (blocks, bias) in packed["decoder"]:
            h = conv_transpose2d_s2(h, blocks, bias)

        # ---- final layer: Conv2d(k=3, p=1) + Sigmoid -------------------------
        h = conv2d_s1_sigmoid(h, packed["final"][0], packed["final"][1])
        recon = jnp.transpose(h, (0, 3, 1, 2))           # NHWC -> NCHW

        return recon, x_nchw, mu, log_var, z

    return jax.jit(forward)


# ----------------------------------------------------------------------------
if __name__ == "__main__":
    latent_dims = 8
    hidden_dims = [8, 16]
    image_shape = (4, 16, 16)      # (C, H, W)
    batch = 2

    key = jax.random.PRNGKey(0)
    key, k_params, k_x, k_eps = jax.random.split(key, 4)

    params = make_params(k_params, latent_dims, hidden_dims, image_shape)
    packed = fold_and_pack(params, latent_dims, hidden_dims, image_shape)
    x = jax.random.uniform(k_x, (batch,) + image_shape, jnp.float32)     # NCHW
    eps = jax.random.normal(k_eps, (batch, latent_dims), jnp.float32)

    forward = make_forward(latent_dims, hidden_dims, image_shape)
    recon, x_out, mu, log_var, z = forward(packed, x, eps)
    jax.block_until_ready((recon, x_out, mu, log_var, z))

    assert recon.shape == x.shape, (recon.shape, x.shape)
    assert mu.shape == (batch, latent_dims)
    assert log_var.shape == (batch, latent_dims)
    assert z.shape == (batch, latent_dims)
    assert bool(jnp.all(jnp.isfinite(recon)))
    print("KERNEL_OK")
</pallas_src>

<mosaic_0001>
module attributes {stable_mosaic.version = 11 : i64} {
  func.func @_multi_tap_conv_kernel(%arg0: i32, %arg1: memref<1x36x9x4xf32, #tpu.memory_space<vmem>>, %arg2: memref<9x4x8xbf16, #tpu.memory_space<vmem>>, %arg3: memref<1x8xf32, #tpu.memory_space<vmem>>, %arg4: memref<1x64x8xf32, #tpu.memory_space<vmem>>) attributes {dimension_semantics = [#tpu.dimension_semantics<parallel>], iteration_bounds = array<i64: 2>, scalar_prefetch = 0 : i64, scratch_operands = 0 : i64, tpu.core_type = #tpu.core_type<tc>, window_params = [{transform_indices = @transform_0, window_bounds = array<i64: 1, 36, 9, 4>}, {pipeline_mode = #tpu.pipeline_mode<synchronous>, transform_indices = @transform_1, window_bounds = array<i64: 9, 4, 8>}, {pipeline_mode = #tpu.pipeline_mode<synchronous>, transform_indices = @transform_2, window_bounds = array<i64: 1, 8>}, {transform_indices = @transform_3, window_bounds = array<i64: 1, 64, 8>}]} {
    %c0 = arith.constant 0 : index
    %c0_0 = arith.constant 0 : index
    %c0_1 = arith.constant 0 : index
    %c0_2 = arith.constant 0 : index
    %0 = vector.load %arg1[%c0, %c0_0, %c0_1, %c0_2] : memref<1x36x9x4xf32, #tpu.memory_space<vmem>>, vector<1x36x9x4xf32>
    %1 = vector.shape_cast %0 : vector<1x36x9x4xf32> to vector<36x9x4xf32>
    %2 = vector.extract_strided_slice %1 {offsets = [0, 0, 0], sizes = [8, 8, 4], strides = [1, 1, 1]} : vector<36x9x4xf32> to vector<8x8x4xf32>
    %3 = vector.shape_cast %2 : vector<8x8x4xf32> to vector<64x4xf32>
    %4 = arith.truncf %3 : vector<64x4xf32> to vector<64x4xbf16>
    %c0_3 = arith.constant 0 : index
    %c0_4 = arith.constant 0 : index
    %c0_5 = arith.constant 0 : index
    %5 = vector.load %arg2[%c0_3, %c0_4, %c0_5] : memref<9x4x8xbf16, #tpu.memory_space<vmem>>, vector<1x4x8xbf16>
    %6 = vector.shape_cast %5 : vector<1x4x8xbf16> to vector<4x8xbf16>
    %cst = arith.constant dense<0.000000e+00> : vector<64x8xf32>
    %7 = tpu.matmul %4, %6, %cst {dimension_numbers = #tpu.dot_dimension_numbers<[1], [0], [0], [1], [0, 0, 1, 1], [], []>} : vector<64x4xbf16>, vector<4x8xbf16>, vector<64x8xf32> -> vector<64x8xf32>
    %8 = vector.extract_strided_slice %1 {offsets = [9, 0, 0], sizes = [8, 8, 4], strides = [1, 1, 1]} : vector<36x9x4xf32> to vector<8x8x4xf32>
    %9 = vector.shape_cast %8 : vector<8x8x4xf32> to vector<64x4xf32>
    %10 = arith.truncf %9 : vector<64x4xf32> to vector<64x4xbf16>
    %c1 = arith.constant 1 : index
    %c0_6 = arith.constant 0 : index
    %c0_7 = arith.constant 0 : index
    %11 = vector.load %arg2[%c1, %c0_6, %c0_7] : memref<9x4x8xbf16, #tpu.memory_space<vmem>>, vector<1x4x8xbf16>
    %12 = vector.shape_cast %11 : vector<1x4x8xbf16> to vector<4x8xbf16>
    %cst_8 = arith.constant dense<0.000000e+00> : vector<64x8xf32>
    %13 = tpu.matmul %10, %12, %cst_8 {dimension_numbers = #tpu.dot_dimension_numbers<[1], [0], [0], [1], [0, 0, 1, 1], [], []>} : vector<64x4xbf16>, vector<4x8xbf16>, vector<64x8xf32> -> vector<64x8xf32>
    %14 = arith.addf %7, %13 : vector<64x8xf32>
    %15 = vector.extract_strided_slice %1 {offsets = [0, 1, 0], sizes = [8, 8, 4], strides = [1, 1, 1]} : vector<36x9x4xf32> to vector<8x8x4xf32>
    %16 = vector.shape_cast %15 : vector<8x8x4xf32> to vector<64x4xf32>
    %17 = arith.truncf %16 : vector<64x4xf32> to vector<64x4xbf16>
    %c2 = arith.constant 2 : index
    %c0_9 = arith.constant 0 : index
    %c0_10 = arith.constant 0 : index
    %18 = vector.load %arg2[%c2, %c0_9, %c0_10] : memref<9x4x8xbf16, #tpu.memory_space<vmem>>, vector<1x4x8xbf16>
    %19 = vector.shape_cast %18 : vector<1x4x8xbf16> to vector<4x8xbf16>
    %cst_11 = arith.constant dense<0.000000e+00> : vector<64x8xf32>
    %20 = tpu.matmul %17, %19, %cst_11 {dimension_numbers = #tpu.dot_dimension_numbers<[1], [0], [0], [1], [0, 0, 1, 1], [], []>} : vector<64x4xbf16>, vector<4x8xbf16>, vector<64x8xf32> -> vector<64x8xf32>
    %21 = arith.addf %14, %20 : vector<64x8xf32>
    %22 = vector.extract_strided_slice %1 {offsets = [18, 0, 0], sizes = [8, 8, 4], strides = [1, 1, 1]} : vector<36x9x4xf32> to vector<8x8x4xf32>
    %23 = vector.shape_cast %22 : vector<8x8x4xf32> to vector<64x4xf32>
    %24 = arith.truncf %23 : vector<64x4xf32> to vector<64x4xbf16>
    %c3 = arith.constant 3 : index
    %c0_12 = arith.constant 0 : index
    %c0_13 = arith.constant 0 : index
    %25 = vector.load %arg2[%c3, %c0_12, %c0_13] : memref<9x4x8xbf16, #tpu.memory_space<vmem>>, vector<1x4x8xbf16>
    %26 = vector.shape_cast %25 : vector<1x4x8xbf16> to vector<4x8xbf16>
    %cst_14 = arith.constant dense<0.000000e+00> : vector<64x8xf32>
    %27 = tpu.matmul %24, %26, %cst_14 {dimension_numbers = #tpu.dot_dimension_numbers<[1], [0], [0], [1], [0, 0, 1, 1], [], []>} : vector<64x4xbf16>, vector<4x8xbf16>, vector<64x8xf32> -> vector<64x8xf32>
    %28 = arith.addf %21, %27 : vector<64x8xf32>
    %29 = vector.extract_strided_slice %1 {offsets = [27, 0, 0], sizes = [8, 8, 4], strides = [1, 1, 1]} : vector<36x9x4xf32> to vector<8x8x4xf32>
    %30 = vector.shape_cast %29 : vector<8x8x4xf32> to vector<64x4xf32>
    %31 = arith.truncf %30 : vector<64x4xf32> to vector<64x4xbf16>
    %c4 = arith.constant 4 : index
    %c0_15 = arith.constant 0 : index
    %c0_16 = arith.constant 0 : index
    %32 = vector.load %arg2[%c4, %c0_15, %c0_16] : memref<9x4x8xbf16, #tpu.memory_space<vmem>>, vector<1x4x8xbf16>
    %33 = vector.shape_cast %32 : vector<1x4x8xbf16> to vector<4x8xbf16>
    %cst_17 = arith.constant dense<0.000000e+00> : vector<64x8xf32>
    %34 = tpu.matmul %31, %33, %cst_17 {dimension_numbers = #tpu.dot_dimension_numbers<[1], [0], [0], [1], [0, 0, 1, 1], [], []>} : vector<64x4xbf16>, vector<4x8xbf16>, vector<64x8xf32> -> vector<64x8xf32>
    %35 = arith.addf %28, %34 : vector<64x8xf32>
    %36 = vector.extract_strided_slice %1 {offsets = [18, 1, 0], sizes = [8, 8, 4], strides = [1, 1, 1]} : vector<36x9x4xf32> to vector<8x8x4xf32>
    %37 = vector.shape_cast %36 : vector<8x8x4xf32> to vector<64x4xf32>
    %38 = arith.truncf %37 : vector<64x4xf32> to vector<64x4xbf16>
    %c5 = arith.constant 5 : index
    %c0_18 = arith.constant 0 : index
    %c0_19 = arith.constant 0 : index
    %39 = vector.load %arg2[%c5, %c0_18, %c0_19] : memref<9x4x8xbf16, #tpu.memory_space<vmem>>, vector<1x4x8xbf16>
    %40 = vector.shape_cast %39 : vector<1x4x8xbf16> to vector<4x8xbf16>
    %cst_20 = arith.constant dense<0.000000e+00> : vector<64x8xf32>
    %41 = tpu.matmul %38, %40, %cst_20 {dimension_numbers = #tpu.dot_dimension_numbers<[1], [0], [0], [1], [0, 0, 1, 1], [], []>} : vector<64x4xbf16>, vector<4x8xbf16>, vector<64x8xf32> -> vector<64x8xf32>
    %42 = arith.addf %35, %41 : vector<64x8xf32>
    %43 = vector.extract_strided_slice %1 {offsets = [1, 0, 0], sizes = [8, 8, 4], strides = [1, 1, 1]} : vector<36x9x4xf32> to vector<8x8x4xf32>
    %44 = vector.shape_cast %43 : vector<8x8x4xf32> to vector<64x4xf32>
    %45 = arith.truncf %44 : vector<64x4xf32> to vector<64x4xbf16>
    %c6 = arith.constant 6 : index
    %c0_21 = arith.constant 0 : index
    %c0_22 = arith.constant 0 : index
    %46 = vector.load %arg2[%c6, %c0_21, %c0_22] : memref<9x4x8xbf16, #tpu.memory_space<vmem>>, vector<1x4x8xbf16>
    %47 = vector.shape_cast %46 : vector<1x4x8xbf16> to vector<4x8xbf16>
    %cst_23 = arith.constant dense<0.000000e+00> : vector<64x8xf32>
    %48 = tpu.matmul %45, %47, %cst_23 {dimension_numbers = #tpu.dot_dimension_numbers<[1], [0], [0], [1], [0, 0, 1, 1], [], []>} : vector<64x4xbf16>, vector<4x8xbf16>, vector<64x8xf32> -> vector<64x8xf32>
    %49 = arith.addf %42, %48 : vector<64x8xf32>
    %50 = vector.extract_strided_slice %1 {offsets = [10, 0, 0], sizes = [8, 8, 4], strides = [1, 1, 1]} : vector<36x9x4xf32> to vector<8x8x4xf32>
    %51 = vector.shape_cast %50 : vector<8x8x4xf32> to vector<64x4xf32>
    %52 = arith.truncf %51 : vector<64x4xf32> to vector<64x4xbf16>
    %c7 = arith.constant 7 : index
    %c0_24 = arith.constant 0 : index
    %c0_25 = arith.constant 0 : index
    %53 = vector.load %arg2[%c7, %c0_24, %c0_25] : memref<9x4x8xbf16, #tpu.memory_space<vmem>>, vector<1x4x8xbf16>
    %54 = vector.shape_cast %53 : vector<1x4x8xbf16> to vector<4x8xbf16>
    %cst_26 = arith.constant dense<0.000000e+00> : vector<64x8xf32>
    %55 = tpu.matmul %52, %54, %cst_26 {dimension_numbers = #tpu.dot_dimension_numbers<[1], [0], [0], [1], [0, 0, 1, 1], [], []>} : vector<64x4xbf16>, vector<4x8xbf16>, vector<64x8xf32> -> vector<64x8xf32>
    %56 = arith.addf %49, %55 : vector<64x8xf32>
    %57 = vector.extract_strided_slice %1 {offsets = [1, 1, 0], sizes = [8, 8, 4], strides = [1, 1, 1]} : vector<36x9x4xf32> to vector<8x8x4xf32>
    %58 = vector.shape_cast %57 : vector<8x8x4xf32> to vector<64x4xf32>
    %59 = arith.truncf %58 : vector<64x4xf32> to vector<64x4xbf16>
    %c8 = arith.constant 8 : index
    %c0_27 = arith.constant 0 : index
    %c0_28 = arith.constant 0 : index
    %60 = vector.load %arg2[%c8, %c0_27, %c0_28] : memref<9x4x8xbf16, #tpu.memory_space<vmem>>, vector<1x4x8xbf16>
    %61 = vector.shape_cast %60 : vector<1x4x8xbf16> to vector<4x8xbf16>
    %cst_29 = arith.constant dense<0.000000e+00> : vector<64x8xf32>
    %62 = tpu.matmul %59, %61, %cst_29 {dimension_numbers = #tpu.dot_dimension_numbers<[1], [0], [0], [1], [0, 0, 1, 1], [], []>} : vector<64x4xbf16>, vector<4x8xbf16>, vector<64x8xf32> -> vector<64x8xf32>
    %63 = arith.addf %56, %62 : vector<64x8xf32>
    %c0_30 = arith.constant 0 : index
    %c0_31 = arith.constant 0 : index
    %64 = vector.load %arg3[%c0_30, %c0_31] : memref<1x8xf32, #tpu.memory_space<vmem>>, vector<1x8xf32>
    %65 = vector.broadcast %64 : vector<1x8xf32> to vector<64x8xf32>
    %66 = arith.addf %63, %65 : vector<64x8xf32>
    %cst_32 = arith.constant 0.000000e+00 : f32
    %67 = vector.broadcast %cst_32 : f32 to vector<64x8xf32>
    %68 = arith.cmpf oge, %66, %67 : vector<64x8xf32>
    %cst_33 = arith.constant 0.00999999977 : f32
    %69 = vector.broadcast %cst_33 : f32 to vector<64x8xf32>
    %70 = arith.mulf %69, %66 : vector<64x8xf32>
    %71 = arith.select %68, %66, %70 : vector<64x8xi1>, vector<64x8xf32>
    %c0_34 = arith.constant 0 : index
    %c0_35 = arith.constant 0 : index
    %c0_36 = arith.constant 0 : index
    %72 = vector.load %arg4[%c0_34, %c0_35, %c0_36] : memref<1x64x8xf32, #tpu.memory_space<vmem>>, vector<1x64x8xf32>
    %73 = vector.shape_cast %72 : vector<1x64x8xf32> to vector<64x8xf32>
    %74 = vector.shape_cast %71 : vector<64x8xf32> to vector<1x64x8xf32>
    tpu.vector_store %arg4[%c0_34, %c0_35, %c0_36], %74 {strides = array<i32>} : memref<1x64x8xf32, #tpu.memory_space<vmem>>, vector<1x64x8xf32>,
    return
  }
  func.func @transform_0(%arg0: i32) -> (i32, i32, i32, i32) {
    %c0_i32 = arith.constant 0 : i32
    %c0_i32_0 = arith.constant 0 : i32
    %c0_i32_1 = arith.constant 0 : i32
    %c0_i32_2 = arith.constant 0 : i32
    return %arg0, %c0_i32, %c0_i32_0, %c0_i32_1 : i32, i32, i32, i32
  }
  func.func @transform_1(%arg0: i32) -> (i32, i32, i32) {
    %c0_i32 = arith.constant 0 : i32
    %c0_i32_0 = arith.constant 0 : i32
    %c0_i32_1 = arith.constant 0 : i32
    %c0_i32_2 = arith.constant 0 : i32
    return %c0_i32, %c0_i32_0, %c0_i32_1 : i32, i32, i32
  }
  func.func @transform_2(%arg0: i32) -> (i32, i32) {
    %c0_i32 = arith.constant 0 : i32
    %c0_i32_0 = arith.constant 0 : i32
    %c0_i32_1 = arith.constant 0 : i32
    return %c0_i32, %c0_i32_0 : i32, i32
  }
  func.func @transform_3(%arg0: i32) -> (i32, i32, i32) {
    %c0_i32 = arith.constant 0 : i32
    %c0_i32_0 = arith.constant 0 : i32
    %c0_i32_1 = arith.constant 0 : i32
    return %arg0, %c0_i32, %c0_i32_0 : i32, i32, i32
  }
}

module attributes {stable_mosaic.version = 11 : i64} {
  func.func @_multi_tap_conv_kernel(%arg0: i32, %arg1: memref<1x20x5x8xf32, #tpu.memory_space<vmem>>, %arg2: memref<9x8x16xbf16, #tpu.memory_space<vmem>>, %arg3: memref<1x16xf32, #tpu.memory_space<vmem>>, %arg4: memref<1x16x16xf32, #tpu.memory_space<vmem>>) attributes {dimension_semantics = [#tpu.dimension_semantics<parallel>], iteration_bounds = array<i64: 2>, scalar_prefetch = 0 : i64, scratch_operands = 0 : i64, tpu.core_type = #tpu.core_type<tc>, window_params = [{transform_indices = @transform_0, window_bounds = array<i64: 1, 20, 5, 8>}, {pipeline_mode = #tpu.pipeline_mode<synchronous>, transform_indices = @transform_1, window_bounds = array<i64: 9, 8, 16>}, {pipeline_mode = #tpu.pipeline_mode<synchronous>, transform_indices = @transform_2, window_bounds = array<i64: 1, 16>}, {transform_indices = @transform_3, window_bounds = array<i64: 1, 16, 16>}]} {
    %c0 = arith.constant 0 : index
    %c0_0 = arith.constant 0 : index
    %c0_1 = arith.constant 0 : index
    %c0_2 = arith.constant 0 : index
    %0 = vector.load %arg1[%c0, %c0_0, %c0_1, %c0_2] : memref<1x20x5x8xf32, #tpu.memory_space<vmem>>, vector<1x20x5x8xf32>
    %1 = vector.shape_cast %0 : vector<1x20x5x8xf32> to vector<20x5x8xf32>
    %2 = vector.extract_strided_slice %1 {offsets = [0, 0, 0], sizes = [4, 4, 8], strides = [1, 1, 1]} : vector<20x5x8xf32> to vector<4x4x8xf32>
    %3 = vector.shape_cast %2 : vector<4x4x8xf32> to vector<16x8xf32>
    %4 = arith.truncf %3 : vector<16x8xf32> to vector<16x8xbf16>
    %c0_3 = arith.constant 0 : index
    %c0_4 = arith.constant 0 : index
    %c0_5 = arith.constant 0 : index
    %5 = vector.load %arg2[%c0_3, %c0_4, %c0_5] : memref<9x8x16xbf16, #tpu.memory_space<vmem>>, vector<1x8x16xbf16>
    %6 = vector.shape_cast %5 : vector<1x8x16xbf16> to vector<8x16xbf16>
    %cst = arith.constant dense<0.000000e+00> : vector<16x16xf32>
    %7 = tpu.matmul %4, %6, %cst {dimension_numbers = #tpu.dot_dimension_numbers<[1], [0], [0], [1], [0, 0, 1, 1], [], []>} : vector<16x8xbf16>, vector<8x16xbf16>, vector<16x16xf32> -> vector<16x16xf32>
    %8 = vector.extract_strided_slice %1 {offsets = [5, 0, 0], sizes = [4, 4, 8], strides = [1, 1, 1]} : vector<20x5x8xf32> to vector<4x4x8xf32>
    %9 = vector.shape_cast %8 : vector<4x4x8xf32> to vector<16x8xf32>
    %10 = arith.truncf %9 : vector<16x8xf32> to vector<16x8xbf16>
    %c1 = arith.constant 1 : index
    %c0_6 = arith.constant 0 : index
    %c0_7 = arith.constant 0 : index
    %11 = vector.load %arg2[%c1, %c0_6, %c0_7] : memref<9x8x16xbf16, #tpu.memory_space<vmem>>, vector<1x8x16xbf16>
    %12 = vector.shape_cast %11 : vector<1x8x16xbf16> to vector<8x16xbf16>
    %cst_8 = arith.constant dense<0.000000e+00> : vector<16x16xf32>
    %13 = tpu.matmul %10, %12, %cst_8 {dimension_numbers = #tpu.dot_dimension_numbers<[1], [0], [0], [1], [0, 0, 1, 1], [], []>} : vector<16x8xbf16>, vector<8x16xbf16>, vector<16x16xf32> -> vector<16x16xf32>
    %14 = arith.addf %7, %13 : vector<16x16xf32>
    %15 = vector.extract_strided_slice %1 {offsets = [0, 1, 0], sizes = [4, 4, 8], strides = [1, 1, 1]} : vector<20x5x8xf32> to vector<4x4x8xf32>
    %16 = vector.shape_cast %15 : vector<4x4x8xf32> to vector<16x8xf32>
    %17 = arith.truncf %16 : vector<16x8xf32> to vector<16x8xbf16>
    %c2 = arith.constant 2 : index
    %c0_9 = arith.constant 0 : index
    %c0_10 = arith.constant 0 : index
    %18 = vector.load %arg2[%c2, %c0_9, %c0_10] : memref<9x8x16xbf16, #tpu.memory_space<vmem>>, vector<1x8x16xbf16>
    %19 = vector.shape_cast %18 : vector<1x8x16xbf16> to vector<8x16xbf16>
    %cst_11 = arith.constant dense<0.000000e+00> : vector<16x16xf32>
    %20 = tpu.matmul %17, %19, %cst_11 {dimension_numbers = #tpu.dot_dimension_numbers<[1], [0], [0], [1], [0, 0, 1, 1], [], []>} : vector<16x8xbf16>, vector<8x16xbf16>, vector<16x16xf32> -> vector<16x16xf32>
    %21 = arith.addf %14, %20 : vector<16x16xf32>
    %22 = vector.extract_strided_slice %1 {offsets = [10, 0, 0], sizes = [4, 4, 8], strides = [1, 1, 1]} : vector<20x5x8xf32> to vector<4x4x8xf32>
    %23 = vector.shape_cast %22 : vector<4x4x8xf32> to vector<16x8xf32>
    %24 = arith.truncf %23 : vector<16x8xf32> to vector<16x8xbf16>
    %c3 = arith.constant 3 : index
    %c0_12 = arith.constant 0 : index
    %c0_13 = arith.constant 0 : index
    %25 = vector.load %arg2[%c3, %c0_12, %c0_13] : memref<9x8x16xbf16, #tpu.memory_space<vmem>>, vector<1x8x16xbf16>
    %26 = vector.shape_cast %25 : vector<1x8x16xbf16> to vector<8x16xbf16>
    %cst_14 = arith.constant dense<0.000000e+00> : vector<16x16xf32>
    %27 = tpu.matmul %24, %26, %cst_14 {dimension_numbers = #tpu.dot_dimension_numbers<[1], [0], [0], [1], [0, 0, 1, 1], [], []>} : vector<16x8xbf16>, vector<8x16xbf16>, vector<16x16xf32> -> vector<16x16xf32>
    %28 = arith.addf %21, %27 : vector<16x16xf32>
    %29 = vector.extract_strided_slice %1 {offsets = [15, 0, 0], sizes = [4, 4, 8], strides = [1, 1, 1]} : vector<20x5x8xf32> to vector<4x4x8xf32>
    %30 = vector.shape_cast %29 : vector<4x4x8xf32> to vector<16x8xf32>
    %31 = arith.truncf %30 : vector<16x8xf32> to vector<16x8xbf16>
    %c4 = arith.constant 4 : index
    %c0_15 = arith.constant 0 : index
    %c0_16 = arith.constant 0 : index
    %32 = vector.load %arg2[%c4, %c0_15, %c0_16] : memref<9x8x16xbf16, #tpu.memory_space<vmem>>, vector<1x8x16xbf16>
    %33 = vector.shape_cast %32 : vector<1x8x16xbf16> to vector<8x16xbf16>
    %cst_17 = arith.constant dense<0.000000e+00> : vector<16x16xf32>
    %34 = tpu.matmul %31, %33, %cst_17 {dimension_numbers = #tpu.dot_dimension_numbers<[1], [0], [0], [1], [0, 0, 1, 1], [], []>} : vector<16x8xbf16>, vector<8x16xbf16>, vector<16x16xf32> -> vector<16x16xf32>
    %35 = arith.addf %28, %34 : vector<16x16xf32>
    %36 = vector.extract_strided_slice %1 {offsets = [10, 1, 0], sizes = [4, 4, 8], strides = [1, 1, 1]} : vector<20x5x8xf32> to vector<4x4x8xf32>
    %37 = vector.shape_cast %36 : vector<4x4x8xf32> to vector<16x8xf32>
    %38 = arith.truncf %37 : vector<16x8xf32> to vector<16x8xbf16>
    %c5 = arith.constant 5 : index
    %c0_18 = arith.constant 0 : index
    %c0_19 = arith.constant 0 : index
    %39 = vector.load %arg2[%c5, %c0_18, %c0_19] : memref<9x8x16xbf16, #tpu.memory_space<vmem>>, vector<1x8x16xbf16>
    %40 = vector.shape_cast %39 : vector<1x8x16xbf16> to vector<8x16xbf16>
    %cst_20 = arith.constant dense<0.000000e+00> : vector<16x16xf32>
    %41 = tpu.matmul %38, %40, %cst_20 {dimension_numbers = #tpu.dot_dimension_numbers<[1], [0], [0], [1], [0, 0, 1, 1], [], []>} : vector<16x8xbf16>, vector<8x16xbf16>, vector<16x16xf32> -> vector<16x16xf32>
    %42 = arith.addf %35, %41 : vector<16x16xf32>
    %43 = vector.extract_strided_slice %1 {offsets = [1, 0, 0], sizes = [4, 4, 8], strides = [1, 1, 1]} : vector<20x5x8xf32> to vector<4x4x8xf32>
    %44 = vector.shape_cast %43 : vector<4x4x8xf32> to vector<16x8xf32>
    %45 = arith.truncf %44 : vector<16x8xf32> to vector<16x8xbf16>
    %c6 = arith.constant 6 : index
    %c0_21 = arith.constant 0 : index
    %c0_22 = arith.constant 0 : index
    %46 = vector.load %arg2[%c6, %c0_21, %c0_22] : memref<9x8x16xbf16, #tpu.memory_space<vmem>>, vector<1x8x16xbf16>
    %47 = vector.shape_cast %46 : vector<1x8x16xbf16> to vector<8x16xbf16>
    %cst_23 = arith.constant dense<0.000000e+00> : vector<16x16xf32>
    %48 = tpu.matmul %45, %47, %cst_23 {dimension_numbers = #tpu.dot_dimension_numbers<[1], [0], [0], [1], [0, 0, 1, 1], [], []>} : vector<16x8xbf16>, vector<8x16xbf16>, vector<16x16xf32> -> vector<16x16xf32>
    %49 = arith.addf %42, %48 : vector<16x16xf32>
    %50 = vector.extract_strided_slice %1 {offsets = [6, 0, 0], sizes = [4, 4, 8], strides = [1, 1, 1]} : vector<20x5x8xf32> to vector<4x4x8xf32>
    %51 = vector.shape_cast %50 : vector<4x4x8xf32> to vector<16x8xf32>
    %52 = arith.truncf %51 : vector<16x8xf32> to vector<16x8xbf16>
    %c7 = arith.constant 7 : index
    %c0_24 = arith.constant 0 : index
    %c0_25 = arith.constant 0 : index
    %53 = vector.load %arg2[%c7, %c0_24, %c0_25] : memref<9x8x16xbf16, #tpu.memory_space<vmem>>, vector<1x8x16xbf16>
    %54 = vector.shape_cast %53 : vector<1x8x16xbf16> to vector<8x16xbf16>
    %cst_26 = arith.constant dense<0.000000e+00> : vector<16x16xf32>
    %55 = tpu.matmul %52, %54, %cst_26 {dimension_numbers = #tpu.dot_dimension_numbers<[1], [0], [0], [1], [0, 0, 1, 1], [], []>} : vector<16x8xbf16>, vector<8x16xbf16>, vector<16x16xf32> -> vector<16x16xf32>
    %56 = arith.addf %49, %55 : vector<16x16xf32>
    %57 = vector.extract_strided_slice %1 {offsets = [1, 1, 0], sizes = [4, 4, 8], strides = [1, 1, 1]} : vector<20x5x8xf32> to vector<4x4x8xf32>
    %58 = vector.shape_cast %57 : vector<4x4x8xf32> to vector<16x8xf32>
    %59 = arith.truncf %58 : vector<16x8xf32> to vector<16x8xbf16>
    %c8 = arith.constant 8 : index
    %c0_27 = arith.constant 0 : index
    %c0_28 = arith.constant 0 : index
    %60 = vector.load %arg2[%c8, %c0_27, %c0_28] : memref<9x8x16xbf16, #tpu.memory_space<vmem>>, vector<1x8x16xbf16>
    %61 = vector.shape_cast %60 : vector<1x8x16xbf16> to vector<8x16xbf16>
    %cst_29 = arith.constant dense<0.000000e+00> : vector<16x16xf32>
    %62 = tpu.matmul %59, %61, %cst_29 {dimension_numbers = #tpu.dot_dimension_numbers<[1], [0], [0], [1], [0, 0, 1, 1], [], []>} : vector<16x8xbf16>, vector<8x16xbf16>, vector<16x16xf32> -> vector<16x16xf32>
    %63 = arith.addf %56, %62 : vector<16x16xf32>
    %c0_30 = arith.constant 0 : index
    %c0_31 = arith.constant 0 : index
    %64 = vector.load %arg3[%c0_30, %c0_31] : memref<1x16xf32, #tpu.memory_space<vmem>>, vector<1x16xf32>
    %65 = vector.broadcast %64 : vector<1x16xf32> to vector<16x16xf32>
    %66 = arith.addf %63, %65 : vector<16x16xf32>
    %cst_32 = arith.constant 0.000000e+00 : f32
    %67 = vector.broadcast %cst_32 : f32 to vector<16x16xf32>
    %68 = arith.cmpf oge, %66, %67 : vector<16x16xf32>
    %cst_33 = arith.constant 0.00999999977 : f32
    %69 = vector.broadcast %cst_33 : f32 to vector<16x16xf32>
    %70 = arith.mulf %69, %66 : vector<16x16xf32>
    %71 = arith.select %68, %66, %70 : vector<16x16xi1>, vector<16x16xf32>
    %c0_34 = arith.constant 0 : index
    %c0_35 = arith.constant 0 : index
    %c0_36 = arith.constant 0 : index
    %72 = vector.load %arg4[%c0_34, %c0_35, %c0_36] : memref<1x16x16xf32, #tpu.memory_space<vmem>>, vector<1x16x16xf32>
    %73 = vector.shape_cast %72 : vector<1x16x16xf32> to vector<16x16xf32>
    %74 = vector.shape_cast %71 : vector<16x16xf32> to vector<1x16x16xf32>
    tpu.vector_store %arg4[%c0_34, %c0_35, %c0_36], %74 {strides = array<i32>} : memref<1x16x16xf32, #tpu.memory_space<vmem>>, vector<1x16x16xf32>,
    return
  }
  func.func @transform_0(%arg0: i32) -> (i32, i32, i32, i32) {
    %c0_i32 = arith.constant 0 : i32
    %c0_i32_0 = arith.constant 0 : i32
    %c0_i32_1 = arith.constant 0 : i32
    %c0_i32_2 = arith.constant 0 : i32
    return %arg0, %c0_i32, %c0_i32_0, %c0_i32_1 : i32, i32, i32, i32
  }
  func.func @transform_1(%arg0: i32) -> (i32, i32, i32) {
    %c0_i32 = arith.constant 0 : i32
    %c0_i32_0 = arith.constant 0 : i32
    %c0_i32_1 = arith.constant 0 : i32
    %c0_i32_2 = arith.constant 0 : i32
    return %c0_i32, %c0_i32_0, %c0_i32_1 : i32, i32, i32
  }
  func.func @transform_2(%arg0: i32) -> (i32, i32) {
    %c0_i32 = arith.constant 0 : i32
    %c0_i32_0 = arith.constant 0 : i32
    %c0_i32_1 = arith.constant 0 : i32
    return %c0_i32, %c0_i32_0 : i32, i32
  }
  func.func @transform_3(%arg0: i32) -> (i32, i32, i32) {
    %c0_i32 = arith.constant 0 : i32
    %c0_i32_0 = arith.constant 0 : i32
    %c0_i32_1 = arith.constant 0 : i32
    return %arg0, %c0_i32, %c0_i32_0 : i32, i32, i32
  }
}

module attributes {stable_mosaic.version = 11 : i64} {
  func.func @_bottleneck_kernel(%arg0: memref<2x256xf32, #tpu.memory_space<vmem>>, %arg1: memref<256x16xbf16, #tpu.memory_space<vmem>>, %arg2: memref<1x16xf32, #tpu.memory_space<vmem>>, %arg3: memref<2x8xf32, #tpu.memory_space<vmem>>, %arg4: memref<8x256xbf16, #tpu.memory_space<vmem>>, %arg5: memref<1x256xf32, #tpu.memory_space<vmem>>, %arg6: memref<2x8xf32, #tpu.memory_space<vmem>>, %arg7: memref<2x8xf32, #tpu.memory_space<vmem>>, %arg8: memref<2x8xf32, #tpu.memory_space<vmem>>, %arg9: memref<2x256xf32, #tpu.memory_space<vmem>>) attributes {dimension_semantics = [], scalar_prefetch = 0 : i64, scratch_operands = 0 : i64, tpu.core_type = #tpu.core_type<tc>} {
    %c0 = arith.constant 0 : index
    %c0_0 = arith.constant 0 : index
    %0 = vector.load %arg0[%c0, %c0_0] : memref<2x256xf32, #tpu.memory_space<vmem>>, vector<2x256xf32>
    %1 = arith.truncf %0 : vector<2x256xf32> to vector<2x256xbf16>
    %c0_1 = arith.constant 0 : index
    %c0_2 = arith.constant 0 : index
    %2 = vector.load %arg1[%c0_1, %c0_2] : memref<256x16xbf16, #tpu.memory_space<vmem>>, vector<256x16xbf16>
    %cst = arith.constant dense<0.000000e+00> : vector<2x16xf32>
    %3 = tpu.matmul %1, %2, %cst {dimension_numbers = #tpu.dot_dimension_numbers<[1], [0], [0], [1], [0, 0, 1, 1], [], []>} : vector<2x256xbf16>, vector<256x16xbf16>, vector<2x16xf32> -> vector<2x16xf32>
    %c0_3 = arith.constant 0 : index
    %c0_4 = arith.constant 0 : index
    %4 = vector.load %arg2[%c0_3, %c0_4] : memref<1x16xf32, #tpu.memory_space<vmem>>, vector<1x16xf32>
    %5 = vector.broadcast %4 : vector<1x16xf32> to vector<2x16xf32>
    %6 = arith.addf %3, %5 : vector<2x16xf32>
    %7 = vector.extract_strided_slice %6 {offsets = [0, 0], sizes = [2, 8], strides = [1, 1]} : vector<2x16xf32> to vector<2x8xf32>
    %8 = vector.extract_strided_slice %6 {offsets = [0, 8], sizes = [2, 8], strides = [1, 1]} : vector<2x16xf32> to vector<2x8xf32>
    %c0_5 = arith.constant 0 : index
    %c0_6 = arith.constant 0 : index
    %9 = vector.load %arg3[%c0_5, %c0_6] : memref<2x8xf32, #tpu.memory_space<vmem>>, vector<2x8xf32>
    %cst_7 = arith.constant 5.000000e-01 : f32
    %10 = vector.broadcast %cst_7 : f32 to vector<2x8xf32>
    %11 = arith.mulf %10, %8 : vector<2x8xf32>
    %12 = math.exp %11 : vector<2x8xf32>
    %13 = arith.mulf %9, %12 : vector<2x8xf32>
    %14 = arith.addf %7, %13 : vector<2x8xf32>
    %15 = arith.truncf %14 : vector<2x8xf32> to vector<2x8xbf16>
    %c0_8 = arith.constant 0 : index
    %c0_9 = arith.constant 0 : index
    %16 = vector.load %arg4[%c0_8, %c0_9] : memref<8x256xbf16, #tpu.memory_space<vmem>>, vector<8x256xbf16>
    %cst_10 = arith.constant dense<0.000000e+00> : vector<2x256xf32>
    %17 = tpu.matmul %15, %16, %cst_10 {dimension_numbers = #tpu.dot_dimension_numbers<[1], [0], [0], [1], [0, 0, 1, 1], [], []>} : vector<2x8xbf16>, vector<8x256xbf16>, vector<2x256xf32> -> vector<2x256xf32>
    %c0_11 = arith.constant 0 : index
    %c0_12 = arith.constant 0 : index
    %18 = vector.load %arg5[%c0_11, %c0_12] : memref<1x256xf32, #tpu.memory_space<vmem>>, vector<1x256xf32>
    %19 = vector.broadcast %18 : vector<1x256xf32> to vector<2x256xf32>
    %20 = arith.addf %17, %19 : vector<2x256xf32>
    %c0_13 = arith.constant 0 : index
    %c0_14 = arith.constant 0 : index
    %21 = vector.load %arg6[%c0_13, %c0_14] : memref<2x8xf32, #tpu.memory_space<vmem>>, vector<2x8xf32>
    tpu.vector_store %arg6[%c0_13, %c0_14], %7 {strides = array<i32>} : memref<2x8xf32, #tpu.memory_space<vmem>>, vector<2x8xf32>,
    %c0_15 = arith.constant 0 : index
    %c0_16 = arith.constant 0 : index
    %22 = vector.load %arg7[%c0_15, %c0_16] : memref<2x8xf32, #tpu.memory_space<vmem>>, vector<2x8xf32>
    tpu.vector_store %arg7[%c0_15, %c0_16], %8 {strides = array<i32>} : memref<2x8xf32, #tpu.memory_space<vmem>>, vector<2x8xf32>,
    %c0_17 = arith.constant 0 : index
    %c0_18 = arith.constant 0 : index
    %23 = vector.load %arg8[%c0_17, %c0_18] : memref<2x8xf32, #tpu.memory_space<vmem>>, vector<2x8xf32>
    tpu.vector_store %arg8[%c0_17, %c0_18], %14 {strides = array<i32>} : memref<2x8xf32, #tpu.memory_space<vmem>>, vector<2x8xf32>,
    %c0_19 = arith.constant 0 : index
    %c0_20 = arith.constant 0 : index
    %24 = vector.load %arg9[%c0_19, %c0_20] : memref<2x256xf32, #tpu.memory_space<vmem>>, vector<2x256xf32>
    tpu.vector_store %arg9[%c0_19, %c0_20], %20 {strides = array<i32>} : memref<2x256xf32, #tpu.memory_space<vmem>>, vector<2x256xf32>,
    return
  }
}

module attributes {stable_mosaic.version = 11 : i64} {
  func.func @_multi_tap_conv_kernel(%arg0: i32, %arg1: memref<1x5x5x16xf32, #tpu.memory_space<vmem>>, %arg2: memref<9x16x16xbf16, #tpu.memory_space<vmem>>, %arg3: memref<1x16xf32, #tpu.memory_space<vmem>>, %arg4: memref<1x64x16xf32, #tpu.memory_space<vmem>>) attributes {dimension_semantics = [#tpu.dimension_semantics<parallel>], iteration_bounds = array<i64: 2>, scalar_prefetch = 0 : i64, scratch_operands = 0 : i64, tpu.core_type = #tpu.core_type<tc>, window_params = [{transform_indices = @transform_0, window_bounds = array<i64: 1, 5, 5, 16>}, {pipeline_mode = #tpu.pipeline_mode<synchronous>, transform_indices = @transform_1, window_bounds = array<i64: 9, 16, 16>}, {pipeline_mode = #tpu.pipeline_mode<synchronous>, transform_indices = @transform_2, window_bounds = array<i64: 1, 16>}, {transform_indices = @transform_3, window_bounds = array<i64: 1, 64, 16>}]} {
    %c0 = arith.constant 0 : index
    %c0_0 = arith.constant 0 : index
    %c0_1 = arith.constant 0 : index
    %c0_2 = arith.constant 0 : index
    %0 = vector.load %arg1[%c0, %c0_0, %c0_1, %c0_2] : memref<1x5x5x16xf32, #tpu.memory_space<vmem>>, vector<1x5x5x16xf32>
    %1 = vector.shape_cast %0 : vector<1x5x5x16xf32> to vector<5x5x16xf32>
    %2 = vector.extract_strided_slice %1 {offsets = [0, 0, 0], sizes = [4, 4, 16], strides = [1, 1, 1]} : vector<5x5x16xf32> to vector<4x4x16xf32>
    %3 = vector.shape_cast %2 : vector<4x4x16xf32> to vector<16x16xf32>
    %4 = arith.truncf %3 : vector<16x16xf32> to vector<16x16xbf16>
    %c0_3 = arith.constant 0 : index
    %c0_4 = arith.constant 0 : index
    %c0_5 = arith.constant 0 : index
    %5 = vector.load %arg2[%c0_3, %c0_4, %c0_5] : memref<9x16x16xbf16, #tpu.memory_space<vmem>>, vector<1x16x16xbf16>
    %6 = vector.shape_cast %5 : vector<1x16x16xbf16> to vector<16x16xbf16>
    %cst = arith.constant dense<0.000000e+00> : vector<16x16xf32>
    %7 = tpu.matmul %4, %6, %cst {dimension_numbers = #tpu.dot_dimension_numbers<[1], [0], [0], [1], [0, 0, 1, 1], [], []>} : vector<16x16xbf16>, vector<16x16xbf16>, vector<16x16xf32> -> vector<16x16xf32>
    %c0_6 = arith.constant 0 : index
    %c0_7 = arith.constant 0 : index
    %8 = vector.load %arg3[%c0_6, %c0_7] : memref<1x16xf32, #tpu.memory_space<vmem>>, vector<1x16xf32>
    %9 = vector.broadcast %8 : vector<1x16xf32> to vector<16x16xf32>
    %10 = arith.addf %7, %9 : vector<16x16xf32>
    %cst_8 = arith.constant 0.000000e+00 : f32
    %11 = vector.broadcast %cst_8 : f32 to vector<16x16xf32>
    %12 = arith.cmpf oge, %10, %11 : vector<16x16xf32>
    %cst_9 = arith.constant 0.00999999977 : f32
    %13 = vector.broadcast %cst_9 : f32 to vector<16x16xf32>
    %14 = arith.mulf %13, %10 : vector<16x16xf32>
    %15 = arith.select %12, %10, %14 : vector<16x16xi1>, vector<16x16xf32>
    %c0_10 = arith.constant 0 : index
    %c0_11 = arith.constant 0 : index
    %c0_12 = arith.constant 0 : index
    %16 = vector.load %arg4[%c0_10, %c0_11, %c0_12] : memref<1x64x16xf32, #tpu.memory_space<vmem>>, vector<1x16x16xf32>
    %17 = vector.shape_cast %16 : vector<1x16x16xf32> to vector<16x16xf32>
    %18 = vector.shape_cast %15 : vector<16x16xf32> to vector<1x16x16xf32>
    tpu.vector_store %arg4[%c0_10, %c0_11, %c0_12], %18 {strides = array<i32>} : memref<1x64x16xf32, #tpu.memory_space<vmem>>, vector<1x16x16xf32>,
    %19 = vector.extract_strided_slice %1 {offsets = [0, 0, 0], sizes = [4, 4, 16], strides = [1, 1, 1]} : vector<5x5x16xf32> to vector<4x4x16xf32>
    %20 = vector.shape_cast %19 : vector<4x4x16xf32> to vector<16x16xf32>
    %21 = arith.truncf %20 : vector<16x16xf32> to vector<16x16xbf16>
    %c1 = arith.constant 1 : index
    %c0_13 = arith.constant 0 : index
    %c0_14 = arith.constant 0 : index
    %22 = vector.load %arg2[%c1, %c0_13, %c0_14] : memref<9x16x16xbf16, #tpu.memory_space<vmem>>, vector<1x16x16xbf16>
    %23 = vector.shape_cast %22 : vector<1x16x16xbf16> to vector<16x16xbf16>
    %cst_15 = arith.constant dense<0.000000e+00> : vector<16x16xf32>
    %24 = tpu.matmul %21, %23, %cst_15 {dimension_numbers = #tpu.dot_dimension_numbers<[1], [0], [0], [1], [0, 0, 1, 1], [], []>} : vector<16x16xbf16>, vector<16x16xbf16>, vector<16x16xf32> -> vector<16x16xf32>
    %25 = vector.extract_strided_slice %1 {offsets = [0, 1, 0], sizes = [4, 4, 16], strides = [1, 1, 1]} : vector<5x5x16xf32> to vector<4x4x16xf32>
    %26 = vector.shape_cast %25 : vector<4x4x16xf32> to vector<16x16xf32>
    %27 = arith.truncf %26 : vector<16x16xf32> to vector<16x16xbf16>
    %c2 = arith.constant 2 : index
    %c0_16 = arith.constant 0 : index
    %c0_17 = arith.constant 0 : index
    %28 = vector.load %arg2[%c2, %c0_16, %c0_17] : memref<9x16x16xbf16, #tpu.memory_space<vmem>>, vector<1x16x16xbf16>
    %29 = vector.shape_cast %28 : vector<1x16x16xbf16> to vector<16x16xbf16>
    %cst_18 = arith.constant dense<0.000000e+00> : vector<16x16xf32>
    %30 = tpu.matmul %27, %29, %cst_18 {dimension_numbers = #tpu.dot_dimension_numbers<[1], [0], [0], [1], [0, 0, 1, 1], [], []>} : vector<16x16xbf16>, vector<16x16xbf16>, vector<16x16xf32> -> vector<16x16xf32>
    %31 = arith.addf %24, %30 : vector<16x16xf32>
    %c0_19 = arith.constant 0 : index
    %c0_20 = arith.constant 0 : index
    %32 = vector.load %arg3[%c0_19, %c0_20] : memref<1x16xf32, #tpu.memory_space<vmem>>, vector<1x16xf32>
    %33 = vector.broadcast %32 : vector<1x16xf32> to vector<16x16xf32>
    %34 = arith.addf %31, %33 : vector<16x16xf32>
    %cst_21 = arith.constant 0.000000e+00 : f32
    %35 = vector.broadcast %cst_21 : f32 to vector<16x16xf32>
    %36 = arith.cmpf oge, %34, %35 : vector<16x16xf32>
    %cst_22 = arith.constant 0.00999999977 : f32
    %37 = vector.broadcast %cst_22 : f32 to vector<16x16xf32>
    %38 = arith.mulf %37, %34 : vector<16x16xf32>
    %39 = arith.select %36, %34, %38 : vector<16x16xi1>, vector<16x16xf32>
    %c0_23 = arith.constant 0 : index
    %c16 = arith.constant 16 : index
    %c0_24 = arith.constant 0 : index
    %40 = vector.load %arg4[%c0_23, %c16, %c0_24] : memref<1x64x16xf32, #tpu.memory_space<vmem>>, vector<1x16x16xf32>
    %41 = vector.shape_cast %40 : vector<1x16x16xf32> to vector<16x16xf32>
    %42 = vector.shape_cast %39 : vector<16x16xf32> to vector<1x16x16xf32>
    tpu.vector_store %arg4[%c0_23, %c16, %c0_24], %42 {strides = array<i32>} : memref<1x64x16xf32, #tpu.memory_space<vmem>>, vector<1x16x16xf32>,
    %43 = vector.extract_strided_slice %1 {offsets = [0, 0, 0], sizes = [4, 4, 16], strides = [1, 1, 1]} : vector<5x5x16xf32> to vector<4x4x16xf32>
    %44 = vector.shape_cast %43 : vector<4x4x16xf32> to vector<16x16xf32>
    %45 = arith.truncf %44 : vector<16x16xf32> to vector<16x16xbf16>
    %c3 = arith.constant 3 : index
    %c0_25 = arith.constant 0 : index
    %c0_26 = arith.constant 0 : index
    %46 = vector.load %arg2[%c3, %c0_25, %c0_26] : memref<9x16x16xbf16, #tpu.memory_space<vmem>>, vector<1x16x16xbf16>
    %47 = vector.shape_cast %46 : vector<1x16x16xbf16> to vector<16x16xbf16>
    %cst_27 = arith.constant dense<0.000000e+00> : vector<16x16xf32>
    %48 = tpu.matmul %45, %47, %cst_27 {dimension_numbers = #tpu.dot_dimension_numbers<[1], [0], [0], [1], [0, 0, 1, 1], [], []>} : vector<16x16xbf16>, vector<16x16xbf16>, vector<16x16xf32> -> vector<16x16xf32>
    %49 = vector.extract_strided_slice %1 {offsets = [1, 0, 0], sizes = [4, 4, 16], strides = [1, 1, 1]} : vector<5x5x16xf32> to vector<4x4x16xf32>
    %50 = vector.shape_cast %49 : vector<4x4x16xf32> to vector<16x16xf32>
    %51 = arith.truncf %50 : vector<16x16xf32> to vector<16x16xbf16>
    %c4 = arith.constant 4 : index
    %c0_28 = arith.constant 0 : index
    %c0_29 = arith.constant 0 : index
    %52 = vector.load %arg2[%c4, %c0_28, %c0_29] : memref<9x16x16xbf16, #tpu.memory_space<vmem>>, vector<1x16x16xbf16>
    %53 = vector.shape_cast %52 : vector<1x16x16xbf16> to vector<16x16xbf16>
    %cst_30 = arith.constant dense<0.000000e+00> : vector<16x16xf32>
    %54 = tpu.matmul %51, %53, %cst_30 {dimension_numbers = #tpu.dot_dimension_numbers<[1], [0], [0], [1], [0, 0, 1, 1], [], []>} : vector<16x16xbf16>, vector<16x16xbf16>, vector<16x16xf32> -> vector<16x16xf32>
    %55 = arith.addf %48, %54 : vector<16x16xf32>
    %c0_31 = arith.constant 0 : index
    %c0_32 = arith.constant 0 : index
    %56 = vector.load %arg3[%c0_31, %c0_32] : memref<1x16xf32, #tpu.memory_space<vmem>>, vector<1x16xf32>
    %57 = vector.broadcast %56 : vector<1x16xf32> to vector<16x16xf32>
    %58 = arith.addf %55, %57 : vector<16x16xf32>
    %cst_33 = arith.constant 0.000000e+00 : f32
    %59 = vector.broadcast %cst_33 : f32 to vector<16x16xf32>
    %60 = arith.cmpf oge, %58, %59 : vector<16x16xf32>
    %cst_34 = arith.constant 0.00999999977 : f32
    %61 = vector.broadcast %cst_34 : f32 to vector<16x16xf32>
    %62 = arith.mulf %61, %58 : vector<16x16xf32>
    %63 = arith.select %60, %58, %62 : vector<16x16xi1>, vector<16x16xf32>
    %c0_35 = arith.constant 0 : index
    %c32 = arith.constant 32 : index
    %c0_36 = arith.constant 0 : index
    %64 = vector.load %arg4[%c0_35, %c32, %c0_36] : memref<1x64x16xf32, #tpu.memory_space<vmem>>, vector<1x16x16xf32>
    %65 = vector.shape_cast %64 : vector<1x16x16xf32> to vector<16x16xf32>
    %66 = vector.shape_cast %63 : vector<16x16xf32> to vector<1x16x16xf32>
    tpu.vector_store %arg4[%c0_35, %c32, %c0_36], %66 {strides = array<i32>} : memref<1x64x16xf32, #tpu.memory_space<vmem>>, vector<1x16x16xf32>,
    %67 = vector.extract_strided_slice %1 {offsets = [0, 0, 0], sizes = [4, 4, 16], strides = [1, 1, 1]} : vector<5x5x16xf32> to vector<4x4x16xf32>
    %68 = vector.shape_cast %67 : vector<4x4x16xf32> to vector<16x16xf32>
    %69 = arith.truncf %68 : vector<16x16xf32> to vector<16x16xbf16>
    %c5 = arith.constant 5 : index
    %c0_37 = arith.constant 0 : index
    %c0_38 = arith.constant 0 : index
    %70 = vector.load %arg2[%c5, %c0_37, %c0_38] : memref<9x16x16xbf16, #tpu.memory_space<vmem>>, vector<1x16x16xbf16>
    %71 = vector.shape_cast %70 : vector<1x16x16xbf16> to vector<16x16xbf16>
    %cst_39 = arith.constant dense<0.000000e+00> : vector<16x16xf32>
    %72 = tpu.matmul %69, %71, %cst_39 {dimension_numbers = #tpu.dot_dimension_numbers<[1], [0], [0], [1], [0, 0, 1, 1], [], []>} : vector<16x16xbf16>, vector<16x16xbf16>, vector<16x16xf32> -> vector<16x16xf32>
    %73 = vector.extract_strided_slice %1 {offsets = [0, 1, 0], sizes = [4, 4, 16], strides = [1, 1, 1]} : vector<5x5x16xf32> to vector<4x4x16xf32>
    %74 = vector.shape_cast %73 : vector<4x4x16xf32> to vector<16x16xf32>
    %75 = arith.truncf %74 : vector<16x16xf32> to vector<16x16xbf16>
    %c6 = arith.constant 6 : index
    %c0_40 = arith.constant 0 : index
    %c0_41 = arith.constant 0 : index
    %76 = vector.load %arg2[%c6, %c0_40, %c0_41] : memref<9x16x16xbf16, #tpu.memory_space<vmem>>, vector<1x16x16xbf16>
    %77 = vector.shape_cast %76 : vector<1x16x16xbf16> to vector<16x16xbf16>
    %cst_42 = arith.constant dense<0.000000e+00> : vector<16x16xf32>
    %78 = tpu.matmul %75, %77, %cst_42 {dimension_numbers = #tpu.dot_dimension_numbers<[1], [0], [0], [1], [0, 0, 1, 1], [], []>} : vector<16x16xbf16>, vector<16x16xbf16>, vector<16x16xf32> -> vector<16x16xf32>
    %79 = arith.addf %72, %78 : vector<16x16xf32>
    %80 = vector.extract_strided_slice %1 {offsets = [1, 0, 0], sizes = [4, 4, 16], strides = [1, 1, 1]} : vector<5x5x16xf32> to vector<4x4x16xf32>
    %81 = vector.shape_cast %80 : vector<4x4x16xf32> to vector<16x16xf32>
    %82 = arith.truncf %81 : vector<16x16xf32> to vector<16x16xbf16>
    %c7 = arith.constant 7 : index
    %c0_43 = arith.constant 0 : index
    %c0_44 = arith.constant 0 : index
    %83 = vector.load %arg2[%c7, %c0_43, %c0_44] : memref<9x16x16xbf16, #tpu.memory_space<vmem>>, vector<1x16x16xbf16>
    %84 = vector.shape_cast %83 : vector<1x16x16xbf16> to vector<16x16xbf16>
    %cst_45 = arith.constant dense<0.000000e+00> : vector<16x16xf32>
    %85 = tpu.matmul %82, %84, %cst_45 {dimension_numbers = #tpu.dot_dimension_numbers<[1], [0], [0], [1], [0, 0, 1, 1], [], []>} : vector<16x16xbf16>, vector<16x16xbf16>, vector<16x16xf32> -> vector<16x16xf32>
    %86 = arith.addf %79, %85 : vector<16x16xf32>
    %87 = vector.extract_strided_slice %1 {offsets = [1, 1, 0], sizes = [4, 4, 16], strides = [1, 1, 1]} : vector<5x5x16xf32> to vector<4x4x16xf32>
    %88 = vector.shape_cast %87 : vector<4x4x16xf32> to vector<16x16xf32>
    %89 = arith.truncf %88 : vector<16x16xf32> to vector<16x16xbf16>
    %c8 = arith.constant 8 : index
    %c0_46 = arith.constant 0 : index
    %c0_47 = arith.constant 0 : index
    %90 = vector.load %arg2[%c8, %c0_46, %c0_47] : memref<9x16x16xbf16, #tpu.memory_space<vmem>>, vector<1x16x16xbf16>
    %91 = vector.shape_cast %90 : vector<1x16x16xbf16> to vector<16x16xbf16>
    %cst_48 = arith.constant dense<0.000000e+00> : vector<16x16xf32>
    %92 = tpu.matmul %89, %91, %cst_48 {dimension_numbers = #tpu.dot_dimension_numbers<[1], [0], [0], [1], [0, 0, 1, 1], [], []>} : vector<16x16xbf16>, vector<16x16xbf16>, vector<16x16xf32> -> vector<16x16xf32>
    %93 = arith.addf %86, %92 : vector<16x16xf32>
    %c0_49 = arith.constant 0 : index
    %c0_50 = arith.constant 0 : index
    %94 = vector.load %arg3[%c0_49, %c0_50] : memref<1x16xf32, #tpu.memory_space<vmem>>, vector<1x16xf32>
    %95 = vector.broadcast %94 : vector<1x16xf32> to vector<16x16xf32>
    %96 = arith.addf %93, %95 : vector<16x16xf32>
    %cst_51 = arith.constant 0.000000e+00 : f32
    %97 = vector.broadcast %cst_51 : f32 to vector<16x16xf32>
    %98 = arith.cmpf oge, %96, %97 : vector<16x16xf32>
    %cst_52 = arith.constant 0.00999999977 : f32
    %99 = vector.broadcast %cst_52 : f32 to vector<16x16xf32>
    %100 = arith.mulf %99, %96 : vector<16x16xf32>
    %101 = arith.select %98, %96, %100 : vector<16x16xi1>, vector<16x16xf32>
    %c0_53 = arith.constant 0 : index
    %c48 = arith.constant 48 : index
    %c0_54 = arith.constant 0 : index
    %102 = vector.load %arg4[%c0_53, %c48, %c0_54] : memref<1x64x16xf32, #tpu.memory_space<vmem>>, vector<1x16x16xf32>
    %103 = vector.shape_cast %102 : vector<1x16x16xf32> to vector<16x16xf32>
    %104 = vector.shape_cast %101 : vector<16x16xf32> to vector<1x16x16xf32>
    tpu.vector_store %arg4[%c0_53, %c48, %c0_54], %104 {strides = array<i32>} : memref<1x64x16xf32, #tpu.memory_space<vmem>>, vector<1x16x16xf32>,
    return
  }
  func.func @transform_0(%arg0: i32) -> (i32, i32, i32, i32) {
    %c0_i32 = arith.constant 0 : i32
    %c0_i32_0 = arith.constant 0 : i32
    %c0_i32_1 = arith.constant 0 : i32
    %c0_i32_2 = arith.constant 0 : i32
    return %arg0, %c0_i32, %c0_i32_0, %c0_i32_1 : i32, i32, i32, i32
  }
  func.func @transform_1(%arg0: i32) -> (i32, i32, i32) {
    %c0_i32 = arith.constant 0 : i32
    %c0_i32_0 = arith.constant 0 : i32
    %c0_i32_1 = arith.constant 0 : i32
    %c0_i32_2 = arith.constant 0 : i32
    return %c0_i32, %c0_i32_0, %c0_i32_1 : i32, i32, i32
  }
  func.func @transform_2(%arg0: i32) -> (i32, i32) {
    %c0_i32 = arith.constant 0 : i32
    %c0_i32_0 = arith.constant 0 : i32
    %c0_i32_1 = arith.constant 0 : i32
    return %c0_i32, %c0_i32_0 : i32, i32
  }
  func.func @transform_3(%arg0: i32) -> (i32, i32, i32) {
    %c0_i32 = arith.constant 0 : i32
    %c0_i32_0 = arith.constant 0 : i32
    %c0_i32_1 = arith.constant 0 : i32
    return %arg0, %c0_i32, %c0_i32_0 : i32, i32, i32
  }
}

module attributes {stable_mosaic.version = 11 : i64} {
  func.func @_multi_tap_conv_kernel(%arg0: i32, %arg1: memref<1x9x9x16xf32, #tpu.memory_space<vmem>>, %arg2: memref<9x16x8xbf16, #tpu.memory_space<vmem>>, %arg3: memref<1x8xf32, #tpu.memory_space<vmem>>, %arg4: memref<1x256x8xf32, #tpu.memory_space<vmem>>) attributes {dimension_semantics = [#tpu.dimension_semantics<parallel>], iteration_bounds = array<i64: 2>, scalar_prefetch = 0 : i64, scratch_operands = 0 : i64, tpu.core_type = #tpu.core_type<tc>, window_params = [{transform_indices = @transform_0, window_bounds = array<i64: 1, 9, 9, 16>}, {pipeline_mode = #tpu.pipeline_mode<synchronous>, transform_indices = @transform_1, window_bounds = array<i64: 9, 16, 8>}, {pipeline_mode = #tpu.pipeline_mode<synchronous>, transform_indices = @transform_2, window_bounds = array<i64: 1, 8>}, {transform_indices = @transform_3, window_bounds = array<i64: 1, 256, 8>}]} {
    %c0 = arith.constant 0 : index
    %c0_0 = arith.constant 0 : index
    %c0_1 = arith.constant 0 : index
    %c0_2 = arith.constant 0 : index
    %0 = vector.load %arg1[%c0, %c0_0, %c0_1, %c0_2] : memref<1x9x9x16xf32, #tpu.memory_space<vmem>>, vector<1x9x9x16xf32>
    %1 = vector.shape_cast %0 : vector<1x9x9x16xf32> to vector<9x9x16xf32>
    %2 = vector.extract_strided_slice %1 {offsets = [0, 0, 0], sizes = [8, 8, 16], strides = [1, 1, 1]} : vector<9x9x16xf32> to vector<8x8x16xf32>
    %3 = vector.shape_cast %2 : vector<8x8x16xf32> to vector<64x16xf32>
    %4 = arith.truncf %3 : vector<64x16xf32> to vector<64x16xbf16>
    %c0_3 = arith.constant 0 : index
    %c0_4 = arith.constant 0 : index
    %c0_5 = arith.constant 0 : index
    %5 = vector.load %arg2[%c0_3, %c0_4, %c0_5] : memref<9x16x8xbf16, #tpu.memory_space<vmem>>, vector<1x16x8xbf16>
    %6 = vector.shape_cast %5 : vector<1x16x8xbf16> to vector<16x8xbf16>
    %cst = arith.constant dense<0.000000e+00> : vector<64x8xf32>
    %7 = tpu.matmul %4, %6, %cst {dimension_numbers = #tpu.dot_dimension_numbers<[1], [0], [0], [1], [0, 0, 1, 1], [], []>} : vector<64x16xbf16>, vector<16x8xbf16>, vector<64x8xf32> -> vector<64x8xf32>
    %c0_6 = arith.constant 0 : index
    %c0_7 = arith.constant 0 : index
    %8 = vector.load %arg3[%c0_6, %c0_7] : memref<1x8xf32, #tpu.memory_space<vmem>>, vector<1x8xf32>
    %9 = vector.broadcast %8 : vector<1x8xf32> to vector<64x8xf32>
    %10 = arith.addf %7, %9 : vector<64x8xf32>
    %cst_8 = arith.constant 0.000000e+00 : f32
    %11 = vector.broadcast %cst_8 : f32 to vector<64x8xf32>
    %12 = arith.cmpf oge, %10, %11 : vector<64x8xf32>
    %cst_9 = arith.constant 0.00999999977 : f32
    %13 = vector.broadcast %cst_9 : f32 to vector<64x8xf32>
    %14 = arith.mulf %13, %10 : vector<64x8xf32>
    %15 = arith.select %12, %10, %14 : vector<64x8xi1>, vector<64x8xf32>
    %c0_10 = arith.constant 0 : index
    %c0_11 = arith.constant 0 : index
    %c0_12 = arith.constant 0 : index
    %16 = vector.load %arg4[%c0_10, %c0_11, %c0_12] : memref<1x256x8xf32, #tpu.memory_space<vmem>>, vector<1x64x8xf32>
    %17 = vector.shape_cast %16 : vector<1x64x8xf32> to vector<64x8xf32>
    %18 = vector.shape_cast %15 : vector<64x8xf32> to vector<1x64x8xf32>
    tpu.vector_store %arg4[%c0_10, %c0_11, %c0_12], %18 {strides = array<i32>} : memref<1x256x8xf32, #tpu.memory_space<vmem>>, vector<1x64x8xf32>,
    %19 = vector.extract_strided_slice %1 {offsets = [0, 0, 0], sizes = [8, 8, 16], strides = [1, 1, 1]} : vector<9x9x16xf32> to vector<8x8x16xf32>
    %20 = vector.shape_cast %19 : vector<8x8x16xf32> to vector<64x16xf32>
    %21 = arith.truncf %20 : vector<64x16xf32> to vector<64x16xbf16>
    %c1 = arith.constant 1 : index
    %c0_13 = arith.constant 0 : index
    %c0_14 = arith.constant 0 : index
    %22 = vector.load %arg2[%c1, %c0_13, %c0_14] : memref<9x16x8xbf16, #tpu.memory_space<vmem>>, vector<1x16x8xbf16>
    %23 = vector.shape_cast %22 : vector<1x16x8xbf16> to vector<16x8xbf16>
    %cst_15 = arith.constant dense<0.000000e+00> : vector<64x8xf32>
    %24 = tpu.matmul %21, %23, %cst_15 {dimension_numbers = #tpu.dot_dimension_numbers<[1], [0], [0], [1], [0, 0, 1, 1], [], []>} : vector<64x16xbf16>, vector<16x8xbf16>, vector<64x8xf32> -> vector<64x8xf32>
    %25 = vector.extract_strided_slice %1 {offsets = [0, 1, 0], sizes = [8, 8, 16], strides = [1, 1, 1]} : vector<9x9x16xf32> to vector<8x8x16xf32>
    %26 = vector.shape_cast %25 : vector<8x8x16xf32> to vector<64x16xf32>
    %27 = arith.truncf %26 : vector<64x16xf32> to vector<64x16xbf16>
    %c2 = arith.constant 2 : index
    %c0_16 = arith.constant 0 : index
    %c0_17 = arith.constant 0 : index
    %28 = vector.load %arg2[%c2, %c0_16, %c0_17] : memref<9x16x8xbf16, #tpu.memory_space<vmem>>, vector<1x16x8xbf16>
    %29 = vector.shape_cast %28 : vector<1x16x8xbf16> to vector<16x8xbf16>
    %cst_18 = arith.constant dense<0.000000e+00> : vector<64x8xf32>
    %30 = tpu.matmul %27, %29, %cst_18 {dimension_numbers = #tpu.dot_dimension_numbers<[1], [0], [0], [1], [0, 0, 1, 1], [], []>} : vector<64x16xbf16>, vector<16x8xbf16>, vector<64x8xf32> -> vector<64x8xf32>
    %31 = arith.addf %24, %30 : vector<64x8xf32>
    %c0_19 = arith.constant 0 : index
    %c0_20 = arith.constant 0 : index
    %32 = vector.load %arg3[%c0_19, %c0_20] : memref<1x8xf32, #tpu.memory_space<vmem>>, vector<1x8xf32>
    %33 = vector.broadcast %32 : vector<1x8xf32> to vector<64x8xf32>
    %34 = arith.addf %31, %33 : vector<64x8xf32>
    %cst_21 = arith.constant 0.000000e+00 : f32
    %35 = vector.broadcast %cst_21 : f32 to vector<64x8xf32>
    %36 = arith.cmpf oge, %34, %35 : vector<64x8xf32>
    %cst_22 = arith.constant 0.00999999977 : f32
    %37 = vector.broadcast %cst_22 : f32 to vector<64x8xf32>
    %38 = arith.mulf %37, %34 : vector<64x8xf32>
    %39 = arith.select %36, %34, %38 : vector<64x8xi1>, vector<64x8xf32>
    %c0_23 = arith.constant 0 : index
    %c64 = arith.constant 64 : index
    %c0_24 = arith.constant 0 : index
    %40 = vector.load %arg4[%c0_23, %c64, %c0_24] : memref<1x256x8xf32, #tpu.memory_space<vmem>>, vector<1x64x8xf32>
    %41 = vector.shape_cast %40 : vector<1x64x8xf32> to vector<64x8xf32>
    %42 = vector.shape_cast %39 : vector<64x8xf32> to vector<1x64x8xf32>
    tpu.vector_store %arg4[%c0_23, %c64, %c0_24], %42 {strides = array<i32>} : memref<1x256x8xf32, #tpu.memory_space<vmem>>, vector<1x64x8xf32>,
    %43 = vector.extract_strided_slice %1 {offsets = [0, 0, 0], sizes = [8, 8, 16], strides = [1, 1, 1]} : vector<9x9x16xf32> to vector<8x8x16xf32>
    %44 = vector.shape_cast %43 : vector<8x8x16xf32> to vector<64x16xf32>
    %45 = arith.truncf %44 : vector<64x16xf32> to vector<64x16xbf16>
    %c3 = arith.constant 3 : index
    %c0_25 = arith.constant 0 : index
    %c0_26 = arith.constant 0 : index
    %46 = vector.load %arg2[%c3, %c0_25, %c0_26] : memref<9x16x8xbf16, #tpu.memory_space<vmem>>, vector<1x16x8xbf16>
    %47 = vector.shape_cast %46 : vector<1x16x8xbf16> to vector<16x8xbf16>
    %cst_27 = arith.constant dense<0.000000e+00> : vector<64x8xf32>
    %48 = tpu.matmul %45, %47, %cst_27 {dimension_numbers = #tpu.dot_dimension_numbers<[1], [0], [0], [1], [0, 0, 1, 1], [], []>} : vector<64x16xbf16>, vector<16x8xbf16>, vector<64x8xf32> -> vector<64x8xf32>
    %49 = vector.extract_strided_slice %1 {offsets = [1, 0, 0], sizes = [8, 8, 16], strides = [1, 1, 1]} : vector<9x9x16xf32> to vector<8x8x16xf32>
    %50 = vector.shape_cast %49 : vector<8x8x16xf32> to vector<64x16xf32>
    %51 = arith.truncf %50 : vector<64x16xf32> to vector<64x16xbf16>
    %c4 = arith.constant 4 : index
    %c0_28 = arith.constant 0 : index
    %c0_29 = arith.constant 0 : index
    %52 = vector.load %arg2[%c4, %c0_28, %c0_29] : memref<9x16x8xbf16, #tpu.memory_space<vmem>>, vector<1x16x8xbf16>
    %53 = vector.shape_cast %52 : vector<1x16x8xbf16> to vector<16x8xbf16>
    %cst_30 = arith.constant dense<0.000000e+00> : vector<64x8xf32>
    %54 = tpu.matmul %51, %53, %cst_30 {dimension_numbers = #tpu.dot_dimension_numbers<[1], [0], [0], [1], [0, 0, 1, 1], [], []>} : vector<64x16xbf16>, vector<16x8xbf16>, vector<64x8xf32> -> vector<64x8xf32>
    %55 = arith.addf %48, %54 : vector<64x8xf32>
    %c0_31 = arith.constant 0 : index
    %c0_32 = arith.constant 0 : index
    %56 = vector.load %arg3[%c0_31, %c0_32] : memref<1x8xf32, #tpu.memory_space<vmem>>, vector<1x8xf32>
    %57 = vector.broadcast %56 : vector<1x8xf32> to vector<64x8xf32>
    %58 = arith.addf %55, %57 : vector<64x8xf32>
    %cst_33 = arith.constant 0.000000e+00 : f32
    %59 = vector.broadcast %cst_33 : f32 to vector<64x8xf32>
    %60 = arith.cmpf oge, %58, %59 : vector<64x8xf32>
    %cst_34 = arith.constant 0.00999999977 : f32
    %61 = vector.broadcast %cst_34 : f32 to vector<64x8xf32>
    %62 = arith.mulf %61, %58 : vector<64x8xf32>
    %63 = arith.select %60, %58, %62 : vector<64x8xi1>, vector<64x8xf32>
    %c0_35 = arith.constant 0 : index
    %c128 = arith.constant 128 : index
    %c0_36 = arith.constant 0 : index
    %64 = vector.load %arg4[%c0_35, %c128, %c0_36] : memref<1x256x8xf32, #tpu.memory_space<vmem>>, vector<1x64x8xf32>
    %65 = vector.shape_cast %64 : vector<1x64x8xf32> to vector<64x8xf32>
    %66 = vector.shape_cast %63 : vector<64x8xf32> to vector<1x64x8xf32>
    tpu.vector_store %arg4[%c0_35, %c128, %c0_36], %66 {strides = array<i32>} : memref<1x256x8xf32, #tpu.memory_space<vmem>>, vector<1x64x8xf32>,
    %67 = vector.extract_strided_slice %1 {offsets = [0, 0, 0], sizes = [8, 8, 16], strides = [1, 1, 1]} : vector<9x9x16xf32> to vector<8x8x16xf32>
    %68 = vector.shape_cast %67 : vector<8x8x16xf32> to vector<64x16xf32>
    %69 = arith.truncf %68 : vector<64x16xf32> to vector<64x16xbf16>
    %c5 = arith.constant 5 : index
    %c0_37 = arith.constant 0 : index
    %c0_38 = arith.constant 0 : index
    %70 = vector.load %arg2[%c5, %c0_37, %c0_38] : memref<9x16x8xbf16, #tpu.memory_space<vmem>>, vector<1x16x8xbf16>
    %71 = vector.shape_cast %70 : vector<1x16x8xbf16> to vector<16x8xbf16>
    %cst_39 = arith.constant dense<0.000000e+00> : vector<64x8xf32>
    %72 = tpu.matmul %69, %71, %cst_39 {dimension_numbers = #tpu.dot_dimension_numbers<[1], [0], [0], [1], [0, 0, 1, 1], [], []>} : vector<64x16xbf16>, vector<16x8xbf16>, vector<64x8xf32> -> vector<64x8xf32>
    %73 = vector.extract_strided_slice %1 {offsets = [0, 1, 0], sizes = [8, 8, 16], strides = [1, 1, 1]} : vector<9x9x16xf32> to vector<8x8x16xf32>
    %74 = vector.shape_cast %73 : vector<8x8x16xf32> to vector<64x16xf32>
    %75 = arith.truncf %74 : vector<64x16xf32> to vector<64x16xbf16>
    %c6 = arith.constant 6 : index
    %c0_40 = arith.constant 0 : index
    %c0_41 = arith.constant 0 : index
    %76 = vector.load %arg2[%c6, %c0_40, %c0_41] : memref<9x16x8xbf16, #tpu.memory_space<vmem>>, vector<1x16x8xbf16>
    %77 = vector.shape_cast %76 : vector<1x16x8xbf16> to vector<16x8xbf16>
    %cst_42 = arith.constant dense<0.000000e+00> : vector<64x8xf32>
    %78 = tpu.matmul %75, %77, %cst_42 {dimension_numbers = #tpu.dot_dimension_numbers<[1], [0], [0], [1], [0, 0, 1, 1], [], []>} : vector<64x16xbf16>, vector<16x8xbf16>, vector<64x8xf32> -> vector<64x8xf32>
    %79 = arith.addf %72, %78 : vector<64x8xf32>
    %80 = vector.extract_strided_slice %1 {offsets = [1, 0, 0], sizes = [8, 8, 16], strides = [1, 1, 1]} : vector<9x9x16xf32> to vector<8x8x16xf32>
    %81 = vector.shape_cast %80 : vector<8x8x16xf32> to vector<64x16xf32>
    %82 = arith.truncf %81 : vector<64x16xf32> to vector<64x16xbf16>
    %c7 = arith.constant 7 : index
    %c0_43 = arith.constant 0 : index
    %c0_44 = arith.constant 0 : index
    %83 = vector.load %arg2[%c7, %c0_43, %c0_44] : memref<9x16x8xbf16, #tpu.memory_space<vmem>>, vector<1x16x8xbf16>
    %84 = vector.shape_cast %83 : vector<1x16x8xbf16> to vector<16x8xbf16>
    %cst_45 = arith.constant dense<0.000000e+00> : vector<64x8xf32>
    %85 = tpu.matmul %82, %84, %cst_45 {dimension_numbers = #tpu.dot_dimension_numbers<[1], [0], [0], [1], [0, 0, 1, 1], [], []>} : vector<64x16xbf16>, vector<16x8xbf16>, vector<64x8xf32> -> vector<64x8xf32>
    %86 = arith.addf %79, %85 : vector<64x8xf32>
    %87 = vector.extract_strided_slice %1 {offsets = [1, 1, 0], sizes = [8, 8, 16], strides = [1, 1, 1]} : vector<9x9x16xf32> to vector<8x8x16xf32>
    %88 = vector.shape_cast %87 : vector<8x8x16xf32> to vector<64x16xf32>
    %89 = arith.truncf %88 : vector<64x16xf32> to vector<64x16xbf16>
    %c8 = arith.constant 8 : index
    %c0_46 = arith.constant 0 : index
    %c0_47 = arith.constant 0 : index
    %90 = vector.load %arg2[%c8, %c0_46, %c0_47] : memref<9x16x8xbf16, #tpu.memory_space<vmem>>, vector<1x16x8xbf16>
    %91 = vector.shape_cast %90 : vector<1x16x8xbf16> to vector<16x8xbf16>
    %cst_48 = arith.constant dense<0.000000e+00> : vector<64x8xf32>
    %92 = tpu.matmul %89, %91, %cst_48 {dimension_numbers = #tpu.dot_dimension_numbers<[1], [0], [0], [1], [0, 0, 1, 1], [], []>} : vector<64x16xbf16>, vector<16x8xbf16>, vector<64x8xf32> -> vector<64x8xf32>
    %93 = arith.addf %86, %92 : vector<64x8xf32>
    %c0_49 = arith.constant 0 : index
    %c0_50 = arith.constant 0 : index
    %94 = vector.load %arg3[%c0_49, %c0_50] : memref<1x8xf32, #tpu.memory_space<vmem>>, vector<1x8xf32>
    %95 = vector.broadcast %94 : vector<1x8xf32> to vector<64x8xf32>
    %96 = arith.addf %93, %95 : vector<64x8xf32>
    %cst_51 = arith.constant 0.000000e+00 : f32
    %97 = vector.broadcast %cst_51 : f32 to vector<64x8xf32>
    %98 = arith.cmpf oge, %96, %97 : vector<64x8xf32>
    %cst_52 = arith.constant 0.00999999977 : f32
    %99 = vector.broadcast %cst_52 : f32 to vector<64x8xf32>
    %100 = arith.mulf %99, %96 : vector<64x8xf32>
    %101 = arith.select %98, %96, %100 : vector<64x8xi1>, vector<64x8xf32>
    %c0_53 = arith.constant 0 : index
    %c192 = arith.constant 192 : index
    %c0_54 = arith.constant 0 : index
    %102 = vector.load %arg4[%c0_53, %c192, %c0_54] : memref<1x256x8xf32, #tpu.memory_space<vmem>>, vector<1x64x8xf32>
    %103 = vector.shape_cast %102 : vector<1x64x8xf32> to vector<64x8xf32>
    %104 = vector.shape_cast %101 : vector<64x8xf32> to vector<1x64x8xf32>
    tpu.vector_store %arg4[%c0_53, %c192, %c0_54], %104 {strides = array<i32>} : memref<1x256x8xf32, #tpu.memory_space<vmem>>, vector<1x64x8xf32>,
    return
  }
  func.func @transform_0(%arg0: i32) -> (i32, i32, i32, i32) {
    %c0_i32 = arith.constant 0 : i32
    %c0_i32_0 = arith.constant 0 : i32
    %c0_i32_1 = arith.constant 0 : i32
    %c0_i32_2 = arith.constant 0 : i32
    return %arg0, %c0_i32, %c0_i32_0, %c0_i32_1 : i32, i32, i32, i32
  }
  func.func @transform_1(%arg0: i32) -> (i32, i32, i32) {
    %c0_i32 = arith.constant 0 : i32
    %c0_i32_0 = arith.constant 0 : i32
    %c0_i32_1 = arith.constant 0 : i32
    %c0_i32_2 = arith.constant 0 : i32
    return %c0_i32, %c0_i32_0, %c0_i32_1 : i32, i32, i32
  }
  func.func @transform_2(%arg0: i32) -> (i32, i32) {
    %c0_i32 = arith.constant 0 : i32
    %c0_i32_0 = arith.constant 0 : i32
    %c0_i32_1 = arith.constant 0 : i32
    return %c0_i32, %c0_i32_0 : i32, i32
  }
  func.func @transform_3(%arg0: i32) -> (i32, i32, i32) {
    %c0_i32 = arith.constant 0 : i32
    %c0_i32_0 = arith.constant 0 : i32
    %c0_i32_1 = arith.constant 0 : i32
    return %arg0, %c0_i32, %c0_i32_0 : i32, i32, i32
  }
}

module attributes {stable_mosaic.version = 11 : i64} {
  func.func @_multi_tap_conv_kernel(%arg0: i32, %arg1: memref<1x18x18x8xf32, #tpu.memory_space<vmem>>, %arg2: memref<9x8x4xbf16, #tpu.memory_space<vmem>>, %arg3: memref<1x4xf32, #tpu.memory_space<vmem>>, %arg4: memref<1x256x4xf32, #tpu.memory_space<vmem>>) attributes {dimension_semantics = [#tpu.dimension_semantics<parallel>], iteration_bounds = array<i64: 2>, scalar_prefetch = 0 : i64, scratch_operands = 0 : i64, tpu.core_type = #tpu.core_type<tc>, window_params = [{transform_indices = @transform_0, window_bounds = array<i64: 1, 18, 18, 8>}, {pipeline_mode = #tpu.pipeline_mode<synchronous>, transform_indices = @transform_1, window_bounds = array<i64: 9, 8, 4>}, {pipeline_mode = #tpu.pipeline_mode<synchronous>, transform_indices = @transform_2, window_bounds = array<i64: 1, 4>}, {transform_indices = @transform_3, window_bounds = array<i64: 1, 256, 4>}]} {
    %c0 = arith.constant 0 : index
    %c0_0 = arith.constant 0 : index
    %c0_1 = arith.constant 0 : index
    %c0_2 = arith.constant 0 : index
    %0 = vector.load %arg1[%c0, %c0_0, %c0_1, %c0_2] : memref<1x18x18x8xf32, #tpu.memory_space<vmem>>, vector<1x18x18x8xf32>
    %1 = vector.shape_cast %0 : vector<1x18x18x8xf32> to vector<18x18x8xf32>
    %2 = vector.extract_strided_slice %1 {offsets = [0, 0, 0], sizes = [16, 16, 8], strides = [1, 1, 1]} : vector<18x18x8xf32> to vector<16x16x8xf32>
    %3 = vector.shape_cast %2 : vector<16x16x8xf32> to vector<256x8xf32>
    %4 = arith.truncf %3 : vector<256x8xf32> to vector<256x8xbf16>
    %c0_3 = arith.constant 0 : index
    %c0_4 = arith.constant 0 : index
    %c0_5 = arith.constant 0 : index
    %5 = vector.load %arg2[%c0_3, %c0_4, %c0_5] : memref<9x8x4xbf16, #tpu.memory_space<vmem>>, vector<1x8x4xbf16>
    %6 = vector.shape_cast %5 : vector<1x8x4xbf16> to vector<8x4xbf16>
    %cst = arith.constant dense<0.000000e+00> : vector<256x4xf32>
    %7 = tpu.matmul %4, %6, %cst {dimension_numbers = #tpu.dot_dimension_numbers<[1], [0], [0], [1], [0, 0, 1, 1], [], []>} : vector<256x8xbf16>, vector<8x4xbf16>, vector<256x4xf32> -> vector<256x4xf32>
    %8 = vector.extract_strided_slice %1 {offsets = [0, 1, 0], sizes = [16, 16, 8], strides = [1, 1, 1]} : vector<18x18x8xf32> to vector<16x16x8xf32>
    %9 = vector.shape_cast %8 : vector<16x16x8xf32> to vector<256x8xf32>
    %10 = arith.truncf %9 : vector<256x8xf32> to vector<256x8xbf16>
    %c1 = arith.constant 1 : index
    %c0_6 = arith.constant 0 : index
    %c0_7 = arith.constant 0 : index
    %11 = vector.load %arg2[%c1, %c0_6, %c0_7] : memref<9x8x4xbf16, #tpu.memory_space<vmem>>, vector<1x8x4xbf16>
    %12 = vector.shape_cast %11 : vector<1x8x4xbf16> to vector<8x4xbf16>
    %cst_8 = arith.constant dense<0.000000e+00> : vector<256x4xf32>
    %13 = tpu.matmul %10, %12, %cst_8 {dimension_numbers = #tpu.dot_dimension_numbers<[1], [0], [0], [1], [0, 0, 1, 1], [], []>} : vector<256x8xbf16>, vector<8x4xbf16>, vector<256x4xf32> -> vector<256x4xf32>
    %14 = arith.addf %7, %13 : vector<256x4xf32>
    %15 = vector.extract_strided_slice %1 {offsets = [0, 2, 0], sizes = [16, 16, 8], strides = [1, 1, 1]} : vector<18x18x8xf32> to vector<16x16x8xf32>
    %16 = vector.shape_cast %15 : vector<16x16x8xf32> to vector<256x8xf32>
    %17 = arith.truncf %16 : vector<256x8xf32> to vector<256x8xbf16>
    %c2 = arith.constant 2 : index
    %c0_9 = arith.constant 0 : index
    %c0_10 = arith.constant 0 : index
    %18 = vector.load %arg2[%c2, %c0_9, %c0_10] : memref<9x8x4xbf16, #tpu.memory_space<vmem>>, vector<1x8x4xbf16>
    %19 = vector.shape_cast %18 : vector<1x8x4xbf16> to vector<8x4xbf16>
    %cst_11 = arith.constant dense<0.000000e+00> : vector<256x4xf32>
    %20 = tpu.matmul %17, %19, %cst_11 {dimension_numbers = #tpu.dot_dimension_numbers<[1], [0], [0], [1], [0, 0, 1, 1], [], []>} : vector<256x8xbf16>, vector<8x4xbf16>, vector<256x4xf32> -> vector<256x4xf32>
    %21 = arith.addf %14, %20 : vector<256x4xf32>
    %22 = vector.extract_strided_slice %1 {offsets = [1, 0, 0], sizes = [16, 16, 8], strides = [1, 1, 1]} : vector<18x18x8xf32> to vector<16x16x8xf32>
    %23 = vector.shape_cast %22 : vector<16x16x8xf32> to vector<256x8xf32>
    %24 = arith.truncf %23 : vector<256x8xf32> to vector<256x8xbf16>
    %c3 = arith.constant 3 : index
    %c0_12 = arith.constant 0 : index
    %c0_13 = arith.constant 0 : index
    %25 = vector.load %arg2[%c3, %c0_12, %c0_13] : memref<9x8x4xbf16, #tpu.memory_space<vmem>>, vector<1x8x4xbf16>
    %26 = vector.shape_cast %25 : vector<1x8x4xbf16> to vector<8x4xbf16>
    %cst_14 = arith.constant dense<0.000000e+00> : vector<256x4xf32>
    %27 = tpu.matmul %24, %26, %cst_14 {dimension_numbers = #tpu.dot_dimension_numbers<[1], [0], [0], [1], [0, 0, 1, 1], [], []>} : vector<256x8xbf16>, vector<8x4xbf16>, vector<256x4xf32> -> vector<256x4xf32>
    %28 = arith.addf %21, %27 : vector<256x4xf32>
    %29 = vector.extract_strided_slice %1 {offsets = [1, 1, 0], sizes = [16, 16, 8], strides = [1, 1, 1]} : vector<18x18x8xf32> to vector<16x16x8xf32>
    %30 = vector.shape_cast %29 : vector<16x16x8xf32> to vector<256x8xf32>
    %31 = arith.truncf %30 : vector<256x8xf32> to vector<256x8xbf16>
    %c4 = arith.constant 4 : index
    %c0_15 = arith.constant 0 : index
    %c0_16 = arith.constant 0 : index
    %32 = vector.load %arg2[%c4, %c0_15, %c0_16] : memref<9x8x4xbf16, #tpu.memory_space<vmem>>, vector<1x8x4xbf16>
    %33 = vector.shape_cast %32 : vector<1x8x4xbf16> to vector<8x4xbf16>
    %cst_17 = arith.constant dense<0.000000e+00> : vector<256x4xf32>
    %34 = tpu.matmul %31, %33, %cst_17 {dimension_numbers = #tpu.dot_dimension_numbers<[1], [0], [0], [1], [0, 0, 1, 1], [], []>} : vector<256x8xbf16>, vector<8x4xbf16>, vector<256x4xf32> -> vector<256x4xf32>
    %35 = arith.addf %28, %34 : vector<256x4xf32>
    %36 = vector.extract_strided_slice %1 {offsets = [1, 2, 0], sizes = [16, 16, 8], strides = [1, 1, 1]} : vector<18x18x8xf32> to vector<16x16x8xf32>
    %37 = vector.shape_cast %36 : vector<16x16x8xf32> to vector<256x8xf32>
    %38 = arith.truncf %37 : vector<256x8xf32> to vector<256x8xbf16>
    %c5 = arith.constant 5 : index
    %c0_18 = arith.constant 0 : index
    %c0_19 = arith.constant 0 : index
    %39 = vector.load %arg2[%c5, %c0_18, %c0_19] : memref<9x8x4xbf16, #tpu.memory_space<vmem>>, vector<1x8x4xbf16>
    %40 = vector.shape_cast %39 : vector<1x8x4xbf16> to vector<8x4xbf16>
    %cst_20 = arith.constant dense<0.000000e+00> : vector<256x4xf32>
    %41 = tpu.matmul %38, %40, %cst_20 {dimension_numbers = #tpu.dot_dimension_numbers<[1], [0], [0], [1], [0, 0, 1, 1], [], []>} : vector<256x8xbf16>, vector<8x4xbf16>, vector<256x4xf32> -> vector<256x4xf32>
    %42 = arith.addf %35, %41 : vector<256x4xf32>
    %43 = vector.extract_strided_slice %1 {offsets = [2, 0, 0], sizes = [16, 16, 8], strides = [1, 1, 1]} : vector<18x18x8xf32> to vector<16x16x8xf32>
    %44 = vector.shape_cast %43 : vector<16x16x8xf32> to vector<256x8xf32>
    %45 = arith.truncf %44 : vector<256x8xf32> to vector<256x8xbf16>
    %c6 = arith.constant 6 : index
    %c0_21 = arith.constant 0 : index
    %c0_22 = arith.constant 0 : index
    %46 = vector.load %arg2[%c6, %c0_21, %c0_22] : memref<9x8x4xbf16, #tpu.memory_space<vmem>>, vector<1x8x4xbf16>
    %47 = vector.shape_cast %46 : vector<1x8x4xbf16> to vector<8x4xbf16>
    %cst_23 = arith.constant dense<0.000000e+00> : vector<256x4xf32>
    %48 = tpu.matmul %45, %47, %cst_23 {dimension_numbers = #tpu.dot_dimension_numbers<[1], [0], [0], [1], [0, 0, 1, 1], [], []>} : vector<256x8xbf16>, vector<8x4xbf16>, vector<256x4xf32> -> vector<256x4xf32>
    %49 = arith.addf %42, %48 : vector<256x4xf32>
    %50 = vector.extract_strided_slice %1 {offsets = [2, 1, 0], sizes = [16, 16, 8], strides = [1, 1, 1]} : vector<18x18x8xf32> to vector<16x16x8xf32>
    %51 = vector.shape_cast %50 : vector<16x16x8xf32> to vector<256x8xf32>
    %52 = arith.truncf %51 : vector<256x8xf32> to vector<256x8xbf16>
    %c7 = arith.constant 7 : index
    %c0_24 = arith.constant 0 : index
    %c0_25 = arith.constant 0 : index
    %53 = vector.load %arg2[%c7, %c0_24, %c0_25] : memref<9x8x4xbf16, #tpu.memory_space<vmem>>, vector<1x8x4xbf16>
    %54 = vector.shape_cast %53 : vector<1x8x4xbf16> to vector<8x4xbf16>
    %cst_26 = arith.constant dense<0.000000e+00> : vector<256x4xf32>
    %55 = tpu.matmul %52, %54, %cst_26 {dimension_numbers = #tpu.dot_dimension_numbers<[1], [0], [0], [1], [0, 0, 1, 1], [], []>} : vector<256x8xbf16>, vector<8x4xbf16>, vector<256x4xf32> -> vector<256x4xf32>
    %56 = arith.addf %49, %55 : vector<256x4xf32>
    %57 = vector.extract_strided_slice %1 {offsets = [2, 2, 0], sizes = [16, 16, 8], strides = [1, 1, 1]} : vector<18x18x8xf32> to vector<16x16x8xf32>
    %58 = vector.shape_cast %57 : vector<16x16x8xf32> to vector<256x8xf32>
    %59 = arith.truncf %58 : vector<256x8xf32> to vector<256x8xbf16>
    %c8 = arith.constant 8 : index
    %c0_27 = arith.constant 0 : index
    %c0_28 = arith.constant 0 : index
    %60 = vector.load %arg2[%c8, %c0_27, %c0_28] : memref<9x8x4xbf16, #tpu.memory_space<vmem>>, vector<1x8x4xbf16>
    %61 = vector.shape_cast %60 : vector<1x8x4xbf16> to vector<8x4xbf16>
    %cst_29 = arith.constant dense<0.000000e+00> : vector<256x4xf32>
    %62 = tpu.matmul %59, %61, %cst_29 {dimension_numbers = #tpu.dot_dimension_numbers<[1], [0], [0], [1], [0, 0, 1, 1], [], []>} : vector<256x8xbf16>, vector<8x4xbf16>, vector<256x4xf32> -> vector<256x4xf32>
    %63 = arith.addf %56, %62 : vector<256x4xf32>
    %c0_30 = arith.constant 0 : index
    %c0_31 = arith.constant 0 : index
    %64 = vector.load %arg3[%c0_30, %c0_31] : memref<1x4xf32, #tpu.memory_space<vmem>>, vector<1x4xf32>
    %65 = vector.broadcast %64 : vector<1x4xf32> to vector<256x4xf32>
    %66 = arith.addf %63, %65 : vector<256x4xf32>
    %67 = arith.negf %66 : vector<256x4xf32>
    %68 = math.exp %67 : vector<256x4xf32>
    %cst_32 = arith.constant 1.000000e+00 : f32
    %69 = vector.broadcast %cst_32 : f32 to vector<256x4xf32>
    %70 = arith.addf %69, %68 : vector<256x4xf32>
    %71 = arith.divf %69, %70 : vector<256x4xf32>
    %c0_33 = arith.constant 0 : index
    %c0_34 = arith.constant 0 : index
    %c0_35 = arith.constant 0 : index
    %72 = vector.load %arg4[%c0_33, %c0_34, %c0_35] : memref<1x256x4xf32, #tpu.memory_space<vmem>>, vector<1x256x4xf32>
    %73 = vector.shape_cast %72 : vector<1x256x4xf32> to vector<256x4xf32>
    %74 = vector.shape_cast %71 : vector<256x4xf32> to vector<1x256x4xf32>
    tpu.vector_store %arg4[%c0_33, %c0_34, %c0_35], %74 {strides = array<i32>} : memref<1x256x4xf32, #tpu.memory_space<vmem>>, vector<1x256x4xf32>,
    return
  }
  func.func @transform_0(%arg0: i32) -> (i32, i32, i32, i32) {
    %c0_i32 = arith.constant 0 : i32
    %c0_i32_0 = arith.constant 0 : i32
    %c0_i32_1 = arith.constant 0 : i32
    %c0_i32_2 = arith.constant 0 : i32
    return %arg0, %c0_i32, %c0_i32_0, %c0_i32_1 : i32, i32, i32, i32
  }
  func.func @transform_1(%arg0: i32) -> (i32, i32, i32) {
    %c0_i32 = arith.constant 0 : i32
    %c0_i32_0 = arith.constant 0 : i32
    %c0_i32_1 = arith.constant 0 : i32
    %c0_i32_2 = arith.constant 0 : i32
    return %c0_i32, %c0_i32_0, %c0_i32_1 : i32, i32, i32
  }
  func.func @transform_2(%arg0: i32) -> (i32, i32) {
    %c0_i32 = arith.constant 0 : i32
    %c0_i32_0 = arith.constant 0 : i32
    %c0_i32_1 = arith.constant 0 : i32
    return %c0_i32, %c0_i32_0 : i32, i32
  }
  func.func @transform_3(%arg0: i32) -> (i32, i32, i32) {
    %c0_i32 = arith.constant 0 : i32
    %c0_i32_0 = arith.constant 0 : i32
    %c0_i32_1 = arith.constant 0 : i32
    return %arg0, %c0_i32, %c0_i32_0 : i32, i32, i32
  }
}

</mosaic_0001>

<llo_original>
// kernel: forward.6
$region0: #{forward.6}
  #allocation0 [shape = 'u32[]', space=smem, size = 0x4, offset = 0x4, fixed_abs, tag = 'smem constant byte address 0x4 - core index']
  #allocation1 [shape = 'u32[72,128]{1,0:T(1,128)}', space=vmem, size = 0x9000, scoped, tag = 'internal scratch']
  %s0 = inlined_call_operand.vmem [shape: f32[2,36,9,4], index: 0, kind: input, shape index: {}]
  %s1 = inlined_call_operand.vmem [shape: bf16[9,4,8], index: 1, kind: input, shape index: {}]
  %s2 = inlined_call_operand.vmem [shape: f32[1,8], index: 2, kind: input, shape index: {}]
  %s3 = inlined_call_operand.vmem [shape: f32[2,64,8], index: 3, kind: output, shape index: {}]
  %s4 = sld [smem:[#allocation0]]
  $region45: #{forward.6} parent=0
    _
  %s6 = ssub.s32 1, %s4
  %s7 = scalar_select 0, %s6, %s4
  loop: start=0, step=1, limit=4
  $region2: #{forward.6} parent=0 // loop_pre_header
    _
  $region3: #{forward.6} parent=0 // loop_header
    %s9 = sphi 0, %s13
    %p10 = scmp.ge.s32.totalorder %s9, 4
    %s19 = sphi 0, %s21
    %s22 = sphi 0, %s19
    %s23 = sphi 0, %s22
    %s39 = sphi 0, %s23
    %s43 = sphi 0, %s43
    %s45 = sphi 0, %s43
    %s46 = sphi 0, %s45
    %s60 = sphi 0, %s46
    %s64 = sphi 0, %s64
    %s66 = sphi 0, %s64
    %s67 = sphi 0, %s66
    %s81 = sphi 0, %s67
    %s87 = sphi 0, %s89
    %s90 = sphi 0, %s87
    %s91 = sphi 0, %s90
    %s107 = sphi 0, %s91
  $region4: #{forward.6} parent=0 // loop_header_branch
    %12 = sbr.rel (%p10) target = $region8
  $region5: #{forward.6} parent=0 // loop_body
    %s14 = ssub.s32 %s9, 1
    %s15 = ssub.s32 %s9, 2
    %s16 = sadd.s32 %s9, 1
    %s17 = ssub.s32 %s9, %s16
    %p18 = scmp.eq.s32.totalorder %s17, 0
    %s20 = sadd.s32 %s19, 1
    %s21 = scalar_select %p18, %s19, %s20
    %p24 = pneg %p18
    %p25 = scmp.eq.s32.totalorder %s9, 1
    %p26 = por %p24, %p25
    %p27 = scmp.ne.s32.totalorder %s19, %s22
    %p28 = scmp.eq.s32.totalorder %s9, 0
    %p29 = por %p27, %p28
    %p30 = scmp.ne.s32.totalorder %s19, %s22
    %p31 = scmp.eq.s32.totalorder %s14, 1
    %p32 = por %p30, %p31
    %p33 = scmp.ne.s32.totalorder %s22, %s23
    %p34 = scmp.eq.s32.totalorder %s14, 0
    %p35 = por %p33, %p34
    %p36 = scmp.ne.s32.totalorder %s22, %s23
    %p37 = scmp.eq.s32.totalorder %s15, 1
    %p38 = por %p36, %p37
    %p40 = scmp.ne.s32.totalorder %s23, %s39
    %p41 = scmp.eq.s32.totalorder %s15, 0
    %p42 = por %p40, %p41
    %s44 = sadd.s32 %s43, 1
    %p47 = scmp.eq.s32.totalorder %s9, 1
    %p48 = scmp.ne.s32.totalorder %s43, %s45
    %p49 = scmp.eq.s32.totalorder %s9, 0
    %p50 = por %p48, %p49
    %p51 = scmp.ne.s32.totalorder %s43, %s45
    %p52 = scmp.eq.s32.totalorder %s14, 1
    %p53 = por %p51, %p52
    %p54 = scmp.ne.s32.totalorder %s45, %s46
    %p55 = scmp.eq.s32.totalorder %s14, 0
    %p56 = por %p54, %p55
    %p57 = scmp.ne.s32.totalorder %s45, %s46
    %p58 = scmp.eq.s32.totalorder %s15, 1
    %p59 = por %p57, %p58
    %p61 = scmp.ne.s32.totalorder %s46, %s60
    %p62 = scmp.eq.s32.totalorder %s15, 0
    %p63 = por %p61, %p62
    %s65 = sadd.s32 %s64, 1
    %p68 = scmp.eq.s32.totalorder %s9, 1
    %p69 = scmp.ne.s32.totalorder %s64, %s66
    %p70 = scmp.eq.s32.totalorder %s9, 0
    %p71 = por %p69, %p70
    %p72 = scmp.ne.s32.totalorder %s64, %s66
    %p73 = scmp.eq.s32.totalorder %s14, 1
    %p74 = por %p72, %p73
    %p75 = scmp.ne.s32.totalorder %s66, %s67
    %p76 = scmp.eq.s32.totalorder %s14, 0
    %p77 = por %p75, %p76
    %p78 = scmp.ne.s32.totalorder %s66, %s67
    %p79 = scmp.eq.s32.totalorder %s15, 1
    %p80 = por %p78, %p79
    %p82 = scmp.ne.s32.totalorder %s67, %s81
    %p83 = scmp.eq.s32.totalorder %s15, 0
    %p84 = por %p82, %p83
    %s85 = ssub.s32 %s9, %s16
    %p86 = scmp.eq.s32.totalorder %s85, 0
    %s88 = sadd.s32 %s87, 1
    %s89 = scalar_select %p86, %s87, %s88
    %p92 = pneg %p86
    %p93 = scmp.eq.s32.totalorder %s9, 1
    %p94 = por %p92, %p93
    %p95 = scmp.ne.s32.totalorder %s87, %s90
    %p96 = scmp.eq.s32.totalorder %s9, 0
    %p97 = por %p95, %p96
    %p98 = scmp.ne.s32.totalorder %s87, %s90
    %p99 = scmp.eq.s32.totalorder %s14, 1
    %p100 = por %p98, %p99
    %p101 = scmp.ne.s32.totalorder %s90, %s91
    %p102 = scmp.eq.s32.totalorder %s14, 0
    %p103 = por %p101, %p102
    %p104 = scmp.ne.s32.totalorder %s90, %s91
    %p105 = scmp.eq.s32.totalorder %s15, 1
    %p106 = por %p104, %p105
    %p108 = scmp.ne.s32.totalorder %s91, %s107
    %p109 = scmp.eq.s32.totalorder %s15, 0
    %p110 = por %p108, %p109
    %p111 = scmp.le.s32.totalorder 1, %s9
    %p112 = scmp.lt.s32.totalorder %s9, 3
    %p113 = pnand %p111, %p112
    %p114 = pneg %p113
    // Predicated region
    $region9: #{forward.6} parent=5 // pred_check
      _
    $region10: #{forward.6} parent=5 // pred_check_branch
      %116 = sbr.rel (%p113) target = $region12
    $region11: #{forward.6} parent=5 // pred_region
      %s117 = ssub.s32 %s9, 1
      // Predicated region
      $region13: #{forward.6} parent=11 // pred_check
        %p118 = pneg %p56
      $region14: #{forward.6} parent=11 // pred_check_branch
        %120 = sbr.rel (%p118) target = $region16
      $region15: #{forward.6} parent=11 // pred_region
        _
      $region16: #{forward.6} parent=11 // pred_fallthru
        _
      // Predicated region
      $region17: #{forward.6} parent=11 // pred_check
        %p121 = pneg %p77
      $region18: #{forward.6} parent=11 // pred_check_branch
        %123 = sbr.rel (%p121) target = $region20
      $region19: #{forward.6} parent=11 // pred_region
        _
      $region20: #{forward.6} parent=11 // pred_fallthru
        _
    $region12: #{forward.6} parent=5 // pred_fallthru
      _
    %p124 = scmp.lt.s32.totalorder %s9, 2
    // Predicated region
    $region21: #{forward.6} parent=5 // pred_check
      %p125 = pneg %p124
    $region22: #{forward.6} parent=5 // pred_check_branch
      %127 = sbr.rel (%p125) target = $region24
    $region23: #{forward.6} parent=5 // pred_region
      // Predicated region
      $region25: #{forward.6} parent=23 // pred_check
        %p128 = pneg %p29
      $region26: #{forward.6} parent=23 // pred_check_branch
        %130 = sbr.rel (%p128) target = $region28
      $region27: #{forward.6} parent=23 // pred_region
        %p131 = scmp.lt.s32.totalorder %s9, 1
        %s132 = scalar_select %p131, %s9, 1
        %s133 = smul.addr %s132, 72
        %s134 = smul.addr %s133, 8
        %s135 = scalar_lea.vmem %s0, %s134
      $region28: #{forward.6} parent=23 // pred_fallthru
        _
    $region24: #{forward.6} parent=5 // pred_fallthru
      _
    %p136 = scmp.le.s32.totalorder 1, %s9
    %p137 = scmp.lt.s32.totalorder %s9, 3
    %p138 = pnand %p136, %p137
    %p139 = pneg %p138
    // Predicated region
    $region29: #{forward.6} parent=5 // pred_check
      _
    $region30: #{forward.6} parent=5 // pred_check_branch
      %141 = sbr.rel (%p138) target = $region32
    $region31: #{forward.6} parent=5 // pred_region
      %s142 = ssub.s32 %s9, 1
      %p143 = scmp.lt.s32.totalorder %s14, 1
      %s144 = scalar_select %p143, %s14, 1
      %s145 = smul.addr %s144, 72
      %s146 = smul.addr %s145, 8
      %s147 = scalar_lea.vmem %s0, %s146
      %p148 = pneg %p35
      %p149 = pneg %p32
      %p150 = pneg %p56
      %p151 = pneg %p53
      %p152 = pneg %p77
      %p153 = pneg %p74
      %p154 = pneg %p103
      %p155 = pneg %p100
      %p156 = scmp.lt.s32.totalorder %s14, 1
      %s157 = scalar_select %p156, %s14, 1
      %s158 = smul.addr %s157, 8
      %s159 = smul.addr %s158, 8
      %s160 = scalar_lea.vmem %s3, %s159
      %p161 = scmp.lt.s32.totalorder %s14, 1
      %s162 = scalar_select %p161, %s14, 1
      %s163 = smul.addr %s162, 72
      %s164 = smul.addr %s163, 8
      %s165 = scalar_lea.vmem %s0, %s164
      %p166 = scmp.lt.s32.totalorder %s14, 1
      %s167 = scalar_select %p166, %s14, 1
      %s168 = smul.addr %s167, 8
      %s169 = smul.addr %s168, 8
      %s170 = scalar_lea.vmem %s3, %s169
      %v172 = vld [vmem:[%s165] sm:$0xff]
      %v173 = vld [vmem:[%s165 + $0x8] sm:$0x1]
      %v174 = vld [vmem:[%s165 + $0x10] sm:$0xff]
      %v175 = vld [vmem:[%s165 + $0x18] sm:$0x1]
      %v176 = vld [vmem:[%s165 + $0x20] sm:$0xff]
      %v177 = vld [vmem:[%s165 + $0x28] sm:$0x1]
      %v178 = vld [vmem:[%s165 + $0x30] sm:$0xff]
      %v179 = vld [vmem:[%s165 + $0x38] sm:$0x1]
      %v180 = vld [vmem:[%s165 + $0x40] sm:$0xff]
      %v181 = vld [vmem:[%s165 + $0x48] sm:$0x1]
      %v182 = vld [vmem:[%s165 + $0x50] sm:$0xff]
      %v183 = vld [vmem:[%s165 + $0x58] sm:$0x1]
      %v184 = vld [vmem:[%s165 + $0x60] sm:$0xff]
      %v185 = vld [vmem:[%s165 + $0x68] sm:$0x1]
      %v186 = vld [vmem:[%s165 + $0x70] sm:$0xff]
      %v187 = vld [vmem:[%s165 + $0x78] sm:$0x1]
      %v188 = vld [vmem:[%s165 + $0x80] sm:$0xff]
      %v189 = vld [vmem:[%s165 + $0x88] sm:$0x1]
      %v190 = vld [vmem:[%s165 + $0x90] sm:$0xff]
      %v191 = vld [vmem:[%s165 + $0xa0] sm:$0xff]
      %v192 = vld [vmem:[%s165 + $0xb0] sm:$0xff]
      %v193 = vld [vmem:[%s165 + $0xc0] sm:$0xff]
      %v194 = vld [vmem:[%s165 + $0xd0] sm:$0xff]
      %v195 = vld [vmem:[%s165 + $0xe0] sm:$0xff]
      %v196 = vld [vmem:[%s165 + $0xf0] sm:$0xff]
      %v197 = vld [vmem:[%s165 + $0x100] sm:$0xff]
      %v198 = vld [vmem:[%s165 + $0x110] sm:$0xff]
      %v199 = vld [vmem:[%s165 + $0x120] sm:$0xff]
      %v200 = vld [vmem:[%s165 + $0x128] sm:$0x1]
      %v201 = vld [vmem:[%s165 + $0x130] sm:$0xff]
      %v202 = vld [vmem:[%s165 + $0x138] sm:$0x1]
      %v203 = vld [vmem:[%s165 + $0x140] sm:$0xff]
      %v204 = vld [vmem:[%s165 + $0x148] sm:$0x1]
      %v205 = vld [vmem:[%s165 + $0x150] sm:$0xff]
      %v206 = vld [vmem:[%s165 + $0x158] sm:$0x1]
      %v207 = vld [vmem:[%s165 + $0x160] sm:$0xff]
      %v208 = vld [vmem:[%s165 + $0x168] sm:$0x1]
      %v209 = vld [vmem:[%s165 + $0x170] sm:$0xff]
      %v210 = vld [vmem:[%s165 + $0x178] sm:$0x1]
      %v211 = vld [vmem:[%s165 + $0x180] sm:$0xff]
      %v212 = vld [vmem:[%s165 + $0x188] sm:$0x1]
      %v213 = vld [vmem:[%s165 + $0x190] sm:$0xff]
      %v214 = vld [vmem:[%s165 + $0x198] sm:$0x1]
      %v215 = vld [vmem:[%s165 + $0x1b0] sm:$0xff]
      %v216 = vld [vmem:[%s165 + $0x1c0] sm:$0xff]
      %v217 = vld [vmem:[%s165 + $0x1d0] sm:$0xff]
      %v218 = vld [vmem:[%s165 + $0x1e0] sm:$0xff]
      %v219 = vld [vmem:[%s165 + $0x1f0] sm:$0xff]
      %v220 = vld [vmem:[%s165 + $0x200] sm:$0xff]
      %v221 = vld [vmem:[%s165 + $0x210] sm:$0xff]
      %v222 = vld [vmem:[%s165 + $0x220] sm:$0xff]
      %v223 = vpack.c.bf16 %v174, %v172
      %v224 = vpack.c.bf16 %v178, %v176
      %v225 = vpack.c.bf16 %v182, %v180
      %v226 = vpack.c.bf16 %v186, %v184
      %v227 = vld [vmem:[%s1] sm:$0x3]
      %v228 = vpack.c.bf16 %v191, %v190
      %v229 = vpack.c.bf16 %v193, %v192
      %v230 = vpack.c.bf16 %v195, %v194
      %v231 = vpack.c.bf16 %v197, %v196
      %s232 = scalar_lea.vmem %s1, 2
      %v233 = vld [vmem:[%s232] sm:$0x3]
      %vm234 = vcmask 31744
      %v236 = vsel %vm234, %v228, 0
      %v239 = vsel %vm234, %v229, 0
      %v242 = vsel %vm234, %v230, 0
      %v245 = vsel %vm234, %v231, 0
      %vm247 = vcmask 1041408
      %v249 = vsel %vm247, %v233, 0
      %251 = vmatpush.bf16.msra.mxu0 0
      %252 = vmatpush.bf16.msra.mxu0 0
      %253 = vmatpush.bf16.msra.mxu0 0
      %254 = vmatpush.bf16.msra.mxu0 0
      %255 = vmatpush.bf16.msra.mxu0 0
      %256 = vmatpush.bf16.msra.mxu0 0
      %257 = vmatpush.bf16.msra.mxu0 0
      %258 = vmatpush.bf16.msra.mxu0 %v249
      %259 = vmatmul.bf16.gmra.mxu0 %v236
      %v260 = vpop.f32.mrf.mxu0
      %v261 = vadd.f32 0.0, %v260
      %v262 = vpop.f32.mrf.mxu0
      %v263 = vadd.f32 0.0, %v262
      %264 = vmatmul.bf16.gmra.mxu0 %v239
      %v265 = vpop.f32.mrf.mxu0
      %v266 = vadd.f32 0.0, %v265
      %v267 = vpop.f32.mrf.mxu0
      %v268 = vadd.f32 0.0, %v267
      %269 = vmatmul.bf16.gmra.mxu0 %v242
      %v270 = vpop.f32.mrf.mxu0
      %v271 = vadd.f32 0.0, %v270
      %v272 = vpop.f32.mrf.mxu0
      %v273 = vadd.f32 0.0, %v272
      %274 = vmatmul.bf16.gmra.mxu0 %v245
      %v275 = vpop.f32.mrf.mxu0
      %v276 = vadd.f32 0.0, %v275
      %v277 = vpop.f32.mrf.mxu0
      %v278 = vadd.f32 0.0, %v277
      %279 = vdwg.mxu0
      %v281 = vsel %vm234, %v223, 0
      %v284 = vsel %vm234, %v224, 0
      %v287 = vsel %vm234, %v225, 0
      %v290 = vsel %vm234, %v226, 0
      %v293 = vsel %vm247, %v227, 0
      %295 = vmatpush.bf16.msra.mxu0 0
      %296 = vmatpush.bf16.msra.mxu0 0
      %297 = vmatpush.bf16.msra.mxu0 0
      %298 = vmatpush.bf16.msra.mxu0 0
      %299 = vmatpush.bf16.msra.mxu0 0
      %300 = vmatpush.bf16.msra.mxu0 0
      %301 = vmatpush.bf16.msra.mxu0 0
      %302 = vmatpush.bf16.msra.mxu0 %v293
      %303 = vmatmul.bf16.gmra.mxu0 %v281
      %v304 = vpop.f32.mrf.mxu0
      %v305 = vadd.f32 %v261, %v304
      %v306 = vpop.f32.mrf.mxu0
      %v307 = vadd.f32 %v263, %v306
      %308 = vmatmul.bf16.gmra.mxu0 %v284
      %v309 = vpop.f32.mrf.mxu0
      %v310 = vadd.f32 %v266, %v309
      %v311 = vpop.f32.mrf.mxu0
      %v312 = vadd.f32 %v268, %v311
      %313 = vmatmul.bf16.gmra.mxu0 %v287
      %v314 = vpop.f32.mrf.mxu0
      %v315 = vadd.f32 %v271, %v314
      %v316 = vpop.f32.mrf.mxu0
      %v317 = vadd.f32 %v273, %v316
      %318 = vmatmul.bf16.gmra.mxu0 %v290
      %v319 = vpop.f32.mrf.mxu0
      %v320 = vadd.f32 %v276, %v319
      %v321 = vpop.f32.mrf.mxu0
      %v322 = vadd.f32 %v278, %v321
      %323 = vdwg.mxu0
      %vm340 = vcmask 1046528
      %v341 = vrot.slane %v172, 1
      %v342 = vrot.slane %v173, 1
      %v343 = vsel %vm340, %v341, %v342
      %v344 = vrot.slane %v174, 1
      %v345 = vrot.slane %v175, 1
      %v346 = vsel %vm340, %v344, %v345
      %v347 = vrot.slane %v176, 1
      %v348 = vrot.slane %v177, 1
      %v349 = vsel %vm340, %v347, %v348
      %v350 = vrot.slane %v178, 1
      %v351 = vrot.slane %v179, 1
      %v352 = vsel %vm340, %v350, %v351
      %v353 = vrot.slane %v180, 1
      %v354 = vrot.slane %v181, 1
      %v355 = vsel %vm340, %v353, %v354
      %v356 = vrot.slane %v182, 1
      %v357 = vrot.slane %v183, 1
      %v358 = vsel %vm340, %v356, %v357
      %v359 = vrot.slane %v184, 1
      %v360 = vrot.slane %v185, 1
      %v361 = vsel %vm340, %v359, %v360
      %v362 = vrot.slane %v186, 1
      %v363 = vrot.slane %v187, 1
      %v364 = vsel %vm340, %v362, %v363
      %v373 = vpack.c.bf16 %v346, %v343
      %v374 = vpack.c.bf16 %v352, %v349
      %v375 = vpack.c.bf16 %v358, %v355
      %v376 = vpack.c.bf16 %v364, %v361
      %s377 = scalar_lea.vmem %s1, 4
      %v378 = vld [vmem:[%s377] sm:$0x3]
      %v380 = vsel %vm234, %v373, 0
      %v383 = vsel %vm234, %v374, 0
      %v386 = vsel %vm234, %v375, 0
      %v389 = vsel %vm234, %v376, 0
      %v392 = vsel %vm247, %v378, 0
      %394 = vmatpush.bf16.msra.mxu0 0
      %395 = vmatpush.bf16.msra.mxu0 0
      %396 = vmatpush.bf16.msra.mxu0 0
      %397 = vmatpush.bf16.msra.mxu0 0
      %398 = vmatpush.bf16.msra.mxu0 0
      %399 = vmatpush.bf16.msra.mxu0 0
      %400 = vmatpush.bf16.msra.mxu0 0
      %401 = vmatpush.bf16.msra.mxu0 %v392
      %402 = vmatmul.bf16.gmra.mxu0 %v380
      %v403 = vpop.f32.mrf.mxu0
      %v404 = vadd.f32 0.0, %v403
      %v405 = vpop.f32.mrf.mxu0
      %v406 = vadd.f32 0.0, %v405
      %407 = vmatmul.bf16.gmra.mxu0 %v383
      %v408 = vpop.f32.mrf.mxu0
      %v409 = vadd.f32 0.0, %v408
      %v410 = vpop.f32.mrf.mxu0
      %v411 = vadd.f32 0.0, %v410
      %412 = vmatmul.bf16.gmra.mxu0 %v386
      %v413 = vpop.f32.mrf.mxu0
      %v414 = vadd.f32 0.0, %v413
      %v415 = vpop.f32.mrf.mxu0
      %v416 = vadd.f32 0.0, %v415
      %417 = vmatmul.bf16.gmra.mxu0 %v389
      %v418 = vpop.f32.mrf.mxu0
      %v419 = vadd.f32 0.0, %v418
      %v420 = vpop.f32.mrf.mxu0
      %v421 = vadd.f32 0.0, %v420
      %422 = vdwg.mxu0
      %v423 = vadd.f32 %v305, %v404
      %v424 = vadd.f32 %v307, %v406
      %v425 = vadd.f32 %v310, %v409
      %v426 = vadd.f32 %v312, %v411
      %v427 = vadd.f32 %v315, %v414
      %v428 = vadd.f32 %v317, %v416
      %v429 = vadd.f32 %v320, %v419
      %v430 = vadd.f32 %v322, %v421
      %v431 = vpack.c.bf16 %v201, %v199
      %v432 = vpack.c.bf16 %v205, %v203
      %v433 = vpack.c.bf16 %v209, %v207
      %v434 = vpack.c.bf16 %v213, %v211
      %s435 = scalar_lea.vmem %s1, 6
      %v436 = vld [vmem:[%s435] sm:$0x3]
      %v438 = vsel %vm234, %v431, 0
      %v441 = vsel %vm234, %v432, 0
      %v444 = vsel %vm234, %v433, 0
      %v447 = vsel %vm234, %v434, 0
      %v450 = vsel %vm247, %v436, 0
      %452 = vmatpush.bf16.msra.mxu0 0
      %453 = vmatpush.bf16.msra.mxu0 0
      %454 = vmatpush.bf16.msra.mxu0 0
      %455 = vmatpush.bf16.msra.mxu0 0
      %456 = vmatpush.bf16.msra.mxu0 0
      %457 = vmatpush.bf16.msra.mxu0 0
      %458 = vmatpush.bf16.msra.mxu0 0
      %459 = vmatpush.bf16.msra.mxu0 %v450
      %460 = vmatmul.bf16.gmra.mxu0 %v438
      %v461 = vpop.f32.mrf.mxu0
      %v462 = vadd.f32 0.0, %v461
      %v463 = vpop.f32.mrf.mxu0
      %v464 = vadd.f32 0.0, %v463
      %465 = vmatmul.bf16.gmra.mxu0 %v441
      %v466 = vpop.f32.mrf.mxu0
      %v467 = vadd.f32 0.0, %v466
      %v468 = vpop.f32.mrf.mxu0
      %v469 = vadd.f32 0.0, %v468
      %470 = vmatmul.bf16.gmra.mxu0 %v444
      %v471 = vpop.f32.mrf.mxu0
      %v472 = vadd.f32 0.0, %v471
      %v473 = vpop.f32.mrf.mxu0
      %v474 = vadd.f32 0.0, %v473
      %475 = vmatmul.bf16.gmra.mxu0 %v447
      %v476 = vpop.f32.mrf.mxu0
      %v477 = vadd.f32 0.0, %v476
      %v478 = vpop.f32.mrf.mxu0
      %v479 = vadd.f32 0.0, %v478
      %480 = vdwg.mxu0
      %v481 = vadd.f32 %v423, %v462
      %v482 = vadd.f32 %v424, %v464
      %v483 = vadd.f32 %v425, %v467
      %v484 = vadd.f32 %v426, %v469
      %v485 = vadd.f32 %v427, %v472
      %v486 = vadd.f32 %v428, %v474
      %v487 = vadd.f32 %v429, %v477
      %v488 = vadd.f32 %v430, %v479
      %v489 = vpack.c.bf16 %v216, %v215
      %v490 = vpack.c.bf16 %v218, %v217
      %v491 = vpack.c.bf16 %v220, %v219
      %v492 = vpack.c.bf16 %v222, %v221
      %s493 = scalar_lea.vmem %s1, 8
      %v494 = vld [vmem:[%s493] sm:$0x3]
      %v496 = vsel %vm234, %v489, 0
      %v499 = vsel %vm234, %v490, 0
      %v502 = vsel %vm234, %v491, 0
      %v505 = vsel %vm234, %v492, 0
      %v508 = vsel %vm247, %v494, 0
      %510 = vmatpush.bf16.msra.mxu0 0
      %511 = vmatpush.bf16.msra.mxu0 0
      %512 = vmatpush.bf16.msra.mxu0 0
      %513 = vmatpush.bf16.msra.mxu0 0
      %514 = vmatpush.bf16.msra.mxu0 0
      %515 = vmatpush.bf16.msra.mxu0 0
      %516 = vmatpush.bf16.msra.mxu0 0
      %517 = vmatpush.bf16.msra.mxu0 %v508
      %518 = vmatmul.bf16.gmra.mxu0 %v496
      %v519 = vpop.f32.mrf.mxu0
      %v520 = vadd.f32 0.0, %v519
      %v521 = vpop.f32.mrf.mxu0
      %v522 = vadd.f32 0.0, %v521
      %523 = vmatmul.bf16.gmra.mxu0 %v499
      %v524 = vpop.f32.mrf.mxu0
      %v525 = vadd.f32 0.0, %v524
      %v526 = vpop.f32.mrf.mxu0
      %v527 = vadd.f32 0.0, %v526
      %528 = vmatmul.bf16.gmra.mxu0 %v502
      %v529 = vpop.f32.mrf.mxu0
      %v530 = vadd.f32 0.0, %v529
      %v531 = vpop.f32.mrf.mxu0
      %v532 = vadd.f32 0.0, %v531
      %533 = vmatmul.bf16.gmra.mxu0 %v505
      %v534 = vpop.f32.mrf.mxu0
      %v535 = vadd.f32 0.0, %v534
      %v536 = vpop.f32.mrf.mxu0
      %v537 = vadd.f32 0.0, %v536
      %538 = vdwg.mxu0
      %v539 = vadd.f32 %v481, %v520
      %v540 = vadd.f32 %v482, %v522
      %v541 = vadd.f32 %v483, %v525
      %v542 = vadd.f32 %v484, %v527
      %v543 = vadd.f32 %v485, %v530
      %v544 = vadd.f32 %v486, %v532
      %v545 = vadd.f32 %v487, %v535
      %v546 = vadd.f32 %v488, %v537
      %v563 = vrot.slane %v199, 1
      %v564 = vrot.slane %v200, 1
      %v565 = vsel %vm340, %v563, %v564
      %v566 = vrot.slane %v201, 1
      %v567 = vrot.slane %v202, 1
      %v568 = vsel %vm340, %v566, %v567
      %v569 = vrot.slane %v203, 1
      %v570 = vrot.slane %v204, 1
      %v571 = vsel %vm340, %v569, %v570
      %v572 = vrot.slane %v205, 1
      %v573 = vrot.slane %v206, 1
      %v574 = vsel %vm340, %v572, %v573
      %v575 = vrot.slane %v207, 1
      %v576 = vrot.slane %v208, 1
      %v577 = vsel %vm340, %v575, %v576
      %v578 = vrot.slane %v209, 1
      %v579 = vrot.slane %v210, 1
      %v580 = vsel %vm340, %v578, %v579
      %v581 = vrot.slane %v211, 1
      %v582 = vrot.slane %v212, 1
      %v583 = vsel %vm340, %v581, %v582
      %v584 = vrot.slane %v213, 1
      %v585 = vrot.slane %v214, 1
      %v586 = vsel %vm340, %v584, %v585
      %v595 = vpack.c.bf16 %v568, %v565
      %v596 = vpack.c.bf16 %v574, %v571
      %v597 = vpack.c.bf16 %v580, %v577
      %v598 = vpack.c.bf16 %v586, %v583
      %s599 = scalar_lea.vmem %s1, 10
      %v600 = vld [vmem:[%s599] sm:$0x3]
      %v602 = vsel %vm234, %v595, 0
      %v605 = vsel %vm234, %v596, 0
      %v608 = vsel %vm234, %v597, 0
      %v611 = vsel %vm234, %v598, 0
      %v614 = vsel %vm247, %v600, 0
      %616 = vmatpush.bf16.msra.mxu0 0
      %617 = vmatpush.bf16.msra.mxu0 0
      %618 = vmatpush.bf16.msra.mxu0 0
      %619 = vmatpush.bf16.msra.mxu0 0
      %620 = vmatpush.bf16.msra.mxu0 0
      %621 = vmatpush.bf16.msra.mxu0 0
      %622 = vmatpush.bf16.msra.mxu0 0
      %623 = vmatpush.bf16.msra.mxu0 %v614
      %624 = vmatmul.bf16.gmra.mxu0 %v602
      %v625 = vpop.f32.mrf.mxu0
      %v626 = vadd.f32 0.0, %v625
      %v627 = vpop.f32.mrf.mxu0
      %v628 = vadd.f32 0.0, %v627
      %629 = vmatmul.bf16.gmra.mxu0 %v605
      %v630 = vpop.f32.mrf.mxu0
      %v631 = vadd.f32 0.0, %v630
      %v632 = vpop.f32.mrf.mxu0
      %v633 = vadd.f32 0.0, %v632
      %634 = vmatmul.bf16.gmra.mxu0 %v608
      %v635 = vpop.f32.mrf.mxu0
      %v636 = vadd.f32 0.0, %v635
      %v637 = vpop.f32.mrf.mxu0
      %v638 = vadd.f32 0.0, %v637
      %639 = vmatmul.bf16.gmra.mxu0 %v611
      %v640 = vpop.f32.mrf.mxu0
      %v641 = vadd.f32 0.0, %v640
      %v642 = vpop.f32.mrf.mxu0
      %v643 = vadd.f32 0.0, %v642
      %644 = vdwg.mxu0
      %v645 = vadd.f32 %v539, %v626
      %v646 = vadd.f32 %v540, %v628
      %v647 = vadd.f32 %v541, %v631
      %v648 = vadd.f32 %v542, %v633
      %v649 = vadd.f32 %v543, %v636
      %v650 = vadd.f32 %v544, %v638
      %v651 = vadd.f32 %v545, %v641
      %v652 = vadd.f32 %v546, %v643
      %v653 = vpack.c.bf16 %v176, %v174
      %v654 = vpack.c.bf16 %v180, %v178
      %v655 = vpack.c.bf16 %v184, %v182
      %v656 = vpack.c.bf16 %v188, %v186
      %s657 = scalar_lea.vmem %s1, 12
      %v658 = vld [vmem:[%s657] sm:$0x3]
      %v660 = vsel %vm234, %v653, 0
      %v663 = vsel %vm234, %v654, 0
      %v666 = vsel %vm234, %v655, 0
      %v669 = vsel %vm234, %v656, 0
      %v672 = vsel %vm247, %v658, 0
      %674 = vmatpush.bf16.msra.mxu0 0
      %675 = vmatpush.bf16.msra.mxu0 0
      %676 = vmatpush.bf16.msra.mxu0 0
      %677 = vmatpush.bf16.msra.mxu0 0
      %678 = vmatpush.bf16.msra.mxu0 0
      %679 = vmatpush.bf16.msra.mxu0 0
      %680 = vmatpush.bf16.msra.mxu0 0
      %681 = vmatpush.bf16.msra.mxu0 %v672
      %682 = vmatmul.bf16.gmra.mxu0 %v660
      %v683 = vpop.f32.mrf.mxu0
      %v684 = vadd.f32 0.0, %v683
      %v685 = vpop.f32.mrf.mxu0
      %v686 = vadd.f32 0.0, %v685
      %687 = vmatmul.bf16.gmra.mxu0 %v663
      %v688 = vpop.f32.mrf.mxu0
      %v689 = vadd.f32 0.0, %v688
      %v690 = vpop.f32.mrf.mxu0
      %v691 = vadd.f32 0.0, %v690
      %692 = vmatmul.bf16.gmra.mxu0 %v666
      %v693 = vpop.f32.mrf.mxu0
      %v694 = vadd.f32 0.0, %v693
      %v695 = vpop.f32.mrf.mxu0
      %v696 = vadd.f32 0.0, %v695
      %697 = vmatmul.bf16.gmra.mxu0 %v669
      %v698 = vpop.f32.mrf.mxu0
      %v699 = vadd.f32 0.0, %v698
      %v700 = vpop.f32.mrf.mxu0
      %v701 = vadd.f32 0.0, %v700
      %702 = vdwg.mxu0
      %v703 = vadd.f32 %v645, %v684
      %v704 = vadd.f32 %v646, %v686
      %v705 = vadd.f32 %v647, %v689
      %v706 = vadd.f32 %v648, %v691
      %v707 = vadd.f32 %v649, %v694
      %v708 = vadd.f32 %v650, %v696
      %v709 = vadd.f32 %v651, %v699
      %v710 = vadd.f32 %v652, %v701
      %v711 = vpack.c.bf16 %v192, %v191
      %v712 = vpack.c.bf16 %v194, %v193
      %v713 = vpack.c.bf16 %v196, %v195
      %v714 = vpack.c.bf16 %v198, %v197
      %s715 = scalar_lea.vmem %s1, 14
      %v716 = vld [vmem:[%s715] sm:$0x3]
      %v718 = vsel %vm234, %v711, 0
      %v721 = vsel %vm234, %v712, 0
      %v724 = vsel %vm234, %v713, 0
      %v727 = vsel %vm234, %v714, 0
      %v730 = vsel %vm247, %v716, 0
      %732 = vmatpush.bf16.msra.mxu0 0
      %733 = vmatpush.bf16.msra.mxu0 0
      %734 = vmatpush.bf16.msra.mxu0 0
      %735 = vmatpush.bf16.msra.mxu0 0
      %736 = vmatpush.bf16.msra.mxu0 0
      %737 = vmatpush.bf16.msra.mxu0 0
      %738 = vmatpush.bf16.msra.mxu0 0
      %739 = vmatpush.bf16.msra.mxu0 %v730
      %740 = vmatmul.bf16.gmra.mxu0 %v718
      %v741 = vpop.f32.mrf.mxu0
      %v742 = vadd.f32 0.0, %v741
      %v743 = vpop.f32.mrf.mxu0
      %v744 = vadd.f32 0.0, %v743
      %745 = vmatmul.bf16.gmra.mxu0 %v721
      %v746 = vpop.f32.mrf.mxu0
      %v747 = vadd.f32 0.0, %v746
      %v748 = vpop.f32.mrf.mxu0
      %v749 = vadd.f32 0.0, %v748
      %750 = vmatmul.bf16.gmra.mxu0 %v724
      %v751 = vpop.f32.mrf.mxu0
      %v752 = vadd.f32 0.0, %v751
      %v753 = vpop.f32.mrf.mxu0
      %v754 = vadd.f32 0.0, %v753
      %755 = vmatmul.bf16.gmra.mxu0 %v727
      %v756 = vpop.f32.mrf.mxu0
      %v757 = vadd.f32 0.0, %v756
      %v758 = vpop.f32.mrf.mxu0
      %v759 = vadd.f32 0.0, %v758
      %760 = vdwg.mxu0
      %v761 = vadd.f32 %v703, %v742
      %v762 = vadd.f32 %v704, %v744
      %v763 = vadd.f32 %v705, %v747
      %v764 = vadd.f32 %v706, %v749
      %v765 = vadd.f32 %v707, %v752
      %v766 = vadd.f32 %v708, %v754
      %v767 = vadd.f32 %v709, %v757
      %v768 = vadd.f32 %v710, %v759
      %v771 = vrot.slane %v188, 1
      %v772 = vrot.slane %v189, 1
      %v773 = vsel %vm340, %v771, %v772
      %v775 = vpack.c.bf16 %v349, %v346
      %v776 = vpack.c.bf16 %v355, %v352
      %v777 = vpack.c.bf16 %v361, %v358
      %v778 = vpack.c.bf16 %v773, %v364
      %s779 = scalar_lea.vmem %s1, 16
      %v780 = vld [vmem:[%s779] sm:$0x3]
      %v782 = vsel %vm234, %v775, 0
      %v785 = vsel %vm234, %v776, 0
      %v788 = vsel %vm234, %v777, 0
      %v791 = vsel %vm234, %v778, 0
      %v794 = vsel %vm247, %v780, 0
      %796 = vmatpush.bf16.msra.mxu0 0
      %797 = vmatpush.bf16.msra.mxu0 0
      %798 = vmatpush.bf16.msra.mxu0 0
      %799 = vmatpush.bf16.msra.mxu0 0
      %800 = vmatpush.bf16.msra.mxu0 0
      %801 = vmatpush.bf16.msra.mxu0 0
      %802 = vmatpush.bf16.msra.mxu0 0
      %803 = vmatpush.bf16.msra.mxu0 %v794
      %804 = vmatmul.bf16.gmra.mxu0 %v782
      %v805 = vpop.f32.mrf.mxu0
      %v806 = vadd.f32 0.0, %v805
      %v807 = vpop.f32.mrf.mxu0
      %v808 = vadd.f32 0.0, %v807
      %809 = vmatmul.bf16.gmra.mxu0 %v785
      %v810 = vpop.f32.mrf.mxu0
      %v811 = vadd.f32 0.0, %v810
      %v812 = vpop.f32.mrf.mxu0
      %v813 = vadd.f32 0.0, %v812
      %814 = vmatmul.bf16.gmra.mxu0 %v788
      %v815 = vpop.f32.mrf.mxu0
      %v816 = vadd.f32 0.0, %v815
      %v817 = vpop.f32.mrf.mxu0
      %v818 = vadd.f32 0.0, %v817
      %819 = vmatmul.bf16.gmra.mxu0 %v791
      %v820 = vpop.f32.mrf.mxu0
      %v821 = vadd.f32 0.0, %v820
      %v822 = vpop.f32.mrf.mxu0
      %v823 = vadd.f32 0.0, %v822
      %824 = vdwg.mxu0
      %v825 = vadd.f32 %v761, %v806
      %v826 = vadd.f32 %v762, %v808
      %v827 = vadd.f32 %v763, %v811
      %v828 = vadd.f32 %v764, %v813
      %v829 = vadd.f32 %v765, %v816
      %v830 = vadd.f32 %v766, %v818
      %v831 = vadd.f32 %v767, %v821
      %v832 = vadd.f32 %v768, %v823
      %v833 = vld [vmem:[%s2] sm:$0x1]
      %v835 = vperm.slane %v833, 0
      %v837 = vadd.f32 %v825, %v835
      %v838 = vadd.f32 %v826, %v835
      %v839 = vadd.f32 %v827, %v835
      %v840 = vadd.f32 %v828, %v835
      %v841 = vadd.f32 %v829, %v835
      %v842 = vadd.f32 %v830, %v835
      %v843 = vadd.f32 %v831, %v835
      %v844 = vadd.f32 %v832, %v835
      %vm845 = vcmp.ge.f32.partialorder %v837, 0.0
      %vm846 = vcmp.ge.f32.partialorder %v838, 0.0
      %vm847 = vcmp.ge.f32.partialorder %v839, 0.0
      %vm848 = vcmp.ge.f32.partialorder %v840, 0.0
      %vm849 = vcmp.ge.f32.partialorder %v841, 0.0
      %vm850 = vcmp.ge.f32.partialorder %v842, 0.0
      %vm851 = vcmp.ge.f32.partialorder %v843, 0.0
      %vm852 = vcmp.ge.f32.partialorder %v844, 0.0
      %v853 = vmul.f32 %v837, 0.01
      %v854 = vmul.f32 %v838, 0.01
      %v855 = vmul.f32 %v839, 0.01
      %v856 = vmul.f32 %v840, 0.01
      %v857 = vmul.f32 %v841, 0.01
      %v858 = vmul.f32 %v842, 0.01
      %v859 = vmul.f32 %v843, 0.01
      %v860 = vmul.f32 %v844, 0.01
      %v861 = vsel %vm845, %v837, %v853
      %v862 = vsel %vm846, %v838, %v854
      %v863 = vsel %vm847, %v839, %v855
      %v864 = vsel %vm848, %v840, %v856
      %v865 = vsel %vm849, %v841, %v857
      %v866 = vsel %vm850, %v842, %v858
      %v867 = vsel %vm851, %v843, %v859
      %v868 = vsel %vm852, %v844, %v860
      %vm869 = vcmask 64512
      %870 = vst.msk [vmem:[%s170] sm:$0xff] %vm869, %v861
      %871 = vst.msk [vmem:[%s170 + $0x8] sm:$0xff] %vm869, %v862
      %872 = vst.msk [vmem:[%s170 + $0x10] sm:$0xff] %vm869, %v863
      %873 = vst.msk [vmem:[%s170 + $0x18] sm:$0xff] %vm869, %v864
      %874 = vst.msk [vmem:[%s170 + $0x20] sm:$0xff] %vm869, %v865
      %875 = vst.msk [vmem:[%s170 + $0x28] sm:$0xff] %vm869, %v866
      %876 = vst.msk [vmem:[%s170 + $0x30] sm:$0xff] %vm869, %v867
      %877 = vst.msk [vmem:[%s170 + $0x38] sm:$0xff] %vm869, %v868
      %p878 = scmp.lt.s32.totalorder %s14, 1
      %s879 = scalar_select %p878, %s14, 1
      %s880 = smul.addr %s879, 8
      %s881 = smul.addr %s880, 8
      %s882 = scalar_lea.vmem %s3, %s881
      // Predicated region
      $region33: #{forward.6} parent=31 // pred_check
        %p883 = pneg %p100
      $region34: #{forward.6} parent=31 // pred_check_branch
        %885 = sbr.rel (%p883) target = $region36
      $region35: #{forward.6} parent=31 // pred_region
        _
      $region36: #{forward.6} parent=31 // pred_fallthru
        _
    $region32: #{forward.6} parent=5 // pred_fallthru
      _
    %p886 = scmp.le.s32.totalorder 2, %s9
    // Predicated region
    $region37: #{forward.6} parent=5 // pred_check
      %p887 = pneg %p886
    $region38: #{forward.6} parent=5 // pred_check_branch
      %889 = sbr.rel (%p887) target = $region40
    $region39: #{forward.6} parent=5 // pred_region
      %s890 = ssub.s32 %s9, 2
      // Predicated region
      $region41: #{forward.6} parent=39 // pred_check
        %p891 = pneg %p106
      $region42: #{forward.6} parent=39 // pred_check_branch
        %893 = sbr.rel (%p891) target = $region44
      $region43: #{forward.6} parent=39 // pred_region
        %p894 = scmp.lt.s32.totalorder %s15, 1
        %s895 = scalar_select %p894, %s15, 1
        %s896 = smul.addr %s895, 8
        %s897 = smul.addr %s896, 8
        %s898 = scalar_lea.vmem %s3, %s897
      $region44: #{forward.6} parent=39 // pred_fallthru
        _
    $region40: #{forward.6} parent=5 // pred_fallthru
      _
  $region6: #{forward.6} parent=0 // loop_footer
    %s13 = sadd.s32 1, %s9
  $region7: #{forward.6} parent=0 // loop_footer_branch
    %8 = sbr.rel target = $region3
  $region8: #{forward.6} parent=0 // loop_exit
    _

// kernel: forward.7
$region0: #{forward.7}
  #allocation0 [shape = 'u32[]', space=smem, size = 0x4, offset = 0x4, fixed_abs, tag = 'smem constant byte address 0x4 - core index']
  #allocation1 [shape = 'u32[72,128]{1,0:T(1,128)}', space=vmem, size = 0x9000, scoped, tag = 'internal scratch']
  %s0 = inlined_call_operand.vmem [shape: f32[2,20,5,8], index: 0, kind: input, shape index: {}]
  %s1 = inlined_call_operand.vmem [shape: bf16[9,8,16], index: 1, kind: input, shape index: {}]
  %s2 = inlined_call_operand.vmem [shape: f32[1,16], index: 2, kind: input, shape index: {}]
  %s3 = inlined_call_operand.vmem [shape: f32[2,16,16], index: 3, kind: output, shape index: {}]
  %s4 = sld [smem:[#allocation0]]
  $region45: #{forward.7} parent=0
    _
  %s6 = ssub.s32 1, %s4
  %s7 = scalar_select 0, %s6, %s4
  loop: start=0, step=1, limit=4
  $region2: #{forward.7} parent=0 // loop_pre_header
    _
  $region3: #{forward.7} parent=0 // loop_header
    %s9 = sphi 0, %s13
    %p10 = scmp.ge.s32.totalorder %s9, 4
    %s19 = sphi 0, %s21
    %s22 = sphi 0, %s19
    %s23 = sphi 0, %s22
    %s39 = sphi 0, %s23
    %s43 = sphi 0, %s43
    %s45 = sphi 0, %s43
    %s46 = sphi 0, %s45
    %s60 = sphi 0, %s46
    %s64 = sphi 0, %s64
    %s66 = sphi 0, %s64
    %s67 = sphi 0, %s66
    %s81 = sphi 0, %s67
    %s87 = sphi 0, %s89
    %s90 = sphi 0, %s87
    %s91 = sphi 0, %s90
    %s107 = sphi 0, %s91
  $region4: #{forward.7} parent=0 // loop_header_branch
    %12 = sbr.rel (%p10) target = $region8
  $region5: #{forward.7} parent=0 // loop_body
    %s14 = ssub.s32 %s9, 1
    %s15 = ssub.s32 %s9, 2
    %s16 = sadd.s32 %s9, 1
    %s17 = ssub.s32 %s9, %s16
    %p18 = scmp.eq.s32.totalorder %s17, 0
    %s20 = sadd.s32 %s19, 1
    %s21 = scalar_select %p18, %s19, %s20
    %p24 = pneg %p18
    %p25 = scmp.eq.s32.totalorder %s9, 1
    %p26 = por %p24, %p25
    %p27 = scmp.ne.s32.totalorder %s19, %s22
    %p28 = scmp.eq.s32.totalorder %s9, 0
    %p29 = por %p27, %p28
    %p30 = scmp.ne.s32.totalorder %s19, %s22
    %p31 = scmp.eq.s32.totalorder %s14, 1
    %p32 = por %p30, %p31
    %p33 = scmp.ne.s32.totalorder %s22, %s23
    %p34 = scmp.eq.s32.totalorder %s14, 0
    %p35 = por %p33, %p34
    %p36 = scmp.ne.s32.totalorder %s22, %s23
    %p37 = scmp.eq.s32.totalorder %s15, 1
    %p38 = por %p36, %p37
    %p40 = scmp.ne.s32.totalorder %s23, %s39
    %p41 = scmp.eq.s32.totalorder %s15, 0
    %p42 = por %p40, %p41
    %s44 = sadd.s32 %s43, 1
    %p47 = scmp.eq.s32.totalorder %s9, 1
    %p48 = scmp.ne.s32.totalorder %s43, %s45
    %p49 = scmp.eq.s32.totalorder %s9, 0
    %p50 = por %p48, %p49
    %p51 = scmp.ne.s32.totalorder %s43, %s45
    %p52 = scmp.eq.s32.totalorder %s14, 1
    %p53 = por %p51, %p52
    %p54 = scmp.ne.s32.totalorder %s45, %s46
    %p55 = scmp.eq.s32.totalorder %s14, 0
    %p56 = por %p54, %p55
    %p57 = scmp.ne.s32.totalorder %s45, %s46
    %p58 = scmp.eq.s32.totalorder %s15, 1
    %p59 = por %p57, %p58
    %p61 = scmp.ne.s32.totalorder %s46, %s60
    %p62 = scmp.eq.s32.totalorder %s15, 0
    %p63 = por %p61, %p62
    %s65 = sadd.s32 %s64, 1
    %p68 = scmp.eq.s32.totalorder %s9, 1
    %p69 = scmp.ne.s32.totalorder %s64, %s66
    %p70 = scmp.eq.s32.totalorder %s9, 0
    %p71 = por %p69, %p70
    %p72 = scmp.ne.s32.totalorder %s64, %s66
    %p73 = scmp.eq.s32.totalorder %s14, 1
    %p74 = por %p72, %p73
    %p75 = scmp.ne.s32.totalorder %s66, %s67
    %p76 = scmp.eq.s32.totalorder %s14, 0
    %p77 = por %p75, %p76
    %p78 = scmp.ne.s32.totalorder %s66, %s67
    %p79 = scmp.eq.s32.totalorder %s15, 1
    %p80 = por %p78, %p79
    %p82 = scmp.ne.s32.totalorder %s67, %s81
    %p83 = scmp.eq.s32.totalorder %s15, 0
    %p84 = por %p82, %p83
    %s85 = ssub.s32 %s9, %s16
    %p86 = scmp.eq.s32.totalorder %s85, 0
    %s88 = sadd.s32 %s87, 1
    %s89 = scalar_select %p86, %s87, %s88
    %p92 = pneg %p86
    %p93 = scmp.eq.s32.totalorder %s9, 1
    %p94 = por %p92, %p93
    %p95 = scmp.ne.s32.totalorder %s87, %s90
    %p96 = scmp.eq.s32.totalorder %s9, 0
    %p97 = por %p95, %p96
    %p98 = scmp.ne.s32.totalorder %s87, %s90
    %p99 = scmp.eq.s32.totalorder %s14, 1
    %p100 = por %p98, %p99
    %p101 = scmp.ne.s32.totalorder %s90, %s91
    %p102 = scmp.eq.s32.totalorder %s14, 0
    %p103 = por %p101, %p102
    %p104 = scmp.ne.s32.totalorder %s90, %s91
    %p105 = scmp.eq.s32.totalorder %s15, 1
    %p106 = por %p104, %p105
    %p108 = scmp.ne.s32.totalorder %s91, %s107
    %p109 = scmp.eq.s32.totalorder %s15, 0
    %p110 = por %p108, %p109
    %p111 = scmp.le.s32.totalorder 1, %s9
    %p112 = scmp.lt.s32.totalorder %s9, 3
    %p113 = pnand %p111, %p112
    %p114 = pneg %p113
    // Predicated region
    $region9: #{forward.7} parent=5 // pred_check
      _
    $region10: #{forward.7} parent=5 // pred_check_branch
      %116 = sbr.rel (%p113) target = $region12
    $region11: #{forward.7} parent=5 // pred_region
      %s117 = ssub.s32 %s9, 1
      // Predicated region
      $region13: #{forward.7} parent=11 // pred_check
        %p118 = pneg %p56
      $region14: #{forward.7} parent=11 // pred_check_branch
        %120 = sbr.rel (%p118) target = $region16
      $region15: #{forward.7} parent=11 // pred_region
        _
      $region16: #{forward.7} parent=11 // pred_fallthru
        _
      // Predicated region
      $region17: #{forward.7} parent=11 // pred_check
        %p121 = pneg %p77
      $region18: #{forward.7} parent=11 // pred_check_branch
        %123 = sbr.rel (%p121) target = $region20
      $region19: #{forward.7} parent=11 // pred_region
        _
      $region20: #{forward.7} parent=11 // pred_fallthru
        _
    $region12: #{forward.7} parent=5 // pred_fallthru
      _
    %p124 = scmp.lt.s32.totalorder %s9, 2
    // Predicated region
    $region21: #{forward.7} parent=5 // pred_check
      %p125 = pneg %p124
    $region22: #{forward.7} parent=5 // pred_check_branch
      %127 = sbr.rel (%p125) target = $region24
    $region23: #{forward.7} parent=5 // pred_region
      // Predicated region
      $region25: #{forward.7} parent=23 // pred_check
        %p128 = pneg %p29
      $region26: #{forward.7} parent=23 // pred_check_branch
        %130 = sbr.rel (%p128) target = $region28
      $region27: #{forward.7} parent=23 // pred_region
        %p131 = scmp.lt.s32.totalorder %s9, 1
        %s132 = scalar_select %p131, %s9, 1
        %s133 = smul.addr %s132, 20
        %s134 = smul.addr %s133, 8
        %s135 = scalar_lea.vmem %s0, %s134
      $region28: #{forward.7} parent=23 // pred_fallthru
        _
    $region24: #{forward.7} parent=5 // pred_fallthru
      _
    %p136 = scmp.le.s32.totalorder 1, %s9
    %p137 = scmp.lt.s32.totalorder %s9, 3
    %p138 = pnand %p136, %p137
    %p139 = pneg %p138
    // Predicated region
    $region29: #{forward.7} parent=5 // pred_check
      _
    $region30: #{forward.7} parent=5 // pred_check_branch
      %141 = sbr.rel (%p138) target = $region32
    $region31: #{forward.7} parent=5 // pred_region
      %s142 = ssub.s32 %s9, 1
      %p143 = scmp.lt.s32.totalorder %s14, 1
      %s144 = scalar_select %p143, %s14, 1
      %s145 = smul.addr %s144, 20
      %s146 = smul.addr %s145, 8
      %s147 = scalar_lea.vmem %s0, %s146
      %p148 = pneg %p35
      %p149 = pneg %p32
      %p150 = pneg %p56
      %p151 = pneg %p53
      %p152 = pneg %p77
      %p153 = pneg %p74
      %p154 = pneg %p103
      %p155 = pneg %p100
      %p156 = scmp.lt.s32.totalorder %s14, 1
      %s157 = scalar_select %p156, %s14, 1
      %s158 = smul.addr %s157, 2
      %s159 = smul.addr %s158, 8
      %s160 = scalar_lea.vmem %s3, %s159
      %p161 = scmp.lt.s32.totalorder %s14, 1
      %s162 = scalar_select %p161, %s14, 1
      %s163 = smul.addr %s162, 20
      %s164 = smul.addr %s163, 8
      %s165 = scalar_lea.vmem %s0, %s164
      %p166 = scmp.lt.s32.totalorder %s14, 1
      %s167 = scalar_select %p166, %s14, 1
      %s168 = smul.addr %s167, 2
      %s169 = smul.addr %s168, 8
      %s170 = scalar_lea.vmem %s3, %s169
      %v172 = vld [vmem:[%s165] sm:$0x1f]
      %v173 = vld [vmem:[%s165 + $0x8] sm:$0x1f]
      %v174 = vld [vmem:[%s165 + $0x10] sm:$0x1f]
      %v175 = vld [vmem:[%s165 + $0x18] sm:$0x1f]
      %v176 = vld [vmem:[%s165 + $0x20] sm:$0x1f]
      %v177 = vld [vmem:[%s165 + $0x28] sm:$0x1f]
      %v178 = vld [vmem:[%s165 + $0x30] sm:$0x1f]
      %v179 = vld [vmem:[%s165 + $0x38] sm:$0x1f]
      %v180 = vld [vmem:[%s165 + $0x40] sm:$0x1f]
      %v181 = vld [vmem:[%s165 + $0x48] sm:$0x1f]
      %v182 = vld [vmem:[%s165 + $0x50] sm:$0x1f]
      %v183 = vld [vmem:[%s165 + $0x58] sm:$0x1f]
      %v184 = vld [vmem:[%s165 + $0x60] sm:$0x1f]
      %v185 = vld [vmem:[%s165 + $0x68] sm:$0x1f]
      %v186 = vld [vmem:[%s165 + $0x78] sm:$0x1f]
      %v187 = vld [vmem:[%s165 + $0x80] sm:$0x1f]
      %v188 = vld [vmem:[%s165 + $0x88] sm:$0x1f]
      %v189 = vld [vmem:[%s165 + $0x90] sm:$0x1f]
      %194 = vst [vmem:[#allocation1] ss:$2 sm:$0xff] %v172
      %s195 = scalar_lea.vmem [#allocation1], 1
      %196 = vst [vmem:[%s195] ss:$2 sm:$0xff] %v173
      %s197 = scalar_lea.vmem [#allocation1], 16
      %198 = vst [vmem:[%s197] ss:$2 sm:$0xff] %v174
      %s199 = scalar_lea.vmem [#allocation1], 17
      %200 = vst [vmem:[%s199] ss:$2 sm:$0xff] %v175
      %v201 = vld.sshfl [vmem:[#allocation1] sm:$0xff pattern:$0x75316420]
      %v202 = vld.sshfl [vmem:[#allocation1 + $0x10] sm:$0xff pattern:$0x75316420]
      %v205 = vpack.c.bf16 %v202, %v201
      %v206 = vld [vmem:[%s1] sm:$0xf]
      %211 = vst [vmem:[#allocation1] ss:$2 sm:$0xff] %v177
      %s212 = scalar_lea.vmem [#allocation1], 1
      %213 = vst [vmem:[%s212] ss:$2 sm:$0xff] %v178
      %s214 = scalar_lea.vmem [#allocation1], 16
      %215 = vst [vmem:[%s214] ss:$2 sm:$0xff] %v179
      %s216 = scalar_lea.vmem [#allocation1], 17
      %217 = vst [vmem:[%s216] ss:$2 sm:$0xff] %v180
      %v218 = vld.sshfl [vmem:[#allocation1] sm:$0xff pattern:$0x75316420]
      %v219 = vld.sshfl [vmem:[#allocation1 + $0x10] sm:$0xff pattern:$0x75316420]
      %v222 = vpack.c.bf16 %v219, %v218
      %s223 = scalar_lea.vmem %s1, 4
      %v224 = vld [vmem:[%s223] sm:$0xf]
      %vm225 = vcmask 64512
      %v227 = vsel %vm225, %v222, 0
      %vm229 = vcmask 1043456
      %v231 = vsel %vm229, %v224, 0
      %233 = vmatpush.bf16.msra.mxu0 0
      %234 = vmatpush.bf16.msra.mxu0 0
      %235 = vmatpush.bf16.msra.mxu0 0
      %236 = vmatpush.bf16.msra.mxu0 0
      %237 = vmatpush.bf16.msra.mxu0 0
      %238 = vmatpush.bf16.msra.mxu0 0
      %239 = vmatpush.bf16.msra.mxu0 0
      %240 = vmatpush.bf16.msra.mxu0 %v231
      %241 = vmatmul.bf16.gmra.mxu0 %v227
      %v242 = vpop.f32.mrf.mxu0
      %v243 = vadd.f32 0.0, %v242
      %v244 = vpop.f32.mrf.mxu0
      %v245 = vadd.f32 0.0, %v244
      %246 = vdwg.mxu0
      %v248 = vsel %vm225, %v205, 0
      %v251 = vsel %vm229, %v206, 0
      %253 = vmatpush.bf16.msra.mxu0 0
      %254 = vmatpush.bf16.msra.mxu0 0
      %255 = vmatpush.bf16.msra.mxu0 0
      %256 = vmatpush.bf16.msra.mxu0 0
      %257 = vmatpush.bf16.msra.mxu0 0
      %258 = vmatpush.bf16.msra.mxu0 0
      %259 = vmatpush.bf16.msra.mxu0 0
      %260 = vmatpush.bf16.msra.mxu0 %v251
      %261 = vmatmul.bf16.gmra.mxu0 %v248
      %v262 = vpop.f32.mrf.mxu0
      %v263 = vadd.f32 %v243, %v262
      %v264 = vpop.f32.mrf.mxu0
      %v265 = vadd.f32 %v245, %v264
      %266 = vdwg.mxu0
      %v267 = vrot.slane %v172, 4
      %v268 = vrot.slane %v173, 4
      %v269 = vrot.slane %v174, 4
      %v270 = vrot.slane %v175, 4
      %vm271 = vcmask 1042432
      %vm272 = vcmask 1046532
      %vm273 = vmor %vm271, %vm272
      %v274 = vrot.slane %v172, 5
      %v275 = vrot.slane %v274, 4
      %v276 = vrot.slane %v267, 5
      %v277 = vsel %vm273, %v275, %v276
      %v278 = vrot.slane %v173, 5
      %v279 = vrot.slane %v278, 4
      %v280 = vrot.slane %v268, 5
      %v281 = vsel %vm273, %v279, %v280
      %v282 = vrot.slane %v174, 5
      %v283 = vrot.slane %v282, 4
      %v284 = vrot.slane %v269, 5
      %v285 = vsel %vm273, %v283, %v284
      %v286 = vrot.slane %v175, 5
      %v287 = vrot.slane %v286, 4
      %v288 = vrot.slane %v270, 5
      %v289 = vsel %vm273, %v287, %v288
      %290 = vst [vmem:[#allocation1] ss:$2 sm:$0xff] %v277
      %s291 = scalar_lea.vmem [#allocation1], 1
      %292 = vst [vmem:[%s291] ss:$2 sm:$0xff] %v281
      %s293 = scalar_lea.vmem [#allocation1], 16
      %294 = vst [vmem:[%s293] ss:$2 sm:$0xff] %v285
      %s295 = scalar_lea.vmem [#allocation1], 17
      %296 = vst [vmem:[%s295] ss:$2 sm:$0xff] %v289
      %v297 = vld.sshfl [vmem:[#allocation1] sm:$0xff pattern:$0x75316420]
      %v298 = vld.sshfl [vmem:[#allocation1 + $0x10] sm:$0xff pattern:$0x75316420]
      %v301 = vpack.c.bf16 %v298, %v297
      %s302 = scalar_lea.vmem %s1, 8
      %v303 = vld [vmem:[%s302] sm:$0xf]
      %v305 = vsel %vm225, %v301, 0
      %v308 = vsel %vm229, %v303, 0
      %310 = vmatpush.bf16.msra.mxu0 0
      %311 = vmatpush.bf16.msra.mxu0 0
      %312 = vmatpush.bf16.msra.mxu0 0
      %313 = vmatpush.bf16.msra.mxu0 0
      %314 = vmatpush.bf16.msra.mxu0 0
      %315 = vmatpush.bf16.msra.mxu0 0
      %316 = vmatpush.bf16.msra.mxu0 0
      %317 = vmatpush.bf16.msra.mxu0 %v308
      %318 = vmatmul.bf16.gmra.mxu0 %v305
      %v319 = vpop.f32.mrf.mxu0
      %v320 = vadd.f32 0.0, %v319
      %v321 = vpop.f32.mrf.mxu0
      %v322 = vadd.f32 0.0, %v321
      %323 = vdwg.mxu0
      %v324 = vadd.f32 %v263, %v320
      %v325 = vadd.f32 %v265, %v322
      %330 = vst [vmem:[#allocation1] ss:$2 sm:$0xff] %v182
      %s331 = scalar_lea.vmem [#allocation1], 1
      %332 = vst [vmem:[%s331] ss:$2 sm:$0xff] %v183
      %s333 = scalar_lea.vmem [#allocation1], 16
      %334 = vst [vmem:[%s333] ss:$2 sm:$0xff] %v184
      %s335 = scalar_lea.vmem [#allocation1], 17
      %336 = vst [vmem:[%s335] ss:$2 sm:$0xff] %v185
      %v337 = vld.sshfl [vmem:[#allocation1] sm:$0xff pattern:$0x75316420]
      %v338 = vld.sshfl [vmem:[#allocation1 + $0x10] sm:$0xff pattern:$0x75316420]
      %v341 = vpack.c.bf16 %v338, %v337
      %s342 = scalar_lea.vmem %s1, 12
      %v343 = vld [vmem:[%s342] sm:$0xf]
      %v345 = vsel %vm225, %v341, 0
      %v348 = vsel %vm229, %v343, 0
      %350 = vmatpush.bf16.msra.mxu0 0
      %351 = vmatpush.bf16.msra.mxu0 0
      %352 = vmatpush.bf16.msra.mxu0 0
      %353 = vmatpush.bf16.msra.mxu0 0
      %354 = vmatpush.bf16.msra.mxu0 0
      %355 = vmatpush.bf16.msra.mxu0 0
      %356 = vmatpush.bf16.msra.mxu0 0
      %357 = vmatpush.bf16.msra.mxu0 %v348
      %358 = vmatmul.bf16.gmra.mxu0 %v345
      %v359 = vpop.f32.mrf.mxu0
      %v360 = vadd.f32 0.0, %v359
      %v361 = vpop.f32.mrf.mxu0
      %v362 = vadd.f32 0.0, %v361
      %363 = vdwg.mxu0
      %v364 = vadd.f32 %v324, %v360
      %v365 = vadd.f32 %v325, %v362
      %370 = vst [vmem:[#allocation1] ss:$2 sm:$0xff] %v186
      %s371 = scalar_lea.vmem [#allocation1], 1
      %372 = vst [vmem:[%s371] ss:$2 sm:$0xff] %v187
      %s373 = scalar_lea.vmem [#allocation1], 16
      %374 = vst [vmem:[%s373] ss:$2 sm:$0xff] %v188
      %s375 = scalar_lea.vmem [#allocation1], 17
      %376 = vst [vmem:[%s375] ss:$2 sm:$0xff] %v189
      %v377 = vld.sshfl [vmem:[#allocation1] sm:$0xff pattern:$0x75316420]
      %v378 = vld.sshfl [vmem:[#allocation1 + $0x10] sm:$0xff pattern:$0x75316420]
      %v381 = vpack.c.bf16 %v378, %v377
      %s382 = scalar_lea.vmem %s1, 16
      %v383 = vld [vmem:[%s382] sm:$0xf]
      %v385 = vsel %vm225, %v381, 0
      %v388 = vsel %vm229, %v383, 0
      %390 = vmatpush.bf16.msra.mxu0 0
      %391 = vmatpush.bf16.msra.mxu0 0
      %392 = vmatpush.bf16.msra.mxu0 0
      %393 = vmatpush.bf16.msra.mxu0 0
      %394 = vmatpush.bf16.msra.mxu0 0
      %395 = vmatpush.bf16.msra.mxu0 0
      %396 = vmatpush.bf16.msra.mxu0 0
      %397 = vmatpush.bf16.msra.mxu0 %v388
      %398 = vmatmul.bf16.gmra.mxu0 %v385
      %v399 = vpop.f32.mrf.mxu0
      %v400 = vadd.f32 0.0, %v399
      %v401 = vpop.f32.mrf.mxu0
      %v402 = vadd.f32 0.0, %v401
      %403 = vdwg.mxu0
      %v404 = vadd.f32 %v364, %v400
      %v405 = vadd.f32 %v365, %v402
      %v406 = vrot.slane %v182, 4
      %v407 = vrot.slane %v183, 4
      %v408 = vrot.slane %v184, 4
      %v409 = vrot.slane %v185, 4
      %v410 = vrot.slane %v182, 5
      %v411 = vrot.slane %v410, 4
      %v412 = vrot.slane %v406, 5
      %v413 = vsel %vm273, %v411, %v412
      %v414 = vrot.slane %v183, 5
      %v415 = vrot.slane %v414, 4
      %v416 = vrot.slane %v407, 5
      %v417 = vsel %vm273, %v415, %v416
      %v418 = vrot.slane %v184, 5
      %v419 = vrot.slane %v418, 4
      %v420 = vrot.slane %v408, 5
      %v421 = vsel %vm273, %v419, %v420
      %v422 = vrot.slane %v185, 5
      %v423 = vrot.slane %v422, 4
      %v424 = vrot.slane %v409, 5
      %v425 = vsel %vm273, %v423, %v424
      %426 = vst [vmem:[#allocation1] ss:$2 sm:$0xff] %v413
      %s427 = scalar_lea.vmem [#allocation1], 1
      %428 = vst [vmem:[%s427] ss:$2 sm:$0xff] %v417
      %s429 = scalar_lea.vmem [#allocation1], 16
      %430 = vst [vmem:[%s429] ss:$2 sm:$0xff] %v421
      %s431 = scalar_lea.vmem [#allocation1], 17
      %432 = vst [vmem:[%s431] ss:$2 sm:$0xff] %v425
      %v433 = vld.sshfl [vmem:[#allocation1] sm:$0xff pattern:$0x75316420]
      %v434 = vld.sshfl [vmem:[#allocation1 + $0x10] sm:$0xff pattern:$0x75316420]
      %v437 = vpack.c.bf16 %v434, %v433
      %s438 = scalar_lea.vmem %s1, 20
      %v439 = vld [vmem:[%s438] sm:$0xf]
      %v441 = vsel %vm225, %v437, 0
      %v444 = vsel %vm229, %v439, 0
      %446 = vmatpush.bf16.msra.mxu0 0
      %447 = vmatpush.bf16.msra.mxu0 0
      %448 = vmatpush.bf16.msra.mxu0 0
      %449 = vmatpush.bf16.msra.mxu0 0
      %450 = vmatpush.bf16.msra.mxu0 0
      %451 = vmatpush.bf16.msra.mxu0 0
      %452 = vmatpush.bf16.msra.mxu0 0
      %453 = vmatpush.bf16.msra.mxu0 %v444
      %454 = vmatmul.bf16.gmra.mxu0 %v441
      %v455 = vpop.f32.mrf.mxu0
      %v456 = vadd.f32 0.0, %v455
      %v457 = vpop.f32.mrf.mxu0
      %v458 = vadd.f32 0.0, %v457
      %459 = vdwg.mxu0
      %v460 = vadd.f32 %v404, %v456
      %v461 = vadd.f32 %v405, %v458
      %463 = vst [vmem:[#allocation1] ss:$2 sm:$0xff] %v173
      %s464 = scalar_lea.vmem [#allocation1], 1
      %465 = vst [vmem:[%s464] ss:$2 sm:$0xff] %v174
      %s466 = scalar_lea.vmem [#allocation1], 16
      %467 = vst [vmem:[%s466] ss:$2 sm:$0xff] %v175
      %s468 = scalar_lea.vmem [#allocation1], 17
      %469 = vst [vmem:[%s468] ss:$2 sm:$0xff] %v176
      %v470 = vld.sshfl [vmem:[#allocation1] sm:$0xff pattern:$0x75316420]
      %v471 = vld.sshfl [vmem:[#allocation1 + $0x10] sm:$0xff pattern:$0x75316420]
      %v474 = vpack.c.bf16 %v471, %v470
      %s475 = scalar_lea.vmem %s1, 24
      %v476 = vld [vmem:[%s475] sm:$0xf]
      %v478 = vsel %vm225, %v474, 0
      %v481 = vsel %vm229, %v476, 0
      %483 = vmatpush.bf16.msra.mxu0 0
      %484 = vmatpush.bf16.msra.mxu0 0
      %485 = vmatpush.bf16.msra.mxu0 0
      %486 = vmatpush.bf16.msra.mxu0 0
      %487 = vmatpush.bf16.msra.mxu0 0
      %488 = vmatpush.bf16.msra.mxu0 0
      %489 = vmatpush.bf16.msra.mxu0 0
      %490 = vmatpush.bf16.msra.mxu0 %v481
      %491 = vmatmul.bf16.gmra.mxu0 %v478
      %v492 = vpop.f32.mrf.mxu0
      %v493 = vadd.f32 0.0, %v492
      %v494 = vpop.f32.mrf.mxu0
      %v495 = vadd.f32 0.0, %v494
      %496 = vdwg.mxu0
      %v497 = vadd.f32 %v460, %v493
      %v498 = vadd.f32 %v461, %v495
      %500 = vst [vmem:[#allocation1] ss:$2 sm:$0xff] %v178
      %s501 = scalar_lea.vmem [#allocation1], 1
      %502 = vst [vmem:[%s501] ss:$2 sm:$0xff] %v179
      %s503 = scalar_lea.vmem [#allocation1], 16
      %504 = vst [vmem:[%s503] ss:$2 sm:$0xff] %v180
      %s505 = scalar_lea.vmem [#allocation1], 17
      %506 = vst [vmem:[%s505] ss:$2 sm:$0xff] %v181
      %v507 = vld.sshfl [vmem:[#allocation1] sm:$0xff pattern:$0x75316420]
      %v508 = vld.sshfl [vmem:[#allocation1 + $0x10] sm:$0xff pattern:$0x75316420]
      %v511 = vpack.c.bf16 %v508, %v507
      %s512 = scalar_lea.vmem %s1, 28
      %v513 = vld [vmem:[%s512] sm:$0xf]
      %v515 = vsel %vm225, %v511, 0
      %v518 = vsel %vm229, %v513, 0
      %520 = vmatpush.bf16.msra.mxu0 0
      %521 = vmatpush.bf16.msra.mxu0 0
      %522 = vmatpush.bf16.msra.mxu0 0
      %523 = vmatpush.bf16.msra.mxu0 0
      %524 = vmatpush.bf16.msra.mxu0 0
      %525 = vmatpush.bf16.msra.mxu0 0
      %526 = vmatpush.bf16.msra.mxu0 0
      %527 = vmatpush.bf16.msra.mxu0 %v518
      %528 = vmatmul.bf16.gmra.mxu0 %v515
      %v529 = vpop.f32.mrf.mxu0
      %v530 = vadd.f32 0.0, %v529
      %v531 = vpop.f32.mrf.mxu0
      %v532 = vadd.f32 0.0, %v531
      %533 = vdwg.mxu0
      %v534 = vadd.f32 %v497, %v530
      %v535 = vadd.f32 %v498, %v532
      %v536 = vrot.slane %v176, 4
      %v537 = vrot.slane %v176, 5
      %v538 = vrot.slane %v537, 4
      %v539 = vrot.slane %v536, 5
      %v540 = vsel %vm273, %v538, %v539
      %541 = vst [vmem:[#allocation1] ss:$2 sm:$0xff] %v281
      %s542 = scalar_lea.vmem [#allocation1], 1
      %543 = vst [vmem:[%s542] ss:$2 sm:$0xff] %v285
      %s544 = scalar_lea.vmem [#allocation1], 16
      %545 = vst [vmem:[%s544] ss:$2 sm:$0xff] %v289
      %s546 = scalar_lea.vmem [#allocation1], 17
      %547 = vst [vmem:[%s546] ss:$2 sm:$0xff] %v540
      %v548 = vld.sshfl [vmem:[#allocation1] sm:$0xff pattern:$0x75316420]
      %v549 = vld.sshfl [vmem:[#allocation1 + $0x10] sm:$0xff pattern:$0x75316420]
      %v552 = vpack.c.bf16 %v549, %v548
      %s553 = scalar_lea.vmem %s1, 32
      %v554 = vld [vmem:[%s553] sm:$0xf]
      %v556 = vsel %vm225, %v552, 0
      %v559 = vsel %vm229, %v554, 0
      %561 = vmatpush.bf16.msra.mxu0 0
      %562 = vmatpush.bf16.msra.mxu0 0
      %563 = vmatpush.bf16.msra.mxu0 0
      %564 = vmatpush.bf16.msra.mxu0 0
      %565 = vmatpush.bf16.msra.mxu0 0
      %566 = vmatpush.bf16.msra.mxu0 0
      %567 = vmatpush.bf16.msra.mxu0 0
      %568 = vmatpush.bf16.msra.mxu0 %v559
      %569 = vmatmul.bf16.gmra.mxu0 %v556
      %v570 = vpop.f32.mrf.mxu0
      %v571 = vadd.f32 0.0, %v570
      %v572 = vpop.f32.mrf.mxu0
      %v573 = vadd.f32 0.0, %v572
      %574 = vdwg.mxu0
      %v575 = vadd.f32 %v534, %v571
      %v576 = vadd.f32 %v535, %v573
      %v577 = vld [vmem:[%s2] sm:$0x1]
      %v579 = vperm.slane %v577, 0
      %v581 = vadd.f32 %v575, %v579
      %v582 = vadd.f32 %v576, %v579
      %vm583 = vcmp.ge.f32.partialorder %v581, 0.0
      %vm584 = vcmp.ge.f32.partialorder %v582, 0.0
      %v585 = vmul.f32 %v581, 0.01
      %v586 = vmul.f32 %v582, 0.01
      %v587 = vsel %vm583, %v581, %v585
      %v588 = vsel %vm584, %v582, %v586
      %vm589 = vcmask 130048
      %590 = vst.msk [vmem:[%s170] sm:$0xff] %vm589, %v587
      %591 = vst.msk [vmem:[%s170 + $0x8] sm:$0xff] %vm589, %v588
      %p592 = scmp.lt.s32.totalorder %s14, 1
      %s593 = scalar_select %p592, %s14, 1
      %s594 = smul.addr %s593, 2
      %s595 = smul.addr %s594, 8
      %s596 = scalar_lea.vmem %s3, %s595
      // Predicated region
      $region33: #{forward.7} parent=31 // pred_check
        %p597 = pneg %p100
      $region34: #{forward.7} parent=31 // pred_check_branch
        %599 = sbr.rel (%p597) target = $region36
      $region35: #{forward.7} parent=31 // pred_region
        _
      $region36: #{forward.7} parent=31 // pred_fallthru
        _
    $region32: #{forward.7} parent=5 // pred_fallthru
      _
    %p600 = scmp.le.s32.totalorder 2, %s9
    // Predicated region
    $region37: #{forward.7} parent=5 // pred_check
      %p601 = pneg %p600
    $region38: #{forward.7} parent=5 // pred_check_branch
      %603 = sbr.rel (%p601) target = $region40
    $region39: #{forward.7} parent=5 // pred_region
      %s604 = ssub.s32 %s9, 2
      // Predicated region
      $region41: #{forward.7} parent=39 // pred_check
        %p605 = pneg %p106
      $region42: #{forward.7} parent=39 // pred_check_branch
        %607 = sbr.rel (%p605) target = $region44
      $region43: #{forward.7} parent=39 // pred_region
        %p608 = scmp.lt.s32.totalorder %s15, 1
        %s609 = scalar_select %p608, %s15, 1
        %s610 = smul.addr %s609, 2
        %s611 = smul.addr %s610, 8
        %s612 = scalar_lea.vmem %s3, %s611
      $region44: #{forward.7} parent=39 // pred_fallthru
        _
    $region40: #{forward.7} parent=5 // pred_fallthru
      _
  $region6: #{forward.7} parent=0 // loop_footer
    %s13 = sadd.s32 1, %s9
  $region7: #{forward.7} parent=0 // loop_footer_branch
    %8 = sbr.rel target = $region3
  $region8: #{forward.7} parent=0 // loop_exit
    _

// kernel: forward.8
$region0: #{forward.8}
  #allocation0 [shape = 'u32[]', space=smem, size = 0x4, offset = 0x4, fixed_abs, tag = 'smem constant byte address 0x4 - core index']
  #allocation1 [shape = 'u32[72,128]{1,0:T(1,128)}', space=vmem, size = 0x9000, scoped, tag = 'internal scratch']
  %s0 = inlined_call_operand.vmem [shape: f32[2,256], index: 0, kind: input, shape index: {}]
  %s1 = inlined_call_operand.vmem [shape: bf16[256,16], index: 1, kind: input, shape index: {}]
  %s2 = inlined_call_operand.vmem [shape: f32[1,16], index: 2, kind: input, shape index: {}]
  %s3 = inlined_call_operand.vmem [shape: f32[2,8], index: 3, kind: input, shape index: {}]
  %s4 = inlined_call_operand.vmem [shape: bf16[8,256], index: 4, kind: input, shape index: {}]
  %s5 = inlined_call_operand.vmem [shape: f32[1,256], index: 5, kind: input, shape index: {}]
  %s6 = inlined_call_operand.hbm [shape: f32[2,8], index: 6, kind: output, shape index: {0}]
  %s7 = inlined_call_operand.hbm [shape: f32[2,8], index: 7, kind: output, shape index: {1}]
  %s8 = inlined_call_operand.hbm [shape: f32[2,8], index: 8, kind: output, shape index: {2}]
  %s9 = inlined_call_operand.vmem [shape: f32[2,256], index: 9, kind: output, shape index: {3}]
  %10 = xla_tuple %s6, %s7, %s8, %s9
  %s11 = sld [smem:[#allocation0]]
  $region58: #{forward.8} parent=0
    _
  %s13 = ssub.s32 1, %s11
  %s14 = scalar_select 0, %s13, %s11
  $region1: #{forward.8} parent=0
    #allocation2 [shape = 'u8[1024]{0}', space=vmem, size = 0x400, scoped, tag = 'output window, operand 0, single buffered']
    #allocation3 [shape = 's32[1]{0}', space=sflag, size = 0x4, scoped, tag = 'scoped memory for forward.8']
    #allocation4 [shape = 'u8[1024]{0}', space=vmem, size = 0x400, scoped, tag = 'output window, operand 1, single buffered']
    #allocation5 [shape = 's32[1]{0}', space=sflag, size = 0x4, scoped, tag = 'scoped memory for forward.8']
    #allocation6 [shape = 'u8[1024]{0}', space=vmem, size = 0x400, scoped, tag = 'output window, operand 2, single buffered']
    %15 = vsyncpa [#allocation3], 0
    %16 = vsyncpa [#allocation5], 0
    // Predicated region
    $region2: #{forward.8} parent=1 // pred_check
      _
    $region3: #{forward.8} parent=1 // pred_check_branch
      %18 = sbr.rel (0) target = $region5
    $region4: #{forward.8} parent=1 // pred_region
      _
    $region5: #{forward.8} parent=1 // pred_fallthru
      _
    // Predicated region
    $region6: #{forward.8} parent=1 // pred_check
      _
    $region7: #{forward.8} parent=1 // pred_check_branch
      %20 = sbr.rel (0) target = $region9
    $region8: #{forward.8} parent=1 // pred_region
      _
    $region9: #{forward.8} parent=1 // pred_fallthru
      _
    // Predicated region
    $region10: #{forward.8} parent=1 // pred_check
      _
    $region11: #{forward.8} parent=1 // pred_check_branch
      %22 = sbr.rel (0) target = $region13
    $region12: #{forward.8} parent=1 // pred_region
      _
    $region13: #{forward.8} parent=1 // pred_fallthru
      _
    // Predicated region
    $region14: #{forward.8} parent=1 // pred_check
      _
    $region15: #{forward.8} parent=1 // pred_check_branch
      %24 = sbr.rel (0) target = $region17
    $region16: #{forward.8} parent=1 // pred_region
      _
    $region17: #{forward.8} parent=1 // pred_fallthru
      _
    // Predicated region
    $region18: #{forward.8} parent=1 // pred_check
      _
    $region19: #{forward.8} parent=1 // pred_check_branch
      %26 = sbr.rel (0) target = $region21
    $region20: #{forward.8} parent=1 // pred_region
      _
    $region21: #{forward.8} parent=1 // pred_fallthru
      _
    // Predicated region
    $region22: #{forward.8} parent=1 // pred_check
      _
    $region23: #{forward.8} parent=1 // pred_check_branch
      %28 = sbr.rel (0) target = $region25
    $region24: #{forward.8} parent=1 // pred_region
      _
    $region25: #{forward.8} parent=1 // pred_fallthru
      _
    %v30 = vld [vmem:[%s0] sm:$0xf]
    %32 = vst [vmem:[#allocation1] ss:$4 sm:$0xff] %v30
    %v33 = vld.sshfl [vmem:[#allocation1] sm:$0xff pattern:$0x73625140]
    %v34 = vld.sshfl [vmem:[#allocation1 + $0x8] sm:$0xff pattern:$0x73625140]
    %v37 = vpack.c.bf16 %v33, %v33
    %v38 = vpack.c.bf16 %v34, %v34
    %v39 = vld [vmem:[%s1] sm:$0xf]
    %v40 = vld [vmem:[%s1 + $0x4] sm:$0xf]
    %v41 = vld [vmem:[%s1 + $0x8] sm:$0xf]
    %v42 = vld [vmem:[%s1 + $0xc] sm:$0xf]
    %v43 = vld [vmem:[%s1 + $0x10] sm:$0xf]
    %v44 = vld [vmem:[%s1 + $0x14] sm:$0xf]
    %v45 = vld [vmem:[%s1 + $0x18] sm:$0xf]
    %v46 = vld [vmem:[%s1 + $0x1c] sm:$0xf]
    %v47 = vld [vmem:[%s1 + $0x20] sm:$0xf]
    %v48 = vld [vmem:[%s1 + $0x24] sm:$0xf]
    %v49 = vld [vmem:[%s1 + $0x28] sm:$0xf]
    %v50 = vld [vmem:[%s1 + $0x2c] sm:$0xf]
    %v51 = vld [vmem:[%s1 + $0x30] sm:$0xf]
    %v52 = vld [vmem:[%s1 + $0x34] sm:$0xf]
    %v53 = vld [vmem:[%s1 + $0x38] sm:$0xf]
    %v54 = vld [vmem:[%s1 + $0x3c] sm:$0xf]
    %v55 = vld [vmem:[%s1 + $0x40] sm:$0xf]
    %v56 = vld [vmem:[%s1 + $0x44] sm:$0xf]
    %v57 = vld [vmem:[%s1 + $0x48] sm:$0xf]
    %v58 = vld [vmem:[%s1 + $0x4c] sm:$0xf]
    %v59 = vld [vmem:[%s1 + $0x50] sm:$0xf]
    %v60 = vld [vmem:[%s1 + $0x54] sm:$0xf]
    %v61 = vld [vmem:[%s1 + $0x58] sm:$0xf]
    %v62 = vld [vmem:[%s1 + $0x5c] sm:$0xf]
    %v63 = vld [vmem:[%s1 + $0x60] sm:$0xf]
    %v64 = vld [vmem:[%s1 + $0x64] sm:$0xf]
    %v65 = vld [vmem:[%s1 + $0x68] sm:$0xf]
    %v66 = vld [vmem:[%s1 + $0x6c] sm:$0xf]
    %v67 = vld [vmem:[%s1 + $0x70] sm:$0xf]
    %v68 = vld [vmem:[%s1 + $0x74] sm:$0xf]
    %v69 = vld [vmem:[%s1 + $0x78] sm:$0xf]
    %v70 = vld [vmem:[%s1 + $0x7c] sm:$0xf]
    %v71 = vld [vmem:[%s2] sm:$0x1]
    %v73 = vperm.slane %v71, 0
    %v107 = vunpack.c.l.b16 %v39
    %v108 = vunpack.c.l.b16 %v40
    %v109 = vunpack.c.l.b16 %v41
    %v110 = vunpack.c.l.b16 %v42
    %v111 = vunpack.c.l.b16 %v43
    %v112 = vunpack.c.l.b16 %v44
    %v113 = vunpack.c.l.b16 %v45
    %v114 = vunpack.c.l.b16 %v46
    %v115 = vunpack.c.l.b16 %v47
    %v116 = vunpack.c.l.b16 %v48
    %v117 = vunpack.c.l.b16 %v49
    %v118 = vunpack.c.l.b16 %v50
    %v119 = vunpack.c.l.b16 %v51
    %v120 = vunpack.c.l.b16 %v52
    %v121 = vunpack.c.l.b16 %v53
    %v122 = vunpack.c.l.b16 %v54
    %v123 = vunpack.c.l.b16 %v55
    %v124 = vunpack.c.l.b16 %v56
    %v125 = vunpack.c.l.b16 %v57
    %v126 = vunpack.c.l.b16 %v58
    %v127 = vunpack.c.l.b16 %v59
    %v128 = vunpack.c.l.b16 %v60
    %v129 = vunpack.c.l.b16 %v61
    %v130 = vunpack.c.l.b16 %v62
    %v131 = vunpack.c.l.b16 %v63
    %v132 = vunpack.c.l.b16 %v64
    %v133 = vunpack.c.l.b16 %v65
    %v134 = vunpack.c.l.b16 %v66
    %v135 = vunpack.c.l.b16 %v67
    %v136 = vunpack.c.l.b16 %v68
    %v137 = vunpack.c.l.b16 %v69
    %v138 = vunpack.c.l.b16 %v70
    %v139 = vpack.c.b16 %v108, %v107
    %v140 = vpack.c.b16 %v110, %v109
    %v141 = vpack.c.b16 %v112, %v111
    %v142 = vpack.c.b16 %v114, %v113
    %v143 = vpack.c.b16 %v116, %v115
    %v144 = vpack.c.b16 %v118, %v117
    %v145 = vpack.c.b16 %v120, %v119
    %v146 = vpack.c.b16 %v122, %v121
    %v147 = vpack.c.b16 %v124, %v123
    %v148 = vpack.c.b16 %v126, %v125
    %v149 = vpack.c.b16 %v128, %v127
    %v150 = vpack.c.b16 %v130, %v129
    %v151 = vpack.c.b16 %v132, %v131
    %v152 = vpack.c.b16 %v134, %v133
    %v153 = vpack.c.b16 %v136, %v135
    %v154 = vpack.c.b16 %v138, %v137
    %171 = vmatpush.bf16.msra.mxu0 %v146
    %172 = vmatpush.bf16.msra.mxu0 %v145
    %173 = vmatpush.bf16.msra.mxu0 %v144
    %174 = vmatpush.bf16.msra.mxu0 %v143
    %175 = vmatpush.bf16.msra.mxu0 %v142
    %176 = vmatpush.bf16.msra.mxu0 %v141
    %177 = vmatpush.bf16.msra.mxu0 %v140
    %178 = vmatpush.bf16.msra.mxu0 %v139
    %179 = vmatmul.bf16.gmra.mxu0 %v37
    %v180 = vpop.f32.mrf.mxu0
    %v181 = vadd.f32 %v73, %v180
    %v182 = vpop.f32.mrf.mxu0
    %183 = vdwg.mxu0
    %184 = vmatpush.bf16.msra.mxu0 %v154
    %185 = vmatpush.bf16.msra.mxu0 %v153
    %186 = vmatpush.bf16.msra.mxu0 %v152
    %187 = vmatpush.bf16.msra.mxu0 %v151
    %188 = vmatpush.bf16.msra.mxu0 %v150
    %189 = vmatpush.bf16.msra.mxu0 %v149
    %190 = vmatpush.bf16.msra.mxu0 %v148
    %191 = vmatpush.bf16.msra.mxu0 %v147
    %192 = vmatmul.bf16.gmra.mxu0 %v38
    %v193 = vpop.f32.mrf.mxu0
    %v194 = vadd.f32 %v181, %v193
    %v195 = vpop.f32.mrf.mxu0
    %196 = vdwg.mxu0
    %v197 = vld [vmem:[%s3] sm:$0x3]
    %v198 = vmul.f32 %v194, 0.5
    %v199 = vmul.f32 %v198, 1.442695
    %v200 = vpow.pop %v199
    %202 = vrot.lane.b32.xlu0 %v200, 120
    %v203 = vpop.permute.xlu0 %202
    %v205 = vmul.f32 %v197, %v203
    %v206 = vadd.f32 %v194, %v205
    %v207 = vpack.c.bf16 %v206, %v206
    %v208 = vld [vmem:[%s4] sm:$0xff]
    %v209 = vld [vmem:[%s5] sm:$0x3]
    %v211 = vperm.slane %v209, 0
    %v212 = vperm.slane %v209, 1
    %v216 = vunpack.c.l.b16 %v208
    %v217 = vunpack.c.h.b16 %v208
    %v218 = vpack.c.b16 %v216, %v216
    %v219 = vpack.c.b16 %v217, %v217
    %vm220 = vcmask 64512
    %v222 = vsel %vm220, %v207, 0
    %vm224 = vcmask 1043456
    %v226 = vsel %vm224, %v218, 0
    %v229 = vsel %vm224, %v219, 0
    %231 = vmatpush.bf16.msra.mxu0 0
    %232 = vmatpush.bf16.msra.mxu0 0
    %233 = vmatpush.bf16.msra.mxu0 0
    %234 = vmatpush.bf16.msra.mxu0 0
    %235 = vmatpush.bf16.msra.mxu0 0
    %236 = vmatpush.bf16.msra.mxu0 0
    %237 = vmatpush.bf16.msra.mxu0 0
    %238 = vmatpush.bf16.msra.mxu0 %v226
    %239 = vmatmul.bf16.gmra.mxu0 %v222
    %v240 = vpop.f32.mrf.mxu0
    %v241 = vadd.f32 %v211, %v240
    %v242 = vpop.f32.mrf.mxu0
    %243 = vdwg.mxu0
    %244 = vmatpush.bf16.msra.mxu0 0
    %245 = vmatpush.bf16.msra.mxu0 0
    %246 = vmatpush.bf16.msra.mxu0 0
    %247 = vmatpush.bf16.msra.mxu0 0
    %248 = vmatpush.bf16.msra.mxu0 0
    %249 = vmatpush.bf16.msra.mxu0 0
    %250 = vmatpush.bf16.msra.mxu0 0
    %251 = vmatpush.bf16.msra.mxu0 %v229
    %252 = vmatmul.bf16.gmra.mxu0 %v222
    %v253 = vpop.f32.mrf.mxu0
    %v254 = vadd.f32 %v212, %v253
    %v255 = vpop.f32.mrf.mxu0
    %256 = vdwg.mxu0
    %vm257 = vcmask 58368
    %258 = vst.msk [vmem:[#allocation2] sm:$0x3] %vm257, %v194
    %260 = vrot.lane.b32.xlu0 %v194, 120
    %v261 = vpop.permute.xlu0 %260
    %263 = vst.msk [vmem:[#allocation4] sm:$0x3] %vm257, %v261
    %264 = vst.msk [vmem:[#allocation6] sm:$0x3] %vm257, %v206
    %v267 = vrot.slane %v254, 6
    %vm268 = vcmask 1041408
    %v269 = vsel %vm268, %v241, %v267
    %271 = vst [vmem:[%s9] sm:$0xf] %v269
    // Predicated region
    $region26: #{forward.8} parent=1 // pred_check
      _
    $region27: #{forward.8} parent=1 // pred_check_branch
      %273 = sbr.rel (0) target = $region29
    $region28: #{forward.8} parent=1 // pred_region
      %275 = vsyncadd [#allocation3], 0
      %s277 = sshll.u32 [#allocation2], 4
      %s278 = int_to_ptr.vmem [resolvable:$true] %s277
      %s279 = sshll.u32 %s6, 4
      %s280 = int_to_ptr.hbm [resolvable:$true] %s279
      %282 = dma.vmem_to_hbm [thread:$0]  %s278, 32, %s280, [#allocation3]
    $region29: #{forward.8} parent=1 // pred_fallthru
      _
    // Predicated region
    $region30: #{forward.8} parent=1 // pred_check
      _
    $region31: #{forward.8} parent=1 // pred_check_branch
      %284 = sbr.rel (0) target = $region33
    $region32: #{forward.8} parent=1 // pred_region
      %286 = vsyncadd [#allocation5], 0
      %s288 = sshll.u32 [#allocation4], 4
      %s289 = int_to_ptr.vmem [resolvable:$true] %s288
      %s290 = sshll.u32 %s7, 4
      %s291 = int_to_ptr.hbm [resolvable:$true] %s290
      %293 = dma.vmem_to_hbm [thread:$0]  %s289, 32, %s291, [#allocation5]
    $region33: #{forward.8} parent=1 // pred_fallthru
      _
    // Predicated region
    $region34: #{forward.8} parent=1 // pred_check
      _
    $region35: #{forward.8} parent=1 // pred_check_branch
      %295 = sbr.rel (0) target = $region37
    $region36: #{forward.8} parent=1 // pred_region
      %297 = vsyncadd [#allocation5], 0
      %s299 = sshll.u32 [#allocation6], 4
      %s300 = int_to_ptr.vmem [resolvable:$true] %s299
      %s301 = sshll.u32 %s8, 4
      %s302 = int_to_ptr.hbm [resolvable:$true] %s301
      %304 = dma.vmem_to_hbm [thread:$0]  %s300, 32, %s302, [#allocation5]
    $region37: #{forward.8} parent=1 // pred_fallthru
      _
    // Predicated region
    $region38: #{forward.8} parent=1 // pred_check
      _
    $region39: #{forward.8} parent=1 // pred_check_branch
      %306 = sbr.rel (0) target = $region41
    $region40: #{forward.8} parent=1 // pred_region
      _
    $region41: #{forward.8} parent=1 // pred_fallthru
      _
    // Predicated region
    $region42: #{forward.8} parent=1 // pred_check
      _
    $region43: #{forward.8} parent=1 // pred_check_branch
      %308 = sbr.rel (0) target = $region45
    $region44: #{forward.8} parent=1 // pred_region
      %310 = dma.done [#allocation3], 32
    $region45: #{forward.8} parent=1 // pred_fallthru
      _
    // Predicated region
    $region46: #{forward.8} parent=1 // pred_check
      _
    $region47: #{forward.8} parent=1 // pred_check_branch
      %312 = sbr.rel (0) target = $region49
    $region48: #{forward.8} parent=1 // pred_region
      %314 = dma.done [#allocation5], 32
    $region49: #{forward.8} parent=1 // pred_fallthru
      _
    // Predicated region
    $region50: #{forward.8} parent=1 // pred_check
      _
    $region51: #{forward.8} parent=1 // pred_check_branch
      %316 = sbr.rel (0) target = $region53
    $region52: #{forward.8} parent=1 // pred_region
      %318 = dma.done [#allocation5], 32
    $region53: #{forward.8} parent=1 // pred_fallthru
      _
    // Predicated region
    $region54: #{forward.8} parent=1 // pred_check
      _
    $region55: #{forward.8} parent=1 // pred_check_branch
      %320 = sbr.rel (0) target = $region57
    $region56: #{forward.8} parent=1 // pred_region
      _
    $region57: #{forward.8} parent=1 // pred_fallthru
      _
    %321 = vsyncpa [#allocation3], 1
    %322 = vsyncpa [#allocation5], 1

// kernel: forward.9
$region0: #{forward.9}
  #allocation0 [shape = 'u32[]', space=smem, size = 0x4, offset = 0x4, fixed_abs, tag = 'smem constant byte address 0x4 - core index']
  #allocation1 [shape = 'u32[72,128]{1,0:T(1,128)}', space=vmem, size = 0x9000, scoped, tag = 'internal scratch']
  %s0 = inlined_call_operand.vmem [shape: f32[2,5,5,16], index: 0, kind: input, shape index: {}]
  %s1 = inlined_call_operand.vmem [shape: bf16[9,16,16], index: 1, kind: input, shape index: {}]
  %s2 = inlined_call_operand.vmem [shape: f32[1,16], index: 2, kind: input, shape index: {}]
  %s3 = inlined_call_operand.vmem [shape: f32[2,64,16], index: 3, kind: output, shape index: {}]
  %s4 = sld [smem:[#allocation0]]
  $region45: #{forward.9} parent=0
    _
  %s6 = ssub.s32 1, %s4
  %s7 = scalar_select 0, %s6, %s4
  loop: start=0, step=1, limit=4
  $region2: #{forward.9} parent=0 // loop_pre_header
    _
  $region3: #{forward.9} parent=0 // loop_header
    %s9 = sphi 0, %s13
    %p10 = scmp.ge.s32.totalorder %s9, 4
    %s19 = sphi 0, %s21
    %s22 = sphi 0, %s19
    %s23 = sphi 0, %s22
    %s39 = sphi 0, %s23
    %s43 = sphi 0, %s43
    %s45 = sphi 0, %s43
    %s46 = sphi 0, %s45
    %s60 = sphi 0, %s46
    %s64 = sphi 0, %s64
    %s66 = sphi 0, %s64
    %s67 = sphi 0, %s66
    %s81 = sphi 0, %s67
    %s87 = sphi 0, %s89
    %s90 = sphi 0, %s87
    %s91 = sphi 0, %s90
    %s107 = sphi 0, %s91
  $region4: #{forward.9} parent=0 // loop_header_branch
    %12 = sbr.rel (%p10) target = $region8
  $region5: #{forward.9} parent=0 // loop_body
    %s14 = ssub.s32 %s9, 1
    %s15 = ssub.s32 %s9, 2
    %s16 = sadd.s32 %s9, 1
    %s17 = ssub.s32 %s9, %s16
    %p18 = scmp.eq.s32.totalorder %s17, 0
    %s20 = sadd.s32 %s19, 1
    %s21 = scalar_select %p18, %s19, %s20
    %p24 = pneg %p18
    %p25 = scmp.eq.s32.totalorder %s9, 1
    %p26 = por %p24, %p25
    %p27 = scmp.ne.s32.totalorder %s19, %s22
    %p28 = scmp.eq.s32.totalorder %s9, 0
    %p29 = por %p27, %p28
    %p30 = scmp.ne.s32.totalorder %s19, %s22
    %p31 = scmp.eq.s32.totalorder %s14, 1
    %p32 = por %p30, %p31
    %p33 = scmp.ne.s32.totalorder %s22, %s23
    %p34 = scmp.eq.s32.totalorder %s14, 0
    %p35 = por %p33, %p34
    %p36 = scmp.ne.s32.totalorder %s22, %s23
    %p37 = scmp.eq.s32.totalorder %s15, 1
    %p38 = por %p36, %p37
    %p40 = scmp.ne.s32.totalorder %s23, %s39
    %p41 = scmp.eq.s32.totalorder %s15, 0
    %p42 = por %p40, %p41
    %s44 = sadd.s32 %s43, 1
    %p47 = scmp.eq.s32.totalorder %s9, 1
    %p48 = scmp.ne.s32.totalorder %s43, %s45
    %p49 = scmp.eq.s32.totalorder %s9, 0
    %p50 = por %p48, %p49
    %p51 = scmp.ne.s32.totalorder %s43, %s45
    %p52 = scmp.eq.s32.totalorder %s14, 1
    %p53 = por %p51, %p52
    %p54 = scmp.ne.s32.totalorder %s45, %s46
    %p55 = scmp.eq.s32.totalorder %s14, 0
    %p56 = por %p54, %p55
    %p57 = scmp.ne.s32.totalorder %s45, %s46
    %p58 = scmp.eq.s32.totalorder %s15, 1
    %p59 = por %p57, %p58
    %p61 = scmp.ne.s32.totalorder %s46, %s60
    %p62 = scmp.eq.s32.totalorder %s15, 0
    %p63 = por %p61, %p62
    %s65 = sadd.s32 %s64, 1
    %p68 = scmp.eq.s32.totalorder %s9, 1
    %p69 = scmp.ne.s32.totalorder %s64, %s66
    %p70 = scmp.eq.s32.totalorder %s9, 0
    %p71 = por %p69, %p70
    %p72 = scmp.ne.s32.totalorder %s64, %s66
    %p73 = scmp.eq.s32.totalorder %s14, 1
    %p74 = por %p72, %p73
    %p75 = scmp.ne.s32.totalorder %s66, %s67
    %p76 = scmp.eq.s32.totalorder %s14, 0
    %p77 = por %p75, %p76
    %p78 = scmp.ne.s32.totalorder %s66, %s67
    %p79 = scmp.eq.s32.totalorder %s15, 1
    %p80 = por %p78, %p79
    %p82 = scmp.ne.s32.totalorder %s67, %s81
    %p83 = scmp.eq.s32.totalorder %s15, 0
    %p84 = por %p82, %p83
    %s85 = ssub.s32 %s9, %s16
    %p86 = scmp.eq.s32.totalorder %s85, 0
    %s88 = sadd.s32 %s87, 1
    %s89 = scalar_select %p86, %s87, %s88
    %p92 = pneg %p86
    %p93 = scmp.eq.s32.totalorder %s9, 1
    %p94 = por %p92, %p93
    %p95 = scmp.ne.s32.totalorder %s87, %s90
    %p96 = scmp.eq.s32.totalorder %s9, 0
    %p97 = por %p95, %p96
    %p98 = scmp.ne.s32.totalorder %s87, %s90
    %p99 = scmp.eq.s32.totalorder %s14, 1
    %p100 = por %p98, %p99
    %p101 = scmp.ne.s32.totalorder %s90, %s91
    %p102 = scmp.eq.s32.totalorder %s14, 0
    %p103 = por %p101, %p102
    %p104 = scmp.ne.s32.totalorder %s90, %s91
    %p105 = scmp.eq.s32.totalorder %s15, 1
    %p106 = por %p104, %p105
    %p108 = scmp.ne.s32.totalorder %s91, %s107
    %p109 = scmp.eq.s32.totalorder %s15, 0
    %p110 = por %p108, %p109
    %p111 = scmp.le.s32.totalorder 1, %s9
    %p112 = scmp.lt.s32.totalorder %s9, 3
    %p113 = pnand %p111, %p112
    %p114 = pneg %p113
    // Predicated region
    $region9: #{forward.9} parent=5 // pred_check
      _
    $region10: #{forward.9} parent=5 // pred_check_branch
      %116 = sbr.rel (%p113) target = $region12
    $region11: #{forward.9} parent=5 // pred_region
      %s117 = ssub.s32 %s9, 1
      // Predicated region
      $region13: #{forward.9} parent=11 // pred_check
        %p118 = pneg %p56
      $region14: #{forward.9} parent=11 // pred_check_branch
        %120 = sbr.rel (%p118) target = $region16
      $region15: #{forward.9} parent=11 // pred_region
        _
      $region16: #{forward.9} parent=11 // pred_fallthru
        _
      // Predicated region
      $region17: #{forward.9} parent=11 // pred_check
        %p121 = pneg %p77
      $region18: #{forward.9} parent=11 // pred_check_branch
        %123 = sbr.rel (%p121) target = $region20
      $region19: #{forward.9} parent=11 // pred_region
        _
      $region20: #{forward.9} parent=11 // pred_fallthru
        _
    $region12: #{forward.9} parent=5 // pred_fallthru
      _
    %p124 = scmp.lt.s32.totalorder %s9, 2
    // Predicated region
    $region21: #{forward.9} parent=5 // pred_check
      %p125 = pneg %p124
    $region22: #{forward.9} parent=5 // pred_check_branch
      %127 = sbr.rel (%p125) target = $region24
    $region23: #{forward.9} parent=5 // pred_region
      // Predicated region
      $region25: #{forward.9} parent=23 // pred_check
        %p128 = pneg %p29
      $region26: #{forward.9} parent=23 // pred_check_branch
        %130 = sbr.rel (%p128) target = $region28
      $region27: #{forward.9} parent=23 // pred_region
        %p131 = scmp.lt.s32.totalorder %s9, 1
        %s132 = scalar_select %p131, %s9, 1
        %s133 = smul.addr %s132, 5
        %s134 = smul.addr %s133, 8
        %s135 = scalar_lea.vmem %s0, %s134
      $region28: #{forward.9} parent=23 // pred_fallthru
        _
    $region24: #{forward.9} parent=5 // pred_fallthru
      _
    %p136 = scmp.le.s32.totalorder 1, %s9
    %p137 = scmp.lt.s32.totalorder %s9, 3
    %p138 = pnand %p136, %p137
    %p139 = pneg %p138
    // Predicated region
    $region29: #{forward.9} parent=5 // pred_check
      _
    $region30: #{forward.9} parent=5 // pred_check_branch
      %141 = sbr.rel (%p138) target = $region32
    $region31: #{forward.9} parent=5 // pred_region
      %s142 = ssub.s32 %s9, 1
      %p143 = scmp.lt.s32.totalorder %s14, 1
      %s144 = scalar_select %p143, %s14, 1
      %s145 = smul.addr %s144, 5
      %s146 = smul.addr %s145, 8
      %s147 = scalar_lea.vmem %s0, %s146
      %p148 = pneg %p35
      %p149 = pneg %p32
      %p150 = pneg %p56
      %p151 = pneg %p53
      %p152 = pneg %p77
      %p153 = pneg %p74
      %p154 = pneg %p103
      %p155 = pneg %p100
      %p156 = scmp.lt.s32.totalorder %s14, 1
      %s157 = scalar_select %p156, %s14, 1
      %s158 = smul.addr %s157, 8
      %s159 = smul.addr %s158, 8
      %s160 = scalar_lea.vmem %s3, %s159
      %p161 = scmp.lt.s32.totalorder %s14, 1
      %s162 = scalar_select %p161, %s14, 1
      %s163 = smul.addr %s162, 5
      %s164 = smul.addr %s163, 8
      %s165 = scalar_lea.vmem %s0, %s164
      %p166 = scmp.lt.s32.totalorder %s14, 1
      %s167 = scalar_select %p166, %s14, 1
      %s168 = smul.addr %s167, 8
      %s169 = smul.addr %s168, 8
      %s170 = scalar_lea.vmem %s3, %s169
      %v172 = vld [vmem:[%s165] sm:$0x1f]
      %v173 = vld [vmem:[%s165 + $0x8] sm:$0x1f]
      %v174 = vld [vmem:[%s165 + $0x10] sm:$0x1f]
      %v175 = vld [vmem:[%s165 + $0x18] sm:$0x1f]
      %v176 = vld [vmem:[%s165 + $0x20] sm:$0x1f]
      %181 = vst [vmem:[#allocation1] ss:$2 sm:$0xff] %v172
      %s182 = scalar_lea.vmem [#allocation1], 1
      %183 = vst [vmem:[%s182] ss:$2 sm:$0xff] %v173
      %s184 = scalar_lea.vmem [#allocation1], 16
      %185 = vst [vmem:[%s184] ss:$2 sm:$0xff] %v174
      %s186 = scalar_lea.vmem [#allocation1], 17
      %187 = vst [vmem:[%s186] ss:$2 sm:$0xff] %v175
      %v188 = vld.sshfl [vmem:[#allocation1] sm:$0xff pattern:$0x75316420]
      %v189 = vld.sshfl [vmem:[#allocation1 + $0x10] sm:$0xff pattern:$0x75316420]
      %v192 = vpack.c.bf16 %v189, %v188
      %v193 = vld [vmem:[%s1] sm:$0xf]
      %v194 = vld [vmem:[%s1 + $0x4] sm:$0xf]
      %v195 = vld [vmem:[%s2] sm:$0x1]
      %v197 = vperm.slane %v195, 0
      %v201 = vunpack.c.l.b16 %v193
      %v202 = vunpack.c.l.b16 %v194
      %v203 = vpack.c.b16 %v202, %v201
      %vm205 = vcmask 130048
      %v207 = vsel %vm205, %v192, 0
      %209 = vmatpush.bf16.msra.mxu0 0
      %210 = vmatpush.bf16.msra.mxu0 0
      %211 = vmatpush.bf16.msra.mxu0 0
      %212 = vmatpush.bf16.msra.mxu0 0
      %213 = vmatpush.bf16.msra.mxu0 0
      %214 = vmatpush.bf16.msra.mxu0 0
      %215 = vmatpush.bf16.msra.mxu0 0
      %216 = vmatpush.bf16.msra.mxu0 %v203
      %217 = vmatmul.bf16.gmra.mxu0 %v207
      %v218 = vpop.f32.mrf.mxu0
      %v219 = vadd.f32 %v197, %v218
      %v220 = vpop.f32.mrf.mxu0
      %v221 = vadd.f32 %v197, %v220
      %222 = vdwg.mxu0
      %vm223 = vcmp.ge.f32.partialorder %v219, 0.0
      %vm224 = vcmp.ge.f32.partialorder %v221, 0.0
      %v225 = vmul.f32 %v219, 0.01
      %v226 = vmul.f32 %v221, 0.01
      %v227 = vsel %vm223, %v219, %v225
      %v228 = vsel %vm224, %v221, %v226
      %229 = vst.msk [vmem:[%s170] sm:$0xff] %vm205, %v227
      %230 = vst.msk [vmem:[%s170 + $0x8] sm:$0xff] %vm205, %v228
      %s231 = scalar_lea.vmem %s1, 8
      %v232 = vld [vmem:[%s231] sm:$0xf]
      %v233 = vld [vmem:[%s231 + $0x4] sm:$0xf]
      %v234 = vrot.slane %v172, 4
      %v235 = vrot.slane %v173, 4
      %v236 = vrot.slane %v174, 4
      %v237 = vrot.slane %v175, 4
      %vm238 = vcmask 1042432
      %vm239 = vcmask 1046532
      %vm240 = vmor %vm238, %vm239
      %v241 = vrot.slane %v172, 5
      %v242 = vrot.slane %v241, 4
      %v243 = vrot.slane %v234, 5
      %v244 = vsel %vm240, %v242, %v243
      %v245 = vrot.slane %v173, 5
      %v246 = vrot.slane %v245, 4
      %v247 = vrot.slane %v235, 5
      %v248 = vsel %vm240, %v246, %v247
      %v249 = vrot.slane %v174, 5
      %v250 = vrot.slane %v249, 4
      %v251 = vrot.slane %v236, 5
      %v252 = vsel %vm240, %v250, %v251
      %v253 = vrot.slane %v175, 5
      %v254 = vrot.slane %v253, 4
      %v255 = vrot.slane %v237, 5
      %v256 = vsel %vm240, %v254, %v255
      %257 = vst [vmem:[#allocation1] ss:$2 sm:$0xff] %v244
      %s258 = scalar_lea.vmem [#allocation1], 1
      %259 = vst [vmem:[%s258] ss:$2 sm:$0xff] %v248
      %s260 = scalar_lea.vmem [#allocation1], 16
      %261 = vst [vmem:[%s260] ss:$2 sm:$0xff] %v252
      %s262 = scalar_lea.vmem [#allocation1], 17
      %263 = vst [vmem:[%s262] ss:$2 sm:$0xff] %v256
      %v264 = vld.sshfl [vmem:[#allocation1] sm:$0xff pattern:$0x75316420]
      %v265 = vld.sshfl [vmem:[#allocation1 + $0x10] sm:$0xff pattern:$0x75316420]
      %v268 = vpack.c.bf16 %v265, %v264
      %s269 = scalar_lea.vmem %s1, 16
      %v270 = vld [vmem:[%s269] sm:$0xf]
      %v271 = vld [vmem:[%s269 + $0x4] sm:$0xf]
      %v274 = vunpack.c.l.b16 %v270
      %v275 = vunpack.c.l.b16 %v271
      %v276 = vpack.c.b16 %v275, %v274
      %v279 = vsel %vm205, %v268, 0
      %281 = vmatpush.bf16.msra.mxu0 0
      %282 = vmatpush.bf16.msra.mxu0 0
      %283 = vmatpush.bf16.msra.mxu0 0
      %284 = vmatpush.bf16.msra.mxu0 0
      %285 = vmatpush.bf16.msra.mxu0 0
      %286 = vmatpush.bf16.msra.mxu0 0
      %287 = vmatpush.bf16.msra.mxu0 0
      %288 = vmatpush.bf16.msra.mxu0 %v276
      %289 = vmatmul.bf16.gmra.mxu0 %v279
      %v290 = vpop.f32.mrf.mxu0
      %v291 = vadd.f32 0.0, %v290
      %v292 = vpop.f32.mrf.mxu0
      %v293 = vadd.f32 0.0, %v292
      %294 = vdwg.mxu0
      %v297 = vunpack.c.l.b16 %v232
      %v298 = vunpack.c.l.b16 %v233
      %v299 = vpack.c.b16 %v298, %v297
      %301 = vmatpush.bf16.msra.mxu0 0
      %302 = vmatpush.bf16.msra.mxu0 0
      %303 = vmatpush.bf16.msra.mxu0 0
      %304 = vmatpush.bf16.msra.mxu0 0
      %305 = vmatpush.bf16.msra.mxu0 0
      %306 = vmatpush.bf16.msra.mxu0 0
      %307 = vmatpush.bf16.msra.mxu0 0
      %308 = vmatpush.bf16.msra.mxu0 %v299
      %309 = vmatmul.bf16.gmra.mxu0 %v207
      %v310 = vpop.f32.mrf.mxu0
      %v311 = vadd.f32 %v291, %v310
      %v312 = vpop.f32.mrf.mxu0
      %v313 = vadd.f32 %v293, %v312
      %314 = vdwg.mxu0
      %v315 = vld [vmem:[%s2] sm:$0x1]
      %v317 = vperm.slane %v315, 0
      %v319 = vadd.f32 %v311, %v317
      %v320 = vadd.f32 %v313, %v317
      %vm321 = vcmp.ge.f32.partialorder %v319, 0.0
      %vm322 = vcmp.ge.f32.partialorder %v320, 0.0
      %v323 = vmul.f32 %v319, 0.01
      %v324 = vmul.f32 %v320, 0.01
      %v325 = vsel %vm321, %v319, %v323
      %v326 = vsel %vm322, %v320, %v324
      %327 = vst.msk [vmem:[%s170 + $0x10] sm:$0xff] %vm205, %v325
      %328 = vst.msk [vmem:[%s170 + $0x18] sm:$0xff] %vm205, %v326
      %s329 = scalar_lea.vmem %s1, 24
      %v330 = vld [vmem:[%s329] sm:$0xf]
      %v331 = vld [vmem:[%s329 + $0x4] sm:$0xf]
      %333 = vst [vmem:[#allocation1] ss:$2 sm:$0xff] %v173
      %s334 = scalar_lea.vmem [#allocation1], 1
      %335 = vst [vmem:[%s334] ss:$2 sm:$0xff] %v174
      %s336 = scalar_lea.vmem [#allocation1], 16
      %337 = vst [vmem:[%s336] ss:$2 sm:$0xff] %v175
      %s338 = scalar_lea.vmem [#allocation1], 17
      %339 = vst [vmem:[%s338] ss:$2 sm:$0xff] %v176
      %v340 = vld.sshfl [vmem:[#allocation1] sm:$0xff pattern:$0x75316420]
      %v341 = vld.sshfl [vmem:[#allocation1 + $0x10] sm:$0xff pattern:$0x75316420]
      %v344 = vpack.c.bf16 %v341, %v340
      %s345 = scalar_lea.vmem %s1, 32
      %v346 = vld [vmem:[%s345] sm:$0xf]
      %v347 = vld [vmem:[%s345 + $0x4] sm:$0xf]
      %v350 = vunpack.c.l.b16 %v346
      %v351 = vunpack.c.l.b16 %v347
      %v352 = vpack.c.b16 %v351, %v350
      %v355 = vsel %vm205, %v344, 0
      %357 = vmatpush.bf16.msra.mxu0 0
      %358 = vmatpush.bf16.msra.mxu0 0
      %359 = vmatpush.bf16.msra.mxu0 0
      %360 = vmatpush.bf16.msra.mxu0 0
      %361 = vmatpush.bf16.msra.mxu0 0
      %362 = vmatpush.bf16.msra.mxu0 0
      %363 = vmatpush.bf16.msra.mxu0 0
      %364 = vmatpush.bf16.msra.mxu0 %v352
      %365 = vmatmul.bf16.gmra.mxu0 %v355
      %v366 = vpop.f32.mrf.mxu0
      %v367 = vadd.f32 0.0, %v366
      %v368 = vpop.f32.mrf.mxu0
      %v369 = vadd.f32 0.0, %v368
      %370 = vdwg.mxu0
      %v373 = vunpack.c.l.b16 %v330
      %v374 = vunpack.c.l.b16 %v331
      %v375 = vpack.c.b16 %v374, %v373
      %377 = vmatpush.bf16.msra.mxu0 0
      %378 = vmatpush.bf16.msra.mxu0 0
      %379 = vmatpush.bf16.msra.mxu0 0
      %380 = vmatpush.bf16.msra.mxu0 0
      %381 = vmatpush.bf16.msra.mxu0 0
      %382 = vmatpush.bf16.msra.mxu0 0
      %383 = vmatpush.bf16.msra.mxu0 0
      %384 = vmatpush.bf16.msra.mxu0 %v375
      %385 = vmatmul.bf16.gmra.mxu0 %v207
      %v386 = vpop.f32.mrf.mxu0
      %v387 = vadd.f32 %v367, %v386
      %v388 = vpop.f32.mrf.mxu0
      %v389 = vadd.f32 %v369, %v388
      %390 = vdwg.mxu0
      %v391 = vld [vmem:[%s2] sm:$0x1]
      %v393 = vperm.slane %v391, 0
      %v395 = vadd.f32 %v387, %v393
      %v396 = vadd.f32 %v389, %v393
      %vm397 = vcmp.ge.f32.partialorder %v395, 0.0
      %vm398 = vcmp.ge.f32.partialorder %v396, 0.0
      %v399 = vmul.f32 %v395, 0.01
      %v400 = vmul.f32 %v396, 0.01
      %v401 = vsel %vm397, %v395, %v399
      %v402 = vsel %vm398, %v396, %v400
      %403 = vst.msk [vmem:[%s170 + $0x20] sm:$0xff] %vm205, %v401
      %404 = vst.msk [vmem:[%s170 + $0x28] sm:$0xff] %vm205, %v402
      %s405 = scalar_lea.vmem %s1, 40
      %v406 = vld [vmem:[%s405] sm:$0xf]
      %v407 = vld [vmem:[%s405 + $0x4] sm:$0xf]
      %s408 = scalar_lea.vmem %s1, 48
      %v409 = vld [vmem:[%s408] sm:$0xf]
      %v410 = vld [vmem:[%s408 + $0x4] sm:$0xf]
      %v413 = vunpack.c.l.b16 %v409
      %v414 = vunpack.c.l.b16 %v410
      %v415 = vpack.c.b16 %v414, %v413
      %417 = vmatpush.bf16.msra.mxu0 0
      %418 = vmatpush.bf16.msra.mxu0 0
      %419 = vmatpush.bf16.msra.mxu0 0
      %420 = vmatpush.bf16.msra.mxu0 0
      %421 = vmatpush.bf16.msra.mxu0 0
      %422 = vmatpush.bf16.msra.mxu0 0
      %423 = vmatpush.bf16.msra.mxu0 0
      %424 = vmatpush.bf16.msra.mxu0 %v415
      %425 = vmatmul.bf16.gmra.mxu0 %v279
      %v426 = vpop.f32.mrf.mxu0
      %v427 = vadd.f32 0.0, %v426
      %v428 = vpop.f32.mrf.mxu0
      %v429 = vadd.f32 0.0, %v428
      %430 = vdwg.mxu0
      %v433 = vunpack.c.l.b16 %v406
      %v434 = vunpack.c.l.b16 %v407
      %v435 = vpack.c.b16 %v434, %v433
      %437 = vmatpush.bf16.msra.mxu0 0
      %438 = vmatpush.bf16.msra.mxu0 0
      %439 = vmatpush.bf16.msra.mxu0 0
      %440 = vmatpush.bf16.msra.mxu0 0
      %441 = vmatpush.bf16.msra.mxu0 0
      %442 = vmatpush.bf16.msra.mxu0 0
      %443 = vmatpush.bf16.msra.mxu0 0
      %444 = vmatpush.bf16.msra.mxu0 %v435
      %445 = vmatmul.bf16.gmra.mxu0 %v207
      %v446 = vpop.f32.mrf.mxu0
      %v447 = vadd.f32 %v427, %v446
      %v448 = vpop.f32.mrf.mxu0
      %v449 = vadd.f32 %v429, %v448
      %450 = vdwg.mxu0
      %s451 = scalar_lea.vmem %s1, 56
      %v452 = vld [vmem:[%s451] sm:$0xf]
      %v453 = vld [vmem:[%s451 + $0x4] sm:$0xf]
      %v456 = vunpack.c.l.b16 %v452
      %v457 = vunpack.c.l.b16 %v453
      %v458 = vpack.c.b16 %v457, %v456
      %460 = vmatpush.bf16.msra.mxu0 0
      %461 = vmatpush.bf16.msra.mxu0 0
      %462 = vmatpush.bf16.msra.mxu0 0
      %463 = vmatpush.bf16.msra.mxu0 0
      %464 = vmatpush.bf16.msra.mxu0 0
      %465 = vmatpush.bf16.msra.mxu0 0
      %466 = vmatpush.bf16.msra.mxu0 0
      %467 = vmatpush.bf16.msra.mxu0 %v458
      %468 = vmatmul.bf16.gmra.mxu0 %v355
      %v469 = vpop.f32.mrf.mxu0
      %v470 = vadd.f32 0.0, %v469
      %v471 = vpop.f32.mrf.mxu0
      %v472 = vadd.f32 0.0, %v471
      %473 = vdwg.mxu0
      %v474 = vadd.f32 %v447, %v470
      %v475 = vadd.f32 %v449, %v472
      %v476 = vrot.slane %v176, 4
      %v477 = vrot.slane %v176, 5
      %v478 = vrot.slane %v477, 4
      %v479 = vrot.slane %v476, 5
      %v480 = vsel %vm240, %v478, %v479
      %481 = vst [vmem:[#allocation1] ss:$2 sm:$0xff] %v248
      %s482 = scalar_lea.vmem [#allocation1], 1
      %483 = vst [vmem:[%s482] ss:$2 sm:$0xff] %v252
      %s484 = scalar_lea.vmem [#allocation1], 16
      %485 = vst [vmem:[%s484] ss:$2 sm:$0xff] %v256
      %s486 = scalar_lea.vmem [#allocation1], 17
      %487 = vst [vmem:[%s486] ss:$2 sm:$0xff] %v480
      %v488 = vld.sshfl [vmem:[#allocation1] sm:$0xff pattern:$0x75316420]
      %v489 = vld.sshfl [vmem:[#allocation1 + $0x10] sm:$0xff pattern:$0x75316420]
      %v492 = vpack.c.bf16 %v489, %v488
      %s493 = scalar_lea.vmem %s1, 64
      %v494 = vld [vmem:[%s493] sm:$0xf]
      %v495 = vld [vmem:[%s493 + $0x4] sm:$0xf]
      %v498 = vunpack.c.l.b16 %v494
      %v499 = vunpack.c.l.b16 %v495
      %v500 = vpack.c.b16 %v499, %v498
      %v503 = vsel %vm205, %v492, 0
      %505 = vmatpush.bf16.msra.mxu0 0
      %506 = vmatpush.bf16.msra.mxu0 0
      %507 = vmatpush.bf16.msra.mxu0 0
      %508 = vmatpush.bf16.msra.mxu0 0
      %509 = vmatpush.bf16.msra.mxu0 0
      %510 = vmatpush.bf16.msra.mxu0 0
      %511 = vmatpush.bf16.msra.mxu0 0
      %512 = vmatpush.bf16.msra.mxu0 %v500
      %513 = vmatmul.bf16.gmra.mxu0 %v503
      %v514 = vpop.f32.mrf.mxu0
      %v515 = vadd.f32 0.0, %v514
      %v516 = vpop.f32.mrf.mxu0
      %v517 = vadd.f32 0.0, %v516
      %518 = vdwg.mxu0
      %v519 = vadd.f32 %v474, %v515
      %v520 = vadd.f32 %v475, %v517
      %v521 = vld [vmem:[%s2] sm:$0x1]
      %v523 = vperm.slane %v521, 0
      %v525 = vadd.f32 %v519, %v523
      %v526 = vadd.f32 %v520, %v523
      %vm527 = vcmp.ge.f32.partialorder %v525, 0.0
      %vm528 = vcmp.ge.f32.partialorder %v526, 0.0
      %v529 = vmul.f32 %v525, 0.01
      %v530 = vmul.f32 %v526, 0.01
      %v531 = vsel %vm527, %v525, %v529
      %v532 = vsel %vm528, %v526, %v530
      %533 = vst.msk [vmem:[%s170 + $0x30] sm:$0xff] %vm205, %v531
      %534 = vst.msk [vmem:[%s170 + $0x38] sm:$0xff] %vm205, %v532
      %p535 = scmp.lt.s32.totalorder %s14, 1
      %s536 = scalar_select %p535, %s14, 1
      %s537 = smul.addr %s536, 8
      %s538 = smul.addr %s537, 8
      %s539 = scalar_lea.vmem %s3, %s538
      // Predicated region
      $region33: #{forward.9} parent=31 // pred_check
        %p540 = pneg %p100
      $region34: #{forward.9} parent=31 // pred_check_branch
        %542 = sbr.rel (%p540) target = $region36
      $region35: #{forward.9} parent=31 // pred_region
        _
      $region36: #{forward.9} parent=31 // pred_fallthru
        _
    $region32: #{forward.9} parent=5 // pred_fallthru
      _
    %p543 = scmp.le.s32.totalorder 2, %s9
    // Predicated region
    $region37: #{forward.9} parent=5 // pred_check
      %p544 = pneg %p543
    $region38: #{forward.9} parent=5 // pred_check_branch
      %546 = sbr.rel (%p544) target = $region40
    $region39: #{forward.9} parent=5 // pred_region
      %s547 = ssub.s32 %s9, 2
      // Predicated region
      $region41: #{forward.9} parent=39 // pred_check
        %p548 = pneg %p106
      $region42: #{forward.9} parent=39 // pred_check_branch
        %550 = sbr.rel (%p548) target = $region44
      $region43: #{forward.9} parent=39 // pred_region
        %p551 = scmp.lt.s32.totalorder %s15, 1
        %s552 = scalar_select %p551, %s15, 1
        %s553 = smul.addr %s552, 8
        %s554 = smul.addr %s553, 8
        %s555 = scalar_lea.vmem %s3, %s554
      $region44: #{forward.9} parent=39 // pred_fallthru
        _
    $region40: #{forward.9} parent=5 // pred_fallthru
      _
  $region6: #{forward.9} parent=0 // loop_footer
    %s13 = sadd.s32 1, %s9
  $region7: #{forward.9} parent=0 // loop_footer_branch
    %8 = sbr.rel target = $region3
  $region8: #{forward.9} parent=0 // loop_exit
    _

// kernel: forward.10
$region0: #{forward.10}
  #allocation0 [shape = 'u32[]', space=smem, size = 0x4, offset = 0x4, fixed_abs, tag = 'smem constant byte address 0x4 - core index']
  #allocation1 [shape = 'u32[72,128]{1,0:T(1,128)}', space=vmem, size = 0x9000, scoped, tag = 'internal scratch']
  %s0 = inlined_call_operand.vmem [shape: f32[2,9,9,16], index: 0, kind: input, shape index: {}]
  %s1 = inlined_call_operand.vmem [shape: bf16[9,16,8], index: 1, kind: input, shape index: {}]
  %s2 = inlined_call_operand.vmem [shape: f32[1,8], index: 2, kind: input, shape index: {}]
  %s3 = inlined_call_operand.vmem [shape: f32[2,256,8], index: 3, kind: output, shape index: {}]
  %s4 = sld [smem:[#allocation0]]
  $region45: #{forward.10} parent=0
    _
  %s6 = ssub.s32 1, %s4
  %s7 = scalar_select 0, %s6, %s4
  loop: start=0, step=1, limit=4
  $region2: #{forward.10} parent=0 // loop_pre_header
    _
  $region3: #{forward.10} parent=0 // loop_header
    %s9 = sphi 0, %s13
    %p10 = scmp.ge.s32.totalorder %s9, 4
    %s19 = sphi 0, %s21
    %s22 = sphi 0, %s19
    %s23 = sphi 0, %s22
    %s39 = sphi 0, %s23
    %s43 = sphi 0, %s43
    %s45 = sphi 0, %s43
    %s46 = sphi 0, %s45
    %s60 = sphi 0, %s46
    %s64 = sphi 0, %s64
    %s66 = sphi 0, %s64
    %s67 = sphi 0, %s66
    %s81 = sphi 0, %s67
    %s87 = sphi 0, %s89
    %s90 = sphi 0, %s87
    %s91 = sphi 0, %s90
    %s107 = sphi 0, %s91
  $region4: #{forward.10} parent=0 // loop_header_branch
    %12 = sbr.rel (%p10) target = $region8
  $region5: #{forward.10} parent=0 // loop_body
    %s14 = ssub.s32 %s9, 1
    %s15 = ssub.s32 %s9, 2
    %s16 = sadd.s32 %s9, 1
    %s17 = ssub.s32 %s9, %s16
    %p18 = scmp.eq.s32.totalorder %s17, 0
    %s20 = sadd.s32 %s19, 1
    %s21 = scalar_select %p18, %s19, %s20
    %p24 = pneg %p18
    %p25 = scmp.eq.s32.totalorder %s9, 1
    %p26 = por %p24, %p25
    %p27 = scmp.ne.s32.totalorder %s19, %s22
    %p28 = scmp.eq.s32.totalorder %s9, 0
    %p29 = por %p27, %p28
    %p30 = scmp.ne.s32.totalorder %s19, %s22
    %p31 = scmp.eq.s32.totalorder %s14, 1
    %p32 = por %p30, %p31
    %p33 = scmp.ne.s32.totalorder %s22, %s23
    %p34 = scmp.eq.s32.totalorder %s14, 0
    %p35 = por %p33, %p34
    %p36 = scmp.ne.s32.totalorder %s22, %s23
    %p37 = scmp.eq.s32.totalorder %s15, 1
    %p38 = por %p36, %p37
    %p40 = scmp.ne.s32.totalorder %s23, %s39
    %p41 = scmp.eq.s32.totalorder %s15, 0
    %p42 = por %p40, %p41
    %s44 = sadd.s32 %s43, 1
    %p47 = scmp.eq.s32.totalorder %s9, 1
    %p48 = scmp.ne.s32.totalorder %s43, %s45
    %p49 = scmp.eq.s32.totalorder %s9, 0
    %p50 = por %p48, %p49
    %p51 = scmp.ne.s32.totalorder %s43, %s45
    %p52 = scmp.eq.s32.totalorder %s14, 1
    %p53 = por %p51, %p52
    %p54 = scmp.ne.s32.totalorder %s45, %s46
    %p55 = scmp.eq.s32.totalorder %s14, 0
    %p56 = por %p54, %p55
    %p57 = scmp.ne.s32.totalorder %s45, %s46
    %p58 = scmp.eq.s32.totalorder %s15, 1
    %p59 = por %p57, %p58
    %p61 = scmp.ne.s32.totalorder %s46, %s60
    %p62 = scmp.eq.s32.totalorder %s15, 0
    %p63 = por %p61, %p62
    %s65 = sadd.s32 %s64, 1
    %p68 = scmp.eq.s32.totalorder %s9, 1
    %p69 = scmp.ne.s32.totalorder %s64, %s66
    %p70 = scmp.eq.s32.totalorder %s9, 0
    %p71 = por %p69, %p70
    %p72 = scmp.ne.s32.totalorder %s64, %s66
    %p73 = scmp.eq.s32.totalorder %s14, 1
    %p74 = por %p72, %p73
    %p75 = scmp.ne.s32.totalorder %s66, %s67
    %p76 = scmp.eq.s32.totalorder %s14, 0
    %p77 = por %p75, %p76
    %p78 = scmp.ne.s32.totalorder %s66, %s67
    %p79 = scmp.eq.s32.totalorder %s15, 1
    %p80 = por %p78, %p79
    %p82 = scmp.ne.s32.totalorder %s67, %s81
    %p83 = scmp.eq.s32.totalorder %s15, 0
    %p84 = por %p82, %p83
    %s85 = ssub.s32 %s9, %s16
    %p86 = scmp.eq.s32.totalorder %s85, 0
    %s88 = sadd.s32 %s87, 1
    %s89 = scalar_select %p86, %s87, %s88
    %p92 = pneg %p86
    %p93 = scmp.eq.s32.totalorder %s9, 1
    %p94 = por %p92, %p93
    %p95 = scmp.ne.s32.totalorder %s87, %s90
    %p96 = scmp.eq.s32.totalorder %s9, 0
    %p97 = por %p95, %p96
    %p98 = scmp.ne.s32.totalorder %s87, %s90
    %p99 = scmp.eq.s32.totalorder %s14, 1
    %p100 = por %p98, %p99
    %p101 = scmp.ne.s32.totalorder %s90, %s91
    %p102 = scmp.eq.s32.totalorder %s14, 0
    %p103 = por %p101, %p102
    %p104 = scmp.ne.s32.totalorder %s90, %s91
    %p105 = scmp.eq.s32.totalorder %s15, 1
    %p106 = por %p104, %p105
    %p108 = scmp.ne.s32.totalorder %s91, %s107
    %p109 = scmp.eq.s32.totalorder %s15, 0
    %p110 = por %p108, %p109
    %p111 = scmp.le.s32.totalorder 1, %s9
    %p112 = scmp.lt.s32.totalorder %s9, 3
    %p113 = pnand %p111, %p112
    %p114 = pneg %p113
    // Predicated region
    $region9: #{forward.10} parent=5 // pred_check
      _
    $region10: #{forward.10} parent=5 // pred_check_branch
      %116 = sbr.rel (%p113) target = $region12
    $region11: #{forward.10} parent=5 // pred_region
      %s117 = ssub.s32 %s9, 1
      // Predicated region
      $region13: #{forward.10} parent=11 // pred_check
        %p118 = pneg %p56
      $region14: #{forward.10} parent=11 // pred_check_branch
        %120 = sbr.rel (%p118) target = $region16
      $region15: #{forward.10} parent=11 // pred_region
        _
      $region16: #{forward.10} parent=11 // pred_fallthru
        _
      // Predicated region
      $region17: #{forward.10} parent=11 // pred_check
        %p121 = pneg %p77
      $region18: #{forward.10} parent=11 // pred_check_branch
        %123 = sbr.rel (%p121) target = $region20
      $region19: #{forward.10} parent=11 // pred_region
        _
      $region20: #{forward.10} parent=11 // pred_fallthru
        _
    $region12: #{forward.10} parent=5 // pred_fallthru
      _
    %p124 = scmp.lt.s32.totalorder %s9, 2
    // Predicated region
    $region21: #{forward.10} parent=5 // pred_check
      %p125 = pneg %p124
    $region22: #{forward.10} parent=5 // pred_check_branch
      %127 = sbr.rel (%p125) target = $region24
    $region23: #{forward.10} parent=5 // pred_region
      // Predicated region
      $region25: #{forward.10} parent=23 // pred_check
        %p128 = pneg %p29
      $region26: #{forward.10} parent=23 // pred_check_branch
        %130 = sbr.rel (%p128) target = $region28
      $region27: #{forward.10} parent=23 // pred_region
        %p131 = scmp.lt.s32.totalorder %s9, 1
        %s132 = scalar_select %p131, %s9, 1
        %s133 = smul.addr %s132, 18
        %s134 = smul.addr %s133, 8
        %s135 = scalar_lea.vmem %s0, %s134
      $region28: #{forward.10} parent=23 // pred_fallthru
        _
    $region24: #{forward.10} parent=5 // pred_fallthru
      _
    %p136 = scmp.le.s32.totalorder 1, %s9
    %p137 = scmp.lt.s32.totalorder %s9, 3
    %p138 = pnand %p136, %p137
    %p139 = pneg %p138
    // Predicated region
    $region29: #{forward.10} parent=5 // pred_check
      _
    $region30: #{forward.10} parent=5 // pred_check_branch
      %141 = sbr.rel (%p138) target = $region32
    $region31: #{forward.10} parent=5 // pred_region
      %s142 = ssub.s32 %s9, 1
      %p143 = scmp.lt.s32.totalorder %s14, 1
      %s144 = scalar_select %p143, %s14, 1
      %s145 = smul.addr %s144, 18
      %s146 = smul.addr %s145, 8
      %s147 = scalar_lea.vmem %s0, %s146
      %p148 = pneg %p35
      %p149 = pneg %p32
      %p150 = pneg %p56
      %p151 = pneg %p53
      %p152 = pneg %p77
      %p153 = pneg %p74
      %p154 = pneg %p103
      %p155 = pneg %p100
      %p156 = scmp.lt.s32.totalorder %s14, 1
      %s157 = scalar_select %p156, %s14, 1
      %s158 = smul.addr %s157, 32
      %s159 = smul.addr %s158, 8
      %s160 = scalar_lea.vmem %s3, %s159
      %p161 = scmp.lt.s32.totalorder %s14, 1
      %s162 = scalar_select %p161, %s14, 1
      %s163 = smul.addr %s162, 18
      %s164 = smul.addr %s163, 8
      %s165 = scalar_lea.vmem %s0, %s164
      %p166 = scmp.lt.s32.totalorder %s14, 1
      %s167 = scalar_select %p166, %s14, 1
      %s168 = smul.addr %s167, 32
      %s169 = smul.addr %s168, 8
      %s170 = scalar_lea.vmem %s3, %s169
      %v172 = vld [vmem:[%s165] sm:$0xff]
      %v173 = vld [vmem:[%s165 + $0x8] sm:$0x1]
      %v174 = vld [vmem:[%s165 + $0x10] sm:$0xff]
      %v175 = vld [vmem:[%s165 + $0x18] sm:$0x1]
      %v176 = vld [vmem:[%s165 + $0x20] sm:$0xff]
      %v177 = vld [vmem:[%s165 + $0x28] sm:$0x1]
      %v178 = vld [vmem:[%s165 + $0x30] sm:$0xff]
      %v179 = vld [vmem:[%s165 + $0x38] sm:$0x1]
      %v180 = vld [vmem:[%s165 + $0x40] sm:$0xff]
      %v181 = vld [vmem:[%s165 + $0x48] sm:$0x1]
      %v182 = vld [vmem:[%s165 + $0x50] sm:$0xff]
      %v183 = vld [vmem:[%s165 + $0x58] sm:$0x1]
      %v184 = vld [vmem:[%s165 + $0x60] sm:$0xff]
      %v185 = vld [vmem:[%s165 + $0x68] sm:$0x1]
      %v186 = vld [vmem:[%s165 + $0x70] sm:$0xff]
      %v187 = vld [vmem:[%s165 + $0x78] sm:$0x1]
      %v188 = vld [vmem:[%s165 + $0x80] sm:$0xff]
      %v189 = vld [vmem:[%s165 + $0x88] sm:$0x1]
      %v190 = vpack.c.bf16 %v174, %v172
      %v191 = vpack.c.bf16 %v178, %v176
      %v192 = vpack.c.bf16 %v182, %v180
      %v193 = vpack.c.bf16 %v186, %v184
      %v194 = vld [vmem:[%s1] sm:$0xf]
      %v195 = vld [vmem:[%s1 + $0x4] sm:$0xf]
      %v196 = vld [vmem:[%s2] sm:$0x1]
      %v198 = vperm.slane %v196, 0
      %v202 = vunpack.c.l.b16 %v194
      %v203 = vunpack.c.l.b16 %v195
      %v204 = vpack.c.b16 %v203, %v202
      %vm206 = vcmask 130048
      %v208 = vsel %vm206, %v190, 0
      %v211 = vsel %vm206, %v191, 0
      %v214 = vsel %vm206, %v192, 0
      %v217 = vsel %vm206, %v193, 0
      %219 = vmatpush.bf16.msra.mxu0 0
      %220 = vmatpush.bf16.msra.mxu0 0
      %221 = vmatpush.bf16.msra.mxu0 0
      %222 = vmatpush.bf16.msra.mxu0 0
      %223 = vmatpush.bf16.msra.mxu0 0
      %224 = vmatpush.bf16.msra.mxu0 0
      %225 = vmatpush.bf16.msra.mxu0 0
      %226 = vmatpush.bf16.msra.mxu0 %v204
      %227 = vmatmul.bf16.gmra.mxu0 %v208
      %v228 = vpop.f32.mrf.mxu0
      %v229 = vadd.f32 %v198, %v228
      %v230 = vpop.f32.mrf.mxu0
      %v231 = vadd.f32 %v198, %v230
      %232 = vmatmul.bf16.gmra.mxu0 %v211
      %v233 = vpop.f32.mrf.mxu0
      %v234 = vadd.f32 %v198, %v233
      %v235 = vpop.f32.mrf.mxu0
      %v236 = vadd.f32 %v198, %v235
      %237 = vmatmul.bf16.gmra.mxu0 %v214
      %v238 = vpop.f32.mrf.mxu0
      %v239 = vadd.f32 %v198, %v238
      %v240 = vpop.f32.mrf.mxu0
      %v241 = vadd.f32 %v198, %v240
      %242 = vmatmul.bf16.gmra.mxu0 %v217
      %v243 = vpop.f32.mrf.mxu0
      %v244 = vadd.f32 %v198, %v243
      %v245 = vpop.f32.mrf.mxu0
      %v246 = vadd.f32 %v198, %v245
      %247 = vdwg.mxu0
      %vm248 = vcmp.ge.f32.partialorder %v229, 0.0
      %vm249 = vcmp.ge.f32.partialorder %v231, 0.0
      %vm250 = vcmp.ge.f32.partialorder %v234, 0.0
      %vm251 = vcmp.ge.f32.partialorder %v236, 0.0
      %vm252 = vcmp.ge.f32.partialorder %v239, 0.0
      %vm253 = vcmp.ge.f32.partialorder %v241, 0.0
      %vm254 = vcmp.ge.f32.partialorder %v244, 0.0
      %vm255 = vcmp.ge.f32.partialorder %v246, 0.0
      %v256 = vmul.f32 %v229, 0.01
      %v257 = vmul.f32 %v231, 0.01
      %v258 = vmul.f32 %v234, 0.01
      %v259 = vmul.f32 %v236, 0.01
      %v260 = vmul.f32 %v239, 0.01
      %v261 = vmul.f32 %v241, 0.01
      %v262 = vmul.f32 %v244, 0.01
      %v263 = vmul.f32 %v246, 0.01
      %v264 = vsel %vm248, %v229, %v256
      %v265 = vsel %vm249, %v231, %v257
      %v266 = vsel %vm250, %v234, %v258
      %v267 = vsel %vm251, %v236, %v259
      %v268 = vsel %vm252, %v239, %v260
      %v269 = vsel %vm253, %v241, %v261
      %v270 = vsel %vm254, %v244, %v262
      %v271 = vsel %vm255, %v246, %v263
      %vm272 = vcmask 64512
      %273 = vst.msk [vmem:[%s170] sm:$0xff] %vm272, %v264
      %274 = vst.msk [vmem:[%s170 + $0x8] sm:$0xff] %vm272, %v265
      %275 = vst.msk [vmem:[%s170 + $0x10] sm:$0xff] %vm272, %v266
      %276 = vst.msk [vmem:[%s170 + $0x18] sm:$0xff] %vm272, %v267
      %277 = vst.msk [vmem:[%s170 + $0x20] sm:$0xff] %vm272, %v268
      %278 = vst.msk [vmem:[%s170 + $0x28] sm:$0xff] %vm272, %v269
      %279 = vst.msk [vmem:[%s170 + $0x30] sm:$0xff] %vm272, %v270
      %280 = vst.msk [vmem:[%s170 + $0x38] sm:$0xff] %vm272, %v271
      %s281 = scalar_lea.vmem %s1, 8
      %v282 = vld [vmem:[%s281] sm:$0xf]
      %v283 = vld [vmem:[%s281 + $0x4] sm:$0xf]
      %vm300 = vcmask 1046528
      %v301 = vrot.slane %v172, 1
      %v302 = vrot.slane %v173, 1
      %v303 = vsel %vm300, %v301, %v302
      %v304 = vrot.slane %v174, 1
      %v305 = vrot.slane %v175, 1
      %v306 = vsel %vm300, %v304, %v305
      %v307 = vrot.slane %v176, 1
      %v308 = vrot.slane %v177, 1
      %v309 = vsel %vm300, %v307, %v308
      %v310 = vrot.slane %v178, 1
      %v311 = vrot.slane %v179, 1
      %v312 = vsel %vm300, %v310, %v311
      %v313 = vrot.slane %v180, 1
      %v314 = vrot.slane %v181, 1
      %v315 = vsel %vm300, %v313, %v314
      %v316 = vrot.slane %v182, 1
      %v317 = vrot.slane %v183, 1
      %v318 = vsel %vm300, %v316, %v317
      %v319 = vrot.slane %v184, 1
      %v320 = vrot.slane %v185, 1
      %v321 = vsel %vm300, %v319, %v320
      %v322 = vrot.slane %v186, 1
      %v323 = vrot.slane %v187, 1
      %v324 = vsel %vm300, %v322, %v323
      %v333 = vpack.c.bf16 %v306, %v303
      %v334 = vpack.c.bf16 %v312, %v309
      %v335 = vpack.c.bf16 %v318, %v315
      %v336 = vpack.c.bf16 %v324, %v321
      %s337 = scalar_lea.vmem %s1, 16
      %v338 = vld [vmem:[%s337] sm:$0xf]
      %v339 = vld [vmem:[%s337 + $0x4] sm:$0xf]
      %v342 = vunpack.c.l.b16 %v338
      %v343 = vunpack.c.l.b16 %v339
      %v344 = vpack.c.b16 %v343, %v342
      %v347 = vsel %vm206, %v333, 0
      %v350 = vsel %vm206, %v334, 0
      %v353 = vsel %vm206, %v335, 0
      %v356 = vsel %vm206, %v336, 0
      %358 = vmatpush.bf16.msra.mxu0 0
      %359 = vmatpush.bf16.msra.mxu0 0
      %360 = vmatpush.bf16.msra.mxu0 0
      %361 = vmatpush.bf16.msra.mxu0 0
      %362 = vmatpush.bf16.msra.mxu0 0
      %363 = vmatpush.bf16.msra.mxu0 0
      %364 = vmatpush.bf16.msra.mxu0 0
      %365 = vmatpush.bf16.msra.mxu0 %v344
      %366 = vmatmul.bf16.gmra.mxu0 %v347
      %v367 = vpop.f32.mrf.mxu0
      %v368 = vadd.f32 0.0, %v367
      %v369 = vpop.f32.mrf.mxu0
      %v370 = vadd.f32 0.0, %v369
      %371 = vmatmul.bf16.gmra.mxu0 %v350
      %v372 = vpop.f32.mrf.mxu0
      %v373 = vadd.f32 0.0, %v372
      %v374 = vpop.f32.mrf.mxu0
      %v375 = vadd.f32 0.0, %v374
      %376 = vmatmul.bf16.gmra.mxu0 %v353
      %v377 = vpop.f32.mrf.mxu0
      %v378 = vadd.f32 0.0, %v377
      %v379 = vpop.f32.mrf.mxu0
      %v380 = vadd.f32 0.0, %v379
      %381 = vmatmul.bf16.gmra.mxu0 %v356
      %v382 = vpop.f32.mrf.mxu0
      %v383 = vadd.f32 0.0, %v382
      %v384 = vpop.f32.mrf.mxu0
      %v385 = vadd.f32 0.0, %v384
      %386 = vdwg.mxu0
      %v389 = vunpack.c.l.b16 %v282
      %v390 = vunpack.c.l.b16 %v283
      %v391 = vpack.c.b16 %v390, %v389
      %393 = vmatpush.bf16.msra.mxu0 0
      %394 = vmatpush.bf16.msra.mxu0 0
      %395 = vmatpush.bf16.msra.mxu0 0
      %396 = vmatpush.bf16.msra.mxu0 0
      %397 = vmatpush.bf16.msra.mxu0 0
      %398 = vmatpush.bf16.msra.mxu0 0
      %399 = vmatpush.bf16.msra.mxu0 0
      %400 = vmatpush.bf16.msra.mxu0 %v391
      %401 = vmatmul.bf16.gmra.mxu0 %v208
      %v402 = vpop.f32.mrf.mxu0
      %v403 = vadd.f32 %v368, %v402
      %v404 = vpop.f32.mrf.mxu0
      %v405 = vadd.f32 %v370, %v404
      %406 = vmatmul.bf16.gmra.mxu0 %v211
      %v407 = vpop.f32.mrf.mxu0
      %v408 = vadd.f32 %v373, %v407
      %v409 = vpop.f32.mrf.mxu0
      %v410 = vadd.f32 %v375, %v409
      %411 = vmatmul.bf16.gmra.mxu0 %v214
      %v412 = vpop.f32.mrf.mxu0
      %v413 = vadd.f32 %v378, %v412
      %v414 = vpop.f32.mrf.mxu0
      %v415 = vadd.f32 %v380, %v414
      %416 = vmatmul.bf16.gmra.mxu0 %v217
      %v417 = vpop.f32.mrf.mxu0
      %v418 = vadd.f32 %v383, %v417
      %v419 = vpop.f32.mrf.mxu0
      %v420 = vadd.f32 %v385, %v419
      %421 = vdwg.mxu0
      %v422 = vld [vmem:[%s2] sm:$0x1]
      %v424 = vperm.slane %v422, 0
      %v426 = vadd.f32 %v403, %v424
      %v427 = vadd.f32 %v405, %v424
      %v428 = vadd.f32 %v408, %v424
      %v429 = vadd.f32 %v410, %v424
      %v430 = vadd.f32 %v413, %v424
      %v431 = vadd.f32 %v415, %v424
      %v432 = vadd.f32 %v418, %v424
      %v433 = vadd.f32 %v420, %v424
      %vm434 = vcmp.ge.f32.partialorder %v426, 0.0
      %vm435 = vcmp.ge.f32.partialorder %v427, 0.0
      %vm436 = vcmp.ge.f32.partialorder %v428, 0.0
      %vm437 = vcmp.ge.f32.partialorder %v429, 0.0
      %vm438 = vcmp.ge.f32.partialorder %v430, 0.0
      %vm439 = vcmp.ge.f32.partialorder %v431, 0.0
      %vm440 = vcmp.ge.f32.partialorder %v432, 0.0
      %vm441 = vcmp.ge.f32.partialorder %v433, 0.0
      %v442 = vmul.f32 %v426, 0.01
      %v443 = vmul.f32 %v427, 0.01
      %v444 = vmul.f32 %v428, 0.01
      %v445 = vmul.f32 %v429, 0.01
      %v446 = vmul.f32 %v430, 0.01
      %v447 = vmul.f32 %v431, 0.01
      %v448 = vmul.f32 %v432, 0.01
      %v449 = vmul.f32 %v433, 0.01
      %v450 = vsel %vm434, %v426, %v442
      %v451 = vsel %vm435, %v427, %v443
      %v452 = vsel %vm436, %v428, %v444
      %v453 = vsel %vm437, %v429, %v445
      %v454 = vsel %vm438, %v430, %v446
      %v455 = vsel %vm439, %v431, %v447
      %v456 = vsel %vm440, %v432, %v448
      %v457 = vsel %vm441, %v433, %v449
      %458 = vst.msk [vmem:[%s170 + $0x40] sm:$0xff] %vm272, %v450
      %459 = vst.msk [vmem:[%s170 + $0x48] sm:$0xff] %vm272, %v451
      %460 = vst.msk [vmem:[%s170 + $0x50] sm:$0xff] %vm272, %v452
      %461 = vst.msk [vmem:[%s170 + $0x58] sm:$0xff] %vm272, %v453
      %462 = vst.msk [vmem:[%s170 + $0x60] sm:$0xff] %vm272, %v454
      %463 = vst.msk [vmem:[%s170 + $0x68] sm:$0xff] %vm272, %v455
      %464 = vst.msk [vmem:[%s170 + $0x70] sm:$0xff] %vm272, %v456
      %465 = vst.msk [vmem:[%s170 + $0x78] sm:$0xff] %vm272, %v457
      %s466 = scalar_lea.vmem %s1, 24
      %v467 = vld [vmem:[%s466] sm:$0xf]
      %v468 = vld [vmem:[%s466 + $0x4] sm:$0xf]
      %v469 = vpack.c.bf16 %v176, %v174
      %v470 = vpack.c.bf16 %v180, %v178
      %v471 = vpack.c.bf16 %v184, %v182
      %v472 = vpack.c.bf16 %v188, %v186
      %s473 = scalar_lea.vmem %s1, 32
      %v474 = vld [vmem:[%s473] sm:$0xf]
      %v475 = vld [vmem:[%s473 + $0x4] sm:$0xf]
      %v478 = vunpack.c.l.b16 %v474
      %v479 = vunpack.c.l.b16 %v475
      %v480 = vpack.c.b16 %v479, %v478
      %v483 = vsel %vm206, %v469, 0
      %v486 = vsel %vm206, %v470, 0
      %v489 = vsel %vm206, %v471, 0
      %v492 = vsel %vm206, %v472, 0
      %494 = vmatpush.bf16.msra.mxu0 0
      %495 = vmatpush.bf16.msra.mxu0 0
      %496 = vmatpush.bf16.msra.mxu0 0
      %497 = vmatpush.bf16.msra.mxu0 0
      %498 = vmatpush.bf16.msra.mxu0 0
      %499 = vmatpush.bf16.msra.mxu0 0
      %500 = vmatpush.bf16.msra.mxu0 0
      %501 = vmatpush.bf16.msra.mxu0 %v480
      %502 = vmatmul.bf16.gmra.mxu0 %v483
      %v503 = vpop.f32.mrf.mxu0
      %v504 = vadd.f32 0.0, %v503
      %v505 = vpop.f32.mrf.mxu0
      %v506 = vadd.f32 0.0, %v505
      %507 = vmatmul.bf16.gmra.mxu0 %v486
      %v508 = vpop.f32.mrf.mxu0
      %v509 = vadd.f32 0.0, %v508
      %v510 = vpop.f32.mrf.mxu0
      %v511 = vadd.f32 0.0, %v510
      %512 = vmatmul.bf16.gmra.mxu0 %v489
      %v513 = vpop.f32.mrf.mxu0
      %v514 = vadd.f32 0.0, %v513
      %v515 = vpop.f32.mrf.mxu0
      %v516 = vadd.f32 0.0, %v515
      %517 = vmatmul.bf16.gmra.mxu0 %v492
      %v518 = vpop.f32.mrf.mxu0
      %v519 = vadd.f32 0.0, %v518
      %v520 = vpop.f32.mrf.mxu0
      %v521 = vadd.f32 0.0, %v520
      %522 = vdwg.mxu0
      %v525 = vunpack.c.l.b16 %v467
      %v526 = vunpack.c.l.b16 %v468
      %v527 = vpack.c.b16 %v526, %v525
      %529 = vmatpush.bf16.msra.mxu0 0
      %530 = vmatpush.bf16.msra.mxu0 0
      %531 = vmatpush.bf16.msra.mxu0 0
      %532 = vmatpush.bf16.msra.mxu0 0
      %533 = vmatpush.bf16.msra.mxu0 0
      %534 = vmatpush.bf16.msra.mxu0 0
      %535 = vmatpush.bf16.msra.mxu0 0
      %536 = vmatpush.bf16.msra.mxu0 %v527
      %537 = vmatmul.bf16.gmra.mxu0 %v208
      %v538 = vpop.f32.mrf.mxu0
      %v539 = vadd.f32 %v504, %v538
      %v540 = vpop.f32.mrf.mxu0
      %v541 = vadd.f32 %v506, %v540
      %542 = vmatmul.bf16.gmra.mxu0 %v211
      %v543 = vpop.f32.mrf.mxu0
      %v544 = vadd.f32 %v509, %v543
      %v545 = vpop.f32.mrf.mxu0
      %v546 = vadd.f32 %v511, %v545
      %547 = vmatmul.bf16.gmra.mxu0 %v214
      %v548 = vpop.f32.mrf.mxu0
      %v549 = vadd.f32 %v514, %v548
      %v550 = vpop.f32.mrf.mxu0
      %v551 = vadd.f32 %v516, %v550
      %552 = vmatmul.bf16.gmra.mxu0 %v217
      %v553 = vpop.f32.mrf.mxu0
      %v554 = vadd.f32 %v519, %v553
      %v555 = vpop.f32.mrf.mxu0
      %v556 = vadd.f32 %v521, %v555
      %557 = vdwg.mxu0
      %v558 = vld [vmem:[%s2] sm:$0x1]
      %v560 = vperm.slane %v558, 0
      %v562 = vadd.f32 %v539, %v560
      %v563 = vadd.f32 %v541, %v560
      %v564 = vadd.f32 %v544, %v560
      %v565 = vadd.f32 %v546, %v560
      %v566 = vadd.f32 %v549, %v560
      %v567 = vadd.f32 %v551, %v560
      %v568 = vadd.f32 %v554, %v560
      %v569 = vadd.f32 %v556, %v560
      %vm570 = vcmp.ge.f32.partialorder %v562, 0.0
      %vm571 = vcmp.ge.f32.partialorder %v563, 0.0
      %vm572 = vcmp.ge.f32.partialorder %v564, 0.0
      %vm573 = vcmp.ge.f32.partialorder %v565, 0.0
      %vm574 = vcmp.ge.f32.partialorder %v566, 0.0
      %vm575 = vcmp.ge.f32.partialorder %v567, 0.0
      %vm576 = vcmp.ge.f32.partialorder %v568, 0.0
      %vm577 = vcmp.ge.f32.partialorder %v569, 0.0
      %v578 = vmul.f32 %v562, 0.01
      %v579 = vmul.f32 %v563, 0.01
      %v580 = vmul.f32 %v564, 0.01
      %v581 = vmul.f32 %v565, 0.01
      %v582 = vmul.f32 %v566, 0.01
      %v583 = vmul.f32 %v567, 0.01
      %v584 = vmul.f32 %v568, 0.01
      %v585 = vmul.f32 %v569, 0.01
      %v586 = vsel %vm570, %v562, %v578
      %v587 = vsel %vm571, %v563, %v579
      %v588 = vsel %vm572, %v564, %v580
      %v589 = vsel %vm573, %v565, %v581
      %v590 = vsel %vm574, %v566, %v582
      %v591 = vsel %vm575, %v567, %v583
      %v592 = vsel %vm576, %v568, %v584
      %v593 = vsel %vm577, %v569, %v585
      %594 = vst.msk [vmem:[%s170 + $0x80] sm:$0xff] %vm272, %v586
      %595 = vst.msk [vmem:[%s170 + $0x88] sm:$0xff] %vm272, %v587
      %596 = vst.msk [vmem:[%s170 + $0x90] sm:$0xff] %vm272, %v588
      %597 = vst.msk [vmem:[%s170 + $0x98] sm:$0xff] %vm272, %v589
      %598 = vst.msk [vmem:[%s170 + $0xa0] sm:$0xff] %vm272, %v590
      %599 = vst.msk [vmem:[%s170 + $0xa8] sm:$0xff] %vm272, %v591
      %600 = vst.msk [vmem:[%s170 + $0xb0] sm:$0xff] %vm272, %v592
      %601 = vst.msk [vmem:[%s170 + $0xb8] sm:$0xff] %vm272, %v593
      %s602 = scalar_lea.vmem %s1, 40
      %v603 = vld [vmem:[%s602] sm:$0xf]
      %v604 = vld [vmem:[%s602 + $0x4] sm:$0xf]
      %s605 = scalar_lea.vmem %s1, 48
      %v606 = vld [vmem:[%s605] sm:$0xf]
      %v607 = vld [vmem:[%s605 + $0x4] sm:$0xf]
      %v610 = vunpack.c.l.b16 %v606
      %v611 = vunpack.c.l.b16 %v607
      %v612 = vpack.c.b16 %v611, %v610
      %614 = vmatpush.bf16.msra.mxu0 0
      %615 = vmatpush.bf16.msra.mxu0 0
      %616 = vmatpush.bf16.msra.mxu0 0
      %617 = vmatpush.bf16.msra.mxu0 0
      %618 = vmatpush.bf16.msra.mxu0 0
      %619 = vmatpush.bf16.msra.mxu0 0
      %620 = vmatpush.bf16.msra.mxu0 0
      %621 = vmatpush.bf16.msra.mxu0 %v612
      %622 = vmatmul.bf16.gmra.mxu0 %v347
      %v623 = vpop.f32.mrf.mxu0
      %v624 = vadd.f32 0.0, %v623
      %v625 = vpop.f32.mrf.mxu0
      %v626 = vadd.f32 0.0, %v625
      %627 = vmatmul.bf16.gmra.mxu0 %v350
      %v628 = vpop.f32.mrf.mxu0
      %v629 = vadd.f32 0.0, %v628
      %v630 = vpop.f32.mrf.mxu0
      %v631 = vadd.f32 0.0, %v630
      %632 = vmatmul.bf16.gmra.mxu0 %v353
      %v633 = vpop.f32.mrf.mxu0
      %v634 = vadd.f32 0.0, %v633
      %v635 = vpop.f32.mrf.mxu0
      %v636 = vadd.f32 0.0, %v635
      %637 = vmatmul.bf16.gmra.mxu0 %v356
      %v638 = vpop.f32.mrf.mxu0
      %v639 = vadd.f32 0.0, %v638
      %v640 = vpop.f32.mrf.mxu0
      %v641 = vadd.f32 0.0, %v640
      %642 = vdwg.mxu0
      %v645 = vunpack.c.l.b16 %v603
      %v646 = vunpack.c.l.b16 %v604
      %v647 = vpack.c.b16 %v646, %v645
      %649 = vmatpush.bf16.msra.mxu0 0
      %650 = vmatpush.bf16.msra.mxu0 0
      %651 = vmatpush.bf16.msra.mxu0 0
      %652 = vmatpush.bf16.msra.mxu0 0
      %653 = vmatpush.bf16.msra.mxu0 0
      %654 = vmatpush.bf16.msra.mxu0 0
      %655 = vmatpush.bf16.msra.mxu0 0
      %656 = vmatpush.bf16.msra.mxu0 %v647
      %657 = vmatmul.bf16.gmra.mxu0 %v208
      %v658 = vpop.f32.mrf.mxu0
      %v659 = vadd.f32 %v624, %v658
      %v660 = vpop.f32.mrf.mxu0
      %v661 = vadd.f32 %v626, %v660
      %662 = vmatmul.bf16.gmra.mxu0 %v211
      %v663 = vpop.f32.mrf.mxu0
      %v664 = vadd.f32 %v629, %v663
      %v665 = vpop.f32.mrf.mxu0
      %v666 = vadd.f32 %v631, %v665
      %667 = vmatmul.bf16.gmra.mxu0 %v214
      %v668 = vpop.f32.mrf.mxu0
      %v669 = vadd.f32 %v634, %v668
      %v670 = vpop.f32.mrf.mxu0
      %v671 = vadd.f32 %v636, %v670
      %672 = vmatmul.bf16.gmra.mxu0 %v217
      %v673 = vpop.f32.mrf.mxu0
      %v674 = vadd.f32 %v639, %v673
      %v675 = vpop.f32.mrf.mxu0
      %v676 = vadd.f32 %v641, %v675
      %677 = vdwg.mxu0
      %s678 = scalar_lea.vmem %s1, 56
      %v679 = vld [vmem:[%s678] sm:$0xf]
      %v680 = vld [vmem:[%s678 + $0x4] sm:$0xf]
      %v683 = vunpack.c.l.b16 %v679
      %v684 = vunpack.c.l.b16 %v680
      %v685 = vpack.c.b16 %v684, %v683
      %687 = vmatpush.bf16.msra.mxu0 0
      %688 = vmatpush.bf16.msra.mxu0 0
      %689 = vmatpush.bf16.msra.mxu0 0
      %690 = vmatpush.bf16.msra.mxu0 0
      %691 = vmatpush.bf16.msra.mxu0 0
      %692 = vmatpush.bf16.msra.mxu0 0
      %693 = vmatpush.bf16.msra.mxu0 0
      %694 = vmatpush.bf16.msra.mxu0 %v685
      %695 = vmatmul.bf16.gmra.mxu0 %v483
      %v696 = vpop.f32.mrf.mxu0
      %v697 = vadd.f32 0.0, %v696
      %v698 = vpop.f32.mrf.mxu0
      %v699 = vadd.f32 0.0, %v698
      %700 = vmatmul.bf16.gmra.mxu0 %v486
      %v701 = vpop.f32.mrf.mxu0
      %v702 = vadd.f32 0.0, %v701
      %v703 = vpop.f32.mrf.mxu0
      %v704 = vadd.f32 0.0, %v703
      %705 = vmatmul.bf16.gmra.mxu0 %v489
      %v706 = vpop.f32.mrf.mxu0
      %v707 = vadd.f32 0.0, %v706
      %v708 = vpop.f32.mrf.mxu0
      %v709 = vadd.f32 0.0, %v708
      %710 = vmatmul.bf16.gmra.mxu0 %v492
      %v711 = vpop.f32.mrf.mxu0
      %v712 = vadd.f32 0.0, %v711
      %v713 = vpop.f32.mrf.mxu0
      %v714 = vadd.f32 0.0, %v713
      %715 = vdwg.mxu0
      %v716 = vadd.f32 %v659, %v697
      %v717 = vadd.f32 %v661, %v699
      %v718 = vadd.f32 %v664, %v702
      %v719 = vadd.f32 %v666, %v704
      %v720 = vadd.f32 %v669, %v707
      %v721 = vadd.f32 %v671, %v709
      %v722 = vadd.f32 %v674, %v712
      %v723 = vadd.f32 %v676, %v714
      %v726 = vrot.slane %v188, 1
      %v727 = vrot.slane %v189, 1
      %v728 = vsel %vm300, %v726, %v727
      %v730 = vpack.c.bf16 %v309, %v306
      %v731 = vpack.c.bf16 %v315, %v312
      %v732 = vpack.c.bf16 %v321, %v318
      %v733 = vpack.c.bf16 %v728, %v324
      %s734 = scalar_lea.vmem %s1, 64
      %v735 = vld [vmem:[%s734] sm:$0xf]
      %v736 = vld [vmem:[%s734 + $0x4] sm:$0xf]
      %v739 = vunpack.c.l.b16 %v735
      %v740 = vunpack.c.l.b16 %v736
      %v741 = vpack.c.b16 %v740, %v739
      %v744 = vsel %vm206, %v730, 0
      %v747 = vsel %vm206, %v731, 0
      %v750 = vsel %vm206, %v732, 0
      %v753 = vsel %vm206, %v733, 0
      %755 = vmatpush.bf16.msra.mxu0 0
      %756 = vmatpush.bf16.msra.mxu0 0
      %757 = vmatpush.bf16.msra.mxu0 0
      %758 = vmatpush.bf16.msra.mxu0 0
      %759 = vmatpush.bf16.msra.mxu0 0
      %760 = vmatpush.bf16.msra.mxu0 0
      %761 = vmatpush.bf16.msra.mxu0 0
      %762 = vmatpush.bf16.msra.mxu0 %v741
      %763 = vmatmul.bf16.gmra.mxu0 %v744
      %v764 = vpop.f32.mrf.mxu0
      %v765 = vadd.f32 0.0, %v764
      %v766 = vpop.f32.mrf.mxu0
      %v767 = vadd.f32 0.0, %v766
      %768 = vmatmul.bf16.gmra.mxu0 %v747
      %v769 = vpop.f32.mrf.mxu0
      %v770 = vadd.f32 0.0, %v769
      %v771 = vpop.f32.mrf.mxu0
      %v772 = vadd.f32 0.0, %v771
      %773 = vmatmul.bf16.gmra.mxu0 %v750
      %v774 = vpop.f32.mrf.mxu0
      %v775 = vadd.f32 0.0, %v774
      %v776 = vpop.f32.mrf.mxu0
      %v777 = vadd.f32 0.0, %v776
      %778 = vmatmul.bf16.gmra.mxu0 %v753
      %v779 = vpop.f32.mrf.mxu0
      %v780 = vadd.f32 0.0, %v779
      %v781 = vpop.f32.mrf.mxu0
      %v782 = vadd.f32 0.0, %v781
      %783 = vdwg.mxu0
      %v784 = vadd.f32 %v716, %v765
      %v785 = vadd.f32 %v717, %v767
      %v786 = vadd.f32 %v718, %v770
      %v787 = vadd.f32 %v719, %v772
      %v788 = vadd.f32 %v720, %v775
      %v789 = vadd.f32 %v721, %v777
      %v790 = vadd.f32 %v722, %v780
      %v791 = vadd.f32 %v723, %v782
      %v792 = vld [vmem:[%s2] sm:$0x1]
      %v794 = vperm.slane %v792, 0
      %v796 = vadd.f32 %v784, %v794
      %v797 = vadd.f32 %v785, %v794
      %v798 = vadd.f32 %v786, %v794
      %v799 = vadd.f32 %v787, %v794
      %v800 = vadd.f32 %v788, %v794
      %v801 = vadd.f32 %v789, %v794
      %v802 = vadd.f32 %v790, %v794
      %v803 = vadd.f32 %v791, %v794
      %vm804 = vcmp.ge.f32.partialorder %v796, 0.0
      %vm805 = vcmp.ge.f32.partialorder %v797, 0.0
      %vm806 = vcmp.ge.f32.partialorder %v798, 0.0
      %vm807 = vcmp.ge.f32.partialorder %v799, 0.0
      %vm808 = vcmp.ge.f32.partialorder %v800, 0.0
      %vm809 = vcmp.ge.f32.partialorder %v801, 0.0
      %vm810 = vcmp.ge.f32.partialorder %v802, 0.0
      %vm811 = vcmp.ge.f32.partialorder %v803, 0.0
      %v812 = vmul.f32 %v796, 0.01
      %v813 = vmul.f32 %v797, 0.01
      %v814 = vmul.f32 %v798, 0.01
      %v815 = vmul.f32 %v799, 0.01
      %v816 = vmul.f32 %v800, 0.01
      %v817 = vmul.f32 %v801, 0.01
      %v818 = vmul.f32 %v802, 0.01
      %v819 = vmul.f32 %v803, 0.01
      %v820 = vsel %vm804, %v796, %v812
      %v821 = vsel %vm805, %v797, %v813
      %v822 = vsel %vm806, %v798, %v814
      %v823 = vsel %vm807, %v799, %v815
      %v824 = vsel %vm808, %v800, %v816
      %v825 = vsel %vm809, %v801, %v817
      %v826 = vsel %vm810, %v802, %v818
      %v827 = vsel %vm811, %v803, %v819
      %828 = vst.msk [vmem:[%s170 + $0xc0] sm:$0xff] %vm272, %v820
      %829 = vst.msk [vmem:[%s170 + $0xc8] sm:$0xff] %vm272, %v821
      %830 = vst.msk [vmem:[%s170 + $0xd0] sm:$0xff] %vm272, %v822
      %831 = vst.msk [vmem:[%s170 + $0xd8] sm:$0xff] %vm272, %v823
      %832 = vst.msk [vmem:[%s170 + $0xe0] sm:$0xff] %vm272, %v824
      %833 = vst.msk [vmem:[%s170 + $0xe8] sm:$0xff] %vm272, %v825
      %834 = vst.msk [vmem:[%s170 + $0xf0] sm:$0xff] %vm272, %v826
      %835 = vst.msk [vmem:[%s170 + $0xf8] sm:$0xff] %vm272, %v827
      %p836 = scmp.lt.s32.totalorder %s14, 1
      %s837 = scalar_select %p836, %s14, 1
      %s838 = smul.addr %s837, 32
      %s839 = smul.addr %s838, 8
      %s840 = scalar_lea.vmem %s3, %s839
      // Predicated region
      $region33: #{forward.10} parent=31 // pred_check
        %p841 = pneg %p100
      $region34: #{forward.10} parent=31 // pred_check_branch
        %843 = sbr.rel (%p841) target = $region36
      $region35: #{forward.10} parent=31 // pred_region
        _
      $region36: #{forward.10} parent=31 // pred_fallthru
        _
    $region32: #{forward.10} parent=5 // pred_fallthru
      _
    %p844 = scmp.le.s32.totalorder 2, %s9
    // Predicated region
    $region37: #{forward.10} parent=5 // pred_check
      %p845 = pneg %p844
    $region38: #{forward.10} parent=5 // pred_check_branch
      %847 = sbr.rel (%p845) target = $region40
    $region39: #{forward.10} parent=5 // pred_region
      %s848 = ssub.s32 %s9, 2
      // Predicated region
      $region41: #{forward.10} parent=39 // pred_check
        %p849 = pneg %p106
      $region42: #{forward.10} parent=39 // pred_check_branch
        %851 = sbr.rel (%p849) target = $region44
      $region43: #{forward.10} parent=39 // pred_region
        %p852 = scmp.lt.s32.totalorder %s15, 1
        %s853 = scalar_select %p852, %s15, 1
        %s854 = smul.addr %s853, 32
        %s855 = smul.addr %s854, 8
        %s856 = scalar_lea.vmem %s3, %s855
      $region44: #{forward.10} parent=39 // pred_fallthru
        _
    $region40: #{forward.10} parent=5 // pred_fallthru
      _
  $region6: #{forward.10} parent=0 // loop_footer
    %s13 = sadd.s32 1, %s9
  $region7: #{forward.10} parent=0 // loop_footer_branch
    %8 = sbr.rel target = $region3
  $region8: #{forward.10} parent=0 // loop_exit
    _

// kernel: forward.11
$region0: #{forward.11}
  #allocation0 [shape = 'u32[]', space=smem, size = 0x4, offset = 0x4, fixed_abs, tag = 'smem constant byte address 0x4 - core index']
  #allocation1 [shape = 'u32[72,128]{1,0:T(1,128)}', space=vmem, size = 0x9000, scoped, tag = 'internal scratch']
  %s0 = inlined_call_operand.vmem [shape: f32[2,18,18,8], index: 0, kind: input, shape index: {}]
  %s1 = inlined_call_operand.vmem [shape: bf16[9,8,4], index: 1, kind: input, shape index: {}]
  %s2 = inlined_call_operand.vmem [shape: f32[1,4], index: 2, kind: input, shape index: {}]
  %s3 = inlined_call_operand.vmem [shape: f32[2,256,4], index: 3, kind: output, shape index: {}]
  %s4 = sld [smem:[#allocation0]]
  $region45: #{forward.11} parent=0
    _
  %s6 = ssub.s32 1, %s4
  %s7 = scalar_select 0, %s6, %s4
  loop: start=0, step=1, limit=4
  $region2: #{forward.11} parent=0 // loop_pre_header
    _
  $region3: #{forward.11} parent=0 // loop_header
    %s9 = sphi 0, %s13
    %p10 = scmp.ge.s32.totalorder %s9, 4
    %s19 = sphi 0, %s21
    %s22 = sphi 0, %s19
    %s23 = sphi 0, %s22
    %s39 = sphi 0, %s23
    %s43 = sphi 0, %s43
    %s45 = sphi 0, %s43
    %s46 = sphi 0, %s45
    %s60 = sphi 0, %s46
    %s64 = sphi 0, %s64
    %s66 = sphi 0, %s64
    %s67 = sphi 0, %s66
    %s81 = sphi 0, %s67
    %s87 = sphi 0, %s89
    %s90 = sphi 0, %s87
    %s91 = sphi 0, %s90
    %s107 = sphi 0, %s91
  $region4: #{forward.11} parent=0 // loop_header_branch
    %12 = sbr.rel (%p10) target = $region8
  $region5: #{forward.11} parent=0 // loop_body
    %s14 = ssub.s32 %s9, 1
    %s15 = ssub.s32 %s9, 2
    %s16 = sadd.s32 %s9, 1
    %s17 = ssub.s32 %s9, %s16
    %p18 = scmp.eq.s32.totalorder %s17, 0
    %s20 = sadd.s32 %s19, 1
    %s21 = scalar_select %p18, %s19, %s20
    %p24 = pneg %p18
    %p25 = scmp.eq.s32.totalorder %s9, 1
    %p26 = por %p24, %p25
    %p27 = scmp.ne.s32.totalorder %s19, %s22
    %p28 = scmp.eq.s32.totalorder %s9, 0
    %p29 = por %p27, %p28
    %p30 = scmp.ne.s32.totalorder %s19, %s22
    %p31 = scmp.eq.s32.totalorder %s14, 1
    %p32 = por %p30, %p31
    %p33 = scmp.ne.s32.totalorder %s22, %s23
    %p34 = scmp.eq.s32.totalorder %s14, 0
    %p35 = por %p33, %p34
    %p36 = scmp.ne.s32.totalorder %s22, %s23
    %p37 = scmp.eq.s32.totalorder %s15, 1
    %p38 = por %p36, %p37
    %p40 = scmp.ne.s32.totalorder %s23, %s39
    %p41 = scmp.eq.s32.totalorder %s15, 0
    %p42 = por %p40, %p41
    %s44 = sadd.s32 %s43, 1
    %p47 = scmp.eq.s32.totalorder %s9, 1
    %p48 = scmp.ne.s32.totalorder %s43, %s45
    %p49 = scmp.eq.s32.totalorder %s9, 0
    %p50 = por %p48, %p49
    %p51 = scmp.ne.s32.totalorder %s43, %s45
    %p52 = scmp.eq.s32.totalorder %s14, 1
    %p53 = por %p51, %p52
    %p54 = scmp.ne.s32.totalorder %s45, %s46
    %p55 = scmp.eq.s32.totalorder %s14, 0
    %p56 = por %p54, %p55
    %p57 = scmp.ne.s32.totalorder %s45, %s46
    %p58 = scmp.eq.s32.totalorder %s15, 1
    %p59 = por %p57, %p58
    %p61 = scmp.ne.s32.totalorder %s46, %s60
    %p62 = scmp.eq.s32.totalorder %s15, 0
    %p63 = por %p61, %p62
    %s65 = sadd.s32 %s64, 1
    %p68 = scmp.eq.s32.totalorder %s9, 1
    %p69 = scmp.ne.s32.totalorder %s64, %s66
    %p70 = scmp.eq.s32.totalorder %s9, 0
    %p71 = por %p69, %p70
    %p72 = scmp.ne.s32.totalorder %s64, %s66
    %p73 = scmp.eq.s32.totalorder %s14, 1
    %p74 = por %p72, %p73
    %p75 = scmp.ne.s32.totalorder %s66, %s67
    %p76 = scmp.eq.s32.totalorder %s14, 0
    %p77 = por %p75, %p76
    %p78 = scmp.ne.s32.totalorder %s66, %s67
    %p79 = scmp.eq.s32.totalorder %s15, 1
    %p80 = por %p78, %p79
    %p82 = scmp.ne.s32.totalorder %s67, %s81
    %p83 = scmp.eq.s32.totalorder %s15, 0
    %p84 = por %p82, %p83
    %s85 = ssub.s32 %s9, %s16
    %p86 = scmp.eq.s32.totalorder %s85, 0
    %s88 = sadd.s32 %s87, 1
    %s89 = scalar_select %p86, %s87, %s88
    %p92 = pneg %p86
    %p93 = scmp.eq.s32.totalorder %s9, 1
    %p94 = por %p92, %p93
    %p95 = scmp.ne.s32.totalorder %s87, %s90
    %p96 = scmp.eq.s32.totalorder %s9, 0
    %p97 = por %p95, %p96
    %p98 = scmp.ne.s32.totalorder %s87, %s90
    %p99 = scmp.eq.s32.totalorder %s14, 1
    %p100 = por %p98, %p99
    %p101 = scmp.ne.s32.totalorder %s90, %s91
    %p102 = scmp.eq.s32.totalorder %s14, 0
    %p103 = por %p101, %p102
    %p104 = scmp.ne.s32.totalorder %s90, %s91
    %p105 = scmp.eq.s32.totalorder %s15, 1
    %p106 = por %p104, %p105
    %p108 = scmp.ne.s32.totalorder %s91, %s107
    %p109 = scmp.eq.s32.totalorder %s15, 0
    %p110 = por %p108, %p109
    %p111 = scmp.le.s32.totalorder 1, %s9
    %p112 = scmp.lt.s32.totalorder %s9, 3
    %p113 = pnand %p111, %p112
    %p114 = pneg %p113
    // Predicated region
    $region9: #{forward.11} parent=5 // pred_check
      _
    $region10: #{forward.11} parent=5 // pred_check_branch
      %116 = sbr.rel (%p113) target = $region12
    $region11: #{forward.11} parent=5 // pred_region
      %s117 = ssub.s32 %s9, 1
      // Predicated region
      $region13: #{forward.11} parent=11 // pred_check
        %p118 = pneg %p56
      $region14: #{forward.11} parent=11 // pred_check_branch
        %120 = sbr.rel (%p118) target = $region16
      $region15: #{forward.11} parent=11 // pred_region
        _
      $region16: #{forward.11} parent=11 // pred_fallthru
        _
      // Predicated region
      $region17: #{forward.11} parent=11 // pred_check
        %p121 = pneg %p77
      $region18: #{forward.11} parent=11 // pred_check_branch
        %123 = sbr.rel (%p121) target = $region20
      $region19: #{forward.11} parent=11 // pred_region
        _
      $region20: #{forward.11} parent=11 // pred_fallthru
        _
    $region12: #{forward.11} parent=5 // pred_fallthru
      _
    %p124 = scmp.lt.s32.totalorder %s9, 2
    // Predicated region
    $region21: #{forward.11} parent=5 // pred_check
      %p125 = pneg %p124
    $region22: #{forward.11} parent=5 // pred_check_branch
      %127 = sbr.rel (%p125) target = $region24
    $region23: #{forward.11} parent=5 // pred_region
      // Predicated region
      $region25: #{forward.11} parent=23 // pred_check
        %p128 = pneg %p29
      $region26: #{forward.11} parent=23 // pred_check_branch
        %130 = sbr.rel (%p128) target = $region28
      $region27: #{forward.11} parent=23 // pred_region
        %p131 = scmp.lt.s32.totalorder %s9, 1
        %s132 = scalar_select %p131, %s9, 1
        %s133 = smul.addr %s132, 54
        %s134 = smul.addr %s133, 8
        %s135 = scalar_lea.vmem %s0, %s134
      $region28: #{forward.11} parent=23 // pred_fallthru
        _
    $region24: #{forward.11} parent=5 // pred_fallthru
      _
    %p136 = scmp.le.s32.totalorder 1, %s9
    %p137 = scmp.lt.s32.totalorder %s9, 3
    %p138 = pnand %p136, %p137
    %p139 = pneg %p138
    // Predicated region
    $region29: #{forward.11} parent=5 // pred_check
      _
    $region30: #{forward.11} parent=5 // pred_check_branch
      %141 = sbr.rel (%p138) target = $region32
    $region31: #{forward.11} parent=5 // pred_region
      %s142 = ssub.s32 %s9, 1
      %p143 = scmp.lt.s32.totalorder %s14, 1
      %s144 = scalar_select %p143, %s14, 1
      %s145 = smul.addr %s144, 54
      %s146 = smul.addr %s145, 8
      %s147 = scalar_lea.vmem %s0, %s146
      %p148 = pneg %p35
      %p149 = pneg %p32
      %p150 = pneg %p56
      %p151 = pneg %p53
      %p152 = pneg %p77
      %p153 = pneg %p74
      %p154 = pneg %p103
      %p155 = pneg %p100
      %p156 = scmp.lt.s32.totalorder %s14, 1
      %s157 = scalar_select %p156, %s14, 1
      %s158 = smul.addr %s157, 32
      %s159 = smul.addr %s158, 8
      %s160 = scalar_lea.vmem %s3, %s159
      %p161 = scmp.lt.s32.totalorder %s14, 1
      %s162 = scalar_select %p161, %s14, 1
      %s163 = smul.addr %s162, 54
      %s164 = smul.addr %s163, 8
      %s165 = scalar_lea.vmem %s0, %s164
      %p166 = scmp.lt.s32.totalorder %s14, 1
      %s167 = scalar_select %p166, %s14, 1
      %s168 = smul.addr %s167, 32
      %s169 = smul.addr %s168, 8
      %s170 = scalar_lea.vmem %s3, %s169
      %v172 = vld [vmem:[%s165] sm:$0xff]
      %v173 = vld [vmem:[%s165 + $0x8] sm:$0xff]
      %v174 = vld [vmem:[%s165 + $0x10] sm:$0x3]
      %v175 = vld [vmem:[%s165 + $0x18] sm:$0xff]
      %v176 = vld [vmem:[%s165 + $0x20] sm:$0xff]
      %v177 = vld [vmem:[%s165 + $0x28] sm:$0x3]
      %v178 = vld [vmem:[%s165 + $0x30] sm:$0xff]
      %v179 = vld [vmem:[%s165 + $0x38] sm:$0xff]
      %v180 = vld [vmem:[%s165 + $0x40] sm:$0x3]
      %v181 = vld [vmem:[%s165 + $0x48] sm:$0xff]
      %v182 = vld [vmem:[%s165 + $0x50] sm:$0xff]
      %v183 = vld [vmem:[%s165 + $0x58] sm:$0x3]
      %v184 = vld [vmem:[%s165 + $0x60] sm:$0xff]
      %v185 = vld [vmem:[%s165 + $0x68] sm:$0xff]
      %v186 = vld [vmem:[%s165 + $0x70] sm:$0x3]
      %v187 = vld [vmem:[%s165 + $0x78] sm:$0xff]
      %v188 = vld [vmem:[%s165 + $0x80] sm:$0xff]
      %v189 = vld [vmem:[%s165 + $0x88] sm:$0x3]
      %v190 = vld [vmem:[%s165 + $0x90] sm:$0xff]
      %v191 = vld [vmem:[%s165 + $0x98] sm:$0xff]
      %v192 = vld [vmem:[%s165 + $0xa0] sm:$0x3]
      %v193 = vld [vmem:[%s165 + $0xa8] sm:$0xff]
      %v194 = vld [vmem:[%s165 + $0xb0] sm:$0xff]
      %v195 = vld [vmem:[%s165 + $0xb8] sm:$0x3]
      %v196 = vld [vmem:[%s165 + $0xc0] sm:$0xff]
      %v197 = vld [vmem:[%s165 + $0xc8] sm:$0xff]
      %v198 = vld [vmem:[%s165 + $0xd0] sm:$0x3]
      %v199 = vld [vmem:[%s165 + $0xd8] sm:$0xff]
      %v200 = vld [vmem:[%s165 + $0xe0] sm:$0xff]
      %v201 = vld [vmem:[%s165 + $0xe8] sm:$0x3]
      %v202 = vld [vmem:[%s165 + $0xf0] sm:$0xff]
      %v203 = vld [vmem:[%s165 + $0xf8] sm:$0xff]
      %v204 = vld [vmem:[%s165 + $0x100] sm:$0x3]
      %v205 = vld [vmem:[%s165 + $0x108] sm:$0xff]
      %v206 = vld [vmem:[%s165 + $0x110] sm:$0xff]
      %v207 = vld [vmem:[%s165 + $0x118] sm:$0x3]
      %v208 = vld [vmem:[%s165 + $0x120] sm:$0xff]
      %v209 = vld [vmem:[%s165 + $0x128] sm:$0xff]
      %v210 = vld [vmem:[%s165 + $0x130] sm:$0x3]
      %v211 = vld [vmem:[%s165 + $0x138] sm:$0xff]
      %v212 = vld [vmem:[%s165 + $0x140] sm:$0xff]
      %v213 = vld [vmem:[%s165 + $0x148] sm:$0x3]
      %v214 = vld [vmem:[%s165 + $0x150] sm:$0xff]
      %v215 = vld [vmem:[%s165 + $0x158] sm:$0xff]
      %v216 = vld [vmem:[%s165 + $0x160] sm:$0x3]
      %v217 = vld [vmem:[%s165 + $0x168] sm:$0xff]
      %v218 = vld [vmem:[%s165 + $0x170] sm:$0xff]
      %v219 = vld [vmem:[%s165 + $0x178] sm:$0x3]
      %v220 = vld [vmem:[%s165 + $0x180] sm:$0xff]
      %v221 = vld [vmem:[%s165 + $0x188] sm:$0xff]
      %v222 = vld [vmem:[%s165 + $0x190] sm:$0x3]
      %v223 = vld [vmem:[%s165 + $0x198] sm:$0xff]
      %v224 = vld [vmem:[%s165 + $0x1a0] sm:$0xff]
      %v225 = vld [vmem:[%s165 + $0x1a8] sm:$0x3]
      %v226 = vpack.c.bf16 %v173, %v172
      %v227 = vpack.c.bf16 %v176, %v175
      %v228 = vpack.c.bf16 %v179, %v178
      %v229 = vpack.c.bf16 %v182, %v181
      %v230 = vpack.c.bf16 %v185, %v184
      %v231 = vpack.c.bf16 %v188, %v187
      %v232 = vpack.c.bf16 %v191, %v190
      %v233 = vpack.c.bf16 %v194, %v193
      %v234 = vpack.c.bf16 %v197, %v196
      %v235 = vpack.c.bf16 %v200, %v199
      %v236 = vpack.c.bf16 %v203, %v202
      %v237 = vpack.c.bf16 %v206, %v205
      %v238 = vpack.c.bf16 %v209, %v208
      %v239 = vpack.c.bf16 %v212, %v211
      %v240 = vpack.c.bf16 %v215, %v214
      %v241 = vpack.c.bf16 %v218, %v217
      %v242 = vld [vmem:[%s1] sm:$0xf]
      %vm291 = vcmask 1046528
      %v292 = vrot.slane %v172, 1
      %v293 = vrot.slane %v173, 1
      %v294 = vsel %vm291, %v292, %v293
      %v295 = vrot.slane %v174, 1
      %v296 = vsel %vm291, %v293, %v295
      %v297 = vrot.slane %v175, 1
      %v298 = vrot.slane %v176, 1
      %v299 = vsel %vm291, %v297, %v298
      %v300 = vrot.slane %v177, 1
      %v301 = vsel %vm291, %v298, %v300
      %v302 = vrot.slane %v178, 1
      %v303 = vrot.slane %v179, 1
      %v304 = vsel %vm291, %v302, %v303
      %v305 = vrot.slane %v180, 1
      %v306 = vsel %vm291, %v303, %v305
      %v307 = vrot.slane %v181, 1
      %v308 = vrot.slane %v182, 1
      %v309 = vsel %vm291, %v307, %v308
      %v310 = vrot.slane %v183, 1
      %v311 = vsel %vm291, %v308, %v310
      %v312 = vrot.slane %v184, 1
      %v313 = vrot.slane %v185, 1
      %v314 = vsel %vm291, %v312, %v313
      %v315 = vrot.slane %v186, 1
      %v316 = vsel %vm291, %v313, %v315
      %v317 = vrot.slane %v187, 1
      %v318 = vrot.slane %v188, 1
      %v319 = vsel %vm291, %v317, %v318
      %v320 = vrot.slane %v189, 1
      %v321 = vsel %vm291, %v318, %v320
      %v322 = vrot.slane %v190, 1
      %v323 = vrot.slane %v191, 1
      %v324 = vsel %vm291, %v322, %v323
      %v325 = vrot.slane %v192, 1
      %v326 = vsel %vm291, %v323, %v325
      %v327 = vrot.slane %v193, 1
      %v328 = vrot.slane %v194, 1
      %v329 = vsel %vm291, %v327, %v328
      %v330 = vrot.slane %v195, 1
      %v331 = vsel %vm291, %v328, %v330
      %v332 = vrot.slane %v196, 1
      %v333 = vrot.slane %v197, 1
      %v334 = vsel %vm291, %v332, %v333
      %v335 = vrot.slane %v198, 1
      %v336 = vsel %vm291, %v333, %v335
      %v337 = vrot.slane %v199, 1
      %v338 = vrot.slane %v200, 1
      %v339 = vsel %vm291, %v337, %v338
      %v340 = vrot.slane %v201, 1
      %v341 = vsel %vm291, %v338, %v340
      %v342 = vrot.slane %v202, 1
      %v343 = vrot.slane %v203, 1
      %v344 = vsel %vm291, %v342, %v343
      %v345 = vrot.slane %v204, 1
      %v346 = vsel %vm291, %v343, %v345
      %v347 = vrot.slane %v205, 1
      %v348 = vrot.slane %v206, 1
      %v349 = vsel %vm291, %v347, %v348
      %v350 = vrot.slane %v207, 1
      %v351 = vsel %vm291, %v348, %v350
      %v352 = vrot.slane %v208, 1
      %v353 = vrot.slane %v209, 1
      %v354 = vsel %vm291, %v352, %v353
      %v355 = vrot.slane %v210, 1
      %v356 = vsel %vm291, %v353, %v355
      %v357 = vrot.slane %v211, 1
      %v358 = vrot.slane %v212, 1
      %v359 = vsel %vm291, %v357, %v358
      %v360 = vrot.slane %v213, 1
      %v361 = vsel %vm291, %v358, %v360
      %v362 = vrot.slane %v214, 1
      %v363 = vrot.slane %v215, 1
      %v364 = vsel %vm291, %v362, %v363
      %v365 = vrot.slane %v216, 1
      %v366 = vsel %vm291, %v363, %v365
      %v367 = vrot.slane %v217, 1
      %v368 = vrot.slane %v218, 1
      %v369 = vsel %vm291, %v367, %v368
      %v370 = vrot.slane %v219, 1
      %v371 = vsel %vm291, %v368, %v370
      %v404 = vpack.c.bf16 %v296, %v294
      %v405 = vpack.c.bf16 %v301, %v299
      %v406 = vpack.c.bf16 %v306, %v304
      %v407 = vpack.c.bf16 %v311, %v309
      %v408 = vpack.c.bf16 %v316, %v314
      %v409 = vpack.c.bf16 %v321, %v319
      %v410 = vpack.c.bf16 %v326, %v324
      %v411 = vpack.c.bf16 %v331, %v329
      %v412 = vpack.c.bf16 %v336, %v334
      %v413 = vpack.c.bf16 %v341, %v339
      %v414 = vpack.c.bf16 %v346, %v344
      %v415 = vpack.c.bf16 %v351, %v349
      %v416 = vpack.c.bf16 %v356, %v354
      %v417 = vpack.c.bf16 %v361, %v359
      %v418 = vpack.c.bf16 %v366, %v364
      %v419 = vpack.c.bf16 %v371, %v369
      %s420 = scalar_lea.vmem %s1, 4
      %v421 = vld [vmem:[%s420] sm:$0xf]
      %vm422 = vcmask 64512
      %v424 = vsel %vm422, %v404, 0
      %v427 = vsel %vm422, %v405, 0
      %v430 = vsel %vm422, %v406, 0
      %v433 = vsel %vm422, %v407, 0
      %v436 = vsel %vm422, %v408, 0
      %v439 = vsel %vm422, %v409, 0
      %v442 = vsel %vm422, %v410, 0
      %v445 = vsel %vm422, %v411, 0
      %v448 = vsel %vm422, %v412, 0
      %v451 = vsel %vm422, %v413, 0
      %v454 = vsel %vm422, %v414, 0
      %v457 = vsel %vm422, %v415, 0
      %v460 = vsel %vm422, %v416, 0
      %v463 = vsel %vm422, %v417, 0
      %v466 = vsel %vm422, %v418, 0
      %v469 = vsel %vm422, %v419, 0
      %vm471 = vcmask 1043456
      %v473 = vsel %vm471, %v421, 0
      %475 = vmatpush.bf16.msra.mxu0 0
      %476 = vmatpush.bf16.msra.mxu0 0
      %477 = vmatpush.bf16.msra.mxu0 0
      %478 = vmatpush.bf16.msra.mxu0 0
      %479 = vmatpush.bf16.msra.mxu0 0
      %480 = vmatpush.bf16.msra.mxu0 0
      %481 = vmatpush.bf16.msra.mxu0 0
      %482 = vmatpush.bf16.msra.mxu0 %v473
      %483 = vmatmul.bf16.gmra.mxu0 %v424
      %v484 = vpop.f32.mrf.mxu0
      %v485 = vadd.f32 0.0, %v484
      %v486 = vpop.f32.mrf.mxu0
      %v487 = vadd.f32 0.0, %v486
      %488 = vmatmul.bf16.gmra.mxu0 %v427
      %v489 = vpop.f32.mrf.mxu0
      %v490 = vadd.f32 0.0, %v489
      %v491 = vpop.f32.mrf.mxu0
      %v492 = vadd.f32 0.0, %v491
      %493 = vmatmul.bf16.gmra.mxu0 %v430
      %v494 = vpop.f32.mrf.mxu0
      %v495 = vadd.f32 0.0, %v494
      %v496 = vpop.f32.mrf.mxu0
      %v497 = vadd.f32 0.0, %v496
      %498 = vmatmul.bf16.gmra.mxu0 %v433
      %v499 = vpop.f32.mrf.mxu0
      %v500 = vadd.f32 0.0, %v499
      %v501 = vpop.f32.mrf.mxu0
      %v502 = vadd.f32 0.0, %v501
      %503 = vmatmul.bf16.gmra.mxu0 %v436
      %v504 = vpop.f32.mrf.mxu0
      %v505 = vadd.f32 0.0, %v504
      %v506 = vpop.f32.mrf.mxu0
      %v507 = vadd.f32 0.0, %v506
      %508 = vmatmul.bf16.gmra.mxu0 %v439
      %v509 = vpop.f32.mrf.mxu0
      %v510 = vadd.f32 0.0, %v509
      %v511 = vpop.f32.mrf.mxu0
      %v512 = vadd.f32 0.0, %v511
      %513 = vmatmul.bf16.gmra.mxu0 %v442
      %v514 = vpop.f32.mrf.mxu0
      %v515 = vadd.f32 0.0, %v514
      %v516 = vpop.f32.mrf.mxu0
      %v517 = vadd.f32 0.0, %v516
      %518 = vmatmul.bf16.gmra.mxu0 %v445
      %v519 = vpop.f32.mrf.mxu0
      %v520 = vadd.f32 0.0, %v519
      %v521 = vpop.f32.mrf.mxu0
      %v522 = vadd.f32 0.0, %v521
      %523 = vmatmul.bf16.gmra.mxu0 %v448
      %v524 = vpop.f32.mrf.mxu0
      %v525 = vadd.f32 0.0, %v524
      %v526 = vpop.f32.mrf.mxu0
      %v527 = vadd.f32 0.0, %v526
      %528 = vmatmul.bf16.gmra.mxu0 %v451
      %v529 = vpop.f32.mrf.mxu0
      %v530 = vadd.f32 0.0, %v529
      %v531 = vpop.f32.mrf.mxu0
      %v532 = vadd.f32 0.0, %v531
      %533 = vmatmul.bf16.gmra.mxu0 %v454
      %v534 = vpop.f32.mrf.mxu0
      %v535 = vadd.f32 0.0, %v534
      %v536 = vpop.f32.mrf.mxu0
      %v537 = vadd.f32 0.0, %v536
      %538 = vmatmul.bf16.gmra.mxu0 %v457
      %v539 = vpop.f32.mrf.mxu0
      %v540 = vadd.f32 0.0, %v539
      %v541 = vpop.f32.mrf.mxu0
      %v542 = vadd.f32 0.0, %v541
      %543 = vmatmul.bf16.gmra.mxu0 %v460
      %v544 = vpop.f32.mrf.mxu0
      %v545 = vadd.f32 0.0, %v544
      %v546 = vpop.f32.mrf.mxu0
      %v547 = vadd.f32 0.0, %v546
      %548 = vmatmul.bf16.gmra.mxu0 %v463
      %v549 = vpop.f32.mrf.mxu0
      %v550 = vadd.f32 0.0, %v549
      %v551 = vpop.f32.mrf.mxu0
      %v552 = vadd.f32 0.0, %v551
      %553 = vmatmul.bf16.gmra.mxu0 %v466
      %v554 = vpop.f32.mrf.mxu0
      %v555 = vadd.f32 0.0, %v554
      %v556 = vpop.f32.mrf.mxu0
      %v557 = vadd.f32 0.0, %v556
      %558 = vmatmul.bf16.gmra.mxu0 %v469
      %v559 = vpop.f32.mrf.mxu0
      %v560 = vadd.f32 0.0, %v559
      %v561 = vpop.f32.mrf.mxu0
      %v562 = vadd.f32 0.0, %v561
      %563 = vdwg.mxu0
      %v565 = vsel %vm422, %v226, 0
      %v568 = vsel %vm422, %v227, 0
      %v571 = vsel %vm422, %v228, 0
      %v574 = vsel %vm422, %v229, 0
      %v577 = vsel %vm422, %v230, 0
      %v580 = vsel %vm422, %v231, 0
      %v583 = vsel %vm422, %v232, 0
      %v586 = vsel %vm422, %v233, 0
      %v589 = vsel %vm422, %v234, 0
      %v592 = vsel %vm422, %v235, 0
      %v595 = vsel %vm422, %v236, 0
      %v598 = vsel %vm422, %v237, 0
      %v601 = vsel %vm422, %v238, 0
      %v604 = vsel %vm422, %v239, 0
      %v607 = vsel %vm422, %v240, 0
      %v610 = vsel %vm422, %v241, 0
      %v613 = vsel %vm471, %v242, 0
      %615 = vmatpush.bf16.msra.mxu0 0
      %616 = vmatpush.bf16.msra.mxu0 0
      %617 = vmatpush.bf16.msra.mxu0 0
      %618 = vmatpush.bf16.msra.mxu0 0
      %619 = vmatpush.bf16.msra.mxu0 0
      %620 = vmatpush.bf16.msra.mxu0 0
      %621 = vmatpush.bf16.msra.mxu0 0
      %622 = vmatpush.bf16.msra.mxu0 %v613
      %623 = vmatmul.bf16.gmra.mxu0 %v565
      %v624 = vpop.f32.mrf.mxu0
      %v625 = vadd.f32 %v485, %v624
      %v626 = vpop.f32.mrf.mxu0
      %v627 = vadd.f32 %v487, %v626
      %628 = vmatmul.bf16.gmra.mxu0 %v568
      %v629 = vpop.f32.mrf.mxu0
      %v630 = vadd.f32 %v490, %v629
      %v631 = vpop.f32.mrf.mxu0
      %v632 = vadd.f32 %v492, %v631
      %633 = vmatmul.bf16.gmra.mxu0 %v571
      %v634 = vpop.f32.mrf.mxu0
      %v635 = vadd.f32 %v495, %v634
      %v636 = vpop.f32.mrf.mxu0
      %v637 = vadd.f32 %v497, %v636
      %638 = vmatmul.bf16.gmra.mxu0 %v574
      %v639 = vpop.f32.mrf.mxu0
      %v640 = vadd.f32 %v500, %v639
      %v641 = vpop.f32.mrf.mxu0
      %v642 = vadd.f32 %v502, %v641
      %643 = vmatmul.bf16.gmra.mxu0 %v577
      %v644 = vpop.f32.mrf.mxu0
      %v645 = vadd.f32 %v505, %v644
      %v646 = vpop.f32.mrf.mxu0
      %v647 = vadd.f32 %v507, %v646
      %648 = vmatmul.bf16.gmra.mxu0 %v580
      %v649 = vpop.f32.mrf.mxu0
      %v650 = vadd.f32 %v510, %v649
      %v651 = vpop.f32.mrf.mxu0
      %v652 = vadd.f32 %v512, %v651
      %653 = vmatmul.bf16.gmra.mxu0 %v583
      %v654 = vpop.f32.mrf.mxu0
      %v655 = vadd.f32 %v515, %v654
      %v656 = vpop.f32.mrf.mxu0
      %v657 = vadd.f32 %v517, %v656
      %658 = vmatmul.bf16.gmra.mxu0 %v586
      %v659 = vpop.f32.mrf.mxu0
      %v660 = vadd.f32 %v520, %v659
      %v661 = vpop.f32.mrf.mxu0
      %v662 = vadd.f32 %v522, %v661
      %663 = vmatmul.bf16.gmra.mxu0 %v589
      %v664 = vpop.f32.mrf.mxu0
      %v665 = vadd.f32 %v525, %v664
      %v666 = vpop.f32.mrf.mxu0
      %v667 = vadd.f32 %v527, %v666
      %668 = vmatmul.bf16.gmra.mxu0 %v592
      %v669 = vpop.f32.mrf.mxu0
      %v670 = vadd.f32 %v530, %v669
      %v671 = vpop.f32.mrf.mxu0
      %v672 = vadd.f32 %v532, %v671
      %673 = vmatmul.bf16.gmra.mxu0 %v595
      %v674 = vpop.f32.mrf.mxu0
      %v675 = vadd.f32 %v535, %v674
      %v676 = vpop.f32.mrf.mxu0
      %v677 = vadd.f32 %v537, %v676
      %678 = vmatmul.bf16.gmra.mxu0 %v598
      %v679 = vpop.f32.mrf.mxu0
      %v680 = vadd.f32 %v540, %v679
      %v681 = vpop.f32.mrf.mxu0
      %v682 = vadd.f32 %v542, %v681
      %683 = vmatmul.bf16.gmra.mxu0 %v601
      %v684 = vpop.f32.mrf.mxu0
      %v685 = vadd.f32 %v545, %v684
      %v686 = vpop.f32.mrf.mxu0
      %v687 = vadd.f32 %v547, %v686
      %688 = vmatmul.bf16.gmra.mxu0 %v604
      %v689 = vpop.f32.mrf.mxu0
      %v690 = vadd.f32 %v550, %v689
      %v691 = vpop.f32.mrf.mxu0
      %v692 = vadd.f32 %v552, %v691
      %693 = vmatmul.bf16.gmra.mxu0 %v607
      %v694 = vpop.f32.mrf.mxu0
      %v695 = vadd.f32 %v555, %v694
      %v696 = vpop.f32.mrf.mxu0
      %v697 = vadd.f32 %v557, %v696
      %698 = vmatmul.bf16.gmra.mxu0 %v610
      %v699 = vpop.f32.mrf.mxu0
      %v700 = vadd.f32 %v560, %v699
      %v701 = vpop.f32.mrf.mxu0
      %v702 = vadd.f32 %v562, %v701
      %703 = vdwg.mxu0
      %vm704 = vcmask 1045504
      %v705 = vrot.slane %v172, 2
      %v706 = vrot.slane %v173, 2
      %v707 = vsel %vm704, %v705, %v706
      %v708 = vrot.slane %v174, 2
      %v709 = vsel %vm704, %v706, %v708
      %v710 = vrot.slane %v175, 2
      %v711 = vrot.slane %v176, 2
      %v712 = vsel %vm704, %v710, %v711
      %v713 = vrot.slane %v177, 2
      %v714 = vsel %vm704, %v711, %v713
      %v715 = vrot.slane %v178, 2
      %v716 = vrot.slane %v179, 2
      %v717 = vsel %vm704, %v715, %v716
      %v718 = vrot.slane %v180, 2
      %v719 = vsel %vm704, %v716, %v718
      %v720 = vrot.slane %v181, 2
      %v721 = vrot.slane %v182, 2
      %v722 = vsel %vm704, %v720, %v721
      %v723 = vrot.slane %v183, 2
      %v724 = vsel %vm704, %v721, %v723
      %v725 = vrot.slane %v184, 2
      %v726 = vrot.slane %v185, 2
      %v727 = vsel %vm704, %v725, %v726
      %v728 = vrot.slane %v186, 2
      %v729 = vsel %vm704, %v726, %v728
      %v730 = vrot.slane %v187, 2
      %v731 = vrot.slane %v188, 2
      %v732 = vsel %vm704, %v730, %v731
      %v733 = vrot.slane %v189, 2
      %v734 = vsel %vm704, %v731, %v733
      %v735 = vrot.slane %v190, 2
      %v736 = vrot.slane %v191, 2
      %v737 = vsel %vm704, %v735, %v736
      %v738 = vrot.slane %v192, 2
      %v739 = vsel %vm704, %v736, %v738
      %v740 = vrot.slane %v193, 2
      %v741 = vrot.slane %v194, 2
      %v742 = vsel %vm704, %v740, %v741
      %v743 = vrot.slane %v195, 2
      %v744 = vsel %vm704, %v741, %v743
      %v745 = vrot.slane %v196, 2
      %v746 = vrot.slane %v197, 2
      %v747 = vsel %vm704, %v745, %v746
      %v748 = vrot.slane %v198, 2
      %v749 = vsel %vm704, %v746, %v748
      %v750 = vrot.slane %v199, 2
      %v751 = vrot.slane %v200, 2
      %v752 = vsel %vm704, %v750, %v751
      %v753 = vrot.slane %v201, 2
      %v754 = vsel %vm704, %v751, %v753
      %v755 = vrot.slane %v202, 2
      %v756 = vrot.slane %v203, 2
      %v757 = vsel %vm704, %v755, %v756
      %v758 = vrot.slane %v204, 2
      %v759 = vsel %vm704, %v756, %v758
      %v760 = vrot.slane %v205, 2
      %v761 = vrot.slane %v206, 2
      %v762 = vsel %vm704, %v760, %v761
      %v763 = vrot.slane %v207, 2
      %v764 = vsel %vm704, %v761, %v763
      %v765 = vrot.slane %v208, 2
      %v766 = vrot.slane %v209, 2
      %v767 = vsel %vm704, %v765, %v766
      %v768 = vrot.slane %v210, 2
      %v769 = vsel %vm704, %v766, %v768
      %v770 = vrot.slane %v211, 2
      %v771 = vrot.slane %v212, 2
      %v772 = vsel %vm704, %v770, %v771
      %v773 = vrot.slane %v213, 2
      %v774 = vsel %vm704, %v771, %v773
      %v775 = vrot.slane %v214, 2
      %v776 = vrot.slane %v215, 2
      %v777 = vsel %vm704, %v775, %v776
      %v778 = vrot.slane %v216, 2
      %v779 = vsel %vm704, %v776, %v778
      %v780 = vrot.slane %v217, 2
      %v781 = vrot.slane %v218, 2
      %v782 = vsel %vm704, %v780, %v781
      %v783 = vrot.slane %v219, 2
      %v784 = vsel %vm704, %v781, %v783
      %v817 = vpack.c.bf16 %v709, %v707
      %v818 = vpack.c.bf16 %v714, %v712
      %v819 = vpack.c.bf16 %v719, %v717
      %v820 = vpack.c.bf16 %v724, %v722
      %v821 = vpack.c.bf16 %v729, %v727
      %v822 = vpack.c.bf16 %v734, %v732
      %v823 = vpack.c.bf16 %v739, %v737
      %v824 = vpack.c.bf16 %v744, %v742
      %v825 = vpack.c.bf16 %v749, %v747
      %v826 = vpack.c.bf16 %v754, %v752
      %v827 = vpack.c.bf16 %v759, %v757
      %v828 = vpack.c.bf16 %v764, %v762
      %v829 = vpack.c.bf16 %v769, %v767
      %v830 = vpack.c.bf16 %v774, %v772
      %v831 = vpack.c.bf16 %v779, %v777
      %v832 = vpack.c.bf16 %v784, %v782
      %s833 = scalar_lea.vmem %s1, 8
      %v834 = vld [vmem:[%s833] sm:$0xf]
      %v836 = vsel %vm422, %v817, 0
      %v839 = vsel %vm422, %v818, 0
      %v842 = vsel %vm422, %v819, 0
      %v845 = vsel %vm422, %v820, 0
      %v848 = vsel %vm422, %v821, 0
      %v851 = vsel %vm422, %v822, 0
      %v854 = vsel %vm422, %v823, 0
      %v857 = vsel %vm422, %v824, 0
      %v860 = vsel %vm422, %v825, 0
      %v863 = vsel %vm422, %v826, 0
      %v866 = vsel %vm422, %v827, 0
      %v869 = vsel %vm422, %v828, 0
      %v872 = vsel %vm422, %v829, 0
      %v875 = vsel %vm422, %v830, 0
      %v878 = vsel %vm422, %v831, 0
      %v881 = vsel %vm422, %v832, 0
      %v884 = vsel %vm471, %v834, 0
      %886 = vmatpush.bf16.msra.mxu0 0
      %887 = vmatpush.bf16.msra.mxu0 0
      %888 = vmatpush.bf16.msra.mxu0 0
      %889 = vmatpush.bf16.msra.mxu0 0
      %890 = vmatpush.bf16.msra.mxu0 0
      %891 = vmatpush.bf16.msra.mxu0 0
      %892 = vmatpush.bf16.msra.mxu0 0
      %893 = vmatpush.bf16.msra.mxu0 %v884
      %894 = vmatmul.bf16.gmra.mxu0 %v836
      %v895 = vpop.f32.mrf.mxu0
      %v896 = vadd.f32 0.0, %v895
      %v897 = vpop.f32.mrf.mxu0
      %v898 = vadd.f32 0.0, %v897
      %899 = vmatmul.bf16.gmra.mxu0 %v839
      %v900 = vpop.f32.mrf.mxu0
      %v901 = vadd.f32 0.0, %v900
      %v902 = vpop.f32.mrf.mxu0
      %v903 = vadd.f32 0.0, %v902
      %904 = vmatmul.bf16.gmra.mxu0 %v842
      %v905 = vpop.f32.mrf.mxu0
      %v906 = vadd.f32 0.0, %v905
      %v907 = vpop.f32.mrf.mxu0
      %v908 = vadd.f32 0.0, %v907
      %909 = vmatmul.bf16.gmra.mxu0 %v845
      %v910 = vpop.f32.mrf.mxu0
      %v911 = vadd.f32 0.0, %v910
      %v912 = vpop.f32.mrf.mxu0
      %v913 = vadd.f32 0.0, %v912
      %914 = vmatmul.bf16.gmra.mxu0 %v848
      %v915 = vpop.f32.mrf.mxu0
      %v916 = vadd.f32 0.0, %v915
      %v917 = vpop.f32.mrf.mxu0
      %v918 = vadd.f32 0.0, %v917
      %919 = vmatmul.bf16.gmra.mxu0 %v851
      %v920 = vpop.f32.mrf.mxu0
      %v921 = vadd.f32 0.0, %v920
      %v922 = vpop.f32.mrf.mxu0
      %v923 = vadd.f32 0.0, %v922
      %924 = vmatmul.bf16.gmra.mxu0 %v854
      %v925 = vpop.f32.mrf.mxu0
      %v926 = vadd.f32 0.0, %v925
      %v927 = vpop.f32.mrf.mxu0
      %v928 = vadd.f32 0.0, %v927
      %929 = vmatmul.bf16.gmra.mxu0 %v857
      %v930 = vpop.f32.mrf.mxu0
      %v931 = vadd.f32 0.0, %v930
      %v932 = vpop.f32.mrf.mxu0
      %v933 = vadd.f32 0.0, %v932
      %934 = vmatmul.bf16.gmra.mxu0 %v860
      %v935 = vpop.f32.mrf.mxu0
      %v936 = vadd.f32 0.0, %v935
      %v937 = vpop.f32.mrf.mxu0
      %v938 = vadd.f32 0.0, %v937
      %939 = vmatmul.bf16.gmra.mxu0 %v863
      %v940 = vpop.f32.mrf.mxu0
      %v941 = vadd.f32 0.0, %v940
      %v942 = vpop.f32.mrf.mxu0
      %v943 = vadd.f32 0.0, %v942
      %944 = vmatmul.bf16.gmra.mxu0 %v866
      %v945 = vpop.f32.mrf.mxu0
      %v946 = vadd.f32 0.0, %v945
      %v947 = vpop.f32.mrf.mxu0
      %v948 = vadd.f32 0.0, %v947
      %949 = vmatmul.bf16.gmra.mxu0 %v869
      %v950 = vpop.f32.mrf.mxu0
      %v951 = vadd.f32 0.0, %v950
      %v952 = vpop.f32.mrf.mxu0
      %v953 = vadd.f32 0.0, %v952
      %954 = vmatmul.bf16.gmra.mxu0 %v872
      %v955 = vpop.f32.mrf.mxu0
      %v956 = vadd.f32 0.0, %v955
      %v957 = vpop.f32.mrf.mxu0
      %v958 = vadd.f32 0.0, %v957
      %959 = vmatmul.bf16.gmra.mxu0 %v875
      %v960 = vpop.f32.mrf.mxu0
      %v961 = vadd.f32 0.0, %v960
      %v962 = vpop.f32.mrf.mxu0
      %v963 = vadd.f32 0.0, %v962
      %964 = vmatmul.bf16.gmra.mxu0 %v878
      %v965 = vpop.f32.mrf.mxu0
      %v966 = vadd.f32 0.0, %v965
      %v967 = vpop.f32.mrf.mxu0
      %v968 = vadd.f32 0.0, %v967
      %969 = vmatmul.bf16.gmra.mxu0 %v881
      %v970 = vpop.f32.mrf.mxu0
      %v971 = vadd.f32 0.0, %v970
      %v972 = vpop.f32.mrf.mxu0
      %v973 = vadd.f32 0.0, %v972
      %974 = vdwg.mxu0
      %v975 = vadd.f32 %v625, %v896
      %v976 = vadd.f32 %v627, %v898
      %v977 = vadd.f32 %v630, %v901
      %v978 = vadd.f32 %v632, %v903
      %v979 = vadd.f32 %v635, %v906
      %v980 = vadd.f32 %v637, %v908
      %v981 = vadd.f32 %v640, %v911
      %v982 = vadd.f32 %v642, %v913
      %v983 = vadd.f32 %v645, %v916
      %v984 = vadd.f32 %v647, %v918
      %v985 = vadd.f32 %v650, %v921
      %v986 = vadd.f32 %v652, %v923
      %v987 = vadd.f32 %v655, %v926
      %v988 = vadd.f32 %v657, %v928
      %v989 = vadd.f32 %v660, %v931
      %v990 = vadd.f32 %v662, %v933
      %v991 = vadd.f32 %v665, %v936
      %v992 = vadd.f32 %v667, %v938
      %v993 = vadd.f32 %v670, %v941
      %v994 = vadd.f32 %v672, %v943
      %v995 = vadd.f32 %v675, %v946
      %v996 = vadd.f32 %v677, %v948
      %v997 = vadd.f32 %v680, %v951
      %v998 = vadd.f32 %v682, %v953
      %v999 = vadd.f32 %v685, %v956
      %v1000 = vadd.f32 %v687, %v958
      %v1001 = vadd.f32 %v690, %v961
      %v1002 = vadd.f32 %v692, %v963
      %v1003 = vadd.f32 %v695, %v966
      %v1004 = vadd.f32 %v697, %v968
      %v1005 = vadd.f32 %v700, %v971
      %v1006 = vadd.f32 %v702, %v973
      %v1007 = vpack.c.bf16 %v221, %v220
      %s1008 = scalar_lea.vmem %s1, 12
      %v1009 = vld [vmem:[%s1008] sm:$0xf]
      %v1011 = vsel %vm422, %v1007, 0
      %v1014 = vsel %vm471, %v1009, 0
      %1016 = vmatpush.bf16.msra.mxu0 0
      %1017 = vmatpush.bf16.msra.mxu0 0
      %1018 = vmatpush.bf16.msra.mxu0 0
      %1019 = vmatpush.bf16.msra.mxu0 0
      %1020 = vmatpush.bf16.msra.mxu0 0
      %1021 = vmatpush.bf16.msra.mxu0 0
      %1022 = vmatpush.bf16.msra.mxu0 0
      %1023 = vmatpush.bf16.msra.mxu0 %v1014
      %1024 = vmatmul.bf16.gmra.mxu0 %v568
      %v1025 = vpop.f32.mrf.mxu0
      %v1026 = vadd.f32 0.0, %v1025
      %v1027 = vpop.f32.mrf.mxu0
      %v1028 = vadd.f32 0.0, %v1027
      %1029 = vmatmul.bf16.gmra.mxu0 %v571
      %v1030 = vpop.f32.mrf.mxu0
      %v1031 = vadd.f32 0.0, %v1030
      %v1032 = vpop.f32.mrf.mxu0
      %v1033 = vadd.f32 0.0, %v1032
      %1034 = vmatmul.bf16.gmra.mxu0 %v574
      %v1035 = vpop.f32.mrf.mxu0
      %v1036 = vadd.f32 0.0, %v1035
      %v1037 = vpop.f32.mrf.mxu0
      %v1038 = vadd.f32 0.0, %v1037
      %1039 = vmatmul.bf16.gmra.mxu0 %v577
      %v1040 = vpop.f32.mrf.mxu0
      %v1041 = vadd.f32 0.0, %v1040
      %v1042 = vpop.f32.mrf.mxu0
      %v1043 = vadd.f32 0.0, %v1042
      %1044 = vmatmul.bf16.gmra.mxu0 %v580
      %v1045 = vpop.f32.mrf.mxu0
      %v1046 = vadd.f32 0.0, %v1045
      %v1047 = vpop.f32.mrf.mxu0
      %v1048 = vadd.f32 0.0, %v1047
      %1049 = vmatmul.bf16.gmra.mxu0 %v583
      %v1050 = vpop.f32.mrf.mxu0
      %v1051 = vadd.f32 0.0, %v1050
      %v1052 = vpop.f32.mrf.mxu0
      %v1053 = vadd.f32 0.0, %v1052
      %1054 = vmatmul.bf16.gmra.mxu0 %v586
      %v1055 = vpop.f32.mrf.mxu0
      %v1056 = vadd.f32 0.0, %v1055
      %v1057 = vpop.f32.mrf.mxu0
      %v1058 = vadd.f32 0.0, %v1057
      %1059 = vmatmul.bf16.gmra.mxu0 %v589
      %v1060 = vpop.f32.mrf.mxu0
      %v1061 = vadd.f32 0.0, %v1060
      %v1062 = vpop.f32.mrf.mxu0
      %v1063 = vadd.f32 0.0, %v1062
      %1064 = vmatmul.bf16.gmra.mxu0 %v592
      %v1065 = vpop.f32.mrf.mxu0
      %v1066 = vadd.f32 0.0, %v1065
      %v1067 = vpop.f32.mrf.mxu0
      %v1068 = vadd.f32 0.0, %v1067
      %1069 = vmatmul.bf16.gmra.mxu0 %v595
      %v1070 = vpop.f32.mrf.mxu0
      %v1071 = vadd.f32 0.0, %v1070
      %v1072 = vpop.f32.mrf.mxu0
      %v1073 = vadd.f32 0.0, %v1072
      %1074 = vmatmul.bf16.gmra.mxu0 %v598
      %v1075 = vpop.f32.mrf.mxu0
      %v1076 = vadd.f32 0.0, %v1075
      %v1077 = vpop.f32.mrf.mxu0
      %v1078 = vadd.f32 0.0, %v1077
      %1079 = vmatmul.bf16.gmra.mxu0 %v601
      %v1080 = vpop.f32.mrf.mxu0
      %v1081 = vadd.f32 0.0, %v1080
      %v1082 = vpop.f32.mrf.mxu0
      %v1083 = vadd.f32 0.0, %v1082
      %1084 = vmatmul.bf16.gmra.mxu0 %v604
      %v1085 = vpop.f32.mrf.mxu0
      %v1086 = vadd.f32 0.0, %v1085
      %v1087 = vpop.f32.mrf.mxu0
      %v1088 = vadd.f32 0.0, %v1087
      %1089 = vmatmul.bf16.gmra.mxu0 %v607
      %v1090 = vpop.f32.mrf.mxu0
      %v1091 = vadd.f32 0.0, %v1090
      %v1092 = vpop.f32.mrf.mxu0
      %v1093 = vadd.f32 0.0, %v1092
      %1094 = vmatmul.bf16.gmra.mxu0 %v610
      %v1095 = vpop.f32.mrf.mxu0
      %v1096 = vadd.f32 0.0, %v1095
      %v1097 = vpop.f32.mrf.mxu0
      %v1098 = vadd.f32 0.0, %v1097
      %1099 = vmatmul.bf16.gmra.mxu0 %v1011
      %v1100 = vpop.f32.mrf.mxu0
      %v1101 = vadd.f32 0.0, %v1100
      %v1102 = vpop.f32.mrf.mxu0
      %v1103 = vadd.f32 0.0, %v1102
      %1104 = vdwg.mxu0
      %v1105 = vadd.f32 %v975, %v1026
      %v1106 = vadd.f32 %v976, %v1028
      %v1107 = vadd.f32 %v977, %v1031
      %v1108 = vadd.f32 %v978, %v1033
      %v1109 = vadd.f32 %v979, %v1036
      %v1110 = vadd.f32 %v980, %v1038
      %v1111 = vadd.f32 %v981, %v1041
      %v1112 = vadd.f32 %v982, %v1043
      %v1113 = vadd.f32 %v983, %v1046
      %v1114 = vadd.f32 %v984, %v1048
      %v1115 = vadd.f32 %v985, %v1051
      %v1116 = vadd.f32 %v986, %v1053
      %v1117 = vadd.f32 %v987, %v1056
      %v1118 = vadd.f32 %v988, %v1058
      %v1119 = vadd.f32 %v989, %v1061
      %v1120 = vadd.f32 %v990, %v1063
      %v1121 = vadd.f32 %v991, %v1066
      %v1122 = vadd.f32 %v992, %v1068
      %v1123 = vadd.f32 %v993, %v1071
      %v1124 = vadd.f32 %v994, %v1073
      %v1125 = vadd.f32 %v995, %v1076
      %v1126 = vadd.f32 %v996, %v1078
      %v1127 = vadd.f32 %v997, %v1081
      %v1128 = vadd.f32 %v998, %v1083
      %v1129 = vadd.f32 %v999, %v1086
      %v1130 = vadd.f32 %v1000, %v1088
      %v1131 = vadd.f32 %v1001, %v1091
      %v1132 = vadd.f32 %v1002, %v1093
      %v1133 = vadd.f32 %v1003, %v1096
      %v1134 = vadd.f32 %v1004, %v1098
      %v1135 = vadd.f32 %v1005, %v1101
      %v1136 = vadd.f32 %v1006, %v1103
      %v1140 = vrot.slane %v220, 1
      %v1141 = vrot.slane %v221, 1
      %v1142 = vsel %vm291, %v1140, %v1141
      %v1143 = vrot.slane %v222, 1
      %v1144 = vsel %vm291, %v1141, %v1143
      %v1147 = vpack.c.bf16 %v1144, %v1142
      %s1148 = scalar_lea.vmem %s1, 16
      %v1149 = vld [vmem:[%s1148] sm:$0xf]
      %v1151 = vsel %vm422, %v1147, 0
      %v1154 = vsel %vm471, %v1149, 0
      %1156 = vmatpush.bf16.msra.mxu0 0
      %1157 = vmatpush.bf16.msra.mxu0 0
      %1158 = vmatpush.bf16.msra.mxu0 0
      %1159 = vmatpush.bf16.msra.mxu0 0
      %1160 = vmatpush.bf16.msra.mxu0 0
      %1161 = vmatpush.bf16.msra.mxu0 0
      %1162 = vmatpush.bf16.msra.mxu0 0
      %1163 = vmatpush.bf16.msra.mxu0 %v1154
      %1164 = vmatmul.bf16.gmra.mxu0 %v427
      %v1165 = vpop.f32.mrf.mxu0
      %v1166 = vadd.f32 0.0, %v1165
      %v1167 = vpop.f32.mrf.mxu0
      %v1168 = vadd.f32 0.0, %v1167
      %1169 = vmatmul.bf16.gmra.mxu0 %v430
      %v1170 = vpop.f32.mrf.mxu0
      %v1171 = vadd.f32 0.0, %v1170
      %v1172 = vpop.f32.mrf.mxu0
      %v1173 = vadd.f32 0.0, %v1172
      %1174 = vmatmul.bf16.gmra.mxu0 %v433
      %v1175 = vpop.f32.mrf.mxu0
      %v1176 = vadd.f32 0.0, %v1175
      %v1177 = vpop.f32.mrf.mxu0
      %v1178 = vadd.f32 0.0, %v1177
      %1179 = vmatmul.bf16.gmra.mxu0 %v436
      %v1180 = vpop.f32.mrf.mxu0
      %v1181 = vadd.f32 0.0, %v1180
      %v1182 = vpop.f32.mrf.mxu0
      %v1183 = vadd.f32 0.0, %v1182
      %1184 = vmatmul.bf16.gmra.mxu0 %v439
      %v1185 = vpop.f32.mrf.mxu0
      %v1186 = vadd.f32 0.0, %v1185
      %v1187 = vpop.f32.mrf.mxu0
      %v1188 = vadd.f32 0.0, %v1187
      %1189 = vmatmul.bf16.gmra.mxu0 %v442
      %v1190 = vpop.f32.mrf.mxu0
      %v1191 = vadd.f32 0.0, %v1190
      %v1192 = vpop.f32.mrf.mxu0
      %v1193 = vadd.f32 0.0, %v1192
      %1194 = vmatmul.bf16.gmra.mxu0 %v445
      %v1195 = vpop.f32.mrf.mxu0
      %v1196 = vadd.f32 0.0, %v1195
      %v1197 = vpop.f32.mrf.mxu0
      %v1198 = vadd.f32 0.0, %v1197
      %1199 = vmatmul.bf16.gmra.mxu0 %v448
      %v1200 = vpop.f32.mrf.mxu0
      %v1201 = vadd.f32 0.0, %v1200
      %v1202 = vpop.f32.mrf.mxu0
      %v1203 = vadd.f32 0.0, %v1202
      %1204 = vmatmul.bf16.gmra.mxu0 %v451
      %v1205 = vpop.f32.mrf.mxu0
      %v1206 = vadd.f32 0.0, %v1205
      %v1207 = vpop.f32.mrf.mxu0
      %v1208 = vadd.f32 0.0, %v1207
      %1209 = vmatmul.bf16.gmra.mxu0 %v454
      %v1210 = vpop.f32.mrf.mxu0
      %v1211 = vadd.f32 0.0, %v1210
      %v1212 = vpop.f32.mrf.mxu0
      %v1213 = vadd.f32 0.0, %v1212
      %1214 = vmatmul.bf16.gmra.mxu0 %v457
      %v1215 = vpop.f32.mrf.mxu0
      %v1216 = vadd.f32 0.0, %v1215
      %v1217 = vpop.f32.mrf.mxu0
      %v1218 = vadd.f32 0.0, %v1217
      %1219 = vmatmul.bf16.gmra.mxu0 %v460
      %v1220 = vpop.f32.mrf.mxu0
      %v1221 = vadd.f32 0.0, %v1220
      %v1222 = vpop.f32.mrf.mxu0
      %v1223 = vadd.f32 0.0, %v1222
      %1224 = vmatmul.bf16.gmra.mxu0 %v463
      %v1225 = vpop.f32.mrf.mxu0
      %v1226 = vadd.f32 0.0, %v1225
      %v1227 = vpop.f32.mrf.mxu0
      %v1228 = vadd.f32 0.0, %v1227
      %1229 = vmatmul.bf16.gmra.mxu0 %v466
      %v1230 = vpop.f32.mrf.mxu0
      %v1231 = vadd.f32 0.0, %v1230
      %v1232 = vpop.f32.mrf.mxu0
      %v1233 = vadd.f32 0.0, %v1232
      %1234 = vmatmul.bf16.gmra.mxu0 %v469
      %v1235 = vpop.f32.mrf.mxu0
      %v1236 = vadd.f32 0.0, %v1235
      %v1237 = vpop.f32.mrf.mxu0
      %v1238 = vadd.f32 0.0, %v1237
      %1239 = vmatmul.bf16.gmra.mxu0 %v1151
      %v1240 = vpop.f32.mrf.mxu0
      %v1241 = vadd.f32 0.0, %v1240
      %v1242 = vpop.f32.mrf.mxu0
      %v1243 = vadd.f32 0.0, %v1242
      %1244 = vdwg.mxu0
      %v1245 = vadd.f32 %v1105, %v1166
      %v1246 = vadd.f32 %v1106, %v1168
      %v1247 = vadd.f32 %v1107, %v1171
      %v1248 = vadd.f32 %v1108, %v1173
      %v1249 = vadd.f32 %v1109, %v1176
      %v1250 = vadd.f32 %v1110, %v1178
      %v1251 = vadd.f32 %v1111, %v1181
      %v1252 = vadd.f32 %v1112, %v1183
      %v1253 = vadd.f32 %v1113, %v1186
      %v1254 = vadd.f32 %v1114, %v1188
      %v1255 = vadd.f32 %v1115, %v1191
      %v1256 = vadd.f32 %v1116, %v1193
      %v1257 = vadd.f32 %v1117, %v1196
      %v1258 = vadd.f32 %v1118, %v1198
      %v1259 = vadd.f32 %v1119, %v1201
      %v1260 = vadd.f32 %v1120, %v1203
      %v1261 = vadd.f32 %v1121, %v1206
      %v1262 = vadd.f32 %v1122, %v1208
      %v1263 = vadd.f32 %v1123, %v1211
      %v1264 = vadd.f32 %v1124, %v1213
      %v1265 = vadd.f32 %v1125, %v1216
      %v1266 = vadd.f32 %v1126, %v1218
      %v1267 = vadd.f32 %v1127, %v1221
      %v1268 = vadd.f32 %v1128, %v1223
      %v1269 = vadd.f32 %v1129, %v1226
      %v1270 = vadd.f32 %v1130, %v1228
      %v1271 = vadd.f32 %v1131, %v1231
      %v1272 = vadd.f32 %v1132, %v1233
      %v1273 = vadd.f32 %v1133, %v1236
      %v1274 = vadd.f32 %v1134, %v1238
      %v1275 = vadd.f32 %v1135, %v1241
      %v1276 = vadd.f32 %v1136, %v1243
      %v1277 = vrot.slane %v220, 2
      %v1278 = vrot.slane %v221, 2
      %v1279 = vsel %vm704, %v1277, %v1278
      %v1280 = vrot.slane %v222, 2
      %v1281 = vsel %vm704, %v1278, %v1280
      %v1284 = vpack.c.bf16 %v1281, %v1279
      %s1285 = scalar_lea.vmem %s1, 20
      %v1286 = vld [vmem:[%s1285] sm:$0xf]
      %v1288 = vsel %vm422, %v1284, 0
      %v1291 = vsel %vm471, %v1286, 0
      %1293 = vmatpush.bf16.msra.mxu0 0
      %1294 = vmatpush.bf16.msra.mxu0 0
      %1295 = vmatpush.bf16.msra.mxu0 0
      %1296 = vmatpush.bf16.msra.mxu0 0
      %1297 = vmatpush.bf16.msra.mxu0 0
      %1298 = vmatpush.bf16.msra.mxu0 0
      %1299 = vmatpush.bf16.msra.mxu0 0
      %1300 = vmatpush.bf16.msra.mxu0 %v1291
      %1301 = vmatmul.bf16.gmra.mxu0 %v839
      %v1302 = vpop.f32.mrf.mxu0
      %v1303 = vadd.f32 0.0, %v1302
      %v1304 = vpop.f32.mrf.mxu0
      %v1305 = vadd.f32 0.0, %v1304
      %1306 = vmatmul.bf16.gmra.mxu0 %v842
      %v1307 = vpop.f32.mrf.mxu0
      %v1308 = vadd.f32 0.0, %v1307
      %v1309 = vpop.f32.mrf.mxu0
      %v1310 = vadd.f32 0.0, %v1309
      %1311 = vmatmul.bf16.gmra.mxu0 %v845
      %v1312 = vpop.f32.mrf.mxu0
      %v1313 = vadd.f32 0.0, %v1312
      %v1314 = vpop.f32.mrf.mxu0
      %v1315 = vadd.f32 0.0, %v1314
      %1316 = vmatmul.bf16.gmra.mxu0 %v848
      %v1317 = vpop.f32.mrf.mxu0
      %v1318 = vadd.f32 0.0, %v1317
      %v1319 = vpop.f32.mrf.mxu0
      %v1320 = vadd.f32 0.0, %v1319
      %1321 = vmatmul.bf16.gmra.mxu0 %v851
      %v1322 = vpop.f32.mrf.mxu0
      %v1323 = vadd.f32 0.0, %v1322
      %v1324 = vpop.f32.mrf.mxu0
      %v1325 = vadd.f32 0.0, %v1324
      %1326 = vmatmul.bf16.gmra.mxu0 %v854
      %v1327 = vpop.f32.mrf.mxu0
      %v1328 = vadd.f32 0.0, %v1327
      %v1329 = vpop.f32.mrf.mxu0
      %v1330 = vadd.f32 0.0, %v1329
      %1331 = vmatmul.bf16.gmra.mxu0 %v857
      %v1332 = vpop.f32.mrf.mxu0
      %v1333 = vadd.f32 0.0, %v1332
      %v1334 = vpop.f32.mrf.mxu0
      %v1335 = vadd.f32 0.0, %v1334
      %1336 = vmatmul.bf16.gmra.mxu0 %v860
      %v1337 = vpop.f32.mrf.mxu0
      %v1338 = vadd.f32 0.0, %v1337
      %v1339 = vpop.f32.mrf.mxu0
      %v1340 = vadd.f32 0.0, %v1339
      %1341 = vmatmul.bf16.gmra.mxu0 %v863
      %v1342 = vpop.f32.mrf.mxu0
      %v1343 = vadd.f32 0.0, %v1342
      %v1344 = vpop.f32.mrf.mxu0
      %v1345 = vadd.f32 0.0, %v1344
      %1346 = vmatmul.bf16.gmra.mxu0 %v866
      %v1347 = vpop.f32.mrf.mxu0
      %v1348 = vadd.f32 0.0, %v1347
      %v1349 = vpop.f32.mrf.mxu0
      %v1350 = vadd.f32 0.0, %v1349
      %1351 = vmatmul.bf16.gmra.mxu0 %v869
      %v1352 = vpop.f32.mrf.mxu0
      %v1353 = vadd.f32 0.0, %v1352
      %v1354 = vpop.f32.mrf.mxu0
      %v1355 = vadd.f32 0.0, %v1354
      %1356 = vmatmul.bf16.gmra.mxu0 %v872
      %v1357 = vpop.f32.mrf.mxu0
      %v1358 = vadd.f32 0.0, %v1357
      %v1359 = vpop.f32.mrf.mxu0
      %v1360 = vadd.f32 0.0, %v1359
      %1361 = vmatmul.bf16.gmra.mxu0 %v875
      %v1362 = vpop.f32.mrf.mxu0
      %v1363 = vadd.f32 0.0, %v1362
      %v1364 = vpop.f32.mrf.mxu0
      %v1365 = vadd.f32 0.0, %v1364
      %1366 = vmatmul.bf16.gmra.mxu0 %v878
      %v1367 = vpop.f32.mrf.mxu0
      %v1368 = vadd.f32 0.0, %v1367
      %v1369 = vpop.f32.mrf.mxu0
      %v1370 = vadd.f32 0.0, %v1369
      %1371 = vmatmul.bf16.gmra.mxu0 %v881
      %v1372 = vpop.f32.mrf.mxu0
      %v1373 = vadd.f32 0.0, %v1372
      %v1374 = vpop.f32.mrf.mxu0
      %v1375 = vadd.f32 0.0, %v1374
      %1376 = vmatmul.bf16.gmra.mxu0 %v1288
      %v1377 = vpop.f32.mrf.mxu0
      %v1378 = vadd.f32 0.0, %v1377
      %v1379 = vpop.f32.mrf.mxu0
      %v1380 = vadd.f32 0.0, %v1379
      %1381 = vdwg.mxu0
      %v1382 = vadd.f32 %v1245, %v1303
      %v1383 = vadd.f32 %v1246, %v1305
      %v1384 = vadd.f32 %v1247, %v1308
      %v1385 = vadd.f32 %v1248, %v1310
      %v1386 = vadd.f32 %v1249, %v1313
      %v1387 = vadd.f32 %v1250, %v1315
      %v1388 = vadd.f32 %v1251, %v1318
      %v1389 = vadd.f32 %v1252, %v1320
      %v1390 = vadd.f32 %v1253, %v1323
      %v1391 = vadd.f32 %v1254, %v1325
      %v1392 = vadd.f32 %v1255, %v1328
      %v1393 = vadd.f32 %v1256, %v1330
      %v1394 = vadd.f32 %v1257, %v1333
      %v1395 = vadd.f32 %v1258, %v1335
      %v1396 = vadd.f32 %v1259, %v1338
      %v1397 = vadd.f32 %v1260, %v1340
      %v1398 = vadd.f32 %v1261, %v1343
      %v1399 = vadd.f32 %v1262, %v1345
      %v1400 = vadd.f32 %v1263, %v1348
      %v1401 = vadd.f32 %v1264, %v1350
      %v1402 = vadd.f32 %v1265, %v1353
      %v1403 = vadd.f32 %v1266, %v1355
      %v1404 = vadd.f32 %v1267, %v1358
      %v1405 = vadd.f32 %v1268, %v1360
      %v1406 = vadd.f32 %v1269, %v1363
      %v1407 = vadd.f32 %v1270, %v1365
      %v1408 = vadd.f32 %v1271, %v1368
      %v1409 = vadd.f32 %v1272, %v1370
      %v1410 = vadd.f32 %v1273, %v1373
      %v1411 = vadd.f32 %v1274, %v1375
      %v1412 = vadd.f32 %v1275, %v1378
      %v1413 = vadd.f32 %v1276, %v1380
      %v1414 = vpack.c.bf16 %v224, %v223
      %s1415 = scalar_lea.vmem %s1, 24
      %v1416 = vld [vmem:[%s1415] sm:$0xf]
      %v1418 = vsel %vm422, %v1414, 0
      %v1421 = vsel %vm471, %v1416, 0
      %1423 = vmatpush.bf16.msra.mxu0 0
      %1424 = vmatpush.bf16.msra.mxu0 0
      %1425 = vmatpush.bf16.msra.mxu0 0
      %1426 = vmatpush.bf16.msra.mxu0 0
      %1427 = vmatpush.bf16.msra.mxu0 0
      %1428 = vmatpush.bf16.msra.mxu0 0
      %1429 = vmatpush.bf16.msra.mxu0 0
      %1430 = vmatpush.bf16.msra.mxu0 %v1421
      %1431 = vmatmul.bf16.gmra.mxu0 %v571
      %v1432 = vpop.f32.mrf.mxu0
      %v1433 = vadd.f32 0.0, %v1432
      %v1434 = vpop.f32.mrf.mxu0
      %v1435 = vadd.f32 0.0, %v1434
      %1436 = vmatmul.bf16.gmra.mxu0 %v574
      %v1437 = vpop.f32.mrf.mxu0
      %v1438 = vadd.f32 0.0, %v1437
      %v1439 = vpop.f32.mrf.mxu0
      %v1440 = vadd.f32 0.0, %v1439
      %1441 = vmatmul.bf16.gmra.mxu0 %v577
      %v1442 = vpop.f32.mrf.mxu0
      %v1443 = vadd.f32 0.0, %v1442
      %v1444 = vpop.f32.mrf.mxu0
      %v1445 = vadd.f32 0.0, %v1444
      %1446 = vmatmul.bf16.gmra.mxu0 %v580
      %v1447 = vpop.f32.mrf.mxu0
      %v1448 = vadd.f32 0.0, %v1447
      %v1449 = vpop.f32.mrf.mxu0
      %v1450 = vadd.f32 0.0, %v1449
      %1451 = vmatmul.bf16.gmra.mxu0 %v583
      %v1452 = vpop.f32.mrf.mxu0
      %v1453 = vadd.f32 0.0, %v1452
      %v1454 = vpop.f32.mrf.mxu0
      %v1455 = vadd.f32 0.0, %v1454
      %1456 = vmatmul.bf16.gmra.mxu0 %v586
      %v1457 = vpop.f32.mrf.mxu0
      %v1458 = vadd.f32 0.0, %v1457
      %v1459 = vpop.f32.mrf.mxu0
      %v1460 = vadd.f32 0.0, %v1459
      %1461 = vmatmul.bf16.gmra.mxu0 %v589
      %v1462 = vpop.f32.mrf.mxu0
      %v1463 = vadd.f32 0.0, %v1462
      %v1464 = vpop.f32.mrf.mxu0
      %v1465 = vadd.f32 0.0, %v1464
      %1466 = vmatmul.bf16.gmra.mxu0 %v592
      %v1467 = vpop.f32.mrf.mxu0
      %v1468 = vadd.f32 0.0, %v1467
      %v1469 = vpop.f32.mrf.mxu0
      %v1470 = vadd.f32 0.0, %v1469
      %1471 = vmatmul.bf16.gmra.mxu0 %v595
      %v1472 = vpop.f32.mrf.mxu0
      %v1473 = vadd.f32 0.0, %v1472
      %v1474 = vpop.f32.mrf.mxu0
      %v1475 = vadd.f32 0.0, %v1474
      %1476 = vmatmul.bf16.gmra.mxu0 %v598
      %v1477 = vpop.f32.mrf.mxu0
      %v1478 = vadd.f32 0.0, %v1477
      %v1479 = vpop.f32.mrf.mxu0
      %v1480 = vadd.f32 0.0, %v1479
      %1481 = vmatmul.bf16.gmra.mxu0 %v601
      %v1482 = vpop.f32.mrf.mxu0
      %v1483 = vadd.f32 0.0, %v1482
      %v1484 = vpop.f32.mrf.mxu0
      %v1485 = vadd.f32 0.0, %v1484
      %1486 = vmatmul.bf16.gmra.mxu0 %v604
      %v1487 = vpop.f32.mrf.mxu0
      %v1488 = vadd.f32 0.0, %v1487
      %v1489 = vpop.f32.mrf.mxu0
      %v1490 = vadd.f32 0.0, %v1489
      %1491 = vmatmul.bf16.gmra.mxu0 %v607
      %v1492 = vpop.f32.mrf.mxu0
      %v1493 = vadd.f32 0.0, %v1492
      %v1494 = vpop.f32.mrf.mxu0
      %v1495 = vadd.f32 0.0, %v1494
      %1496 = vmatmul.bf16.gmra.mxu0 %v610
      %v1497 = vpop.f32.mrf.mxu0
      %v1498 = vadd.f32 0.0, %v1497
      %v1499 = vpop.f32.mrf.mxu0
      %v1500 = vadd.f32 0.0, %v1499
      %1501 = vmatmul.bf16.gmra.mxu0 %v1011
      %v1502 = vpop.f32.mrf.mxu0
      %v1503 = vadd.f32 0.0, %v1502
      %v1504 = vpop.f32.mrf.mxu0
      %v1505 = vadd.f32 0.0, %v1504
      %1506 = vmatmul.bf16.gmra.mxu0 %v1418
      %v1507 = vpop.f32.mrf.mxu0
      %v1508 = vadd.f32 0.0, %v1507
      %v1509 = vpop.f32.mrf.mxu0
      %v1510 = vadd.f32 0.0, %v1509
      %1511 = vdwg.mxu0
      %v1512 = vadd.f32 %v1382, %v1433
      %v1513 = vadd.f32 %v1383, %v1435
      %v1514 = vadd.f32 %v1384, %v1438
      %v1515 = vadd.f32 %v1385, %v1440
      %v1516 = vadd.f32 %v1386, %v1443
      %v1517 = vadd.f32 %v1387, %v1445
      %v1518 = vadd.f32 %v1388, %v1448
      %v1519 = vadd.f32 %v1389, %v1450
      %v1520 = vadd.f32 %v1390, %v1453
      %v1521 = vadd.f32 %v1391, %v1455
      %v1522 = vadd.f32 %v1392, %v1458
      %v1523 = vadd.f32 %v1393, %v1460
      %v1524 = vadd.f32 %v1394, %v1463
      %v1525 = vadd.f32 %v1395, %v1465
      %v1526 = vadd.f32 %v1396, %v1468
      %v1527 = vadd.f32 %v1397, %v1470
      %v1528 = vadd.f32 %v1398, %v1473
      %v1529 = vadd.f32 %v1399, %v1475
      %v1530 = vadd.f32 %v1400, %v1478
      %v1531 = vadd.f32 %v1401, %v1480
      %v1532 = vadd.f32 %v1402, %v1483
      %v1533 = vadd.f32 %v1403, %v1485
      %v1534 = vadd.f32 %v1404, %v1488
      %v1535 = vadd.f32 %v1405, %v1490
      %v1536 = vadd.f32 %v1406, %v1493
      %v1537 = vadd.f32 %v1407, %v1495
      %v1538 = vadd.f32 %v1408, %v1498
      %v1539 = vadd.f32 %v1409, %v1500
      %v1540 = vadd.f32 %v1410, %v1503
      %v1541 = vadd.f32 %v1411, %v1505
      %v1542 = vadd.f32 %v1412, %v1508
      %v1543 = vadd.f32 %v1413, %v1510
      %v1547 = vrot.slane %v223, 1
      %v1548 = vrot.slane %v224, 1
      %v1549 = vsel %vm291, %v1547, %v1548
      %v1550 = vrot.slane %v225, 1
      %v1551 = vsel %vm291, %v1548, %v1550
      %v1554 = vpack.c.bf16 %v1551, %v1549
      %s1555 = scalar_lea.vmem %s1, 28
      %v1556 = vld [vmem:[%s1555] sm:$0xf]
      %v1558 = vsel %vm422, %v1554, 0
      %v1561 = vsel %vm471, %v1556, 0
      %1563 = vmatpush.bf16.msra.mxu0 0
      %1564 = vmatpush.bf16.msra.mxu0 0
      %1565 = vmatpush.bf16.msra.mxu0 0
      %1566 = vmatpush.bf16.msra.mxu0 0
      %1567 = vmatpush.bf16.msra.mxu0 0
      %1568 = vmatpush.bf16.msra.mxu0 0
      %1569 = vmatpush.bf16.msra.mxu0 0
      %1570 = vmatpush.bf16.msra.mxu0 %v1561
      %1571 = vmatmul.bf16.gmra.mxu0 %v430
      %v1572 = vpop.f32.mrf.mxu0
      %v1573 = vadd.f32 0.0, %v1572
      %v1574 = vpop.f32.mrf.mxu0
      %v1575 = vadd.f32 0.0, %v1574
      %1576 = vmatmul.bf16.gmra.mxu0 %v433
      %v1577 = vpop.f32.mrf.mxu0
      %v1578 = vadd.f32 0.0, %v1577
      %v1579 = vpop.f32.mrf.mxu0
      %v1580 = vadd.f32 0.0, %v1579
      %1581 = vmatmul.bf16.gmra.mxu0 %v436
      %v1582 = vpop.f32.mrf.mxu0
      %v1583 = vadd.f32 0.0, %v1582
      %v1584 = vpop.f32.mrf.mxu0
      %v1585 = vadd.f32 0.0, %v1584
      %1586 = vmatmul.bf16.gmra.mxu0 %v439
      %v1587 = vpop.f32.mrf.mxu0
      %v1588 = vadd.f32 0.0, %v1587
      %v1589 = vpop.f32.mrf.mxu0
      %v1590 = vadd.f32 0.0, %v1589
      %1591 = vmatmul.bf16.gmra.mxu0 %v442
      %v1592 = vpop.f32.mrf.mxu0
      %v1593 = vadd.f32 0.0, %v1592
      %v1594 = vpop.f32.mrf.mxu0
      %v1595 = vadd.f32 0.0, %v1594
      %1596 = vmatmul.bf16.gmra.mxu0 %v445
      %v1597 = vpop.f32.mrf.mxu0
      %v1598 = vadd.f32 0.0, %v1597
      %v1599 = vpop.f32.mrf.mxu0
      %v1600 = vadd.f32 0.0, %v1599
      %1601 = vmatmul.bf16.gmra.mxu0 %v448
      %v1602 = vpop.f32.mrf.mxu0
      %v1603 = vadd.f32 0.0, %v1602
      %v1604 = vpop.f32.mrf.mxu0
      %v1605 = vadd.f32 0.0, %v1604
      %1606 = vmatmul.bf16.gmra.mxu0 %v451
      %v1607 = vpop.f32.mrf.mxu0
      %v1608 = vadd.f32 0.0, %v1607
      %v1609 = vpop.f32.mrf.mxu0
      %v1610 = vadd.f32 0.0, %v1609
      %1611 = vmatmul.bf16.gmra.mxu0 %v454
      %v1612 = vpop.f32.mrf.mxu0
      %v1613 = vadd.f32 0.0, %v1612
      %v1614 = vpop.f32.mrf.mxu0
      %v1615 = vadd.f32 0.0, %v1614
      %1616 = vmatmul.bf16.gmra.mxu0 %v457
      %v1617 = vpop.f32.mrf.mxu0
      %v1618 = vadd.f32 0.0, %v1617
      %v1619 = vpop.f32.mrf.mxu0
      %v1620 = vadd.f32 0.0, %v1619
      %1621 = vmatmul.bf16.gmra.mxu0 %v460
      %v1622 = vpop.f32.mrf.mxu0
      %v1623 = vadd.f32 0.0, %v1622
      %v1624 = vpop.f32.mrf.mxu0
      %v1625 = vadd.f32 0.0, %v1624
      %1626 = vmatmul.bf16.gmra.mxu0 %v463
      %v1627 = vpop.f32.mrf.mxu0
      %v1628 = vadd.f32 0.0, %v1627
      %v1629 = vpop.f32.mrf.mxu0
      %v1630 = vadd.f32 0.0, %v1629
      %1631 = vmatmul.bf16.gmra.mxu0 %v466
      %v1632 = vpop.f32.mrf.mxu0
      %v1633 = vadd.f32 0.0, %v1632
      %v1634 = vpop.f32.mrf.mxu0
      %v1635 = vadd.f32 0.0, %v1634
      %1636 = vmatmul.bf16.gmra.mxu0 %v469
      %v1637 = vpop.f32.mrf.mxu0
      %v1638 = vadd.f32 0.0, %v1637
      %v1639 = vpop.f32.mrf.mxu0
      %v1640 = vadd.f32 0.0, %v1639
      %1641 = vmatmul.bf16.gmra.mxu0 %v1151
      %v1642 = vpop.f32.mrf.mxu0
      %v1643 = vadd.f32 0.0, %v1642
      %v1644 = vpop.f32.mrf.mxu0
      %v1645 = vadd.f32 0.0, %v1644
      %1646 = vmatmul.bf16.gmra.mxu0 %v1558
      %v1647 = vpop.f32.mrf.mxu0
      %v1648 = vadd.f32 0.0, %v1647
      %v1649 = vpop.f32.mrf.mxu0
      %v1650 = vadd.f32 0.0, %v1649
      %1651 = vdwg.mxu0
      %v1652 = vadd.f32 %v1512, %v1573
      %v1653 = vadd.f32 %v1513, %v1575
      %v1654 = vadd.f32 %v1514, %v1578
      %v1655 = vadd.f32 %v1515, %v1580
      %v1656 = vadd.f32 %v1516, %v1583
      %v1657 = vadd.f32 %v1517, %v1585
      %v1658 = vadd.f32 %v1518, %v1588
      %v1659 = vadd.f32 %v1519, %v1590
      %v1660 = vadd.f32 %v1520, %v1593
      %v1661 = vadd.f32 %v1521, %v1595
      %v1662 = vadd.f32 %v1522, %v1598
      %v1663 = vadd.f32 %v1523, %v1600
      %v1664 = vadd.f32 %v1524, %v1603
      %v1665 = vadd.f32 %v1525, %v1605
      %v1666 = vadd.f32 %v1526, %v1608
      %v1667 = vadd.f32 %v1527, %v1610
      %v1668 = vadd.f32 %v1528, %v1613
      %v1669 = vadd.f32 %v1529, %v1615
      %v1670 = vadd.f32 %v1530, %v1618
      %v1671 = vadd.f32 %v1531, %v1620
      %v1672 = vadd.f32 %v1532, %v1623
      %v1673 = vadd.f32 %v1533, %v1625
      %v1674 = vadd.f32 %v1534, %v1628
      %v1675 = vadd.f32 %v1535, %v1630
      %v1676 = vadd.f32 %v1536, %v1633
      %v1677 = vadd.f32 %v1537, %v1635
      %v1678 = vadd.f32 %v1538, %v1638
      %v1679 = vadd.f32 %v1539, %v1640
      %v1680 = vadd.f32 %v1540, %v1643
      %v1681 = vadd.f32 %v1541, %v1645
      %v1682 = vadd.f32 %v1542, %v1648
      %v1683 = vadd.f32 %v1543, %v1650
      %v1684 = vrot.slane %v223, 2
      %v1685 = vrot.slane %v224, 2
      %v1686 = vsel %vm704, %v1684, %v1685
      %v1687 = vrot.slane %v225, 2
      %v1688 = vsel %vm704, %v1685, %v1687
      %v1691 = vpack.c.bf16 %v1688, %v1686
      %s1692 = scalar_lea.vmem %s1, 32
      %v1693 = vld [vmem:[%s1692] sm:$0xf]
      %v1695 = vsel %vm422, %v1691, 0
      %v1698 = vsel %vm471, %v1693, 0
      %1700 = vmatpush.bf16.msra.mxu0 0
      %1701 = vmatpush.bf16.msra.mxu0 0
      %1702 = vmatpush.bf16.msra.mxu0 0
      %1703 = vmatpush.bf16.msra.mxu0 0
      %1704 = vmatpush.bf16.msra.mxu0 0
      %1705 = vmatpush.bf16.msra.mxu0 0
      %1706 = vmatpush.bf16.msra.mxu0 0
      %1707 = vmatpush.bf16.msra.mxu0 %v1698
      %1708 = vmatmul.bf16.gmra.mxu0 %v842
      %v1709 = vpop.f32.mrf.mxu0
      %v1710 = vadd.f32 0.0, %v1709
      %v1711 = vpop.f32.mrf.mxu0
      %v1712 = vadd.f32 0.0, %v1711
      %1713 = vmatmul.bf16.gmra.mxu0 %v845
      %v1714 = vpop.f32.mrf.mxu0
      %v1715 = vadd.f32 0.0, %v1714
      %v1716 = vpop.f32.mrf.mxu0
      %v1717 = vadd.f32 0.0, %v1716
      %1718 = vmatmul.bf16.gmra.mxu0 %v848
      %v1719 = vpop.f32.mrf.mxu0
      %v1720 = vadd.f32 0.0, %v1719
      %v1721 = vpop.f32.mrf.mxu0
      %v1722 = vadd.f32 0.0, %v1721
      %1723 = vmatmul.bf16.gmra.mxu0 %v851
      %v1724 = vpop.f32.mrf.mxu0
      %v1725 = vadd.f32 0.0, %v1724
      %v1726 = vpop.f32.mrf.mxu0
      %v1727 = vadd.f32 0.0, %v1726
      %1728 = vmatmul.bf16.gmra.mxu0 %v854
      %v1729 = vpop.f32.mrf.mxu0
      %v1730 = vadd.f32 0.0, %v1729
      %v1731 = vpop.f32.mrf.mxu0
      %v1732 = vadd.f32 0.0, %v1731
      %1733 = vmatmul.bf16.gmra.mxu0 %v857
      %v1734 = vpop.f32.mrf.mxu0
      %v1735 = vadd.f32 0.0, %v1734
      %v1736 = vpop.f32.mrf.mxu0
      %v1737 = vadd.f32 0.0, %v1736
      %1738 = vmatmul.bf16.gmra.mxu0 %v860
      %v1739 = vpop.f32.mrf.mxu0
      %v1740 = vadd.f32 0.0, %v1739
      %v1741 = vpop.f32.mrf.mxu0
      %v1742 = vadd.f32 0.0, %v1741
      %1743 = vmatmul.bf16.gmra.mxu0 %v863
      %v1744 = vpop.f32.mrf.mxu0
      %v1745 = vadd.f32 0.0, %v1744
      %v1746 = vpop.f32.mrf.mxu0
      %v1747 = vadd.f32 0.0, %v1746
      %1748 = vmatmul.bf16.gmra.mxu0 %v866
      %v1749 = vpop.f32.mrf.mxu0
      %v1750 = vadd.f32 0.0, %v1749
      %v1751 = vpop.f32.mrf.mxu0
      %v1752 = vadd.f32 0.0, %v1751
      %1753 = vmatmul.bf16.gmra.mxu0 %v869
      %v1754 = vpop.f32.mrf.mxu0
      %v1755 = vadd.f32 0.0, %v1754
      %v1756 = vpop.f32.mrf.mxu0
      %v1757 = vadd.f32 0.0, %v1756
      %1758 = vmatmul.bf16.gmra.mxu0 %v872
      %v1759 = vpop.f32.mrf.mxu0
      %v1760 = vadd.f32 0.0, %v1759
      %v1761 = vpop.f32.mrf.mxu0
      %v1762 = vadd.f32 0.0, %v1761
      %1763 = vmatmul.bf16.gmra.mxu0 %v875
      %v1764 = vpop.f32.mrf.mxu0
      %v1765 = vadd.f32 0.0, %v1764
      %v1766 = vpop.f32.mrf.mxu0
      %v1767 = vadd.f32 0.0, %v1766
      %1768 = vmatmul.bf16.gmra.mxu0 %v878
      %v1769 = vpop.f32.mrf.mxu0
      %v1770 = vadd.f32 0.0, %v1769
      %v1771 = vpop.f32.mrf.mxu0
      %v1772 = vadd.f32 0.0, %v1771
      %1773 = vmatmul.bf16.gmra.mxu0 %v881
      %v1774 = vpop.f32.mrf.mxu0
      %v1775 = vadd.f32 0.0, %v1774
      %v1776 = vpop.f32.mrf.mxu0
      %v1777 = vadd.f32 0.0, %v1776
      %1778 = vmatmul.bf16.gmra.mxu0 %v1288
      %v1779 = vpop.f32.mrf.mxu0
      %v1780 = vadd.f32 0.0, %v1779
      %v1781 = vpop.f32.mrf.mxu0
      %v1782 = vadd.f32 0.0, %v1781
      %1783 = vmatmul.bf16.gmra.mxu0 %v1695
      %v1784 = vpop.f32.mrf.mxu0
      %v1785 = vadd.f32 0.0, %v1784
      %v1786 = vpop.f32.mrf.mxu0
      %v1787 = vadd.f32 0.0, %v1786
      %1788 = vdwg.mxu0
      %v1789 = vadd.f32 %v1652, %v1710
      %v1790 = vadd.f32 %v1653, %v1712
      %v1791 = vadd.f32 %v1654, %v1715
      %v1792 = vadd.f32 %v1655, %v1717
      %v1793 = vadd.f32 %v1656, %v1720
      %v1794 = vadd.f32 %v1657, %v1722
      %v1795 = vadd.f32 %v1658, %v1725
      %v1796 = vadd.f32 %v1659, %v1727
      %v1797 = vadd.f32 %v1660, %v1730
      %v1798 = vadd.f32 %v1661, %v1732
      %v1799 = vadd.f32 %v1662, %v1735
      %v1800 = vadd.f32 %v1663, %v1737
      %v1801 = vadd.f32 %v1664, %v1740
      %v1802 = vadd.f32 %v1665, %v1742
      %v1803 = vadd.f32 %v1666, %v1745
      %v1804 = vadd.f32 %v1667, %v1747
      %v1805 = vadd.f32 %v1668, %v1750
      %v1806 = vadd.f32 %v1669, %v1752
      %v1807 = vadd.f32 %v1670, %v1755
      %v1808 = vadd.f32 %v1671, %v1757
      %v1809 = vadd.f32 %v1672, %v1760
      %v1810 = vadd.f32 %v1673, %v1762
      %v1811 = vadd.f32 %v1674, %v1765
      %v1812 = vadd.f32 %v1675, %v1767
      %v1813 = vadd.f32 %v1676, %v1770
      %v1814 = vadd.f32 %v1677, %v1772
      %v1815 = vadd.f32 %v1678, %v1775
      %v1816 = vadd.f32 %v1679, %v1777
      %v1817 = vadd.f32 %v1680, %v1780
      %v1818 = vadd.f32 %v1681, %v1782
      %v1819 = vadd.f32 %v1682, %v1785
      %v1820 = vadd.f32 %v1683, %v1787
      %v1821 = vld [vmem:[%s2] sm:$0x1]
      %v1823 = vperm.slane %v1821, 0
      %v1825 = vadd.f32 %v1789, %v1823
      %v1826 = vadd.f32 %v1790, %v1823
      %v1827 = vadd.f32 %v1791, %v1823
      %v1828 = vadd.f32 %v1792, %v1823
      %v1829 = vadd.f32 %v1793, %v1823
      %v1830 = vadd.f32 %v1794, %v1823
      %v1831 = vadd.f32 %v1795, %v1823
      %v1832 = vadd.f32 %v1796, %v1823
      %v1833 = vadd.f32 %v1797, %v1823
      %v1834 = vadd.f32 %v1798, %v1823
      %v1835 = vadd.f32 %v1799, %v1823
      %v1836 = vadd.f32 %v1800, %v1823
      %v1837 = vadd.f32 %v1801, %v1823
      %v1838 = vadd.f32 %v1802, %v1823
      %v1839 = vadd.f32 %v1803, %v1823
      %v1840 = vadd.f32 %v1804, %v1823
      %v1841 = vadd.f32 %v1805, %v1823
      %v1842 = vadd.f32 %v1806, %v1823
      %v1843 = vadd.f32 %v1807, %v1823
      %v1844 = vadd.f32 %v1808, %v1823
      %v1845 = vadd.f32 %v1809, %v1823
      %v1846 = vadd.f32 %v1810, %v1823
      %v1847 = vadd.f32 %v1811, %v1823
      %v1848 = vadd.f32 %v1812, %v1823
      %v1849 = vadd.f32 %v1813, %v1823
      %v1850 = vadd.f32 %v1814, %v1823
      %v1851 = vadd.f32 %v1815, %v1823
      %v1852 = vadd.f32 %v1816, %v1823
      %v1853 = vadd.f32 %v1817, %v1823
      %v1854 = vadd.f32 %v1818, %v1823
      %v1855 = vadd.f32 %v1819, %v1823
      %v1856 = vadd.f32 %v1820, %v1823
      %v1857 = vxor.u32 %v1825, 2147483648
      %v1858 = vxor.u32 %v1826, 2147483648
      %v1859 = vxor.u32 %v1827, 2147483648
      %v1860 = vxor.u32 %v1828, 2147483648
      %v1861 = vxor.u32 %v1829, 2147483648
      %v1862 = vxor.u32 %v1830, 2147483648
      %v1863 = vxor.u32 %v1831, 2147483648
      %v1864 = vxor.u32 %v1832, 2147483648
      %v1865 = vxor.u32 %v1833, 2147483648
      %v1866 = vxor.u32 %v1834, 2147483648
      %v1867 = vxor.u32 %v1835, 2147483648
      %v1868 = vxor.u32 %v1836, 2147483648
      %v1869 = vxor.u32 %v1837, 2147483648
      %v1870 = vxor.u32 %v1838, 2147483648
      %v1871 = vxor.u32 %v1839, 2147483648
      %v1872 = vxor.u32 %v1840, 2147483648
      %v1873 = vxor.u32 %v1841, 2147483648
      %v1874 = vxor.u32 %v1842, 2147483648
      %v1875 = vxor.u32 %v1843, 2147483648
      %v1876 = vxor.u32 %v1844, 2147483648
      %v1877 = vxor.u32 %v1845, 2147483648
      %v1878 = vxor.u32 %v1846, 2147483648
      %v1879 = vxor.u32 %v1847, 2147483648
      %v1880 = vxor.u32 %v1848, 2147483648
      %v1881 = vxor.u32 %v1849, 2147483648
      %v1882 = vxor.u32 %v1850, 2147483648
      %v1883 = vxor.u32 %v1851, 2147483648
      %v1884 = vxor.u32 %v1852, 2147483648
      %v1885 = vxor.u32 %v1853, 2147483648
      %v1886 = vxor.u32 %v1854, 2147483648
      %v1887 = vxor.u32 %v1855, 2147483648
      %v1888 = vxor.u32 %v1856, 2147483648
      %v1889 = vmul.f32 %v1857, 1.442695
      %v1890 = vpow.pop %v1889
      %v1891 = vmul.f32 %v1858, 1.442695
      %v1892 = vpow.pop %v1891
      %v1893 = vmul.f32 %v1859, 1.442695
      %v1894 = vpow.pop %v1893
      %v1895 = vmul.f32 %v1860, 1.442695
      %v1896 = vpow.pop %v1895
      %v1897 = vmul.f32 %v1861, 1.442695
      %v1898 = vpow.pop %v1897
      %v1899 = vmul.f32 %v1862, 1.442695
      %v1900 = vpow.pop %v1899
      %v1901 = vmul.f32 %v1863, 1.442695
      %v1902 = vpow.pop %v1901
      %v1903 = vmul.f32 %v1864, 1.442695
      %v1904 = vpow.pop %v1903
      %v1905 = vmul.f32 %v1865, 1.442695
      %v1906 = vpow.pop %v1905
      %v1907 = vmul.f32 %v1866, 1.442695
      %v1908 = vpow.pop %v1907
      %v1909 = vmul.f32 %v1867, 1.442695
      %v1910 = vpow.pop %v1909
      %v1911 = vmul.f32 %v1868, 1.442695
      %v1912 = vpow.pop %v1911
      %v1913 = vmul.f32 %v1869, 1.442695
      %v1914 = vpow.pop %v1913
      %v1915 = vmul.f32 %v1870, 1.442695
      %v1916 = vpow.pop %v1915
      %v1917 = vmul.f32 %v1871, 1.442695
      %v1918 = vpow.pop %v1917
      %v1919 = vmul.f32 %v1872, 1.442695
      %v1920 = vpow.pop %v1919
      %v1921 = vmul.f32 %v1873, 1.442695
      %v1922 = vpow.pop %v1921
      %v1923 = vmul.f32 %v1874, 1.442695
      %v1924 = vpow.pop %v1923
      %v1925 = vmul.f32 %v1875, 1.442695
      %v1926 = vpow.pop %v1925
      %v1927 = vmul.f32 %v1876, 1.442695
      %v1928 = vpow.pop %v1927
      %v1929 = vmul.f32 %v1877, 1.442695
      %v1930 = vpow.pop %v1929
      %v1931 = vmul.f32 %v1878, 1.442695
      %v1932 = vpow.pop %v1931
      %v1933 = vmul.f32 %v1879, 1.442695
      %v1934 = vpow.pop %v1933
      %v1935 = vmul.f32 %v1880, 1.442695
      %v1936 = vpow.pop %v1935
      %v1937 = vmul.f32 %v1881, 1.442695
      %v1938 = vpow.pop %v1937
      %v1939 = vmul.f32 %v1882, 1.442695
      %v1940 = vpow.pop %v1939
      %v1941 = vmul.f32 %v1883, 1.442695
      %v1942 = vpow.pop %v1941
      %v1943 = vmul.f32 %v1884, 1.442695
      %v1944 = vpow.pop %v1943
      %v1945 = vmul.f32 %v1885, 1.442695
      %v1946 = vpow.pop %v1945
      %v1947 = vmul.f32 %v1886, 1.442695
      %v1948 = vpow.pop %v1947
      %v1949 = vmul.f32 %v1887, 1.442695
      %v1950 = vpow.pop %v1949
      %v1951 = vmul.f32 %v1888, 1.442695
      %v1952 = vpow.pop %v1951
      %v1953 = vadd.f32 %v1890, 1.0
      %v1954 = vadd.f32 %v1892, 1.0
      %v1955 = vadd.f32 %v1894, 1.0
      %v1956 = vadd.f32 %v1896, 1.0
      %v1957 = vadd.f32 %v1898, 1.0
      %v1958 = vadd.f32 %v1900, 1.0
      %v1959 = vadd.f32 %v1902, 1.0
      %v1960 = vadd.f32 %v1904, 1.0
      %v1961 = vadd.f32 %v1906, 1.0
      %v1962 = vadd.f32 %v1908, 1.0
      %v1963 = vadd.f32 %v1910, 1.0
      %v1964 = vadd.f32 %v1912, 1.0
      %v1965 = vadd.f32 %v1914, 1.0
      %v1966 = vadd.f32 %v1916, 1.0
      %v1967 = vadd.f32 %v1918, 1.0
      %v1968 = vadd.f32 %v1920, 1.0
      %v1969 = vadd.f32 %v1922, 1.0
      %v1970 = vadd.f32 %v1924, 1.0
      %v1971 = vadd.f32 %v1926, 1.0
      %v1972 = vadd.f32 %v1928, 1.0
      %v1973 = vadd.f32 %v1930, 1.0
      %v1974 = vadd.f32 %v1932, 1.0
      %v1975 = vadd.f32 %v1934, 1.0
      %v1976 = vadd.f32 %v1936, 1.0
      %v1977 = vadd.f32 %v1938, 1.0
      %v1978 = vadd.f32 %v1940, 1.0
      %v1979 = vadd.f32 %v1942, 1.0
      %v1980 = vadd.f32 %v1944, 1.0
      %v1981 = vadd.f32 %v1946, 1.0
      %v1982 = vadd.f32 %v1948, 1.0
      %v1983 = vadd.f32 %v1950, 1.0
      %v1984 = vadd.f32 %v1952, 1.0
      %v1985 = vrcp.pop %v1953
      %v1986 = vmul.f32 %v1953, %v1985
      %v1987 = vsub.f32 1.0, %v1986
      %v1988 = vmul.f32 %v1985, %v1987
      %v1989 = vadd.f32 %v1985, %v1988
      %vm1990 = vweird.f32 %v1953
      %vm1991 = vweird.f32 %v1985
      %vm1992 = vmor %vm1990, %vm1991
      %v1993 = vsel %vm1992, %v1985, %v1989
      %v1994 = vand.u32 2147483647, %v1953
      %vm1995 = vcmp.eq.f32.partialorder %v1994, 8.507059e+37
      %v1996 = vand.u32 %v1953, 2147483648
      %v1997 = vor.u32 1.1754944e-38, %v1996
      %v1998 = vsel %vm1995, %v1997, %v1993
      %v1999 = vmul.f32 1.0, %v1998
      %v2000 = vrcp.pop %v1954
      %v2001 = vmul.f32 %v1954, %v2000
      %v2002 = vsub.f32 1.0, %v2001
      %v2003 = vmul.f32 %v2000, %v2002
      %v2004 = vadd.f32 %v2000, %v2003
      %vm2005 = vweird.f32 %v1954
      %vm2006 = vweird.f32 %v2000
      %vm2007 = vmor %vm2005, %vm2006
      %v2008 = vsel %vm2007, %v2000, %v2004
      %v2009 = vand.u32 2147483647, %v1954
      %vm2010 = vcmp.eq.f32.partialorder %v2009, 8.507059e+37
      %v2011 = vand.u32 %v1954, 2147483648
      %v2012 = vor.u32 1.1754944e-38, %v2011
      %v2013 = vsel %vm2010, %v2012, %v2008
      %v2014 = vmul.f32 1.0, %v2013
      %v2015 = vrcp.pop %v1955
      %v2016 = vmul.f32 %v1955, %v2015
      %v2017 = vsub.f32 1.0, %v2016
      %v2018 = vmul.f32 %v2015, %v2017
      %v2019 = vadd.f32 %v2015, %v2018
      %vm2020 = vweird.f32 %v1955
      %vm2021 = vweird.f32 %v2015
      %vm2022 = vmor %vm2020, %vm2021
      %v2023 = vsel %vm2022, %v2015, %v2019
      %v2024 = vand.u32 2147483647, %v1955
      %vm2025 = vcmp.eq.f32.partialorder %v2024, 8.507059e+37
      %v2026 = vand.u32 %v1955, 2147483648
      %v2027 = vor.u32 1.1754944e-38, %v2026
      %v2028 = vsel %vm2025, %v2027, %v2023
      %v2029 = vmul.f32 1.0, %v2028
      %v2030 = vrcp.pop %v1956
      %v2031 = vmul.f32 %v1956, %v2030
      %v2032 = vsub.f32 1.0, %v2031
      %v2033 = vmul.f32 %v2030, %v2032
      %v2034 = vadd.f32 %v2030, %v2033
      %vm2035 = vweird.f32 %v1956
      %vm2036 = vweird.f32 %v2030
      %vm2037 = vmor %vm2035, %vm2036
      %v2038 = vsel %vm2037, %v2030, %v2034
      %v2039 = vand.u32 2147483647, %v1956
      %vm2040 = vcmp.eq.f32.partialorder %v2039, 8.507059e+37
      %v2041 = vand.u32 %v1956, 2147483648
      %v2042 = vor.u32 1.1754944e-38, %v2041
      %v2043 = vsel %vm2040, %v2042, %v2038
      %v2044 = vmul.f32 1.0, %v2043
      %v2045 = vrcp.pop %v1957
      %v2046 = vmul.f32 %v1957, %v2045
      %v2047 = vsub.f32 1.0, %v2046
      %v2048 = vmul.f32 %v2045, %v2047
      %v2049 = vadd.f32 %v2045, %v2048
      %vm2050 = vweird.f32 %v1957
      %vm2051 = vweird.f32 %v2045
      %vm2052 = vmor %vm2050, %vm2051
      %v2053 = vsel %vm2052, %v2045, %v2049
      %v2054 = vand.u32 2147483647, %v1957
      %vm2055 = vcmp.eq.f32.partialorder %v2054, 8.507059e+37
      %v2056 = vand.u32 %v1957, 2147483648
      %v2057 = vor.u32 1.1754944e-38, %v2056
      %v2058 = vsel %vm2055, %v2057, %v2053
      %v2059 = vmul.f32 1.0, %v2058
      %v2060 = vrcp.pop %v1958
      %v2061 = vmul.f32 %v1958, %v2060
      %v2062 = vsub.f32 1.0, %v2061
      %v2063 = vmul.f32 %v2060, %v2062
      %v2064 = vadd.f32 %v2060, %v2063
      %vm2065 = vweird.f32 %v1958
      %vm2066 = vweird.f32 %v2060
      %vm2067 = vmor %vm2065, %vm2066
      %v2068 = vsel %vm2067, %v2060, %v2064
      %v2069 = vand.u32 2147483647, %v1958
      %vm2070 = vcmp.eq.f32.partialorder %v2069, 8.507059e+37
      %v2071 = vand.u32 %v1958, 2147483648
      %v2072 = vor.u32 1.1754944e-38, %v2071
      %v2073 = vsel %vm2070, %v2072, %v2068
      %v2074 = vmul.f32 1.0, %v2073
      %v2075 = vrcp.pop %v1959
      %v2076 = vmul.f32 %v1959, %v2075
      %v2077 = vsub.f32 1.0, %v2076
      %v2078 = vmul.f32 %v2075, %v2077
      %v2079 = vadd.f32 %v2075, %v2078
      %vm2080 = vweird.f32 %v1959
      %vm2081 = vweird.f32 %v2075
      %vm2082 = vmor %vm2080, %vm2081
      %v2083 = vsel %vm2082, %v2075, %v2079
      %v2084 = vand.u32 2147483647, %v1959
      %vm2085 = vcmp.eq.f32.partialorder %v2084, 8.507059e+37
      %v2086 = vand.u32 %v1959, 2147483648
      %v2087 = vor.u32 1.1754944e-38, %v2086
      %v2088 = vsel %vm2085, %v2087, %v2083
      %v2089 = vmul.f32 1.0, %v2088
      %v2090 = vrcp.pop %v1960
      %v2091 = vmul.f32 %v1960, %v2090
      %v2092 = vsub.f32 1.0, %v2091
      %v2093 = vmul.f32 %v2090, %v2092
      %v2094 = vadd.f32 %v2090, %v2093
      %vm2095 = vweird.f32 %v1960
      %vm2096 = vweird.f32 %v2090
      %vm2097 = vmor %vm2095, %vm2096
      %v2098 = vsel %vm2097, %v2090, %v2094
      %v2099 = vand.u32 2147483647, %v1960
      %vm2100 = vcmp.eq.f32.partialorder %v2099, 8.507059e+37
      %v2101 = vand.u32 %v1960, 2147483648
      %v2102 = vor.u32 1.1754944e-38, %v2101
      %v2103 = vsel %vm2100, %v2102, %v2098
      %v2104 = vmul.f32 1.0, %v2103
      %v2105 = vrcp.pop %v1961
      %v2106 = vmul.f32 %v1961, %v2105
      %v2107 = vsub.f32 1.0, %v2106
      %v2108 = vmul.f32 %v2105, %v2107
      %v2109 = vadd.f32 %v2105, %v2108
      %vm2110 = vweird.f32 %v1961
      %vm2111 = vweird.f32 %v2105
      %vm2112 = vmor %vm2110, %vm2111
      %v2113 = vsel %vm2112, %v2105, %v2109
      %v2114 = vand.u32 2147483647, %v1961
      %vm2115 = vcmp.eq.f32.partialorder %v2114, 8.507059e+37
      %v2116 = vand.u32 %v1961, 2147483648
      %v2117 = vor.u32 1.1754944e-38, %v2116
      %v2118 = vsel %vm2115, %v2117, %v2113
      %v2119 = vmul.f32 1.0, %v2118
      %v2120 = vrcp.pop %v1962
      %v2121 = vmul.f32 %v1962, %v2120
      %v2122 = vsub.f32 1.0, %v2121
      %v2123 = vmul.f32 %v2120, %v2122
      %v2124 = vadd.f32 %v2120, %v2123
      %vm2125 = vweird.f32 %v1962
      %vm2126 = vweird.f32 %v2120
      %vm2127 = vmor %vm2125, %vm2126
      %v2128 = vsel %vm2127, %v2120, %v2124
      %v2129 = vand.u32 2147483647, %v1962
      %vm2130 = vcmp.eq.f32.partialorder %v2129, 8.507059e+37
      %v2131 = vand.u32 %v1962, 2147483648
      %v2132 = vor.u32 1.1754944e-38, %v2131
      %v2133 = vsel %vm2130, %v2132, %v2128
      %v2134 = vmul.f32 1.0, %v2133
      %v2135 = vrcp.pop %v1963
      %v2136 = vmul.f32 %v1963, %v2135
      %v2137 = vsub.f32 1.0, %v2136
      %v2138 = vmul.f32 %v2135, %v2137
      %v2139 = vadd.f32 %v2135, %v2138
      %vm2140 = vweird.f32 %v1963
      %vm2141 = vweird.f32 %v2135
      %vm2142 = vmor %vm2140, %vm2141
      %v2143 = vsel %vm2142, %v2135, %v2139
      %v2144 = vand.u32 2147483647, %v1963
      %vm2145 = vcmp.eq.f32.partialorder %v2144, 8.507059e+37
      %v2146 = vand.u32 %v1963, 2147483648
      %v2147 = vor.u32 1.1754944e-38, %v2146
      %v2148 = vsel %vm2145, %v2147, %v2143
      %v2149 = vmul.f32 1.0, %v2148
      %v2150 = vrcp.pop %v1964
      %v2151 = vmul.f32 %v1964, %v2150
      %v2152 = vsub.f32 1.0, %v2151
      %v2153 = vmul.f32 %v2150, %v2152
      %v2154 = vadd.f32 %v2150, %v2153
      %vm2155 = vweird.f32 %v1964
      %vm2156 = vweird.f32 %v2150
      %vm2157 = vmor %vm2155, %vm2156
      %v2158 = vsel %vm2157, %v2150, %v2154
      %v2159 = vand.u32 2147483647, %v1964
      %vm2160 = vcmp.eq.f32.partialorder %v2159, 8.507059e+37
      %v2161 = vand.u32 %v1964, 2147483648
      %v2162 = vor.u32 1.1754944e-38, %v2161
      %v2163 = vsel %vm2160, %v2162, %v2158
      %v2164 = vmul.f32 1.0, %v2163
      %v2165 = vrcp.pop %v1965
      %v2166 = vmul.f32 %v1965, %v2165
      %v2167 = vsub.f32 1.0, %v2166
      %v2168 = vmul.f32 %v2165, %v2167
      %v2169 = vadd.f32 %v2165, %v2168
      %vm2170 = vweird.f32 %v1965
      %vm2171 = vweird.f32 %v2165
      %vm2172 = vmor %vm2170, %vm2171
      %v2173 = vsel %vm2172, %v2165, %v2169
      %v2174 = vand.u32 2147483647, %v1965
      %vm2175 = vcmp.eq.f32.partialorder %v2174, 8.507059e+37
      %v2176 = vand.u32 %v1965, 2147483648
      %v2177 = vor.u32 1.1754944e-38, %v2176
      %v2178 = vsel %vm2175, %v2177, %v2173
      %v2179 = vmul.f32 1.0, %v2178
      %v2180 = vrcp.pop %v1966
      %v2181 = vmul.f32 %v1966, %v2180
      %v2182 = vsub.f32 1.0, %v2181
      %v2183 = vmul.f32 %v2180, %v2182
      %v2184 = vadd.f32 %v2180, %v2183
      %vm2185 = vweird.f32 %v1966
      %vm2186 = vweird.f32 %v2180
      %vm2187 = vmor %vm2185, %vm2186
      %v2188 = vsel %vm2187, %v2180, %v2184
      %v2189 = vand.u32 2147483647, %v1966
      %vm2190 = vcmp.eq.f32.partialorder %v2189, 8.507059e+37
      %v2191 = vand.u32 %v1966, 2147483648
      %v2192 = vor.u32 1.1754944e-38, %v2191
      %v2193 = vsel %vm2190, %v2192, %v2188
      %v2194 = vmul.f32 1.0, %v2193
      %v2195 = vrcp.pop %v1967
      %v2196 = vmul.f32 %v1967, %v2195
      %v2197 = vsub.f32 1.0, %v2196
      %v2198 = vmul.f32 %v2195, %v2197
      %v2199 = vadd.f32 %v2195, %v2198
      %vm2200 = vweird.f32 %v1967
      %vm2201 = vweird.f32 %v2195
      %vm2202 = vmor %vm2200, %vm2201
      %v2203 = vsel %vm2202, %v2195, %v2199
      %v2204 = vand.u32 2147483647, %v1967
      %vm2205 = vcmp.eq.f32.partialorder %v2204, 8.507059e+37
      %v2206 = vand.u32 %v1967, 2147483648
      %v2207 = vor.u32 1.1754944e-38, %v2206
      %v2208 = vsel %vm2205, %v2207, %v2203
      %v2209 = vmul.f32 1.0, %v2208
      %v2210 = vrcp.pop %v1968
      %v2211 = vmul.f32 %v1968, %v2210
      %v2212 = vsub.f32 1.0, %v2211
      %v2213 = vmul.f32 %v2210, %v2212
      %v2214 = vadd.f32 %v2210, %v2213
      %vm2215 = vweird.f32 %v1968
      %vm2216 = vweird.f32 %v2210
      %vm2217 = vmor %vm2215, %vm2216
      %v2218 = vsel %vm2217, %v2210, %v2214
      %v2219 = vand.u32 2147483647, %v1968
      %vm2220 = vcmp.eq.f32.partialorder %v2219, 8.507059e+37
      %v2221 = vand.u32 %v1968, 2147483648
      %v2222 = vor.u32 1.1754944e-38, %v2221
      %v2223 = vsel %vm2220, %v2222, %v2218
      %v2224 = vmul.f32 1.0, %v2223
      %v2225 = vrcp.pop %v1969
      %v2226 = vmul.f32 %v1969, %v2225
      %v2227 = vsub.f32 1.0, %v2226
      %v2228 = vmul.f32 %v2225, %v2227
      %v2229 = vadd.f32 %v2225, %v2228
      %vm2230 = vweird.f32 %v1969
      %vm2231 = vweird.f32 %v2225
      %vm2232 = vmor %vm2230, %vm2231
      %v2233 = vsel %vm2232, %v2225, %v2229
      %v2234 = vand.u32 2147483647, %v1969
      %vm2235 = vcmp.eq.f32.partialorder %v2234, 8.507059e+37
      %v2236 = vand.u32 %v1969, 2147483648
      %v2237 = vor.u32 1.1754944e-38, %v2236
      %v2238 = vsel %vm2235, %v2237, %v2233
      %v2239 = vmul.f32 1.0, %v2238
      %v2240 = vrcp.pop %v1970
      %v2241 = vmul.f32 %v1970, %v2240
      %v2242 = vsub.f32 1.0, %v2241
      %v2243 = vmul.f32 %v2240, %v2242
      %v2244 = vadd.f32 %v2240, %v2243
      %vm2245 = vweird.f32 %v1970
      %vm2246 = vweird.f32 %v2240
      %vm2247 = vmor %vm2245, %vm2246
      %v2248 = vsel %vm2247, %v2240, %v2244
      %v2249 = vand.u32 2147483647, %v1970
      %vm2250 = vcmp.eq.f32.partialorder %v2249, 8.507059e+37
      %v2251 = vand.u32 %v1970, 2147483648
      %v2252 = vor.u32 1.1754944e-38, %v2251
      %v2253 = vsel %vm2250, %v2252, %v2248
      %v2254 = vmul.f32 1.0, %v2253
      %v2255 = vrcp.pop %v1971
      %v2256 = vmul.f32 %v1971, %v2255
      %v2257 = vsub.f32 1.0, %v2256
      %v2258 = vmul.f32 %v2255, %v2257
      %v2259 = vadd.f32 %v2255, %v2258
      %vm2260 = vweird.f32 %v1971
      %vm2261 = vweird.f32 %v2255
      %vm2262 = vmor %vm2260, %vm2261
      %v2263 = vsel %vm2262, %v2255, %v2259
      %v2264 = vand.u32 2147483647, %v1971
      %vm2265 = vcmp.eq.f32.partialorder %v2264, 8.507059e+37
      %v2266 = vand.u32 %v1971, 2147483648
      %v2267 = vor.u32 1.1754944e-38, %v2266
      %v2268 = vsel %vm2265, %v2267, %v2263
      %v2269 = vmul.f32 1.0, %v2268
      %v2270 = vrcp.pop %v1972
      %v2271 = vmul.f32 %v1972, %v2270
      %v2272 = vsub.f32 1.0, %v2271
      %v2273 = vmul.f32 %v2270, %v2272
      %v2274 = vadd.f32 %v2270, %v2273
      %vm2275 = vweird.f32 %v1972
      %vm2276 = vweird.f32 %v2270
      %vm2277 = vmor %vm2275, %vm2276
      %v2278 = vsel %vm2277, %v2270, %v2274
      %v2279 = vand.u32 2147483647, %v1972
      %vm2280 = vcmp.eq.f32.partialorder %v2279, 8.507059e+37
      %v2281 = vand.u32 %v1972, 2147483648
      %v2282 = vor.u32 1.1754944e-38, %v2281
      %v2283 = vsel %vm2280, %v2282, %v2278
      %v2284 = vmul.f32 1.0, %v2283
      %v2285 = vrcp.pop %v1973
      %v2286 = vmul.f32 %v1973, %v2285
      %v2287 = vsub.f32 1.0, %v2286
      %v2288 = vmul.f32 %v2285, %v2287
      %v2289 = vadd.f32 %v2285, %v2288
      %vm2290 = vweird.f32 %v1973
      %vm2291 = vweird.f32 %v2285
      %vm2292 = vmor %vm2290, %vm2291
      %v2293 = vsel %vm2292, %v2285, %v2289
      %v2294 = vand.u32 2147483647, %v1973
      %vm2295 = vcmp.eq.f32.partialorder %v2294, 8.507059e+37
      %v2296 = vand.u32 %v1973, 2147483648
      %v2297 = vor.u32 1.1754944e-38, %v2296
      %v2298 = vsel %vm2295, %v2297, %v2293
      %v2299 = vmul.f32 1.0, %v2298
      %v2300 = vrcp.pop %v1974
      %v2301 = vmul.f32 %v1974, %v2300
      %v2302 = vsub.f32 1.0, %v2301
      %v2303 = vmul.f32 %v2300, %v2302
      %v2304 = vadd.f32 %v2300, %v2303
      %vm2305 = vweird.f32 %v1974
      %vm2306 = vweird.f32 %v2300
      %vm2307 = vmor %vm2305, %vm2306
      %v2308 = vsel %vm2307, %v2300, %v2304
      %v2309 = vand.u32 2147483647, %v1974
      %vm2310 = vcmp.eq.f32.partialorder %v2309, 8.507059e+37
      %v2311 = vand.u32 %v1974, 2147483648
      %v2312 = vor.u32 1.1754944e-38, %v2311
      %v2313 = vsel %vm2310, %v2312, %v2308
      %v2314 = vmul.f32 1.0, %v2313
      %v2315 = vrcp.pop %v1975
      %v2316 = vmul.f32 %v1975, %v2315
      %v2317 = vsub.f32 1.0, %v2316
      %v2318 = vmul.f32 %v2315, %v2317
      %v2319 = vadd.f32 %v2315, %v2318
      %vm2320 = vweird.f32 %v1975
      %vm2321 = vweird.f32 %v2315
      %vm2322 = vmor %vm2320, %vm2321
      %v2323 = vsel %vm2322, %v2315, %v2319
      %v2324 = vand.u32 2147483647, %v1975
      %vm2325 = vcmp.eq.f32.partialorder %v2324, 8.507059e+37
      %v2326 = vand.u32 %v1975, 2147483648
      %v2327 = vor.u32 1.1754944e-38, %v2326
      %v2328 = vsel %vm2325, %v2327, %v2323
      %v2329 = vmul.f32 1.0, %v2328
      %v2330 = vrcp.pop %v1976
      %v2331 = vmul.f32 %v1976, %v2330
      %v2332 = vsub.f32 1.0, %v2331
      %v2333 = vmul.f32 %v2330, %v2332
      %v2334 = vadd.f32 %v2330, %v2333
      %vm2335 = vweird.f32 %v1976
      %vm2336 = vweird.f32 %v2330
      %vm2337 = vmor %vm2335, %vm2336
      %v2338 = vsel %vm2337, %v2330, %v2334
      %v2339 = vand.u32 2147483647, %v1976
      %vm2340 = vcmp.eq.f32.partialorder %v2339, 8.507059e+37
      %v2341 = vand.u32 %v1976, 2147483648
      %v2342 = vor.u32 1.1754944e-38, %v2341
      %v2343 = vsel %vm2340, %v2342, %v2338
      %v2344 = vmul.f32 1.0, %v2343
      %v2345 = vrcp.pop %v1977
      %v2346 = vmul.f32 %v1977, %v2345
      %v2347 = vsub.f32 1.0, %v2346
      %v2348 = vmul.f32 %v2345, %v2347
      %v2349 = vadd.f32 %v2345, %v2348
      %vm2350 = vweird.f32 %v1977
      %vm2351 = vweird.f32 %v2345
      %vm2352 = vmor %vm2350, %vm2351
      %v2353 = vsel %vm2352, %v2345, %v2349
      %v2354 = vand.u32 2147483647, %v1977
      %vm2355 = vcmp.eq.f32.partialorder %v2354, 8.507059e+37
      %v2356 = vand.u32 %v1977, 2147483648
      %v2357 = vor.u32 1.1754944e-38, %v2356
      %v2358 = vsel %vm2355, %v2357, %v2353
      %v2359 = vmul.f32 1.0, %v2358
      %v2360 = vrcp.pop %v1978
      %v2361 = vmul.f32 %v1978, %v2360
      %v2362 = vsub.f32 1.0, %v2361
      %v2363 = vmul.f32 %v2360, %v2362
      %v2364 = vadd.f32 %v2360, %v2363
      %vm2365 = vweird.f32 %v1978
      %vm2366 = vweird.f32 %v2360
      %vm2367 = vmor %vm2365, %vm2366
      %v2368 = vsel %vm2367, %v2360, %v2364
      %v2369 = vand.u32 2147483647, %v1978
      %vm2370 = vcmp.eq.f32.partialorder %v2369, 8.507059e+37
      %v2371 = vand.u32 %v1978, 2147483648
      %v2372 = vor.u32 1.1754944e-38, %v2371
      %v2373 = vsel %vm2370, %v2372, %v2368
      %v2374 = vmul.f32 1.0, %v2373
      %v2375 = vrcp.pop %v1979
      %v2376 = vmul.f32 %v1979, %v2375
      %v2377 = vsub.f32 1.0, %v2376
      %v2378 = vmul.f32 %v2375, %v2377
      %v2379 = vadd.f32 %v2375, %v2378
      %vm2380 = vweird.f32 %v1979
      %vm2381 = vweird.f32 %v2375
      %vm2382 = vmor %vm2380, %vm2381
      %v2383 = vsel %vm2382, %v2375, %v2379
      %v2384 = vand.u32 2147483647, %v1979
      %vm2385 = vcmp.eq.f32.partialorder %v2384, 8.507059e+37
      %v2386 = vand.u32 %v1979, 2147483648
      %v2387 = vor.u32 1.1754944e-38, %v2386
      %v2388 = vsel %vm2385, %v2387, %v2383
      %v2389 = vmul.f32 1.0, %v2388
      %v2390 = vrcp.pop %v1980
      %v2391 = vmul.f32 %v1980, %v2390
      %v2392 = vsub.f32 1.0, %v2391
      %v2393 = vmul.f32 %v2390, %v2392
      %v2394 = vadd.f32 %v2390, %v2393
      %vm2395 = vweird.f32 %v1980
      %vm2396 = vweird.f32 %v2390
      %vm2397 = vmor %vm2395, %vm2396
      %v2398 = vsel %vm2397, %v2390, %v2394
      %v2399 = vand.u32 2147483647, %v1980
      %vm2400 = vcmp.eq.f32.partialorder %v2399, 8.507059e+37
      %v2401 = vand.u32 %v1980, 2147483648
      %v2402 = vor.u32 1.1754944e-38, %v2401
      %v2403 = vsel %vm2400, %v2402, %v2398
      %v2404 = vmul.f32 1.0, %v2403
      %v2405 = vrcp.pop %v1981
      %v2406 = vmul.f32 %v1981, %v2405
      %v2407 = vsub.f32 1.0, %v2406
      %v2408 = vmul.f32 %v2405, %v2407
      %v2409 = vadd.f32 %v2405, %v2408
      %vm2410 = vweird.f32 %v1981
      %vm2411 = vweird.f32 %v2405
      %vm2412 = vmor %vm2410, %vm2411
      %v2413 = vsel %vm2412, %v2405, %v2409
      %v2414 = vand.u32 2147483647, %v1981
      %vm2415 = vcmp.eq.f32.partialorder %v2414, 8.507059e+37
      %v2416 = vand.u32 %v1981, 2147483648
      %v2417 = vor.u32 1.1754944e-38, %v2416
      %v2418 = vsel %vm2415, %v2417, %v2413
      %v2419 = vmul.f32 1.0, %v2418
      %v2420 = vrcp.pop %v1982
      %v2421 = vmul.f32 %v1982, %v2420
      %v2422 = vsub.f32 1.0, %v2421
      %v2423 = vmul.f32 %v2420, %v2422
      %v2424 = vadd.f32 %v2420, %v2423
      %vm2425 = vweird.f32 %v1982
      %vm2426 = vweird.f32 %v2420
      %vm2427 = vmor %vm2425, %vm2426
      %v2428 = vsel %vm2427, %v2420, %v2424
      %v2429 = vand.u32 2147483647, %v1982
      %vm2430 = vcmp.eq.f32.partialorder %v2429, 8.507059e+37
      %v2431 = vand.u32 %v1982, 2147483648
      %v2432 = vor.u32 1.1754944e-38, %v2431
      %v2433 = vsel %vm2430, %v2432, %v2428
      %v2434 = vmul.f32 1.0, %v2433
      %v2435 = vrcp.pop %v1983
      %v2436 = vmul.f32 %v1983, %v2435
      %v2437 = vsub.f32 1.0, %v2436
      %v2438 = vmul.f32 %v2435, %v2437
      %v2439 = vadd.f32 %v2435, %v2438
      %vm2440 = vweird.f32 %v1983
      %vm2441 = vweird.f32 %v2435
      %vm2442 = vmor %vm2440, %vm2441
      %v2443 = vsel %vm2442, %v2435, %v2439
      %v2444 = vand.u32 2147483647, %v1983
      %vm2445 = vcmp.eq.f32.partialorder %v2444, 8.507059e+37
      %v2446 = vand.u32 %v1983, 2147483648
      %v2447 = vor.u32 1.1754944e-38, %v2446
      %v2448 = vsel %vm2445, %v2447, %v2443
      %v2449 = vmul.f32 1.0, %v2448
      %v2450 = vrcp.pop %v1984
      %v2451 = vmul.f32 %v1984, %v2450
      %v2452 = vsub.f32 1.0, %v2451
      %v2453 = vmul.f32 %v2450, %v2452
      %v2454 = vadd.f32 %v2450, %v2453
      %vm2455 = vweird.f32 %v1984
      %vm2456 = vweird.f32 %v2450
      %vm2457 = vmor %vm2455, %vm2456
      %v2458 = vsel %vm2457, %v2450, %v2454
      %v2459 = vand.u32 2147483647, %v1984
      %vm2460 = vcmp.eq.f32.partialorder %v2459, 8.507059e+37
      %v2461 = vand.u32 %v1984, 2147483648
      %v2462 = vor.u32 1.1754944e-38, %v2461
      %v2463 = vsel %vm2460, %v2462, %v2458
      %v2464 = vmul.f32 1.0, %v2463
      %vm2465 = vcmask 31744
      %2466 = vst.msk [vmem:[%s170] sm:$0xff] %vm2465, %v1999
      %2467 = vst.msk [vmem:[%s170 + $0x8] sm:$0xff] %vm2465, %v2014
      %2468 = vst.msk [vmem:[%s170 + $0x10] sm:$0xff] %vm2465, %v2029
      %2469 = vst.msk [vmem:[%s170 + $0x18] sm:$0xff] %vm2465, %v2044
      %2470 = vst.msk [vmem:[%s170 + $0x20] sm:$0xff] %vm2465, %v2059
      %2471 = vst.msk [vmem:[%s170 + $0x28] sm:$0xff] %vm2465, %v2074
      %2472 = vst.msk [vmem:[%s170 + $0x30] sm:$0xff] %vm2465, %v2089
      %2473 = vst.msk [vmem:[%s170 + $0x38] sm:$0xff] %vm2465, %v2104
      %2474 = vst.msk [vmem:[%s170 + $0x40] sm:$0xff] %vm2465, %v2119
      %2475 = vst.msk [vmem:[%s170 + $0x48] sm:$0xff] %vm2465, %v2134
      %2476 = vst.msk [vmem:[%s170 + $0x50] sm:$0xff] %vm2465, %v2149
      %2477 = vst.msk [vmem:[%s170 + $0x58] sm:$0xff] %vm2465, %v2164
      %2478 = vst.msk [vmem:[%s170 + $0x60] sm:$0xff] %vm2465, %v2179
      %2479 = vst.msk [vmem:[%s170 + $0x68] sm:$0xff] %vm2465, %v2194
      %2480 = vst.msk [vmem:[%s170 + $0x70] sm:$0xff] %vm2465, %v2209
      %2481 = vst.msk [vmem:[%s170 + $0x78] sm:$0xff] %vm2465, %v2224
      %2482 = vst.msk [vmem:[%s170 + $0x80] sm:$0xff] %vm2465, %v2239
      %2483 = vst.msk [vmem:[%s170 + $0x88] sm:$0xff] %vm2465, %v2254
      %2484 = vst.msk [vmem:[%s170 + $0x90] sm:$0xff] %vm2465, %v2269
      %2485 = vst.msk [vmem:[%s170 + $0x98] sm:$0xff] %vm2465, %v2284
      %2486 = vst.msk [vmem:[%s170 + $0xa0] sm:$0xff] %vm2465, %v2299
      %2487 = vst.msk [vmem:[%s170 + $0xa8] sm:$0xff] %vm2465, %v2314
      %2488 = vst.msk [vmem:[%s170 + $0xb0] sm:$0xff] %vm2465, %v2329
      %2489 = vst.msk [vmem:[%s170 + $0xb8] sm:$0xff] %vm2465, %v2344
      %2490 = vst.msk [vmem:[%s170 + $0xc0] sm:$0xff] %vm2465, %v2359
      %2491 = vst.msk [vmem:[%s170 + $0xc8] sm:$0xff] %vm2465, %v2374
      %2492 = vst.msk [vmem:[%s170 + $0xd0] sm:$0xff] %vm2465, %v2389
      %2493 = vst.msk [vmem:[%s170 + $0xd8] sm:$0xff] %vm2465, %v2404
      %2494 = vst.msk [vmem:[%s170 + $0xe0] sm:$0xff] %vm2465, %v2419
      %2495 = vst.msk [vmem:[%s170 + $0xe8] sm:$0xff] %vm2465, %v2434
      %2496 = vst.msk [vmem:[%s170 + $0xf0] sm:$0xff] %vm2465, %v2449
      %2497 = vst.msk [vmem:[%s170 + $0xf8] sm:$0xff] %vm2465, %v2464
      %p2498 = scmp.lt.s32.totalorder %s14, 1
      %s2499 = scalar_select %p2498, %s14, 1
      %s2500 = smul.addr %s2499, 32
      %s2501 = smul.addr %s2500, 8
      %s2502 = scalar_lea.vmem %s3, %s2501
      // Predicated region
      $region33: #{forward.11} parent=31 // pred_check
        %p2503 = pneg %p100
      $region34: #{forward.11} parent=31 // pred_check_branch
        %2505 = sbr.rel (%p2503) target = $region36
      $region35: #{forward.11} parent=31 // pred_region
        _
      $region36: #{forward.11} parent=31 // pred_fallthru
        _
    $region32: #{forward.11} parent=5 // pred_fallthru
      _
    %p2506 = scmp.le.s32.totalorder 2, %s9
    // Predicated region
    $region37: #{forward.11} parent=5 // pred_check
      %p2507 = pneg %p2506
    $region38: #{forward.11} parent=5 // pred_check_branch
      %2509 = sbr.rel (%p2507) target = $region40
    $region39: #{forward.11} parent=5 // pred_region
      %s2510 = ssub.s32 %s9, 2
      // Predicated region
      $region41: #{forward.11} parent=39 // pred_check
        %p2511 = pneg %p106
      $region42: #{forward.11} parent=39 // pred_check_branch
        %2513 = sbr.rel (%p2511) target = $region44
      $region43: #{forward.11} parent=39 // pred_region
        %p2514 = scmp.lt.s32.totalorder %s15, 1
        %s2515 = scalar_select %p2514, %s15, 1
        %s2516 = smul.addr %s2515, 32
        %s2517 = smul.addr %s2516, 8
        %s2518 = scalar_lea.vmem %s3, %s2517
      $region44: #{forward.11} parent=39 // pred_fallthru
        _
    $region40: #{forward.11} parent=5 // pred_fallthru
      _
  $region6: #{forward.11} parent=0 // loop_footer
    %s13 = sadd.s32 1, %s9
  $region7: #{forward.11} parent=0 // loop_footer_branch
    %8 = sbr.rel target = $region3
  $region8: #{forward.11} parent=0 // loop_exit
    _

</llo_original>
